<compile_context>
chip_gen: v6e
topology: v6e:2x2x1
jax: 0.10.0
libtpu: 0.0.40
codegen_flags: <defaults>
</compile_context>

<pallas_src>
import functools

import jax
import jax.numpy as jnp
from jax.experimental import pallas as pl
from jax.experimental.pallas import tpu as pltpu


# ------------------------------------------------------------------ utilities
def _full_specs(*shapes):
    """Full-array BlockSpecs for a grid=(1,) pallas_call."""
    return [pl.BlockSpec(s, (lambda i, n=len(s): (0,) * n)) for s in shapes]


_CPARAMS = pltpu.CompilerParams(dimension_semantics=("arbitrary",))


# ------------------------------------------------------------- LSTM building block
def _lstm_cell(xg, h, c, whh_ref, H):
    """One LSTM cell update given the precomputed input gates xg = x@Wih + b."""
    gates = xg + jnp.dot(h, whh_ref[...], preferred_element_type=jnp.float32)
    i = jax.nn.sigmoid(gates[:, 0 * H:1 * H])
    f = jax.nn.sigmoid(gates[:, 1 * H:2 * H])
    g = jnp.tanh(gates[:, 2 * H:3 * H])
    o = jax.nn.sigmoid(gates[:, 3 * H:4 * H])
    c_new = f * c + i * g
    h_new = o * jnp.tanh(c_new)
    return h_new, c_new


# ------------------------------------------- fused sequence-encoder LSTM kernel
def _lstm_enc_kernel(x_ref, wih_ref, whh_ref, b_ref, hT_ref, cT_ref,
                     xg_sc, h_sc, c_sc, *, T, B, H):
    # Hoisted input-to-hidden projection: one (T*B, I) @ (I, 4H) MXU matmul.
    x = x_ref[...]                                           # (T, B, I)
    xg = (jnp.dot(x.reshape(T * B, x.shape[-1]), wih_ref[...],
                  preferred_element_type=jnp.float32) + b_ref[...])
    xg_sc[...] = xg.reshape(T, B, 4 * H)

    h_sc[...] = jnp.zeros_like(h_sc)
    c_sc[...] = jnp.zeros_like(c_sc)

    def step(t, carry):
        h_new, c_new = _lstm_cell(xg_sc[t], h_sc[...], c_sc[...], whh_ref, H)
        h_sc[...] = h_new
        c_sc[...] = c_new
        return carry

    jax.lax.fori_loop(0, T, step, 0, unroll=True)

    hT_ref[...] = h_sc[...]
    cT_ref[...] = c_sc[...]


def lstm_encode(x_bti, p):
    """Encode (B, T, I) with a 1-layer LSTM; returns final (h, c), each (B, H)."""
    B, T, I = x_bti.shape
    H = p["whh"].shape[0]
    x = jnp.transpose(x_bti, (1, 0, 2))                      # (T, B, I)
    hT, cT = pl.pallas_call(
        functools.partial(_lstm_enc_kernel, T=T, B=B, H=H),
        grid=(1,),
        in_specs=_full_specs((T, B, I), (I, 4 * H), (H, 4 * H), (1, 4 * H)),
        out_specs=tuple(_full_specs((B, H), (B, H))),
        out_shape=(jax.ShapeDtypeStruct((B, H), jnp.float32),
                   jax.ShapeDtypeStruct((B, H), jnp.float32)),
        scratch_shapes=[pltpu.VMEM((T, B, 4 * H), jnp.float32),
                        pltpu.VMEM((B, H), jnp.float32),
                        pltpu.VMEM((B, H), jnp.float32)],
        compiler_params=_CPARAMS,
    )(x, p["wih"], p["whh"], p["b"])
    return hT, cT


# ---------------------------------- fused attention / FCNet / fusion-MLP kernel
def _att_chain_kernel(img_ref, hist_ref, q_ref,
                      wimg_ref, bimg_ref,
                      awv_ref, awq_ref, abh_ref, awp_ref, abp_ref,
                      fcw_ref, fcb_ref,
                      w1_ref, b1_ref, w2_ref, b2_ref,
                      wfc1_ref, bfc1_ref,
                      out_ref, *, B, K, RND, H2, AH):
    # image = img_embed(image)  -- fused here so image_e never hits HBM.
    img = img_ref[...]                                       # (B, K, F)
    image = (jnp.dot(img.reshape(B * K, img.shape[-1]), wimg_ref[...],
                     preferred_element_type=jnp.float32)
             + bimg_ref[...]).reshape(B, K, H2)
    hist = hist_ref[...]                                     # (B, RND, H2)
    q = q_ref[...]                                           # (B, H2)

    def attend(v, query, n, idx):
        # Additive attention + softmax + weighted pooling over axis 1.
        vp = jnp.dot(v.reshape(B * n, H2), awv_ref[idx],
                     preferred_element_type=jnp.float32).reshape(B, n, AH)
        qp = (jnp.dot(query, awq_ref[idx], preferred_element_type=jnp.float32)
              + abh_ref[idx])                                # (B, AH)
        joint = jnp.tanh(vp + qp[:, None, :])                # (B, n, AH)
        # (AH,1) projection as VPU multiply + lane reduction (no N=1 matmul).
        logits = jnp.sum(joint * awp_ref[idx][None], axis=-1) + abp_ref[idx]
        e = jnp.exp(logits - jnp.max(logits, axis=-1, keepdims=True))
        att = e * pl.reciprocal(jnp.sum(e, axis=-1, keepdims=True), approx=True)
        return jnp.sum(att[:, :, None] * v, axis=1)          # (B, H2)

    def fcnet(x, idx):                                       # Linear + ReLU
        return jnp.maximum(
            jnp.dot(x, fcw_ref[idx], preferred_element_type=jnp.float32)
            + fcb_ref[idx], 0.0)

    # attention stack order: 0=track_1 1=locate_1 2=track_2 3=locate_2
    #                        4=track_3 5=locate_3
    # fcnet stack order:     0=q_net 1=v_net 2=h_net 3=qhi_net 4=qih_net
    qv_emb = attend(image, q, K, 0)
    qh_emb = attend(hist, q, RND, 1)
    qhi_emb = attend(image, qh_emb, K, 2)
    qih_emb = attend(hist, qv_emb, RND, 3)

    q_re = fcnet(q, 0)                                       # q_net (computed once, reused)
    qih_m = q_re * fcnet(qih_emb, 2)                         # h_net
    qhi_m = q_re * fcnet(qhi_emb, 1)                         # v_net

    qihi_emb = attend(image, qih_m, K, 4)
    qhih_emb = attend(hist, qhi_m, RND, 5)

    qhi_repr = fcnet(qihi_emb, 3)                            # qhi_net
    qih_repr = fcnet(qhih_emb, 4)                            # qih_net
    qqhi = q_re * qhi_repr
    qqih = q_re * qih_repr

    a = jnp.dot(qqhi, w1_ref[...], preferred_element_type=jnp.float32) + b1_ref[...]
    b = jnp.dot(qqih, w2_ref[...], preferred_element_type=jnp.float32) + b2_ref[...]
    # fc1 applied to cat([a, b], 1) without materializing the concat:
    # split fc1 weight rows into the w1-half and the w2-half.
    # TODO(synk): F.dropout is treated as eval-mode identity (deterministic).
    y = (jnp.dot(a, wfc1_ref[:H2, :], preferred_element_type=jnp.float32)
         + jnp.dot(b, wfc1_ref[H2:, :], preferred_element_type=jnp.float32)
         + bfc1_ref[...])
    out_ref[...] = jnp.tanh(y)


def att_chain(image, h_emb, q_vec, params):
    B, K, F = image.shape
    RND = h_emb.shape[1]
    H2 = q_vec.shape[1]
    att = params["att"]
    fc = params["fc"]
    AH = att["wv"].shape[-1]
    NIN = params["fc1"]["w"].shape[1]
    return pl.pallas_call(
        functools.partial(_att_chain_kernel, B=B, K=K, RND=RND, H2=H2, AH=AH),
        grid=(1,),
        in_specs=_full_specs(
            (B, K, F), (B, RND, H2), (B, H2),
            (F, H2), (1, H2),
            (6, H2, AH), (6, H2, AH), (6, 1, AH), (6, 1, AH), (6, 1, 1),
            (5, H2, H2), (5, 1, H2),
            (H2, H2), (1, H2), (H2, H2), (1, H2),
            (2 * H2, NIN), (1, NIN)),
        out_specs=_full_specs((B, NIN))[0],
        out_shape=jax.ShapeDtypeStruct((B, NIN), jnp.float32),
        compiler_params=_CPARAMS,
    )(image, h_emb, q_vec,
      params["img_embed"]["w"], params["img_embed"]["b"],
      att["wv"], att["wq"], att["bh"], att["wp"], att["bp"],
      fc["w"], fc["b"],
      params["w1"]["w"], params["w1"]["b"],
      params["w2"]["w"], params["w2"]["b"],
      params["fc1"]["w"], params["fc1"]["b"])


# --------------------------------------------------------- fused decoder kernel
def _decoder_kernel(joint_ref, ans_ref, h0_ref, c0_ref,
                    wih_ref, whh_ref, b_ref, wout_ref, bout_ref,
                    pred_ref, xg_sc, hs_sc, h_sc, c_sc, *, T, B, H):
    # Step 0: feed the fused joint representation through the decoder LSTM once
    # (output discarded; only the refreshed hidden state is kept).
    jg = (jnp.dot(joint_ref[...], wih_ref[...], preferred_element_type=jnp.float32)
          + b_ref[...])
    h, c = _lstm_cell(jg, h0_ref[...], c0_ref[...], whh_ref, H)
    h_sc[...] = h
    c_sc[...] = c

    # Answer sequence: hoisted input projection, then the recurrence.
    ans = ans_ref[...]                                       # (T, B, ninp)
    xg = (jnp.dot(ans.reshape(T * B, ans.shape[-1]), wih_ref[...],
                  preferred_element_type=jnp.float32) + b_ref[...])
    xg_sc[...] = xg.reshape(T, B, 4 * H)

    def step(t, carry):
        h_new, c_new = _lstm_cell(xg_sc[t], h_sc[...], c_sc[...], whh_ref, H)
        h_sc[...] = h_new
        c_sc[...] = c_new
        hs_sc[t] = h_new
        return carry

    jax.lax.fori_loop(0, T, step, 0, unroll=True)

    # Vocab projection over all timesteps in a single MXU matmul.
    logits = (jnp.dot(hs_sc[...].reshape(T * B, H), wout_ref[...],
                      preferred_element_type=jnp.float32) + bout_ref[...])
    pred_ref[...] = logits.reshape(T, B, -1)


def decoder_run(joint, ans_emb, h0, c0, params):
    B, NIN = joint.shape
    T = ans_emb.shape[1]
    H = params["dec_lstm"]["whh"].shape[0]
    V = params["dec_out"]["w"].shape[1]
    ans = jnp.transpose(ans_emb, (1, 0, 2))                  # (T, B, ninp)
    pred = pl.pallas_call(
        functools.partial(_decoder_kernel, T=T, B=B, H=H),
        grid=(1,),
        in_specs=_full_specs((B, NIN), (T, B, NIN), (B, H), (B, H),
                             (NIN, 4 * H), (H, 4 * H), (1, 4 * H),
                             (H, V), (1, V)),
        out_specs=_full_specs((T, B, V))[0],
        out_shape=jax.ShapeDtypeStruct((T, B, V), jnp.float32),
        scratch_shapes=[pltpu.VMEM((T, B, 4 * H), jnp.float32),
                        pltpu.VMEM((T, B, H), jnp.float32),
                        pltpu.VMEM((B, H), jnp.float32),
                        pltpu.VMEM((B, H), jnp.float32)],
        compiler_params=_CPARAMS,
    )(joint, ans, h0, c0,
      params["dec_lstm"]["wih"], params["dec_lstm"]["whh"], params["dec_lstm"]["b"],
      params["dec_out"]["w"], params["dec_out"]["b"])
    return jnp.transpose(pred, (1, 0, 2))                    # (B, T, V)


# ------------------------------------------------------------------- params
def init_params(key, *, vocab, ninp, nhid, img_feat, att_hid):
    h2 = 2 * nhid
    keys = iter(jax.random.split(key, 64))

    def nrm(shape, scale=0.05):
        return scale * jax.random.normal(next(keys), shape, dtype=jnp.float32)

    def lin(din, dout):
        return {"w": nrm((din, dout)), "b": jnp.zeros((1, dout), jnp.float32)}

    def lstm(din, dh):
        return {"wih": nrm((din, 4 * dh)), "whh": nrm((dh, 4 * dh)),
                "b": jnp.zeros((1, 4 * dh), jnp.float32)}

    return {
        "emb": nrm((vocab, ninp)),
        "q_enc": lstm(ninp, h2),
        "h_enc": lstm(ninp, h2),
        "img_embed": lin(img_feat, h2),
        # 6 stacked additive attentions:
        # [track_1, locate_1, track_2, locate_2, track_3, locate_3]
        "att": {"wv": nrm((6, h2, att_hid)),
                "wq": nrm((6, h2, att_hid)),
                "bh": jnp.zeros((6, 1, att_hid), jnp.float32),
                "wp": nrm((6, 1, att_hid)),
                "bp": jnp.zeros((6, 1, 1), jnp.float32)},
        # 5 stacked FCNets (Linear+ReLU): [q_net, v_net, h_net, qhi_net, qih_net]
        "fc": {"w": nrm((5, h2, h2)),
               "b": jnp.zeros((5, 1, h2), jnp.float32)},
        "w1": lin(h2, h2), "w2": lin(h2, h2),
        "fc1": lin(2 * h2, ninp),
        "dec_lstm": lstm(ninp, h2),
        "dec_out": lin(h2, vocab),
    }


# ------------------------------------------------------------------ forward
def forward(params, image, question, history, answer, rnd):
    h2 = params["q_enc"]["whh"].shape[0]

    # question / history encoders (one fused Pallas kernel each)
    w_emb = jnp.take(params["emb"], question, axis=0)        # (B, Lq, ninp)
    q_vec, q_c = lstm_encode(w_emb, params["q_enc"])         # (B, 2H) each
    hw_emb = jnp.take(params["emb"], history, axis=0)        # (B*rnd, Lh, ninp)
    h_vec, _ = lstm_encode(hw_emb, params["h_enc"])          # (B*rnd, 2H)
    h_emb = h_vec.reshape(-1, rnd, h2)                       # (B, rnd, 2H)

    # img_embed + 6 attentions + FCNets + w1/w2 + fc1(tanh), all in one kernel
    joint = att_chain(image, h_emb, q_vec, params)           # (B, ninp)

    # decoder: hidden refresh with joint, then answer sequence + vocab projection
    ans_emb = jnp.take(params["emb"], answer, axis=0)        # (B, La, ninp)
    pred = decoder_run(joint, ans_emb, q_vec, q_c, params)   # (B, La, vocab)
    return pred


# --------------------------------------------------------------------- main
if __name__ == "__main__":
    B, K, IMG_FEAT = 2, 16, 64
    NHID, NINP, ATT_HID = 32, 32, 64
    VOCAB = 100
    LQ, LH, LA, RND = 8, 8, 6, 4

    params = init_params(jax.random.PRNGKey(0), vocab=VOCAB, ninp=NINP,
                         nhid=NHID, img_feat=IMG_FEAT, att_hid=ATT_HID)

    k1, k2, k3, k4 = jax.random.split(jax.random.PRNGKey(0), 4)
    image = jax.random.normal(k1, (B, K, IMG_FEAT), jnp.float32)
    question = jax.random.randint(k2, (B, LQ), 0, VOCAB, dtype=jnp.int32)
    history = jax.random.randint(k3, (B * RND, LH), 0, VOCAB, dtype=jnp.int32)
    answer = jax.random.randint(k4, (B, LA), 0, VOCAB, dtype=jnp.int32)

    fwd = jax.jit(functools.partial(forward, rnd=RND))
    pred = fwd(params, image, question, history, answer)
    jax.block_until_ready(pred)

    assert pred.shape == (B, LA, VOCAB), pred.shape
    assert jnp.all(jnp.isfinite(pred))
    print("KERNEL_OK")
</pallas_src>

<mosaic_0001>
module attributes {stable_mosaic.version = 11 : i64} {
  func.func @_lstm_enc_kernel(%arg0: i32, %arg1: memref<8x2x32xf32, #tpu.memory_space<vmem>>, %arg2: memref<32x256xf32, #tpu.memory_space<vmem>>, %arg3: memref<64x256xf32, #tpu.memory_space<vmem>>, %arg4: memref<1x256xf32, #tpu.memory_space<vmem>>, %arg5: memref<2x64xf32, #tpu.memory_space<vmem>>, %arg6: memref<2x64xf32, #tpu.memory_space<vmem>>, %arg7: memref<8x2x256xf32, #tpu.memory_space<vmem>>, %arg8: memref<2x64xf32, #tpu.memory_space<vmem>>, %arg9: memref<2x64xf32, #tpu.memory_space<vmem>>) attributes {dimension_semantics = [#tpu.dimension_semantics<arbitrary>], iteration_bounds = array<i64: 1>, scalar_prefetch = 0 : i64, scratch_operands = 3 : i64, tpu.core_type = #tpu.core_type<tc>, window_params = [{pipeline_mode = #tpu.pipeline_mode<synchronous>, transform_indices = @transform_0, window_bounds = array<i64: 8, 2, 32>}, {pipeline_mode = #tpu.pipeline_mode<synchronous>, transform_indices = @transform_1, window_bounds = array<i64: 32, 256>}, {pipeline_mode = #tpu.pipeline_mode<synchronous>, transform_indices = @transform_2, window_bounds = array<i64: 64, 256>}, {pipeline_mode = #tpu.pipeline_mode<synchronous>, transform_indices = @transform_3, window_bounds = array<i64: 1, 256>}, {pipeline_mode = #tpu.pipeline_mode<synchronous>, transform_indices = @transform_4, window_bounds = array<i64: 2, 64>}, {pipeline_mode = #tpu.pipeline_mode<synchronous>, transform_indices = @transform_5, window_bounds = array<i64: 2, 64>}]} {
    %c0 = arith.constant 0 : index
    %c0_0 = arith.constant 0 : index
    %c0_1 = arith.constant 0 : index
    %0 = vector.load %arg1[%c0, %c0_0, %c0_1] : memref<8x2x32xf32, #tpu.memory_space<vmem>>, vector<8x2x32xf32>
    %1 = vector.shape_cast %0 : vector<8x2x32xf32> to vector<16x32xf32>
    %c0_2 = arith.constant 0 : index
    %c0_3 = arith.constant 0 : index
    %2 = vector.load %arg2[%c0_2, %c0_3] : memref<32x256xf32, #tpu.memory_space<vmem>>, vector<32x256xf32>
    %cst = arith.constant dense<0.000000e+00> : vector<16x256xf32>
    %3 = tpu.matmul %1, %2, %cst {dimension_numbers = #tpu.dot_dimension_numbers<[1], [0], [0], [1], [0, 0, 1, 1], [], []>} : vector<16x32xf32>, vector<32x256xf32>, vector<16x256xf32> -> vector<16x256xf32>
    %c0_4 = arith.constant 0 : index
    %c0_5 = arith.constant 0 : index
    %4 = vector.load %arg4[%c0_4, %c0_5] : memref<1x256xf32, #tpu.memory_space<vmem>>, vector<1x256xf32>
    %5 = vector.broadcast %4 : vector<1x256xf32> to vector<16x256xf32>
    %6 = arith.addf %3, %5 : vector<16x256xf32>
    %7 = vector.shape_cast %6 : vector<16x256xf32> to vector<8x2x256xf32>
    %c0_6 = arith.constant 0 : index
    %c0_7 = arith.constant 0 : index
    %c0_8 = arith.constant 0 : index
    %8 = vector.load %arg7[%c0_6, %c0_7, %c0_8] : memref<8x2x256xf32, #tpu.memory_space<vmem>>, vector<8x2x256xf32>
    tpu.vector_store %arg7[%c0_6, %c0_7, %c0_8], %7 {strides = array<i32>} : memref<8x2x256xf32, #tpu.memory_space<vmem>>, vector<8x2x256xf32>,
    %cst_9 = arith.constant 0.000000e+00 : f32
    %9 = vector.broadcast %cst_9 : f32 to vector<2x64xf32>
    %c0_10 = arith.constant 0 : index
    %c0_11 = arith.constant 0 : index
    %10 = vector.load %arg8[%c0_10, %c0_11] : memref<2x64xf32, #tpu.memory_space<vmem>>, vector<2x64xf32>
    tpu.vector_store %arg8[%c0_10, %c0_11], %9 {strides = array<i32>} : memref<2x64xf32, #tpu.memory_space<vmem>>, vector<2x64xf32>,
    %cst_12 = arith.constant 0.000000e+00 : f32
    %11 = vector.broadcast %cst_12 : f32 to vector<2x64xf32>
    %c0_13 = arith.constant 0 : index
    %c0_14 = arith.constant 0 : index
    %12 = vector.load %arg9[%c0_13, %c0_14] : memref<2x64xf32, #tpu.memory_space<vmem>>, vector<2x64xf32>
    tpu.vector_store %arg9[%c0_13, %c0_14], %11 {strides = array<i32>} : memref<2x64xf32, #tpu.memory_space<vmem>>, vector<2x64xf32>,
    %c0_i32 = arith.constant 0 : i32
    %13 = arith.index_cast %c0_i32 : i32 to index
    %c0_15 = arith.constant 0 : index
    %c0_16 = arith.constant 0 : index
    %14 = vector.load %arg7[%13, %c0_15, %c0_16] : memref<8x2x256xf32, #tpu.memory_space<vmem>>, vector<1x2x256xf32>
    %15 = vector.shape_cast %14 : vector<1x2x256xf32> to vector<2x256xf32>
    %c0_17 = arith.constant 0 : index
    %c0_18 = arith.constant 0 : index
    %16 = vector.load %arg8[%c0_17, %c0_18] : memref<2x64xf32, #tpu.memory_space<vmem>>, vector<2x64xf32>
    %c0_19 = arith.constant 0 : index
    %c0_20 = arith.constant 0 : index
    %17 = vector.load %arg9[%c0_19, %c0_20] : memref<2x64xf32, #tpu.memory_space<vmem>>, vector<2x64xf32>
    %c0_21 = arith.constant 0 : index
    %c0_22 = arith.constant 0 : index
    %18 = vector.load %arg3[%c0_21, %c0_22] : memref<64x256xf32, #tpu.memory_space<vmem>>, vector<64x256xf32>
    %cst_23 = arith.constant dense<0.000000e+00> : vector<2x256xf32>
    %19 = tpu.matmul %16, %18, %cst_23 {dimension_numbers = #tpu.dot_dimension_numbers<[1], [0], [0], [1], [0, 0, 1, 1], [], []>} : vector<2x64xf32>, vector<64x256xf32>, vector<2x256xf32> -> vector<2x256xf32>
    %20 = arith.addf %15, %19 : vector<2x256xf32>
    %21 = vector.extract_strided_slice %20 {offsets = [0, 0], sizes = [2, 64], strides = [1, 1]} : vector<2x256xf32> to vector<2x64xf32>
    %22 = arith.negf %21 : vector<2x64xf32>
    %23 = math.exp %22 : vector<2x64xf32>
    %cst_24 = arith.constant 1.000000e+00 : f32
    %24 = vector.broadcast %cst_24 : f32 to vector<2x64xf32>
    %25 = arith.addf %24, %23 : vector<2x64xf32>
    %26 = arith.divf %24, %25 : vector<2x64xf32>
    %27 = vector.extract_strided_slice %20 {offsets = [0, 64], sizes = [2, 64], strides = [1, 1]} : vector<2x256xf32> to vector<2x64xf32>
    %28 = arith.negf %27 : vector<2x64xf32>
    %29 = math.exp %28 : vector<2x64xf32>
    %cst_25 = arith.constant 1.000000e+00 : f32
    %30 = vector.broadcast %cst_25 : f32 to vector<2x64xf32>
    %31 = arith.addf %30, %29 : vector<2x64xf32>
    %32 = arith.divf %30, %31 : vector<2x64xf32>
    %33 = vector.extract_strided_slice %20 {offsets = [0, 128], sizes = [2, 64], strides = [1, 1]} : vector<2x256xf32> to vector<2x64xf32>
    %34 = math.tanh %33 : vector<2x64xf32>
    %35 = vector.extract_strided_slice %20 {offsets = [0, 192], sizes = [2, 64], strides = [1, 1]} : vector<2x256xf32> to vector<2x64xf32>
    %36 = arith.negf %35 : vector<2x64xf32>
    %37 = math.exp %36 : vector<2x64xf32>
    %cst_26 = arith.constant 1.000000e+00 : f32
    %38 = vector.broadcast %cst_26 : f32 to vector<2x64xf32>
    %39 = arith.addf %38, %37 : vector<2x64xf32>
    %40 = arith.divf %38, %39 : vector<2x64xf32>
    %41 = arith.mulf %32, %17 : vector<2x64xf32>
    %42 = arith.mulf %26, %34 : vector<2x64xf32>
    %43 = arith.addf %41, %42 : vector<2x64xf32>
    %44 = math.tanh %43 : vector<2x64xf32>
    %45 = arith.mulf %40, %44 : vector<2x64xf32>
    %c0_27 = arith.constant 0 : index
    %c0_28 = arith.constant 0 : index
    %46 = vector.load %arg8[%c0_27, %c0_28] : memref<2x64xf32, #tpu.memory_space<vmem>>, vector<2x64xf32>
    tpu.vector_store %arg8[%c0_27, %c0_28], %45 {strides = array<i32>} : memref<2x64xf32, #tpu.memory_space<vmem>>, vector<2x64xf32>,
    %c0_29 = arith.constant 0 : index
    %c0_30 = arith.constant 0 : index
    %47 = vector.load %arg9[%c0_29, %c0_30] : memref<2x64xf32, #tpu.memory_space<vmem>>, vector<2x64xf32>
    tpu.vector_store %arg9[%c0_29, %c0_30], %43 {strides = array<i32>} : memref<2x64xf32, #tpu.memory_space<vmem>>, vector<2x64xf32>,
    %c1_i32 = arith.constant 1 : i32
    %48 = arith.index_cast %c1_i32 : i32 to index
    %c0_31 = arith.constant 0 : index
    %c0_32 = arith.constant 0 : index
    %49 = vector.load %arg7[%48, %c0_31, %c0_32] : memref<8x2x256xf32, #tpu.memory_space<vmem>>, vector<1x2x256xf32>
    %50 = vector.shape_cast %49 : vector<1x2x256xf32> to vector<2x256xf32>
    %c0_33 = arith.constant 0 : index
    %c0_34 = arith.constant 0 : index
    %51 = vector.load %arg8[%c0_33, %c0_34] : memref<2x64xf32, #tpu.memory_space<vmem>>, vector<2x64xf32>
    %c0_35 = arith.constant 0 : index
    %c0_36 = arith.constant 0 : index
    %52 = vector.load %arg9[%c0_35, %c0_36] : memref<2x64xf32, #tpu.memory_space<vmem>>, vector<2x64xf32>
    %c0_37 = arith.constant 0 : index
    %c0_38 = arith.constant 0 : index
    %53 = vector.load %arg3[%c0_37, %c0_38] : memref<64x256xf32, #tpu.memory_space<vmem>>, vector<64x256xf32>
    %cst_39 = arith.constant dense<0.000000e+00> : vector<2x256xf32>
    %54 = tpu.matmul %51, %53, %cst_39 {dimension_numbers = #tpu.dot_dimension_numbers<[1], [0], [0], [1], [0, 0, 1, 1], [], []>} : vector<2x64xf32>, vector<64x256xf32>, vector<2x256xf32> -> vector<2x256xf32>
    %55 = arith.addf %50, %54 : vector<2x256xf32>
    %56 = vector.extract_strided_slice %55 {offsets = [0, 0], sizes = [2, 64], strides = [1, 1]} : vector<2x256xf32> to vector<2x64xf32>
    %57 = arith.negf %56 : vector<2x64xf32>
    %58 = math.exp %57 : vector<2x64xf32>
    %cst_40 = arith.constant 1.000000e+00 : f32
    %59 = vector.broadcast %cst_40 : f32 to vector<2x64xf32>
    %60 = arith.addf %59, %58 : vector<2x64xf32>
    %61 = arith.divf %59, %60 : vector<2x64xf32>
    %62 = vector.extract_strided_slice %55 {offsets = [0, 64], sizes = [2, 64], strides = [1, 1]} : vector<2x256xf32> to vector<2x64xf32>
    %63 = arith.negf %62 : vector<2x64xf32>
    %64 = math.exp %63 : vector<2x64xf32>
    %cst_41 = arith.constant 1.000000e+00 : f32
    %65 = vector.broadcast %cst_41 : f32 to vector<2x64xf32>
    %66 = arith.addf %65, %64 : vector<2x64xf32>
    %67 = arith.divf %65, %66 : vector<2x64xf32>
    %68 = vector.extract_strided_slice %55 {offsets = [0, 128], sizes = [2, 64], strides = [1, 1]} : vector<2x256xf32> to vector<2x64xf32>
    %69 = math.tanh %68 : vector<2x64xf32>
    %70 = vector.extract_strided_slice %55 {offsets = [0, 192], sizes = [2, 64], strides = [1, 1]} : vector<2x256xf32> to vector<2x64xf32>
    %71 = arith.negf %70 : vector<2x64xf32>
    %72 = math.exp %71 : vector<2x64xf32>
    %cst_42 = arith.constant 1.000000e+00 : f32
    %73 = vector.broadcast %cst_42 : f32 to vector<2x64xf32>
    %74 = arith.addf %73, %72 : vector<2x64xf32>
    %75 = arith.divf %73, %74 : vector<2x64xf32>
    %76 = arith.mulf %67, %52 : vector<2x64xf32>
    %77 = arith.mulf %61, %69 : vector<2x64xf32>
    %78 = arith.addf %76, %77 : vector<2x64xf32>
    %79 = math.tanh %78 : vector<2x64xf32>
    %80 = arith.mulf %75, %79 : vector<2x64xf32>
    %c0_43 = arith.constant 0 : index
    %c0_44 = arith.constant 0 : index
    %81 = vector.load %arg8[%c0_43, %c0_44] : memref<2x64xf32, #tpu.memory_space<vmem>>, vector<2x64xf32>
    tpu.vector_store %arg8[%c0_43, %c0_44], %80 {strides = array<i32>} : memref<2x64xf32, #tpu.memory_space<vmem>>, vector<2x64xf32>,
    %c0_45 = arith.constant 0 : index
    %c0_46 = arith.constant 0 : index
    %82 = vector.load %arg9[%c0_45, %c0_46] : memref<2x64xf32, #tpu.memory_space<vmem>>, vector<2x64xf32>
    tpu.vector_store %arg9[%c0_45, %c0_46], %78 {strides = array<i32>} : memref<2x64xf32, #tpu.memory_space<vmem>>, vector<2x64xf32>,
    %c2_i32 = arith.constant 2 : i32
    %83 = arith.index_cast %c2_i32 : i32 to index
    %c0_47 = arith.constant 0 : index
    %c0_48 = arith.constant 0 : index
    %84 = vector.load %arg7[%83, %c0_47, %c0_48] : memref<8x2x256xf32, #tpu.memory_space<vmem>>, vector<1x2x256xf32>
    %85 = vector.shape_cast %84 : vector<1x2x256xf32> to vector<2x256xf32>
    %c0_49 = arith.constant 0 : index
    %c0_50 = arith.constant 0 : index
    %86 = vector.load %arg8[%c0_49, %c0_50] : memref<2x64xf32, #tpu.memory_space<vmem>>, vector<2x64xf32>
    %c0_51 = arith.constant 0 : index
    %c0_52 = arith.constant 0 : index
    %87 = vector.load %arg9[%c0_51, %c0_52] : memref<2x64xf32, #tpu.memory_space<vmem>>, vector<2x64xf32>
    %c0_53 = arith.constant 0 : index
    %c0_54 = arith.constant 0 : index
    %88 = vector.load %arg3[%c0_53, %c0_54] : memref<64x256xf32, #tpu.memory_space<vmem>>, vector<64x256xf32>
    %cst_55 = arith.constant dense<0.000000e+00> : vector<2x256xf32>
    %89 = tpu.matmul %86, %88, %cst_55 {dimension_numbers = #tpu.dot_dimension_numbers<[1], [0], [0], [1], [0, 0, 1, 1], [], []>} : vector<2x64xf32>, vector<64x256xf32>, vector<2x256xf32> -> vector<2x256xf32>
    %90 = arith.addf %85, %89 : vector<2x256xf32>
    %91 = vector.extract_strided_slice %90 {offsets = [0, 0], sizes = [2, 64], strides = [1, 1]} : vector<2x256xf32> to vector<2x64xf32>
    %92 = arith.negf %91 : vector<2x64xf32>
    %93 = math.exp %92 : vector<2x64xf32>
    %cst_56 = arith.constant 1.000000e+00 : f32
    %94 = vector.broadcast %cst_56 : f32 to vector<2x64xf32>
    %95 = arith.addf %94, %93 : vector<2x64xf32>
    %96 = arith.divf %94, %95 : vector<2x64xf32>
    %97 = vector.extract_strided_slice %90 {offsets = [0, 64], sizes = [2, 64], strides = [1, 1]} : vector<2x256xf32> to vector<2x64xf32>
    %98 = arith.negf %97 : vector<2x64xf32>
    %99 = math.exp %98 : vector<2x64xf32>
    %cst_57 = arith.constant 1.000000e+00 : f32
    %100 = vector.broadcast %cst_57 : f32 to vector<2x64xf32>
    %101 = arith.addf %100, %99 : vector<2x64xf32>
    %102 = arith.divf %100, %101 : vector<2x64xf32>
    %103 = vector.extract_strided_slice %90 {offsets = [0, 128], sizes = [2, 64], strides = [1, 1]} : vector<2x256xf32> to vector<2x64xf32>
    %104 = math.tanh %103 : vector<2x64xf32>
    %105 = vector.extract_strided_slice %90 {offsets = [0, 192], sizes = [2, 64], strides = [1, 1]} : vector<2x256xf32> to vector<2x64xf32>
    %106 = arith.negf %105 : vector<2x64xf32>
    %107 = math.exp %106 : vector<2x64xf32>
    %cst_58 = arith.constant 1.000000e+00 : f32
    %108 = vector.broadcast %cst_58 : f32 to vector<2x64xf32>
    %109 = arith.addf %108, %107 : vector<2x64xf32>
    %110 = arith.divf %108, %109 : vector<2x64xf32>
    %111 = arith.mulf %102, %87 : vector<2x64xf32>
    %112 = arith.mulf %96, %104 : vector<2x64xf32>
    %113 = arith.addf %111, %112 : vector<2x64xf32>
    %114 = math.tanh %113 : vector<2x64xf32>
    %115 = arith.mulf %110, %114 : vector<2x64xf32>
    %c0_59 = arith.constant 0 : index
    %c0_60 = arith.constant 0 : index
    %116 = vector.load %arg8[%c0_59, %c0_60] : memref<2x64xf32, #tpu.memory_space<vmem>>, vector<2x64xf32>
    tpu.vector_store %arg8[%c0_59, %c0_60], %115 {strides = array<i32>} : memref<2x64xf32, #tpu.memory_space<vmem>>, vector<2x64xf32>,
    %c0_61 = arith.constant 0 : index
    %c0_62 = arith.constant 0 : index
    %117 = vector.load %arg9[%c0_61, %c0_62] : memref<2x64xf32, #tpu.memory_space<vmem>>, vector<2x64xf32>
    tpu.vector_store %arg9[%c0_61, %c0_62], %113 {strides = array<i32>} : memref<2x64xf32, #tpu.memory_space<vmem>>, vector<2x64xf32>,
    %c3_i32 = arith.constant 3 : i32
    %118 = arith.index_cast %c3_i32 : i32 to index
    %c0_63 = arith.constant 0 : index
    %c0_64 = arith.constant 0 : index
    %119 = vector.load %arg7[%118, %c0_63, %c0_64] : memref<8x2x256xf32, #tpu.memory_space<vmem>>, vector<1x2x256xf32>
    %120 = vector.shape_cast %119 : vector<1x2x256xf32> to vector<2x256xf32>
    %c0_65 = arith.constant 0 : index
    %c0_66 = arith.constant 0 : index
    %121 = vector.load %arg8[%c0_65, %c0_66] : memref<2x64xf32, #tpu.memory_space<vmem>>, vector<2x64xf32>
    %c0_67 = arith.constant 0 : index
    %c0_68 = arith.constant 0 : index
    %122 = vector.load %arg9[%c0_67, %c0_68] : memref<2x64xf32, #tpu.memory_space<vmem>>, vector<2x64xf32>
    %c0_69 = arith.constant 0 : index
    %c0_70 = arith.constant 0 : index
    %123 = vector.load %arg3[%c0_69, %c0_70] : memref<64x256xf32, #tpu.memory_space<vmem>>, vector<64x256xf32>
    %cst_71 = arith.constant dense<0.000000e+00> : vector<2x256xf32>
    %124 = tpu.matmul %121, %123, %cst_71 {dimension_numbers = #tpu.dot_dimension_numbers<[1], [0], [0], [1], [0, 0, 1, 1], [], []>} : vector<2x64xf32>, vector<64x256xf32>, vector<2x256xf32> -> vector<2x256xf32>
    %125 = arith.addf %120, %124 : vector<2x256xf32>
    %126 = vector.extract_strided_slice %125 {offsets = [0, 0], sizes = [2, 64], strides = [1, 1]} : vector<2x256xf32> to vector<2x64xf32>
    %127 = arith.negf %126 : vector<2x64xf32>
    %128 = math.exp %127 : vector<2x64xf32>
    %cst_72 = arith.constant 1.000000e+00 : f32
    %129 = vector.broadcast %cst_72 : f32 to vector<2x64xf32>
    %130 = arith.addf %129, %128 : vector<2x64xf32>
    %131 = arith.divf %129, %130 : vector<2x64xf32>
    %132 = vector.extract_strided_slice %125 {offsets = [0, 64], sizes = [2, 64], strides = [1, 1]} : vector<2x256xf32> to vector<2x64xf32>
    %133 = arith.negf %132 : vector<2x64xf32>
    %134 = math.exp %133 : vector<2x64xf32>
    %cst_73 = arith.constant 1.000000e+00 : f32
    %135 = vector.broadcast %cst_73 : f32 to vector<2x64xf32>
    %136 = arith.addf %135, %134 : vector<2x64xf32>
    %137 = arith.divf %135, %136 : vector<2x64xf32>
    %138 = vector.extract_strided_slice %125 {offsets = [0, 128], sizes = [2, 64], strides = [1, 1]} : vector<2x256xf32> to vector<2x64xf32>
    %139 = math.tanh %138 : vector<2x64xf32>
    %140 = vector.extract_strided_slice %125 {offsets = [0, 192], sizes = [2, 64], strides = [1, 1]} : vector<2x256xf32> to vector<2x64xf32>
    %141 = arith.negf %140 : vector<2x64xf32>
    %142 = math.exp %141 : vector<2x64xf32>
    %cst_74 = arith.constant 1.000000e+00 : f32
    %143 = vector.broadcast %cst_74 : f32 to vector<2x64xf32>
    %144 = arith.addf %143, %142 : vector<2x64xf32>
    %145 = arith.divf %143, %144 : vector<2x64xf32>
    %146 = arith.mulf %137, %122 : vector<2x64xf32>
    %147 = arith.mulf %131, %139 : vector<2x64xf32>
    %148 = arith.addf %146, %147 : vector<2x64xf32>
    %149 = math.tanh %148 : vector<2x64xf32>
    %150 = arith.mulf %145, %149 : vector<2x64xf32>
    %c0_75 = arith.constant 0 : index
    %c0_76 = arith.constant 0 : index
    %151 = vector.load %arg8[%c0_75, %c0_76] : memref<2x64xf32, #tpu.memory_space<vmem>>, vector<2x64xf32>
    tpu.vector_store %arg8[%c0_75, %c0_76], %150 {strides = array<i32>} : memref<2x64xf32, #tpu.memory_space<vmem>>, vector<2x64xf32>,
    %c0_77 = arith.constant 0 : index
    %c0_78 = arith.constant 0 : index
    %152 = vector.load %arg9[%c0_77, %c0_78] : memref<2x64xf32, #tpu.memory_space<vmem>>, vector<2x64xf32>
    tpu.vector_store %arg9[%c0_77, %c0_78], %148 {strides = array<i32>} : memref<2x64xf32, #tpu.memory_space<vmem>>, vector<2x64xf32>,
    %c4_i32 = arith.constant 4 : i32
    %153 = arith.index_cast %c4_i32 : i32 to index
    %c0_79 = arith.constant 0 : index
    %c0_80 = arith.constant 0 : index
    %154 = vector.load %arg7[%153, %c0_79, %c0_80] : memref<8x2x256xf32, #tpu.memory_space<vmem>>, vector<1x2x256xf32>
    %155 = vector.shape_cast %154 : vector<1x2x256xf32> to vector<2x256xf32>
    %c0_81 = arith.constant 0 : index
    %c0_82 = arith.constant 0 : index
    %156 = vector.load %arg8[%c0_81, %c0_82] : memref<2x64xf32, #tpu.memory_space<vmem>>, vector<2x64xf32>
    %c0_83 = arith.constant 0 : index
    %c0_84 = arith.constant 0 : index
    %157 = vector.load %arg9[%c0_83, %c0_84] : memref<2x64xf32, #tpu.memory_space<vmem>>, vector<2x64xf32>
    %c0_85 = arith.constant 0 : index
    %c0_86 = arith.constant 0 : index
    %158 = vector.load %arg3[%c0_85, %c0_86] : memref<64x256xf32, #tpu.memory_space<vmem>>, vector<64x256xf32>
    %cst_87 = arith.constant dense<0.000000e+00> : vector<2x256xf32>
    %159 = tpu.matmul %156, %158, %cst_87 {dimension_numbers = #tpu.dot_dimension_numbers<[1], [0], [0], [1], [0, 0, 1, 1], [], []>} : vector<2x64xf32>, vector<64x256xf32>, vector<2x256xf32> -> vector<2x256xf32>
    %160 = arith.addf %155, %159 : vector<2x256xf32>
    %161 = vector.extract_strided_slice %160 {offsets = [0, 0], sizes = [2, 64], strides = [1, 1]} : vector<2x256xf32> to vector<2x64xf32>
    %162 = arith.negf %161 : vector<2x64xf32>
    %163 = math.exp %162 : vector<2x64xf32>
    %cst_88 = arith.constant 1.000000e+00 : f32
    %164 = vector.broadcast %cst_88 : f32 to vector<2x64xf32>
    %165 = arith.addf %164, %163 : vector<2x64xf32>
    %166 = arith.divf %164, %165 : vector<2x64xf32>
    %167 = vector.extract_strided_slice %160 {offsets = [0, 64], sizes = [2, 64], strides = [1, 1]} : vector<2x256xf32> to vector<2x64xf32>
    %168 = arith.negf %167 : vector<2x64xf32>
    %169 = math.exp %168 : vector<2x64xf32>
    %cst_89 = arith.constant 1.000000e+00 : f32
    %170 = vector.broadcast %cst_89 : f32 to vector<2x64xf32>
    %171 = arith.addf %170, %169 : vector<2x64xf32>
    %172 = arith.divf %170, %171 : vector<2x64xf32>
    %173 = vector.extract_strided_slice %160 {offsets = [0, 128], sizes = [2, 64], strides = [1, 1]} : vector<2x256xf32> to vector<2x64xf32>
    %174 = math.tanh %173 : vector<2x64xf32>
    %175 = vector.extract_strided_slice %160 {offsets = [0, 192], sizes = [2, 64], strides = [1, 1]} : vector<2x256xf32> to vector<2x64xf32>
    %176 = arith.negf %175 : vector<2x64xf32>
    %177 = math.exp %176 : vector<2x64xf32>
    %cst_90 = arith.constant 1.000000e+00 : f32
    %178 = vector.broadcast %cst_90 : f32 to vector<2x64xf32>
    %179 = arith.addf %178, %177 : vector<2x64xf32>
    %180 = arith.divf %178, %179 : vector<2x64xf32>
    %181 = arith.mulf %172, %157 : vector<2x64xf32>
    %182 = arith.mulf %166, %174 : vector<2x64xf32>
    %183 = arith.addf %181, %182 : vector<2x64xf32>
    %184 = math.tanh %183 : vector<2x64xf32>
    %185 = arith.mulf %180, %184 : vector<2x64xf32>
    %c0_91 = arith.constant 0 : index
    %c0_92 = arith.constant 0 : index
    %186 = vector.load %arg8[%c0_91, %c0_92] : memref<2x64xf32, #tpu.memory_space<vmem>>, vector<2x64xf32>
    tpu.vector_store %arg8[%c0_91, %c0_92], %185 {strides = array<i32>} : memref<2x64xf32, #tpu.memory_space<vmem>>, vector<2x64xf32>,
    %c0_93 = arith.constant 0 : index
    %c0_94 = arith.constant 0 : index
    %187 = vector.load %arg9[%c0_93, %c0_94] : memref<2x64xf32, #tpu.memory_space<vmem>>, vector<2x64xf32>
    tpu.vector_store %arg9[%c0_93, %c0_94], %183 {strides = array<i32>} : memref<2x64xf32, #tpu.memory_space<vmem>>, vector<2x64xf32>,
    %c5_i32 = arith.constant 5 : i32
    %188 = arith.index_cast %c5_i32 : i32 to index
    %c0_95 = arith.constant 0 : index
    %c0_96 = arith.constant 0 : index
    %189 = vector.load %arg7[%188, %c0_95, %c0_96] : memref<8x2x256xf32, #tpu.memory_space<vmem>>, vector<1x2x256xf32>
    %190 = vector.shape_cast %189 : vector<1x2x256xf32> to vector<2x256xf32>
    %c0_97 = arith.constant 0 : index
    %c0_98 = arith.constant 0 : index
    %191 = vector.load %arg8[%c0_97, %c0_98] : memref<2x64xf32, #tpu.memory_space<vmem>>, vector<2x64xf32>
    %c0_99 = arith.constant 0 : index
    %c0_100 = arith.constant 0 : index
    %192 = vector.load %arg9[%c0_99, %c0_100] : memref<2x64xf32, #tpu.memory_space<vmem>>, vector<2x64xf32>
    %c0_101 = arith.constant 0 : index
    %c0_102 = arith.constant 0 : index
    %193 = vector.load %arg3[%c0_101, %c0_102] : memref<64x256xf32, #tpu.memory_space<vmem>>, vector<64x256xf32>
    %cst_103 = arith.constant dense<0.000000e+00> : vector<2x256xf32>
    %194 = tpu.matmul %191, %193, %cst_103 {dimension_numbers = #tpu.dot_dimension_numbers<[1], [0], [0], [1], [0, 0, 1, 1], [], []>} : vector<2x64xf32>, vector<64x256xf32>, vector<2x256xf32> -> vector<2x256xf32>
    %195 = arith.addf %190, %194 : vector<2x256xf32>
    %196 = vector.extract_strided_slice %195 {offsets = [0, 0], sizes = [2, 64], strides = [1, 1]} : vector<2x256xf32> to vector<2x64xf32>
    %197 = arith.negf %196 : vector<2x64xf32>
    %198 = math.exp %197 : vector<2x64xf32>
    %cst_104 = arith.constant 1.000000e+00 : f32
    %199 = vector.broadcast %cst_104 : f32 to vector<2x64xf32>
    %200 = arith.addf %199, %198 : vector<2x64xf32>
    %201 = arith.divf %199, %200 : vector<2x64xf32>
    %202 = vector.extract_strided_slice %195 {offsets = [0, 64], sizes = [2, 64], strides = [1, 1]} : vector<2x256xf32> to vector<2x64xf32>
    %203 = arith.negf %202 : vector<2x64xf32>
    %204 = math.exp %203 : vector<2x64xf32>
    %cst_105 = arith.constant 1.000000e+00 : f32
    %205 = vector.broadcast %cst_105 : f32 to vector<2x64xf32>
    %206 = arith.addf %205, %204 : vector<2x64xf32>
    %207 = arith.divf %205, %206 : vector<2x64xf32>
    %208 = vector.extract_strided_slice %195 {offsets = [0, 128], sizes = [2, 64], strides = [1, 1]} : vector<2x256xf32> to vector<2x64xf32>
    %209 = math.tanh %208 : vector<2x64xf32>
    %210 = vector.extract_strided_slice %195 {offsets = [0, 192], sizes = [2, 64], strides = [1, 1]} : vector<2x256xf32> to vector<2x64xf32>
    %211 = arith.negf %210 : vector<2x64xf32>
    %212 = math.exp %211 : vector<2x64xf32>
    %cst_106 = arith.constant 1.000000e+00 : f32
    %213 = vector.broadcast %cst_106 : f32 to vector<2x64xf32>
    %214 = arith.addf %213, %212 : vector<2x64xf32>
    %215 = arith.divf %213, %214 : vector<2x64xf32>
    %216 = arith.mulf %207, %192 : vector<2x64xf32>
    %217 = arith.mulf %201, %209 : vector<2x64xf32>
    %218 = arith.addf %216, %217 : vector<2x64xf32>
    %219 = math.tanh %218 : vector<2x64xf32>
    %220 = arith.mulf %215, %219 : vector<2x64xf32>
    %c0_107 = arith.constant 0 : index
    %c0_108 = arith.constant 0 : index
    %221 = vector.load %arg8[%c0_107, %c0_108] : memref<2x64xf32, #tpu.memory_space<vmem>>, vector<2x64xf32>
    tpu.vector_store %arg8[%c0_107, %c0_108], %220 {strides = array<i32>} : memref<2x64xf32, #tpu.memory_space<vmem>>, vector<2x64xf32>,
    %c0_109 = arith.constant 0 : index
    %c0_110 = arith.constant 0 : index
    %222 = vector.load %arg9[%c0_109, %c0_110] : memref<2x64xf32, #tpu.memory_space<vmem>>, vector<2x64xf32>
    tpu.vector_store %arg9[%c0_109, %c0_110], %218 {strides = array<i32>} : memref<2x64xf32, #tpu.memory_space<vmem>>, vector<2x64xf32>,
    %c6_i32 = arith.constant 6 : i32
    %223 = arith.index_cast %c6_i32 : i32 to index
    %c0_111 = arith.constant 0 : index
    %c0_112 = arith.constant 0 : index
    %224 = vector.load %arg7[%223, %c0_111, %c0_112] : memref<8x2x256xf32, #tpu.memory_space<vmem>>, vector<1x2x256xf32>
    %225 = vector.shape_cast %224 : vector<1x2x256xf32> to vector<2x256xf32>
    %c0_113 = arith.constant 0 : index
    %c0_114 = arith.constant 0 : index
    %226 = vector.load %arg8[%c0_113, %c0_114] : memref<2x64xf32, #tpu.memory_space<vmem>>, vector<2x64xf32>
    %c0_115 = arith.constant 0 : index
    %c0_116 = arith.constant 0 : index
    %227 = vector.load %arg9[%c0_115, %c0_116] : memref<2x64xf32, #tpu.memory_space<vmem>>, vector<2x64xf32>
    %c0_117 = arith.constant 0 : index
    %c0_118 = arith.constant 0 : index
    %228 = vector.load %arg3[%c0_117, %c0_118] : memref<64x256xf32, #tpu.memory_space<vmem>>, vector<64x256xf32>
    %cst_119 = arith.constant dense<0.000000e+00> : vector<2x256xf32>
    %229 = tpu.matmul %226, %228, %cst_119 {dimension_numbers = #tpu.dot_dimension_numbers<[1], [0], [0], [1], [0, 0, 1, 1], [], []>} : vector<2x64xf32>, vector<64x256xf32>, vector<2x256xf32> -> vector<2x256xf32>
    %230 = arith.addf %225, %229 : vector<2x256xf32>
    %231 = vector.extract_strided_slice %230 {offsets = [0, 0], sizes = [2, 64], strides = [1, 1]} : vector<2x256xf32> to vector<2x64xf32>
    %232 = arith.negf %231 : vector<2x64xf32>
    %233 = math.exp %232 : vector<2x64xf32>
    %cst_120 = arith.constant 1.000000e+00 : f32
    %234 = vector.broadcast %cst_120 : f32 to vector<2x64xf32>
    %235 = arith.addf %234, %233 : vector<2x64xf32>
    %236 = arith.divf %234, %235 : vector<2x64xf32>
    %237 = vector.extract_strided_slice %230 {offsets = [0, 64], sizes = [2, 64], strides = [1, 1]} : vector<2x256xf32> to vector<2x64xf32>
    %238 = arith.negf %237 : vector<2x64xf32>
    %239 = math.exp %238 : vector<2x64xf32>
    %cst_121 = arith.constant 1.000000e+00 : f32
    %240 = vector.broadcast %cst_121 : f32 to vector<2x64xf32>
    %241 = arith.addf %240, %239 : vector<2x64xf32>
    %242 = arith.divf %240, %241 : vector<2x64xf32>
    %243 = vector.extract_strided_slice %230 {offsets = [0, 128], sizes = [2, 64], strides = [1, 1]} : vector<2x256xf32> to vector<2x64xf32>
    %244 = math.tanh %243 : vector<2x64xf32>
    %245 = vector.extract_strided_slice %230 {offsets = [0, 192], sizes = [2, 64], strides = [1, 1]} : vector<2x256xf32> to vector<2x64xf32>
    %246 = arith.negf %245 : vector<2x64xf32>
    %247 = math.exp %246 : vector<2x64xf32>
    %cst_122 = arith.constant 1.000000e+00 : f32
    %248 = vector.broadcast %cst_122 : f32 to vector<2x64xf32>
    %249 = arith.addf %248, %247 : vector<2x64xf32>
    %250 = arith.divf %248, %249 : vector<2x64xf32>
    %251 = arith.mulf %242, %227 : vector<2x64xf32>
    %252 = arith.mulf %236, %244 : vector<2x64xf32>
    %253 = arith.addf %251, %252 : vector<2x64xf32>
    %254 = math.tanh %253 : vector<2x64xf32>
    %255 = arith.mulf %250, %254 : vector<2x64xf32>
    %c0_123 = arith.constant 0 : index
    %c0_124 = arith.constant 0 : index
    %256 = vector.load %arg8[%c0_123, %c0_124] : memref<2x64xf32, #tpu.memory_space<vmem>>, vector<2x64xf32>
    tpu.vector_store %arg8[%c0_123, %c0_124], %255 {strides = array<i32>} : memref<2x64xf32, #tpu.memory_space<vmem>>, vector<2x64xf32>,
    %c0_125 = arith.constant 0 : index
    %c0_126 = arith.constant 0 : index
    %257 = vector.load %arg9[%c0_125, %c0_126] : memref<2x64xf32, #tpu.memory_space<vmem>>, vector<2x64xf32>
    tpu.vector_store %arg9[%c0_125, %c0_126], %253 {strides = array<i32>} : memref<2x64xf32, #tpu.memory_space<vmem>>, vector<2x64xf32>,
    %c7_i32 = arith.constant 7 : i32
    %258 = arith.index_cast %c7_i32 : i32 to index
    %c0_127 = arith.constant 0 : index
    %c0_128 = arith.constant 0 : index
    %259 = vector.load %arg7[%258, %c0_127, %c0_128] : memref<8x2x256xf32, #tpu.memory_space<vmem>>, vector<1x2x256xf32>
    %260 = vector.shape_cast %259 : vector<1x2x256xf32> to vector<2x256xf32>
    %c0_129 = arith.constant 0 : index
    %c0_130 = arith.constant 0 : index
    %261 = vector.load %arg8[%c0_129, %c0_130] : memref<2x64xf32, #tpu.memory_space<vmem>>, vector<2x64xf32>
    %c0_131 = arith.constant 0 : index
    %c0_132 = arith.constant 0 : index
    %262 = vector.load %arg9[%c0_131, %c0_132] : memref<2x64xf32, #tpu.memory_space<vmem>>, vector<2x64xf32>
    %c0_133 = arith.constant 0 : index
    %c0_134 = arith.constant 0 : index
    %263 = vector.load %arg3[%c0_133, %c0_134] : memref<64x256xf32, #tpu.memory_space<vmem>>, vector<64x256xf32>
    %cst_135 = arith.constant dense<0.000000e+00> : vector<2x256xf32>
    %264 = tpu.matmul %261, %263, %cst_135 {dimension_numbers = #tpu.dot_dimension_numbers<[1], [0], [0], [1], [0, 0, 1, 1], [], []>} : vector<2x64xf32>, vector<64x256xf32>, vector<2x256xf32> -> vector<2x256xf32>
    %265 = arith.addf %260, %264 : vector<2x256xf32>
    %266 = vector.extract_strided_slice %265 {offsets = [0, 0], sizes = [2, 64], strides = [1, 1]} : vector<2x256xf32> to vector<2x64xf32>
    %267 = arith.negf %266 : vector<2x64xf32>
    %268 = math.exp %267 : vector<2x64xf32>
    %cst_136 = arith.constant 1.000000e+00 : f32
    %269 = vector.broadcast %cst_136 : f32 to vector<2x64xf32>
    %270 = arith.addf %269, %268 : vector<2x64xf32>
    %271 = arith.divf %269, %270 : vector<2x64xf32>
    %272 = vector.extract_strided_slice %265 {offsets = [0, 64], sizes = [2, 64], strides = [1, 1]} : vector<2x256xf32> to vector<2x64xf32>
    %273 = arith.negf %272 : vector<2x64xf32>
    %274 = math.exp %273 : vector<2x64xf32>
    %cst_137 = arith.constant 1.000000e+00 : f32
    %275 = vector.broadcast %cst_137 : f32 to vector<2x64xf32>
    %276 = arith.addf %275, %274 : vector<2x64xf32>
    %277 = arith.divf %275, %276 : vector<2x64xf32>
    %278 = vector.extract_strided_slice %265 {offsets = [0, 128], sizes = [2, 64], strides = [1, 1]} : vector<2x256xf32> to vector<2x64xf32>
    %279 = math.tanh %278 : vector<2x64xf32>
    %280 = vector.extract_strided_slice %265 {offsets = [0, 192], sizes = [2, 64], strides = [1, 1]} : vector<2x256xf32> to vector<2x64xf32>
    %281 = arith.negf %280 : vector<2x64xf32>
    %282 = math.exp %281 : vector<2x64xf32>
    %cst_138 = arith.constant 1.000000e+00 : f32
    %283 = vector.broadcast %cst_138 : f32 to vector<2x64xf32>
    %284 = arith.addf %283, %282 : vector<2x64xf32>
    %285 = arith.divf %283, %284 : vector<2x64xf32>
    %286 = arith.mulf %277, %262 : vector<2x64xf32>
    %287 = arith.mulf %271, %279 : vector<2x64xf32>
    %288 = arith.addf %286, %287 : vector<2x64xf32>
    %289 = math.tanh %288 : vector<2x64xf32>
    %290 = arith.mulf %285, %289 : vector<2x64xf32>
    %c0_139 = arith.constant 0 : index
    %c0_140 = arith.constant 0 : index
    %291 = vector.load %arg8[%c0_139, %c0_140] : memref<2x64xf32, #tpu.memory_space<vmem>>, vector<2x64xf32>
    tpu.vector_store %arg8[%c0_139, %c0_140], %290 {strides = array<i32>} : memref<2x64xf32, #tpu.memory_space<vmem>>, vector<2x64xf32>,
    %c0_141 = arith.constant 0 : index
    %c0_142 = arith.constant 0 : index
    %292 = vector.load %arg9[%c0_141, %c0_142] : memref<2x64xf32, #tpu.memory_space<vmem>>, vector<2x64xf32>
    tpu.vector_store %arg9[%c0_141, %c0_142], %288 {strides = array<i32>} : memref<2x64xf32, #tpu.memory_space<vmem>>, vector<2x64xf32>,
    %c8_i32 = arith.constant 8 : i32
    %c0_143 = arith.constant 0 : index
    %c0_144 = arith.constant 0 : index
    %293 = vector.load %arg8[%c0_143, %c0_144] : memref<2x64xf32, #tpu.memory_space<vmem>>, vector<2x64xf32>
    %c0_145 = arith.constant 0 : index
    %c0_146 = arith.constant 0 : index
    %294 = vector.load %arg5[%c0_145, %c0_146] : memref<2x64xf32, #tpu.memory_space<vmem>>, vector<2x64xf32>
    tpu.vector_store %arg5[%c0_145, %c0_146], %293 {strides = array<i32>} : memref<2x64xf32, #tpu.memory_space<vmem>>, vector<2x64xf32>,
    %c0_147 = arith.constant 0 : index
    %c0_148 = arith.constant 0 : index
    %295 = vector.load %arg9[%c0_147, %c0_148] : memref<2x64xf32, #tpu.memory_space<vmem>>, vector<2x64xf32>
    %c0_149 = arith.constant 0 : index
    %c0_150 = arith.constant 0 : index
    %296 = vector.load %arg6[%c0_149, %c0_150] : memref<2x64xf32, #tpu.memory_space<vmem>>, vector<2x64xf32>
    tpu.vector_store %arg6[%c0_149, %c0_150], %295 {strides = array<i32>} : memref<2x64xf32, #tpu.memory_space<vmem>>, vector<2x64xf32>,
    return
  }
  func.func @transform_0(%arg0: i32) -> (i32, i32, i32) {
    %c0_i32 = arith.constant 0 : i32
    %c0_i32_0 = arith.constant 0 : i32
    %c0_i32_1 = arith.constant 0 : i32
    %c0_i32_2 = arith.constant 0 : i32
    return %c0_i32, %c0_i32_0, %c0_i32_1 : i32, i32, i32
  }
  func.func @transform_1(%arg0: i32) -> (i32, i32) {
    %c0_i32 = arith.constant 0 : i32
    %c0_i32_0 = arith.constant 0 : i32
    %c0_i32_1 = arith.constant 0 : i32
    return %c0_i32, %c0_i32_0 : i32, i32
  }
  func.func @transform_2(%arg0: i32) -> (i32, i32) {
    %c0_i32 = arith.constant 0 : i32
    %c0_i32_0 = arith.constant 0 : i32
    %c0_i32_1 = arith.constant 0 : i32
    return %c0_i32, %c0_i32_0 : i32, i32
  }
  func.func @transform_3(%arg0: i32) -> (i32, i32) {
    %c0_i32 = arith.constant 0 : i32
    %c0_i32_0 = arith.constant 0 : i32
    %c0_i32_1 = arith.constant 0 : i32
    return %c0_i32, %c0_i32_0 : i32, i32
  }
  func.func @transform_4(%arg0: i32) -> (i32, i32) {
    %c0_i32 = arith.constant 0 : i32
    %c0_i32_0 = arith.constant 0 : i32
    %c0_i32_1 = arith.constant 0 : i32
    return %c0_i32, %c0_i32_0 : i32, i32
  }
  func.func @transform_5(%arg0: i32) -> (i32, i32) {
    %c0_i32 = arith.constant 0 : i32
    %c0_i32_0 = arith.constant 0 : i32
    %c0_i32_1 = arith.constant 0 : i32
    return %c0_i32, %c0_i32_0 : i32, i32
  }
}

module attributes {stable_mosaic.version = 11 : i64} {
  func.func @_lstm_enc_kernel(%arg0: i32, %arg1: memref<8x8x32xf32, #tpu.memory_space<vmem>>, %arg2: memref<32x256xf32, #tpu.memory_space<vmem>>, %arg3: memref<64x256xf32, #tpu.memory_space<vmem>>, %arg4: memref<1x256xf32, #tpu.memory_space<vmem>>, %arg5: memref<8x64xf32, #tpu.memory_space<vmem>>, %arg6: memref<8x64xf32, #tpu.memory_space<vmem>>, %arg7: memref<8x8x256xf32, #tpu.memory_space<vmem>>, %arg8: memref<8x64xf32, #tpu.memory_space<vmem>>, %arg9: memref<8x64xf32, #tpu.memory_space<vmem>>) attributes {dimension_semantics = [#tpu.dimension_semantics<arbitrary>], iteration_bounds = array<i64: 1>, scalar_prefetch = 0 : i64, scratch_operands = 3 : i64, tpu.core_type = #tpu.core_type<tc>, window_params = [{pipeline_mode = #tpu.pipeline_mode<synchronous>, transform_indices = @transform_0, window_bounds = array<i64: 8, 8, 32>}, {pipeline_mode = #tpu.pipeline_mode<synchronous>, transform_indices = @transform_1, window_bounds = array<i64: 32, 256>}, {pipeline_mode = #tpu.pipeline_mode<synchronous>, transform_indices = @transform_2, window_bounds = array<i64: 64, 256>}, {pipeline_mode = #tpu.pipeline_mode<synchronous>, transform_indices = @transform_3, window_bounds = array<i64: 1, 256>}, {pipeline_mode = #tpu.pipeline_mode<synchronous>, transform_indices = @transform_4, window_bounds = array<i64: 8, 64>}, {pipeline_mode = #tpu.pipeline_mode<synchronous>, transform_indices = @transform_5, window_bounds = array<i64: 8, 64>}]} {
    %c0 = arith.constant 0 : index
    %c0_0 = arith.constant 0 : index
    %c0_1 = arith.constant 0 : index
    %0 = vector.load %arg1[%c0, %c0_0, %c0_1] : memref<8x8x32xf32, #tpu.memory_space<vmem>>, vector<8x8x32xf32>
    %1 = vector.shape_cast %0 : vector<8x8x32xf32> to vector<64x32xf32>
    %c0_2 = arith.constant 0 : index
    %c0_3 = arith.constant 0 : index
    %2 = vector.load %arg2[%c0_2, %c0_3] : memref<32x256xf32, #tpu.memory_space<vmem>>, vector<32x256xf32>
    %cst = arith.constant dense<0.000000e+00> : vector<64x256xf32>
    %3 = tpu.matmul %1, %2, %cst {dimension_numbers = #tpu.dot_dimension_numbers<[1], [0], [0], [1], [0, 0, 1, 1], [], []>} : vector<64x32xf32>, vector<32x256xf32>, vector<64x256xf32> -> vector<64x256xf32>
    %c0_4 = arith.constant 0 : index
    %c0_5 = arith.constant 0 : index
    %4 = vector.load %arg4[%c0_4, %c0_5] : memref<1x256xf32, #tpu.memory_space<vmem>>, vector<1x256xf32>
    %5 = vector.broadcast %4 : vector<1x256xf32> to vector<64x256xf32>
    %6 = arith.addf %3, %5 : vector<64x256xf32>
    %7 = vector.shape_cast %6 : vector<64x256xf32> to vector<8x8x256xf32>
    %c0_6 = arith.constant 0 : index
    %c0_7 = arith.constant 0 : index
    %c0_8 = arith.constant 0 : index
    %8 = vector.load %arg7[%c0_6, %c0_7, %c0_8] : memref<8x8x256xf32, #tpu.memory_space<vmem>>, vector<8x8x256xf32>
    tpu.vector_store %arg7[%c0_6, %c0_7, %c0_8], %7 {strides = array<i32>} : memref<8x8x256xf32, #tpu.memory_space<vmem>>, vector<8x8x256xf32>,
    %cst_9 = arith.constant 0.000000e+00 : f32
    %9 = vector.broadcast %cst_9 : f32 to vector<8x64xf32>
    %c0_10 = arith.constant 0 : index
    %c0_11 = arith.constant 0 : index
    %10 = vector.load %arg8[%c0_10, %c0_11] : memref<8x64xf32, #tpu.memory_space<vmem>>, vector<8x64xf32>
    tpu.vector_store %arg8[%c0_10, %c0_11], %9 {strides = array<i32>} : memref<8x64xf32, #tpu.memory_space<vmem>>, vector<8x64xf32>,
    %cst_12 = arith.constant 0.000000e+00 : f32
    %11 = vector.broadcast %cst_12 : f32 to vector<8x64xf32>
    %c0_13 = arith.constant 0 : index
    %c0_14 = arith.constant 0 : index
    %12 = vector.load %arg9[%c0_13, %c0_14] : memref<8x64xf32, #tpu.memory_space<vmem>>, vector<8x64xf32>
    tpu.vector_store %arg9[%c0_13, %c0_14], %11 {strides = array<i32>} : memref<8x64xf32, #tpu.memory_space<vmem>>, vector<8x64xf32>,
    %c0_i32 = arith.constant 0 : i32
    %13 = arith.index_cast %c0_i32 : i32 to index
    %c0_15 = arith.constant 0 : index
    %c0_16 = arith.constant 0 : index
    %14 = vector.load %arg7[%13, %c0_15, %c0_16] : memref<8x8x256xf32, #tpu.memory_space<vmem>>, vector<1x8x256xf32>
    %15 = vector.shape_cast %14 : vector<1x8x256xf32> to vector<8x256xf32>
    %c0_17 = arith.constant 0 : index
    %c0_18 = arith.constant 0 : index
    %16 = vector.load %arg8[%c0_17, %c0_18] : memref<8x64xf32, #tpu.memory_space<vmem>>, vector<8x64xf32>
    %c0_19 = arith.constant 0 : index
    %c0_20 = arith.constant 0 : index
    %17 = vector.load %arg9[%c0_19, %c0_20] : memref<8x64xf32, #tpu.memory_space<vmem>>, vector<8x64xf32>
    %c0_21 = arith.constant 0 : index
    %c0_22 = arith.constant 0 : index
    %18 = vector.load %arg3[%c0_21, %c0_22] : memref<64x256xf32, #tpu.memory_space<vmem>>, vector<64x256xf32>
    %cst_23 = arith.constant dense<0.000000e+00> : vector<8x256xf32>
    %19 = tpu.matmul %16, %18, %cst_23 {dimension_numbers = #tpu.dot_dimension_numbers<[1], [0], [0], [1], [0, 0, 1, 1], [], []>} : vector<8x64xf32>, vector<64x256xf32>, vector<8x256xf32> -> vector<8x256xf32>
    %20 = arith.addf %15, %19 : vector<8x256xf32>
    %21 = vector.extract_strided_slice %20 {offsets = [0, 0], sizes = [8, 64], strides = [1, 1]} : vector<8x256xf32> to vector<8x64xf32>
    %22 = arith.negf %21 : vector<8x64xf32>
    %23 = math.exp %22 : vector<8x64xf32>
    %cst_24 = arith.constant 1.000000e+00 : f32
    %24 = vector.broadcast %cst_24 : f32 to vector<8x64xf32>
    %25 = arith.addf %24, %23 : vector<8x64xf32>
    %26 = arith.divf %24, %25 : vector<8x64xf32>
    %27 = vector.extract_strided_slice %20 {offsets = [0, 64], sizes = [8, 64], strides = [1, 1]} : vector<8x256xf32> to vector<8x64xf32>
    %28 = arith.negf %27 : vector<8x64xf32>
    %29 = math.exp %28 : vector<8x64xf32>
    %cst_25 = arith.constant 1.000000e+00 : f32
    %30 = vector.broadcast %cst_25 : f32 to vector<8x64xf32>
    %31 = arith.addf %30, %29 : vector<8x64xf32>
    %32 = arith.divf %30, %31 : vector<8x64xf32>
    %33 = vector.extract_strided_slice %20 {offsets = [0, 128], sizes = [8, 64], strides = [1, 1]} : vector<8x256xf32> to vector<8x64xf32>
    %34 = math.tanh %33 : vector<8x64xf32>
    %35 = vector.extract_strided_slice %20 {offsets = [0, 192], sizes = [8, 64], strides = [1, 1]} : vector<8x256xf32> to vector<8x64xf32>
    %36 = arith.negf %35 : vector<8x64xf32>
    %37 = math.exp %36 : vector<8x64xf32>
    %cst_26 = arith.constant 1.000000e+00 : f32
    %38 = vector.broadcast %cst_26 : f32 to vector<8x64xf32>
    %39 = arith.addf %38, %37 : vector<8x64xf32>
    %40 = arith.divf %38, %39 : vector<8x64xf32>
    %41 = arith.mulf %32, %17 : vector<8x64xf32>
    %42 = arith.mulf %26, %34 : vector<8x64xf32>
    %43 = arith.addf %41, %42 : vector<8x64xf32>
    %44 = math.tanh %43 : vector<8x64xf32>
    %45 = arith.mulf %40, %44 : vector<8x64xf32>
    %c0_27 = arith.constant 0 : index
    %c0_28 = arith.constant 0 : index
    %46 = vector.load %arg8[%c0_27, %c0_28] : memref<8x64xf32, #tpu.memory_space<vmem>>, vector<8x64xf32>
    tpu.vector_store %arg8[%c0_27, %c0_28], %45 {strides = array<i32>} : memref<8x64xf32, #tpu.memory_space<vmem>>, vector<8x64xf32>,
    %c0_29 = arith.constant 0 : index
    %c0_30 = arith.constant 0 : index
    %47 = vector.load %arg9[%c0_29, %c0_30] : memref<8x64xf32, #tpu.memory_space<vmem>>, vector<8x64xf32>
    tpu.vector_store %arg9[%c0_29, %c0_30], %43 {strides = array<i32>} : memref<8x64xf32, #tpu.memory_space<vmem>>, vector<8x64xf32>,
    %c1_i32 = arith.constant 1 : i32
    %48 = arith.index_cast %c1_i32 : i32 to index
    %c0_31 = arith.constant 0 : index
    %c0_32 = arith.constant 0 : index
    %49 = vector.load %arg7[%48, %c0_31, %c0_32] : memref<8x8x256xf32, #tpu.memory_space<vmem>>, vector<1x8x256xf32>
    %50 = vector.shape_cast %49 : vector<1x8x256xf32> to vector<8x256xf32>
    %c0_33 = arith.constant 0 : index
    %c0_34 = arith.constant 0 : index
    %51 = vector.load %arg8[%c0_33, %c0_34] : memref<8x64xf32, #tpu.memory_space<vmem>>, vector<8x64xf32>
    %c0_35 = arith.constant 0 : index
    %c0_36 = arith.constant 0 : index
    %52 = vector.load %arg9[%c0_35, %c0_36] : memref<8x64xf32, #tpu.memory_space<vmem>>, vector<8x64xf32>
    %c0_37 = arith.constant 0 : index
    %c0_38 = arith.constant 0 : index
    %53 = vector.load %arg3[%c0_37, %c0_38] : memref<64x256xf32, #tpu.memory_space<vmem>>, vector<64x256xf32>
    %cst_39 = arith.constant dense<0.000000e+00> : vector<8x256xf32>
    %54 = tpu.matmul %51, %53, %cst_39 {dimension_numbers = #tpu.dot_dimension_numbers<[1], [0], [0], [1], [0, 0, 1, 1], [], []>} : vector<8x64xf32>, vector<64x256xf32>, vector<8x256xf32> -> vector<8x256xf32>
    %55 = arith.addf %50, %54 : vector<8x256xf32>
    %56 = vector.extract_strided_slice %55 {offsets = [0, 0], sizes = [8, 64], strides = [1, 1]} : vector<8x256xf32> to vector<8x64xf32>
    %57 = arith.negf %56 : vector<8x64xf32>
    %58 = math.exp %57 : vector<8x64xf32>
    %cst_40 = arith.constant 1.000000e+00 : f32
    %59 = vector.broadcast %cst_40 : f32 to vector<8x64xf32>
    %60 = arith.addf %59, %58 : vector<8x64xf32>
    %61 = arith.divf %59, %60 : vector<8x64xf32>
    %62 = vector.extract_strided_slice %55 {offsets = [0, 64], sizes = [8, 64], strides = [1, 1]} : vector<8x256xf32> to vector<8x64xf32>
    %63 = arith.negf %62 : vector<8x64xf32>
    %64 = math.exp %63 : vector<8x64xf32>
    %cst_41 = arith.constant 1.000000e+00 : f32
    %65 = vector.broadcast %cst_41 : f32 to vector<8x64xf32>
    %66 = arith.addf %65, %64 : vector<8x64xf32>
    %67 = arith.divf %65, %66 : vector<8x64xf32>
    %68 = vector.extract_strided_slice %55 {offsets = [0, 128], sizes = [8, 64], strides = [1, 1]} : vector<8x256xf32> to vector<8x64xf32>
    %69 = math.tanh %68 : vector<8x64xf32>
    %70 = vector.extract_strided_slice %55 {offsets = [0, 192], sizes = [8, 64], strides = [1, 1]} : vector<8x256xf32> to vector<8x64xf32>
    %71 = arith.negf %70 : vector<8x64xf32>
    %72 = math.exp %71 : vector<8x64xf32>
    %cst_42 = arith.constant 1.000000e+00 : f32
    %73 = vector.broadcast %cst_42 : f32 to vector<8x64xf32>
    %74 = arith.addf %73, %72 : vector<8x64xf32>
    %75 = arith.divf %73, %74 : vector<8x64xf32>
    %76 = arith.mulf %67, %52 : vector<8x64xf32>
    %77 = arith.mulf %61, %69 : vector<8x64xf32>
    %78 = arith.addf %76, %77 : vector<8x64xf32>
    %79 = math.tanh %78 : vector<8x64xf32>
    %80 = arith.mulf %75, %79 : vector<8x64xf32>
    %c0_43 = arith.constant 0 : index
    %c0_44 = arith.constant 0 : index
    %81 = vector.load %arg8[%c0_43, %c0_44] : memref<8x64xf32, #tpu.memory_space<vmem>>, vector<8x64xf32>
    tpu.vector_store %arg8[%c0_43, %c0_44], %80 {strides = array<i32>} : memref<8x64xf32, #tpu.memory_space<vmem>>, vector<8x64xf32>,
    %c0_45 = arith.constant 0 : index
    %c0_46 = arith.constant 0 : index
    %82 = vector.load %arg9[%c0_45, %c0_46] : memref<8x64xf32, #tpu.memory_space<vmem>>, vector<8x64xf32>
    tpu.vector_store %arg9[%c0_45, %c0_46], %78 {strides = array<i32>} : memref<8x64xf32, #tpu.memory_space<vmem>>, vector<8x64xf32>,
    %c2_i32 = arith.constant 2 : i32
    %83 = arith.index_cast %c2_i32 : i32 to index
    %c0_47 = arith.constant 0 : index
    %c0_48 = arith.constant 0 : index
    %84 = vector.load %arg7[%83, %c0_47, %c0_48] : memref<8x8x256xf32, #tpu.memory_space<vmem>>, vector<1x8x256xf32>
    %85 = vector.shape_cast %84 : vector<1x8x256xf32> to vector<8x256xf32>
    %c0_49 = arith.constant 0 : index
    %c0_50 = arith.constant 0 : index
    %86 = vector.load %arg8[%c0_49, %c0_50] : memref<8x64xf32, #tpu.memory_space<vmem>>, vector<8x64xf32>
    %c0_51 = arith.constant 0 : index
    %c0_52 = arith.constant 0 : index
    %87 = vector.load %arg9[%c0_51, %c0_52] : memref<8x64xf32, #tpu.memory_space<vmem>>, vector<8x64xf32>
    %c0_53 = arith.constant 0 : index
    %c0_54 = arith.constant 0 : index
    %88 = vector.load %arg3[%c0_53, %c0_54] : memref<64x256xf32, #tpu.memory_space<vmem>>, vector<64x256xf32>
    %cst_55 = arith.constant dense<0.000000e+00> : vector<8x256xf32>
    %89 = tpu.matmul %86, %88, %cst_55 {dimension_numbers = #tpu.dot_dimension_numbers<[1], [0], [0], [1], [0, 0, 1, 1], [], []>} : vector<8x64xf32>, vector<64x256xf32>, vector<8x256xf32> -> vector<8x256xf32>
    %90 = arith.addf %85, %89 : vector<8x256xf32>
    %91 = vector.extract_strided_slice %90 {offsets = [0, 0], sizes = [8, 64], strides = [1, 1]} : vector<8x256xf32> to vector<8x64xf32>
    %92 = arith.negf %91 : vector<8x64xf32>
    %93 = math.exp %92 : vector<8x64xf32>
    %cst_56 = arith.constant 1.000000e+00 : f32
    %94 = vector.broadcast %cst_56 : f32 to vector<8x64xf32>
    %95 = arith.addf %94, %93 : vector<8x64xf32>
    %96 = arith.divf %94, %95 : vector<8x64xf32>
    %97 = vector.extract_strided_slice %90 {offsets = [0, 64], sizes = [8, 64], strides = [1, 1]} : vector<8x256xf32> to vector<8x64xf32>
    %98 = arith.negf %97 : vector<8x64xf32>
    %99 = math.exp %98 : vector<8x64xf32>
    %cst_57 = arith.constant 1.000000e+00 : f32
    %100 = vector.broadcast %cst_57 : f32 to vector<8x64xf32>
    %101 = arith.addf %100, %99 : vector<8x64xf32>
    %102 = arith.divf %100, %101 : vector<8x64xf32>
    %103 = vector.extract_strided_slice %90 {offsets = [0, 128], sizes = [8, 64], strides = [1, 1]} : vector<8x256xf32> to vector<8x64xf32>
    %104 = math.tanh %103 : vector<8x64xf32>
    %105 = vector.extract_strided_slice %90 {offsets = [0, 192], sizes = [8, 64], strides = [1, 1]} : vector<8x256xf32> to vector<8x64xf32>
    %106 = arith.negf %105 : vector<8x64xf32>
    %107 = math.exp %106 : vector<8x64xf32>
    %cst_58 = arith.constant 1.000000e+00 : f32
    %108 = vector.broadcast %cst_58 : f32 to vector<8x64xf32>
    %109 = arith.addf %108, %107 : vector<8x64xf32>
    %110 = arith.divf %108, %109 : vector<8x64xf32>
    %111 = arith.mulf %102, %87 : vector<8x64xf32>
    %112 = arith.mulf %96, %104 : vector<8x64xf32>
    %113 = arith.addf %111, %112 : vector<8x64xf32>
    %114 = math.tanh %113 : vector<8x64xf32>
    %115 = arith.mulf %110, %114 : vector<8x64xf32>
    %c0_59 = arith.constant 0 : index
    %c0_60 = arith.constant 0 : index
    %116 = vector.load %arg8[%c0_59, %c0_60] : memref<8x64xf32, #tpu.memory_space<vmem>>, vector<8x64xf32>
    tpu.vector_store %arg8[%c0_59, %c0_60], %115 {strides = array<i32>} : memref<8x64xf32, #tpu.memory_space<vmem>>, vector<8x64xf32>,
    %c0_61 = arith.constant 0 : index
    %c0_62 = arith.constant 0 : index
    %117 = vector.load %arg9[%c0_61, %c0_62] : memref<8x64xf32, #tpu.memory_space<vmem>>, vector<8x64xf32>
    tpu.vector_store %arg9[%c0_61, %c0_62], %113 {strides = array<i32>} : memref<8x64xf32, #tpu.memory_space<vmem>>, vector<8x64xf32>,
    %c3_i32 = arith.constant 3 : i32
    %118 = arith.index_cast %c3_i32 : i32 to index
    %c0_63 = arith.constant 0 : index
    %c0_64 = arith.constant 0 : index
    %119 = vector.load %arg7[%118, %c0_63, %c0_64] : memref<8x8x256xf32, #tpu.memory_space<vmem>>, vector<1x8x256xf32>
    %120 = vector.shape_cast %119 : vector<1x8x256xf32> to vector<8x256xf32>
    %c0_65 = arith.constant 0 : index
    %c0_66 = arith.constant 0 : index
    %121 = vector.load %arg8[%c0_65, %c0_66] : memref<8x64xf32, #tpu.memory_space<vmem>>, vector<8x64xf32>
    %c0_67 = arith.constant 0 : index
    %c0_68 = arith.constant 0 : index
    %122 = vector.load %arg9[%c0_67, %c0_68] : memref<8x64xf32, #tpu.memory_space<vmem>>, vector<8x64xf32>
    %c0_69 = arith.constant 0 : index
    %c0_70 = arith.constant 0 : index
    %123 = vector.load %arg3[%c0_69, %c0_70] : memref<64x256xf32, #tpu.memory_space<vmem>>, vector<64x256xf32>
    %cst_71 = arith.constant dense<0.000000e+00> : vector<8x256xf32>
    %124 = tpu.matmul %121, %123, %cst_71 {dimension_numbers = #tpu.dot_dimension_numbers<[1], [0], [0], [1], [0, 0, 1, 1], [], []>} : vector<8x64xf32>, vector<64x256xf32>, vector<8x256xf32> -> vector<8x256xf32>
    %125 = arith.addf %120, %124 : vector<8x256xf32>
    %126 = vector.extract_strided_slice %125 {offsets = [0, 0], sizes = [8, 64], strides = [1, 1]} : vector<8x256xf32> to vector<8x64xf32>
    %127 = arith.negf %126 : vector<8x64xf32>
    %128 = math.exp %127 : vector<8x64xf32>
    %cst_72 = arith.constant 1.000000e+00 : f32
    %129 = vector.broadcast %cst_72 : f32 to vector<8x64xf32>
    %130 = arith.addf %129, %128 : vector<8x64xf32>
    %131 = arith.divf %129, %130 : vector<8x64xf32>
    %132 = vector.extract_strided_slice %125 {offsets = [0, 64], sizes = [8, 64], strides = [1, 1]} : vector<8x256xf32> to vector<8x64xf32>
    %133 = arith.negf %132 : vector<8x64xf32>
    %134 = math.exp %133 : vector<8x64xf32>
    %cst_73 = arith.constant 1.000000e+00 : f32
    %135 = vector.broadcast %cst_73 : f32 to vector<8x64xf32>
    %136 = arith.addf %135, %134 : vector<8x64xf32>
    %137 = arith.divf %135, %136 : vector<8x64xf32>
    %138 = vector.extract_strided_slice %125 {offsets = [0, 128], sizes = [8, 64], strides = [1, 1]} : vector<8x256xf32> to vector<8x64xf32>
    %139 = math.tanh %138 : vector<8x64xf32>
    %140 = vector.extract_strided_slice %125 {offsets = [0, 192], sizes = [8, 64], strides = [1, 1]} : vector<8x256xf32> to vector<8x64xf32>
    %141 = arith.negf %140 : vector<8x64xf32>
    %142 = math.exp %141 : vector<8x64xf32>
    %cst_74 = arith.constant 1.000000e+00 : f32
    %143 = vector.broadcast %cst_74 : f32 to vector<8x64xf32>
    %144 = arith.addf %143, %142 : vector<8x64xf32>
    %145 = arith.divf %143, %144 : vector<8x64xf32>
    %146 = arith.mulf %137, %122 : vector<8x64xf32>
    %147 = arith.mulf %131, %139 : vector<8x64xf32>
    %148 = arith.addf %146, %147 : vector<8x64xf32>
    %149 = math.tanh %148 : vector<8x64xf32>
    %150 = arith.mulf %145, %149 : vector<8x64xf32>
    %c0_75 = arith.constant 0 : index
    %c0_76 = arith.constant 0 : index
    %151 = vector.load %arg8[%c0_75, %c0_76] : memref<8x64xf32, #tpu.memory_space<vmem>>, vector<8x64xf32>
    tpu.vector_store %arg8[%c0_75, %c0_76], %150 {strides = array<i32>} : memref<8x64xf32, #tpu.memory_space<vmem>>, vector<8x64xf32>,
    %c0_77 = arith.constant 0 : index
    %c0_78 = arith.constant 0 : index
    %152 = vector.load %arg9[%c0_77, %c0_78] : memref<8x64xf32, #tpu.memory_space<vmem>>, vector<8x64xf32>
    tpu.vector_store %arg9[%c0_77, %c0_78], %148 {strides = array<i32>} : memref<8x64xf32, #tpu.memory_space<vmem>>, vector<8x64xf32>,
    %c4_i32 = arith.constant 4 : i32
    %153 = arith.index_cast %c4_i32 : i32 to index
    %c0_79 = arith.constant 0 : index
    %c0_80 = arith.constant 0 : index
    %154 = vector.load %arg7[%153, %c0_79, %c0_80] : memref<8x8x256xf32, #tpu.memory_space<vmem>>, vector<1x8x256xf32>
    %155 = vector.shape_cast %154 : vector<1x8x256xf32> to vector<8x256xf32>
    %c0_81 = arith.constant 0 : index
    %c0_82 = arith.constant 0 : index
    %156 = vector.load %arg8[%c0_81, %c0_82] : memref<8x64xf32, #tpu.memory_space<vmem>>, vector<8x64xf32>
    %c0_83 = arith.constant 0 : index
    %c0_84 = arith.constant 0 : index
    %157 = vector.load %arg9[%c0_83, %c0_84] : memref<8x64xf32, #tpu.memory_space<vmem>>, vector<8x64xf32>
    %c0_85 = arith.constant 0 : index
    %c0_86 = arith.constant 0 : index
    %158 = vector.load %arg3[%c0_85, %c0_86] : memref<64x256xf32, #tpu.memory_space<vmem>>, vector<64x256xf32>
    %cst_87 = arith.constant dense<0.000000e+00> : vector<8x256xf32>
    %159 = tpu.matmul %156, %158, %cst_87 {dimension_numbers = #tpu.dot_dimension_numbers<[1], [0], [0], [1], [0, 0, 1, 1], [], []>} : vector<8x64xf32>, vector<64x256xf32>, vector<8x256xf32> -> vector<8x256xf32>
    %160 = arith.addf %155, %159 : vector<8x256xf32>
    %161 = vector.extract_strided_slice %160 {offsets = [0, 0], sizes = [8, 64], strides = [1, 1]} : vector<8x256xf32> to vector<8x64xf32>
    %162 = arith.negf %161 : vector<8x64xf32>
    %163 = math.exp %162 : vector<8x64xf32>
    %cst_88 = arith.constant 1.000000e+00 : f32
    %164 = vector.broadcast %cst_88 : f32 to vector<8x64xf32>
    %165 = arith.addf %164, %163 : vector<8x64xf32>
    %166 = arith.divf %164, %165 : vector<8x64xf32>
    %167 = vector.extract_strided_slice %160 {offsets = [0, 64], sizes = [8, 64], strides = [1, 1]} : vector<8x256xf32> to vector<8x64xf32>
    %168 = arith.negf %167 : vector<8x64xf32>
    %169 = math.exp %168 : vector<8x64xf32>
    %cst_89 = arith.constant 1.000000e+00 : f32
    %170 = vector.broadcast %cst_89 : f32 to vector<8x64xf32>
    %171 = arith.addf %170, %169 : vector<8x64xf32>
    %172 = arith.divf %170, %171 : vector<8x64xf32>
    %173 = vector.extract_strided_slice %160 {offsets = [0, 128], sizes = [8, 64], strides = [1, 1]} : vector<8x256xf32> to vector<8x64xf32>
    %174 = math.tanh %173 : vector<8x64xf32>
    %175 = vector.extract_strided_slice %160 {offsets = [0, 192], sizes = [8, 64], strides = [1, 1]} : vector<8x256xf32> to vector<8x64xf32>
    %176 = arith.negf %175 : vector<8x64xf32>
    %177 = math.exp %176 : vector<8x64xf32>
    %cst_90 = arith.constant 1.000000e+00 : f32
    %178 = vector.broadcast %cst_90 : f32 to vector<8x64xf32>
    %179 = arith.addf %178, %177 : vector<8x64xf32>
    %180 = arith.divf %178, %179 : vector<8x64xf32>
    %181 = arith.mulf %172, %157 : vector<8x64xf32>
    %182 = arith.mulf %166, %174 : vector<8x64xf32>
    %183 = arith.addf %181, %182 : vector<8x64xf32>
    %184 = math.tanh %183 : vector<8x64xf32>
    %185 = arith.mulf %180, %184 : vector<8x64xf32>
    %c0_91 = arith.constant 0 : index
    %c0_92 = arith.constant 0 : index
    %186 = vector.load %arg8[%c0_91, %c0_92] : memref<8x64xf32, #tpu.memory_space<vmem>>, vector<8x64xf32>
    tpu.vector_store %arg8[%c0_91, %c0_92], %185 {strides = array<i32>} : memref<8x64xf32, #tpu.memory_space<vmem>>, vector<8x64xf32>,
    %c0_93 = arith.constant 0 : index
    %c0_94 = arith.constant 0 : index
    %187 = vector.load %arg9[%c0_93, %c0_94] : memref<8x64xf32, #tpu.memory_space<vmem>>, vector<8x64xf32>
    tpu.vector_store %arg9[%c0_93, %c0_94], %183 {strides = array<i32>} : memref<8x64xf32, #tpu.memory_space<vmem>>, vector<8x64xf32>,
    %c5_i32 = arith.constant 5 : i32
    %188 = arith.index_cast %c5_i32 : i32 to index
    %c0_95 = arith.constant 0 : index
    %c0_96 = arith.constant 0 : index
    %189 = vector.load %arg7[%188, %c0_95, %c0_96] : memref<8x8x256xf32, #tpu.memory_space<vmem>>, vector<1x8x256xf32>
    %190 = vector.shape_cast %189 : vector<1x8x256xf32> to vector<8x256xf32>
    %c0_97 = arith.constant 0 : index
    %c0_98 = arith.constant 0 : index
    %191 = vector.load %arg8[%c0_97, %c0_98] : memref<8x64xf32, #tpu.memory_space<vmem>>, vector<8x64xf32>
    %c0_99 = arith.constant 0 : index
    %c0_100 = arith.constant 0 : index
    %192 = vector.load %arg9[%c0_99, %c0_100] : memref<8x64xf32, #tpu.memory_space<vmem>>, vector<8x64xf32>
    %c0_101 = arith.constant 0 : index
    %c0_102 = arith.constant 0 : index
    %193 = vector.load %arg3[%c0_101, %c0_102] : memref<64x256xf32, #tpu.memory_space<vmem>>, vector<64x256xf32>
    %cst_103 = arith.constant dense<0.000000e+00> : vector<8x256xf32>
    %194 = tpu.matmul %191, %193, %cst_103 {dimension_numbers = #tpu.dot_dimension_numbers<[1], [0], [0], [1], [0, 0, 1, 1], [], []>} : vector<8x64xf32>, vector<64x256xf32>, vector<8x256xf32> -> vector<8x256xf32>
    %195 = arith.addf %190, %194 : vector<8x256xf32>
    %196 = vector.extract_strided_slice %195 {offsets = [0, 0], sizes = [8, 64], strides = [1, 1]} : vector<8x256xf32> to vector<8x64xf32>
    %197 = arith.negf %196 : vector<8x64xf32>
    %198 = math.exp %197 : vector<8x64xf32>
    %cst_104 = arith.constant 1.000000e+00 : f32
    %199 = vector.broadcast %cst_104 : f32 to vector<8x64xf32>
    %200 = arith.addf %199, %198 : vector<8x64xf32>
    %201 = arith.divf %199, %200 : vector<8x64xf32>
    %202 = vector.extract_strided_slice %195 {offsets = [0, 64], sizes = [8, 64], strides = [1, 1]} : vector<8x256xf32> to vector<8x64xf32>
    %203 = arith.negf %202 : vector<8x64xf32>
    %204 = math.exp %203 : vector<8x64xf32>
    %cst_105 = arith.constant 1.000000e+00 : f32
    %205 = vector.broadcast %cst_105 : f32 to vector<8x64xf32>
    %206 = arith.addf %205, %204 : vector<8x64xf32>
    %207 = arith.divf %205, %206 : vector<8x64xf32>
    %208 = vector.extract_strided_slice %195 {offsets = [0, 128], sizes = [8, 64], strides = [1, 1]} : vector<8x256xf32> to vector<8x64xf32>
    %209 = math.tanh %208 : vector<8x64xf32>
    %210 = vector.extract_strided_slice %195 {offsets = [0, 192], sizes = [8, 64], strides = [1, 1]} : vector<8x256xf32> to vector<8x64xf32>
    %211 = arith.negf %210 : vector<8x64xf32>
    %212 = math.exp %211 : vector<8x64xf32>
    %cst_106 = arith.constant 1.000000e+00 : f32
    %213 = vector.broadcast %cst_106 : f32 to vector<8x64xf32>
    %214 = arith.addf %213, %212 : vector<8x64xf32>
    %215 = arith.divf %213, %214 : vector<8x64xf32>
    %216 = arith.mulf %207, %192 : vector<8x64xf32>
    %217 = arith.mulf %201, %209 : vector<8x64xf32>
    %218 = arith.addf %216, %217 : vector<8x64xf32>
    %219 = math.tanh %218 : vector<8x64xf32>
    %220 = arith.mulf %215, %219 : vector<8x64xf32>
    %c0_107 = arith.constant 0 : index
    %c0_108 = arith.constant 0 : index
    %221 = vector.load %arg8[%c0_107, %c0_108] : memref<8x64xf32, #tpu.memory_space<vmem>>, vector<8x64xf32>
    tpu.vector_store %arg8[%c0_107, %c0_108], %220 {strides = array<i32>} : memref<8x64xf32, #tpu.memory_space<vmem>>, vector<8x64xf32>,
    %c0_109 = arith.constant 0 : index
    %c0_110 = arith.constant 0 : index
    %222 = vector.load %arg9[%c0_109, %c0_110] : memref<8x64xf32, #tpu.memory_space<vmem>>, vector<8x64xf32>
    tpu.vector_store %arg9[%c0_109, %c0_110], %218 {strides = array<i32>} : memref<8x64xf32, #tpu.memory_space<vmem>>, vector<8x64xf32>,
    %c6_i32 = arith.constant 6 : i32
    %223 = arith.index_cast %c6_i32 : i32 to index
    %c0_111 = arith.constant 0 : index
    %c0_112 = arith.constant 0 : index
    %224 = vector.load %arg7[%223, %c0_111, %c0_112] : memref<8x8x256xf32, #tpu.memory_space<vmem>>, vector<1x8x256xf32>
    %225 = vector.shape_cast %224 : vector<1x8x256xf32> to vector<8x256xf32>
    %c0_113 = arith.constant 0 : index
    %c0_114 = arith.constant 0 : index
    %226 = vector.load %arg8[%c0_113, %c0_114] : memref<8x64xf32, #tpu.memory_space<vmem>>, vector<8x64xf32>
    %c0_115 = arith.constant 0 : index
    %c0_116 = arith.constant 0 : index
    %227 = vector.load %arg9[%c0_115, %c0_116] : memref<8x64xf32, #tpu.memory_space<vmem>>, vector<8x64xf32>
    %c0_117 = arith.constant 0 : index
    %c0_118 = arith.constant 0 : index
    %228 = vector.load %arg3[%c0_117, %c0_118] : memref<64x256xf32, #tpu.memory_space<vmem>>, vector<64x256xf32>
    %cst_119 = arith.constant dense<0.000000e+00> : vector<8x256xf32>
    %229 = tpu.matmul %226, %228, %cst_119 {dimension_numbers = #tpu.dot_dimension_numbers<[1], [0], [0], [1], [0, 0, 1, 1], [], []>} : vector<8x64xf32>, vector<64x256xf32>, vector<8x256xf32> -> vector<8x256xf32>
    %230 = arith.addf %225, %229 : vector<8x256xf32>
    %231 = vector.extract_strided_slice %230 {offsets = [0, 0], sizes = [8, 64], strides = [1, 1]} : vector<8x256xf32> to vector<8x64xf32>
    %232 = arith.negf %231 : vector<8x64xf32>
    %233 = math.exp %232 : vector<8x64xf32>
    %cst_120 = arith.constant 1.000000e+00 : f32
    %234 = vector.broadcast %cst_120 : f32 to vector<8x64xf32>
    %235 = arith.addf %234, %233 : vector<8x64xf32>
    %236 = arith.divf %234, %235 : vector<8x64xf32>
    %237 = vector.extract_strided_slice %230 {offsets = [0, 64], sizes = [8, 64], strides = [1, 1]} : vector<8x256xf32> to vector<8x64xf32>
    %238 = arith.negf %237 : vector<8x64xf32>
    %239 = math.exp %238 : vector<8x64xf32>
    %cst_121 = arith.constant 1.000000e+00 : f32
    %240 = vector.broadcast %cst_121 : f32 to vector<8x64xf32>
    %241 = arith.addf %240, %239 : vector<8x64xf32>
    %242 = arith.divf %240, %241 : vector<8x64xf32>
    %243 = vector.extract_strided_slice %230 {offsets = [0, 128], sizes = [8, 64], strides = [1, 1]} : vector<8x256xf32> to vector<8x64xf32>
    %244 = math.tanh %243 : vector<8x64xf32>
    %245 = vector.extract_strided_slice %230 {offsets = [0, 192], sizes = [8, 64], strides = [1, 1]} : vector<8x256xf32> to vector<8x64xf32>
    %246 = arith.negf %245 : vector<8x64xf32>
    %247 = math.exp %246 : vector<8x64xf32>
    %cst_122 = arith.constant 1.000000e+00 : f32
    %248 = vector.broadcast %cst_122 : f32 to vector<8x64xf32>
    %249 = arith.addf %248, %247 : vector<8x64xf32>
    %250 = arith.divf %248, %249 : vector<8x64xf32>
    %251 = arith.mulf %242, %227 : vector<8x64xf32>
    %252 = arith.mulf %236, %244 : vector<8x64xf32>
    %253 = arith.addf %251, %252 : vector<8x64xf32>
    %254 = math.tanh %253 : vector<8x64xf32>
    %255 = arith.mulf %250, %254 : vector<8x64xf32>
    %c0_123 = arith.constant 0 : index
    %c0_124 = arith.constant 0 : index
    %256 = vector.load %arg8[%c0_123, %c0_124] : memref<8x64xf32, #tpu.memory_space<vmem>>, vector<8x64xf32>
    tpu.vector_store %arg8[%c0_123, %c0_124], %255 {strides = array<i32>} : memref<8x64xf32, #tpu.memory_space<vmem>>, vector<8x64xf32>,
    %c0_125 = arith.constant 0 : index
    %c0_126 = arith.constant 0 : index
    %257 = vector.load %arg9[%c0_125, %c0_126] : memref<8x64xf32, #tpu.memory_space<vmem>>, vector<8x64xf32>
    tpu.vector_store %arg9[%c0_125, %c0_126], %253 {strides = array<i32>} : memref<8x64xf32, #tpu.memory_space<vmem>>, vector<8x64xf32>,
    %c7_i32 = arith.constant 7 : i32
    %258 = arith.index_cast %c7_i32 : i32 to index
    %c0_127 = arith.constant 0 : index
    %c0_128 = arith.constant 0 : index
    %259 = vector.load %arg7[%258, %c0_127, %c0_128] : memref<8x8x256xf32, #tpu.memory_space<vmem>>, vector<1x8x256xf32>
    %260 = vector.shape_cast %259 : vector<1x8x256xf32> to vector<8x256xf32>
    %c0_129 = arith.constant 0 : index
    %c0_130 = arith.constant 0 : index
    %261 = vector.load %arg8[%c0_129, %c0_130] : memref<8x64xf32, #tpu.memory_space<vmem>>, vector<8x64xf32>
    %c0_131 = arith.constant 0 : index
    %c0_132 = arith.constant 0 : index
    %262 = vector.load %arg9[%c0_131, %c0_132] : memref<8x64xf32, #tpu.memory_space<vmem>>, vector<8x64xf32>
    %c0_133 = arith.constant 0 : index
    %c0_134 = arith.constant 0 : index
    %263 = vector.load %arg3[%c0_133, %c0_134] : memref<64x256xf32, #tpu.memory_space<vmem>>, vector<64x256xf32>
    %cst_135 = arith.constant dense<0.000000e+00> : vector<8x256xf32>
    %264 = tpu.matmul %261, %263, %cst_135 {dimension_numbers = #tpu.dot_dimension_numbers<[1], [0], [0], [1], [0, 0, 1, 1], [], []>} : vector<8x64xf32>, vector<64x256xf32>, vector<8x256xf32> -> vector<8x256xf32>
    %265 = arith.addf %260, %264 : vector<8x256xf32>
    %266 = vector.extract_strided_slice %265 {offsets = [0, 0], sizes = [8, 64], strides = [1, 1]} : vector<8x256xf32> to vector<8x64xf32>
    %267 = arith.negf %266 : vector<8x64xf32>
    %268 = math.exp %267 : vector<8x64xf32>
    %cst_136 = arith.constant 1.000000e+00 : f32
    %269 = vector.broadcast %cst_136 : f32 to vector<8x64xf32>
    %270 = arith.addf %269, %268 : vector<8x64xf32>
    %271 = arith.divf %269, %270 : vector<8x64xf32>
    %272 = vector.extract_strided_slice %265 {offsets = [0, 64], sizes = [8, 64], strides = [1, 1]} : vector<8x256xf32> to vector<8x64xf32>
    %273 = arith.negf %272 : vector<8x64xf32>
    %274 = math.exp %273 : vector<8x64xf32>
    %cst_137 = arith.constant 1.000000e+00 : f32
    %275 = vector.broadcast %cst_137 : f32 to vector<8x64xf32>
    %276 = arith.addf %275, %274 : vector<8x64xf32>
    %277 = arith.divf %275, %276 : vector<8x64xf32>
    %278 = vector.extract_strided_slice %265 {offsets = [0, 128], sizes = [8, 64], strides = [1, 1]} : vector<8x256xf32> to vector<8x64xf32>
    %279 = math.tanh %278 : vector<8x64xf32>
    %280 = vector.extract_strided_slice %265 {offsets = [0, 192], sizes = [8, 64], strides = [1, 1]} : vector<8x256xf32> to vector<8x64xf32>
    %281 = arith.negf %280 : vector<8x64xf32>
    %282 = math.exp %281 : vector<8x64xf32>
    %cst_138 = arith.constant 1.000000e+00 : f32
    %283 = vector.broadcast %cst_138 : f32 to vector<8x64xf32>
    %284 = arith.addf %283, %282 : vector<8x64xf32>
    %285 = arith.divf %283, %284 : vector<8x64xf32>
    %286 = arith.mulf %277, %262 : vector<8x64xf32>
    %287 = arith.mulf %271, %279 : vector<8x64xf32>
    %288 = arith.addf %286, %287 : vector<8x64xf32>
    %289 = math.tanh %288 : vector<8x64xf32>
    %290 = arith.mulf %285, %289 : vector<8x64xf32>
    %c0_139 = arith.constant 0 : index
    %c0_140 = arith.constant 0 : index
    %291 = vector.load %arg8[%c0_139, %c0_140] : memref<8x64xf32, #tpu.memory_space<vmem>>, vector<8x64xf32>
    tpu.vector_store %arg8[%c0_139, %c0_140], %290 {strides = array<i32>} : memref<8x64xf32, #tpu.memory_space<vmem>>, vector<8x64xf32>,
    %c0_141 = arith.constant 0 : index
    %c0_142 = arith.constant 0 : index
    %292 = vector.load %arg9[%c0_141, %c0_142] : memref<8x64xf32, #tpu.memory_space<vmem>>, vector<8x64xf32>
    tpu.vector_store %arg9[%c0_141, %c0_142], %288 {strides = array<i32>} : memref<8x64xf32, #tpu.memory_space<vmem>>, vector<8x64xf32>,
    %c8_i32 = arith.constant 8 : i32
    %c0_143 = arith.constant 0 : index
    %c0_144 = arith.constant 0 : index
    %293 = vector.load %arg8[%c0_143, %c0_144] : memref<8x64xf32, #tpu.memory_space<vmem>>, vector<8x64xf32>
    %c0_145 = arith.constant 0 : index
    %c0_146 = arith.constant 0 : index
    %294 = vector.load %arg5[%c0_145, %c0_146] : memref<8x64xf32, #tpu.memory_space<vmem>>, vector<8x64xf32>
    tpu.vector_store %arg5[%c0_145, %c0_146], %293 {strides = array<i32>} : memref<8x64xf32, #tpu.memory_space<vmem>>, vector<8x64xf32>,
    %c0_147 = arith.constant 0 : index
    %c0_148 = arith.constant 0 : index
    %295 = vector.load %arg9[%c0_147, %c0_148] : memref<8x64xf32, #tpu.memory_space<vmem>>, vector<8x64xf32>
    %c0_149 = arith.constant 0 : index
    %c0_150 = arith.constant 0 : index
    %296 = vector.load %arg6[%c0_149, %c0_150] : memref<8x64xf32, #tpu.memory_space<vmem>>, vector<8x64xf32>
    tpu.vector_store %arg6[%c0_149, %c0_150], %295 {strides = array<i32>} : memref<8x64xf32, #tpu.memory_space<vmem>>, vector<8x64xf32>,
    return
  }
  func.func @transform_0(%arg0: i32) -> (i32, i32, i32) {
    %c0_i32 = arith.constant 0 : i32
    %c0_i32_0 = arith.constant 0 : i32
    %c0_i32_1 = arith.constant 0 : i32
    %c0_i32_2 = arith.constant 0 : i32
    return %c0_i32, %c0_i32_0, %c0_i32_1 : i32, i32, i32
  }
  func.func @transform_1(%arg0: i32) -> (i32, i32) {
    %c0_i32 = arith.constant 0 : i32
    %c0_i32_0 = arith.constant 0 : i32
    %c0_i32_1 = arith.constant 0 : i32
    return %c0_i32, %c0_i32_0 : i32, i32
  }
  func.func @transform_2(%arg0: i32) -> (i32, i32) {
    %c0_i32 = arith.constant 0 : i32
    %c0_i32_0 = arith.constant 0 : i32
    %c0_i32_1 = arith.constant 0 : i32
    return %c0_i32, %c0_i32_0 : i32, i32
  }
  func.func @transform_3(%arg0: i32) -> (i32, i32) {
    %c0_i32 = arith.constant 0 : i32
    %c0_i32_0 = arith.constant 0 : i32
    %c0_i32_1 = arith.constant 0 : i32
    return %c0_i32, %c0_i32_0 : i32, i32
  }
  func.func @transform_4(%arg0: i32) -> (i32, i32) {
    %c0_i32 = arith.constant 0 : i32
    %c0_i32_0 = arith.constant 0 : i32
    %c0_i32_1 = arith.constant 0 : i32
    return %c0_i32, %c0_i32_0 : i32, i32
  }
  func.func @transform_5(%arg0: i32) -> (i32, i32) {
    %c0_i32 = arith.constant 0 : i32
    %c0_i32_0 = arith.constant 0 : i32
    %c0_i32_1 = arith.constant 0 : i32
    return %c0_i32, %c0_i32_0 : i32, i32
  }
}

module attributes {stable_mosaic.version = 11 : i64} {
  func.func @_att_chain_kernel(%arg0: i32, %arg1: memref<2x16x64xf32, #tpu.memory_space<vmem>>, %arg2: memref<2x4x64xf32, #tpu.memory_space<vmem>>, %arg3: memref<2x64xf32, #tpu.memory_space<vmem>>, %arg4: memref<64x64xf32, #tpu.memory_space<vmem>>, %arg5: memref<1x64xf32, #tpu.memory_space<vmem>>, %arg6: memref<6x64x64xf32, #tpu.memory_space<vmem>>, %arg7: memref<6x64x64xf32, #tpu.memory_space<vmem>>, %arg8: memref<6x1x64xf32, #tpu.memory_space<vmem>>, %arg9: memref<6x1x64xf32, #tpu.memory_space<vmem>>, %arg10: memref<6x1x1xf32, #tpu.memory_space<vmem>>, %arg11: memref<5x64x64xf32, #tpu.memory_space<vmem>>, %arg12: memref<5x1x64xf32, #tpu.memory_space<vmem>>, %arg13: memref<64x64xf32, #tpu.memory_space<vmem>>, %arg14: memref<1x64xf32, #tpu.memory_space<vmem>>, %arg15: memref<64x64xf32, #tpu.memory_space<vmem>>, %arg16: memref<1x64xf32, #tpu.memory_space<vmem>>, %arg17: memref<128x32xf32, #tpu.memory_space<vmem>>, %arg18: memref<1x32xf32, #tpu.memory_space<vmem>>, %arg19: memref<2x32xf32, #tpu.memory_space<vmem>>) attributes {dimension_semantics = [#tpu.dimension_semantics<arbitrary>], iteration_bounds = array<i64: 1>, scalar_prefetch = 0 : i64, scratch_operands = 0 : i64, tpu.core_type = #tpu.core_type<tc>, window_params = [{pipeline_mode = #tpu.pipeline_mode<synchronous>, transform_indices = @transform_0, window_bounds = array<i64: 2, 16, 64>}, {pipeline_mode = #tpu.pipeline_mode<synchronous>, transform_indices = @transform_1, window_bounds = array<i64: 2, 4, 64>}, {pipeline_mode = #tpu.pipeline_mode<synchronous>, transform_indices = @transform_2, window_bounds = array<i64: 2, 64>}, {pipeline_mode = #tpu.pipeline_mode<synchronous>, transform_indices = @transform_3, window_bounds = array<i64: 64, 64>}, {pipeline_mode = #tpu.pipeline_mode<synchronous>, transform_indices = @transform_4, window_bounds = array<i64: 1, 64>}, {pipeline_mode = #tpu.pipeline_mode<synchronous>, transform_indices = @transform_5, window_bounds = array<i64: 6, 64, 64>}, {pipeline_mode = #tpu.pipeline_mode<synchronous>, transform_indices = @transform_6, window_bounds = array<i64: 6, 64, 64>}, {pipeline_mode = #tpu.pipeline_mode<synchronous>, transform_indices = @transform_7, window_bounds = array<i64: 6, 1, 64>}, {pipeline_mode = #tpu.pipeline_mode<synchronous>, transform_indices = @transform_8, window_bounds = array<i64: 6, 1, 64>}, {pipeline_mode = #tpu.pipeline_mode<synchronous>, transform_indices = @transform_9, window_bounds = array<i64: 6, 1, 1>}, {pipeline_mode = #tpu.pipeline_mode<synchronous>, transform_indices = @transform_10, window_bounds = array<i64: 5, 64, 64>}, {pipeline_mode = #tpu.pipeline_mode<synchronous>, transform_indices = @transform_11, window_bounds = array<i64: 5, 1, 64>}, {pipeline_mode = #tpu.pipeline_mode<synchronous>, transform_indices = @transform_12, window_bounds = array<i64: 64, 64>}, {pipeline_mode = #tpu.pipeline_mode<synchronous>, transform_indices = @transform_13, window_bounds = array<i64: 1, 64>}, {pipeline_mode = #tpu.pipeline_mode<synchronous>, transform_indices = @transform_14, window_bounds = array<i64: 64, 64>}, {pipeline_mode = #tpu.pipeline_mode<synchronous>, transform_indices = @transform_15, window_bounds = array<i64: 1, 64>}, {pipeline_mode = #tpu.pipeline_mode<synchronous>, transform_indices = @transform_16, window_bounds = array<i64: 128, 32>}, {pipeline_mode = #tpu.pipeline_mode<synchronous>, transform_indices = @transform_17, window_bounds = array<i64: 1, 32>}, {pipeline_mode = #tpu.pipeline_mode<synchronous>, transform_indices = @transform_18, window_bounds = array<i64: 2, 32>}]} {
    %c0 = arith.constant 0 : index
    %c0_0 = arith.constant 0 : index
    %c0_1 = arith.constant 0 : index
    %0 = vector.load %arg1[%c0, %c0_0, %c0_1] : memref<2x16x64xf32, #tpu.memory_space<vmem>>, vector<2x16x64xf32>
    %1 = vector.shape_cast %0 : vector<2x16x64xf32> to vector<32x64xf32>
    %c0_2 = arith.constant 0 : index
    %c0_3 = arith.constant 0 : index
    %2 = vector.load %arg4[%c0_2, %c0_3] : memref<64x64xf32, #tpu.memory_space<vmem>>, vector<64x64xf32>
    %cst = arith.constant dense<0.000000e+00> : vector<32x64xf32>
    %3 = tpu.matmul %1, %2, %cst {dimension_numbers = #tpu.dot_dimension_numbers<[1], [0], [0], [1], [0, 0, 1, 1], [], []>} : vector<32x64xf32>, vector<64x64xf32>, vector<32x64xf32> -> vector<32x64xf32>
    %c0_4 = arith.constant 0 : index
    %c0_5 = arith.constant 0 : index
    %4 = vector.load %arg5[%c0_4, %c0_5] : memref<1x64xf32, #tpu.memory_space<vmem>>, vector<1x64xf32>
    %5 = vector.broadcast %4 : vector<1x64xf32> to vector<32x64xf32>
    %6 = arith.addf %3, %5 : vector<32x64xf32>
    %7 = vector.shape_cast %6 : vector<32x64xf32> to vector<2x16x64xf32>
    %c0_6 = arith.constant 0 : index
    %c0_7 = arith.constant 0 : index
    %c0_8 = arith.constant 0 : index
    %8 = vector.load %arg2[%c0_6, %c0_7, %c0_8] : memref<2x4x64xf32, #tpu.memory_space<vmem>>, vector<2x4x64xf32>
    %c0_9 = arith.constant 0 : index
    %c0_10 = arith.constant 0 : index
    %9 = vector.load %arg3[%c0_9, %c0_10] : memref<2x64xf32, #tpu.memory_space<vmem>>, vector<2x64xf32>
    %10 = vector.shape_cast %7 : vector<2x16x64xf32> to vector<32x64xf32>
    %c0_11 = arith.constant 0 : index
    %c0_12 = arith.constant 0 : index
    %c0_13 = arith.constant 0 : index
    %11 = vector.load %arg6[%c0_11, %c0_12, %c0_13] : memref<6x64x64xf32, #tpu.memory_space<vmem>>, vector<1x64x64xf32>
    %12 = vector.shape_cast %11 : vector<1x64x64xf32> to vector<64x64xf32>
    %cst_14 = arith.constant dense<0.000000e+00> : vector<32x64xf32>
    %13 = tpu.matmul %10, %12, %cst_14 {dimension_numbers = #tpu.dot_dimension_numbers<[1], [0], [0], [1], [0, 0, 1, 1], [], []>} : vector<32x64xf32>, vector<64x64xf32>, vector<32x64xf32> -> vector<32x64xf32>
    %14 = vector.shape_cast %13 : vector<32x64xf32> to vector<2x16x64xf32>
    %c0_15 = arith.constant 0 : index
    %c0_16 = arith.constant 0 : index
    %c0_17 = arith.constant 0 : index
    %15 = vector.load %arg7[%c0_15, %c0_16, %c0_17] : memref<6x64x64xf32, #tpu.memory_space<vmem>>, vector<1x64x64xf32>
    %16 = vector.shape_cast %15 : vector<1x64x64xf32> to vector<64x64xf32>
    %cst_18 = arith.constant dense<0.000000e+00> : vector<2x64xf32>
    %17 = tpu.matmul %9, %16, %cst_18 {dimension_numbers = #tpu.dot_dimension_numbers<[1], [0], [0], [1], [0, 0, 1, 1], [], []>} : vector<2x64xf32>, vector<64x64xf32>, vector<2x64xf32> -> vector<2x64xf32>
    %c0_19 = arith.constant 0 : index
    %c0_20 = arith.constant 0 : index
    %c0_21 = arith.constant 0 : index
    %18 = vector.load %arg8[%c0_19, %c0_20, %c0_21] : memref<6x1x64xf32, #tpu.memory_space<vmem>>, vector<1x1x64xf32>
    %19 = vector.shape_cast %18 : vector<1x1x64xf32> to vector<1x64xf32>
    %20 = vector.broadcast %19 : vector<1x64xf32> to vector<2x64xf32>
    %21 = arith.addf %17, %20 : vector<2x64xf32>
    %22 = vector.shape_cast %21 : vector<2x64xf32> to vector<2x1x64xf32>
    %23 = vector.broadcast %22 : vector<2x1x64xf32> to vector<2x16x64xf32>
    %24 = arith.addf %14, %23 : vector<2x16x64xf32>
    %25 = math.tanh %24 : vector<2x16x64xf32>
    %c0_22 = arith.constant 0 : index
    %c0_23 = arith.constant 0 : index
    %c0_24 = arith.constant 0 : index
    %26 = vector.load %arg9[%c0_22, %c0_23, %c0_24] : memref<6x1x64xf32, #tpu.memory_space<vmem>>, vector<1x1x64xf32>
    %27 = vector.shape_cast %26 : vector<1x1x64xf32> to vector<1x64xf32>
    %28 = vector.shape_cast %27 : vector<1x64xf32> to vector<1x1x64xf32>
    %29 = vector.broadcast %28 : vector<1x1x64xf32> to vector<2x16x64xf32>
    %30 = arith.mulf %25, %29 : vector<2x16x64xf32>
    %cst_25 = arith.constant dense<0.000000e+00> : vector<2x16xf32>
    %31 = vector.multi_reduction <add>, %30, %cst_25 [2] : vector<2x16x64xf32> to vector<2x16xf32>
    %c0_26 = arith.constant 0 : index
    %c0_27 = arith.constant 0 : index
    %c0_28 = arith.constant 0 : index
    %32 = vector.load %arg10[%c0_26, %c0_27, %c0_28] : memref<6x1x1xf32, #tpu.memory_space<vmem>>, vector<1x1x1xf32>
    %33 = vector.shape_cast %32 : vector<1x1x1xf32> to vector<1x1xf32>
    %34 = vector.broadcast %33 : vector<1x1xf32> to vector<2x16xf32>
    %35 = arith.addf %31, %34 : vector<2x16xf32>
    %cst_29 = arith.constant dense<0xFF800000> : vector<2xf32>
    %36 = vector.multi_reduction <maximumf>, %35, %cst_29 [1] : vector<2x16xf32> to vector<2xf32>
    %37 = vector.shape_cast %36 : vector<2xf32> to vector<2x1xf32>
    %38 = vector.broadcast %37 : vector<2x1xf32> to vector<2x16xf32>
    %39 = arith.subf %35, %38 : vector<2x16xf32>
    %40 = math.exp %39 : vector<2x16xf32>
    %cst_30 = arith.constant dense<0.000000e+00> : vector<2xf32>
    %41 = vector.multi_reduction <add>, %40, %cst_30 [1] : vector<2x16xf32> to vector<2xf32>
    %42 = vector.shape_cast %41 : vector<2xf32> to vector<2x1xf32>
    %43 = tpu.reciprocal %42 {approx = true} : vector<2x1xf32> -> vector<2x1xf32>
    %44 = vector.broadcast %43 : vector<2x1xf32> to vector<2x16xf32>
    %45 = arith.mulf %40, %44 : vector<2x16xf32>
    %46 = vector.shape_cast %45 : vector<2x16xf32> to vector<2x16x1xf32>
    %47 = vector.broadcast %46 : vector<2x16x1xf32> to vector<2x16x64xf32>
    %48 = arith.mulf %47, %7 : vector<2x16x64xf32>
    %cst_31 = arith.constant dense<0.000000e+00> : vector<2x64xf32>
    %49 = vector.multi_reduction <add>, %48, %cst_31 [1] : vector<2x16x64xf32> to vector<2x64xf32>
    %50 = vector.shape_cast %8 : vector<2x4x64xf32> to vector<8x64xf32>
    %c1 = arith.constant 1 : index
    %c0_32 = arith.constant 0 : index
    %c0_33 = arith.constant 0 : index
    %51 = vector.load %arg6[%c1, %c0_32, %c0_33] : memref<6x64x64xf32, #tpu.memory_space<vmem>>, vector<1x64x64xf32>
    %52 = vector.shape_cast %51 : vector<1x64x64xf32> to vector<64x64xf32>
    %cst_34 = arith.constant dense<0.000000e+00> : vector<8x64xf32>
    %53 = tpu.matmul %50, %52, %cst_34 {dimension_numbers = #tpu.dot_dimension_numbers<[1], [0], [0], [1], [0, 0, 1, 1], [], []>} : vector<8x64xf32>, vector<64x64xf32>, vector<8x64xf32> -> vector<8x64xf32>
    %54 = vector.shape_cast %53 : vector<8x64xf32> to vector<2x4x64xf32>
    %c1_35 = arith.constant 1 : index
    %c0_36 = arith.constant 0 : index
    %c0_37 = arith.constant 0 : index
    %55 = vector.load %arg7[%c1_35, %c0_36, %c0_37] : memref<6x64x64xf32, #tpu.memory_space<vmem>>, vector<1x64x64xf32>
    %56 = vector.shape_cast %55 : vector<1x64x64xf32> to vector<64x64xf32>
    %cst_38 = arith.constant dense<0.000000e+00> : vector<2x64xf32>
    %57 = tpu.matmul %9, %56, %cst_38 {dimension_numbers = #tpu.dot_dimension_numbers<[1], [0], [0], [1], [0, 0, 1, 1], [], []>} : vector<2x64xf32>, vector<64x64xf32>, vector<2x64xf32> -> vector<2x64xf32>
    %c1_39 = arith.constant 1 : index
    %c0_40 = arith.constant 0 : index
    %c0_41 = arith.constant 0 : index
    %58 = vector.load %arg8[%c1_39, %c0_40, %c0_41] : memref<6x1x64xf32, #tpu.memory_space<vmem>>, vector<1x1x64xf32>
    %59 = vector.shape_cast %58 : vector<1x1x64xf32> to vector<1x64xf32>
    %60 = vector.broadcast %59 : vector<1x64xf32> to vector<2x64xf32>
    %61 = arith.addf %57, %60 : vector<2x64xf32>
    %62 = vector.shape_cast %61 : vector<2x64xf32> to vector<2x1x64xf32>
    %63 = vector.broadcast %62 : vector<2x1x64xf32> to vector<2x4x64xf32>
    %64 = arith.addf %54, %63 : vector<2x4x64xf32>
    %65 = math.tanh %64 : vector<2x4x64xf32>
    %c1_42 = arith.constant 1 : index
    %c0_43 = arith.constant 0 : index
    %c0_44 = arith.constant 0 : index
    %66 = vector.load %arg9[%c1_42, %c0_43, %c0_44] : memref<6x1x64xf32, #tpu.memory_space<vmem>>, vector<1x1x64xf32>
    %67 = vector.shape_cast %66 : vector<1x1x64xf32> to vector<1x64xf32>
    %68 = vector.shape_cast %67 : vector<1x64xf32> to vector<1x1x64xf32>
    %69 = vector.broadcast %68 : vector<1x1x64xf32> to vector<2x4x64xf32>
    %70 = arith.mulf %65, %69 : vector<2x4x64xf32>
    %cst_45 = arith.constant dense<0.000000e+00> : vector<2x4xf32>
    %71 = vector.multi_reduction <add>, %70, %cst_45 [2] : vector<2x4x64xf32> to vector<2x4xf32>
    %c1_46 = arith.constant 1 : index
    %c0_47 = arith.constant 0 : index
    %c0_48 = arith.constant 0 : index
    %72 = vector.load %arg10[%c1_46, %c0_47, %c0_48] : memref<6x1x1xf32, #tpu.memory_space<vmem>>, vector<1x1x1xf32>
    %73 = vector.shape_cast %72 : vector<1x1x1xf32> to vector<1x1xf32>
    %74 = vector.broadcast %73 : vector<1x1xf32> to vector<2x4xf32>
    %75 = arith.addf %71, %74 : vector<2x4xf32>
    %cst_49 = arith.constant dense<0xFF800000> : vector<2xf32>
    %76 = vector.multi_reduction <maximumf>, %75, %cst_49 [1] : vector<2x4xf32> to vector<2xf32>
    %77 = vector.shape_cast %76 : vector<2xf32> to vector<2x1xf32>
    %78 = vector.broadcast %77 : vector<2x1xf32> to vector<2x4xf32>
    %79 = arith.subf %75, %78 : vector<2x4xf32>
    %80 = math.exp %79 : vector<2x4xf32>
    %cst_50 = arith.constant dense<0.000000e+00> : vector<2xf32>
    %81 = vector.multi_reduction <add>, %80, %cst_50 [1] : vector<2x4xf32> to vector<2xf32>
    %82 = vector.shape_cast %81 : vector<2xf32> to vector<2x1xf32>
    %83 = tpu.reciprocal %82 {approx = true} : vector<2x1xf32> -> vector<2x1xf32>
    %84 = vector.broadcast %83 : vector<2x1xf32> to vector<2x4xf32>
    %85 = arith.mulf %80, %84 : vector<2x4xf32>
    %86 = vector.shape_cast %85 : vector<2x4xf32> to vector<2x4x1xf32>
    %87 = vector.broadcast %86 : vector<2x4x1xf32> to vector<2x4x64xf32>
    %88 = arith.mulf %87, %8 : vector<2x4x64xf32>
    %cst_51 = arith.constant dense<0.000000e+00> : vector<2x64xf32>
    %89 = vector.multi_reduction <add>, %88, %cst_51 [1] : vector<2x4x64xf32> to vector<2x64xf32>
    %90 = vector.shape_cast %7 : vector<2x16x64xf32> to vector<32x64xf32>
    %c2 = arith.constant 2 : index
    %c0_52 = arith.constant 0 : index
    %c0_53 = arith.constant 0 : index
    %91 = vector.load %arg6[%c2, %c0_52, %c0_53] : memref<6x64x64xf32, #tpu.memory_space<vmem>>, vector<1x64x64xf32>
    %92 = vector.shape_cast %91 : vector<1x64x64xf32> to vector<64x64xf32>
    %cst_54 = arith.constant dense<0.000000e+00> : vector<32x64xf32>
    %93 = tpu.matmul %90, %92, %cst_54 {dimension_numbers = #tpu.dot_dimension_numbers<[1], [0], [0], [1], [0, 0, 1, 1], [], []>} : vector<32x64xf32>, vector<64x64xf32>, vector<32x64xf32> -> vector<32x64xf32>
    %94 = vector.shape_cast %93 : vector<32x64xf32> to vector<2x16x64xf32>
    %c2_55 = arith.constant 2 : index
    %c0_56 = arith.constant 0 : index
    %c0_57 = arith.constant 0 : index
    %95 = vector.load %arg7[%c2_55, %c0_56, %c0_57] : memref<6x64x64xf32, #tpu.memory_space<vmem>>, vector<1x64x64xf32>
    %96 = vector.shape_cast %95 : vector<1x64x64xf32> to vector<64x64xf32>
    %cst_58 = arith.constant dense<0.000000e+00> : vector<2x64xf32>
    %97 = tpu.matmul %89, %96, %cst_58 {dimension_numbers = #tpu.dot_dimension_numbers<[1], [0], [0], [1], [0, 0, 1, 1], [], []>} : vector<2x64xf32>, vector<64x64xf32>, vector<2x64xf32> -> vector<2x64xf32>
    %c2_59 = arith.constant 2 : index
    %c0_60 = arith.constant 0 : index
    %c0_61 = arith.constant 0 : index
    %98 = vector.load %arg8[%c2_59, %c0_60, %c0_61] : memref<6x1x64xf32, #tpu.memory_space<vmem>>, vector<1x1x64xf32>
    %99 = vector.shape_cast %98 : vector<1x1x64xf32> to vector<1x64xf32>
    %100 = vector.broadcast %99 : vector<1x64xf32> to vector<2x64xf32>
    %101 = arith.addf %97, %100 : vector<2x64xf32>
    %102 = vector.shape_cast %101 : vector<2x64xf32> to vector<2x1x64xf32>
    %103 = vector.broadcast %102 : vector<2x1x64xf32> to vector<2x16x64xf32>
    %104 = arith.addf %94, %103 : vector<2x16x64xf32>
    %105 = math.tanh %104 : vector<2x16x64xf32>
    %c2_62 = arith.constant 2 : index
    %c0_63 = arith.constant 0 : index
    %c0_64 = arith.constant 0 : index
    %106 = vector.load %arg9[%c2_62, %c0_63, %c0_64] : memref<6x1x64xf32, #tpu.memory_space<vmem>>, vector<1x1x64xf32>
    %107 = vector.shape_cast %106 : vector<1x1x64xf32> to vector<1x64xf32>
    %108 = vector.shape_cast %107 : vector<1x64xf32> to vector<1x1x64xf32>
    %109 = vector.broadcast %108 : vector<1x1x64xf32> to vector<2x16x64xf32>
    %110 = arith.mulf %105, %109 : vector<2x16x64xf32>
    %cst_65 = arith.constant dense<0.000000e+00> : vector<2x16xf32>
    %111 = vector.multi_reduction <add>, %110, %cst_65 [2] : vector<2x16x64xf32> to vector<2x16xf32>
    %c2_66 = arith.constant 2 : index
    %c0_67 = arith.constant 0 : index
    %c0_68 = arith.constant 0 : index
    %112 = vector.load %arg10[%c2_66, %c0_67, %c0_68] : memref<6x1x1xf32, #tpu.memory_space<vmem>>, vector<1x1x1xf32>
    %113 = vector.shape_cast %112 : vector<1x1x1xf32> to vector<1x1xf32>
    %114 = vector.broadcast %113 : vector<1x1xf32> to vector<2x16xf32>
    %115 = arith.addf %111, %114 : vector<2x16xf32>
    %cst_69 = arith.constant dense<0xFF800000> : vector<2xf32>
    %116 = vector.multi_reduction <maximumf>, %115, %cst_69 [1] : vector<2x16xf32> to vector<2xf32>
    %117 = vector.shape_cast %116 : vector<2xf32> to vector<2x1xf32>
    %118 = vector.broadcast %117 : vector<2x1xf32> to vector<2x16xf32>
    %119 = arith.subf %115, %118 : vector<2x16xf32>
    %120 = math.exp %119 : vector<2x16xf32>
    %cst_70 = arith.constant dense<0.000000e+00> : vector<2xf32>
    %121 = vector.multi_reduction <add>, %120, %cst_70 [1] : vector<2x16xf32> to vector<2xf32>
    %122 = vector.shape_cast %121 : vector<2xf32> to vector<2x1xf32>
    %123 = tpu.reciprocal %122 {approx = true} : vector<2x1xf32> -> vector<2x1xf32>
    %124 = vector.broadcast %123 : vector<2x1xf32> to vector<2x16xf32>
    %125 = arith.mulf %120, %124 : vector<2x16xf32>
    %126 = vector.shape_cast %125 : vector<2x16xf32> to vector<2x16x1xf32>
    %127 = vector.broadcast %126 : vector<2x16x1xf32> to vector<2x16x64xf32>
    %128 = arith.mulf %127, %7 : vector<2x16x64xf32>
    %cst_71 = arith.constant dense<0.000000e+00> : vector<2x64xf32>
    %129 = vector.multi_reduction <add>, %128, %cst_71 [1] : vector<2x16x64xf32> to vector<2x64xf32>
    %130 = vector.shape_cast %8 : vector<2x4x64xf32> to vector<8x64xf32>
    %c3 = arith.constant 3 : index
    %c0_72 = arith.constant 0 : index
    %c0_73 = arith.constant 0 : index
    %131 = vector.load %arg6[%c3, %c0_72, %c0_73] : memref<6x64x64xf32, #tpu.memory_space<vmem>>, vector<1x64x64xf32>
    %132 = vector.shape_cast %131 : vector<1x64x64xf32> to vector<64x64xf32>
    %cst_74 = arith.constant dense<0.000000e+00> : vector<8x64xf32>
    %133 = tpu.matmul %130, %132, %cst_74 {dimension_numbers = #tpu.dot_dimension_numbers<[1], [0], [0], [1], [0, 0, 1, 1], [], []>} : vector<8x64xf32>, vector<64x64xf32>, vector<8x64xf32> -> vector<8x64xf32>
    %134 = vector.shape_cast %133 : vector<8x64xf32> to vector<2x4x64xf32>
    %c3_75 = arith.constant 3 : index
    %c0_76 = arith.constant 0 : index
    %c0_77 = arith.constant 0 : index
    %135 = vector.load %arg7[%c3_75, %c0_76, %c0_77] : memref<6x64x64xf32, #tpu.memory_space<vmem>>, vector<1x64x64xf32>
    %136 = vector.shape_cast %135 : vector<1x64x64xf32> to vector<64x64xf32>
    %cst_78 = arith.constant dense<0.000000e+00> : vector<2x64xf32>
    %137 = tpu.matmul %49, %136, %cst_78 {dimension_numbers = #tpu.dot_dimension_numbers<[1], [0], [0], [1], [0, 0, 1, 1], [], []>} : vector<2x64xf32>, vector<64x64xf32>, vector<2x64xf32> -> vector<2x64xf32>
    %c3_79 = arith.constant 3 : index
    %c0_80 = arith.constant 0 : index
    %c0_81 = arith.constant 0 : index
    %138 = vector.load %arg8[%c3_79, %c0_80, %c0_81] : memref<6x1x64xf32, #tpu.memory_space<vmem>>, vector<1x1x64xf32>
    %139 = vector.shape_cast %138 : vector<1x1x64xf32> to vector<1x64xf32>
    %140 = vector.broadcast %139 : vector<1x64xf32> to vector<2x64xf32>
    %141 = arith.addf %137, %140 : vector<2x64xf32>
    %142 = vector.shape_cast %141 : vector<2x64xf32> to vector<2x1x64xf32>
    %143 = vector.broadcast %142 : vector<2x1x64xf32> to vector<2x4x64xf32>
    %144 = arith.addf %134, %143 : vector<2x4x64xf32>
    %145 = math.tanh %144 : vector<2x4x64xf32>
    %c3_82 = arith.constant 3 : index
    %c0_83 = arith.constant 0 : index
    %c0_84 = arith.constant 0 : index
    %146 = vector.load %arg9[%c3_82, %c0_83, %c0_84] : memref<6x1x64xf32, #tpu.memory_space<vmem>>, vector<1x1x64xf32>
    %147 = vector.shape_cast %146 : vector<1x1x64xf32> to vector<1x64xf32>
    %148 = vector.shape_cast %147 : vector<1x64xf32> to vector<1x1x64xf32>
    %149 = vector.broadcast %148 : vector<1x1x64xf32> to vector<2x4x64xf32>
    %150 = arith.mulf %145, %149 : vector<2x4x64xf32>
    %cst_85 = arith.constant dense<0.000000e+00> : vector<2x4xf32>
    %151 = vector.multi_reduction <add>, %150, %cst_85 [2] : vector<2x4x64xf32> to vector<2x4xf32>
    %c3_86 = arith.constant 3 : index
    %c0_87 = arith.constant 0 : index
    %c0_88 = arith.constant 0 : index
    %152 = vector.load %arg10[%c3_86, %c0_87, %c0_88] : memref<6x1x1xf32, #tpu.memory_space<vmem>>, vector<1x1x1xf32>
    %153 = vector.shape_cast %152 : vector<1x1x1xf32> to vector<1x1xf32>
    %154 = vector.broadcast %153 : vector<1x1xf32> to vector<2x4xf32>
    %155 = arith.addf %151, %154 : vector<2x4xf32>
    %cst_89 = arith.constant dense<0xFF800000> : vector<2xf32>
    %156 = vector.multi_reduction <maximumf>, %155, %cst_89 [1] : vector<2x4xf32> to vector<2xf32>
    %157 = vector.shape_cast %156 : vector<2xf32> to vector<2x1xf32>
    %158 = vector.broadcast %157 : vector<2x1xf32> to vector<2x4xf32>
    %159 = arith.subf %155, %158 : vector<2x4xf32>
    %160 = math.exp %159 : vector<2x4xf32>
    %cst_90 = arith.constant dense<0.000000e+00> : vector<2xf32>
    %161 = vector.multi_reduction <add>, %160, %cst_90 [1] : vector<2x4xf32> to vector<2xf32>
    %162 = vector.shape_cast %161 : vector<2xf32> to vector<2x1xf32>
    %163 = tpu.reciprocal %162 {approx = true} : vector<2x1xf32> -> vector<2x1xf32>
    %164 = vector.broadcast %163 : vector<2x1xf32> to vector<2x4xf32>
    %165 = arith.mulf %160, %164 : vector<2x4xf32>
    %166 = vector.shape_cast %165 : vector<2x4xf32> to vector<2x4x1xf32>
    %167 = vector.broadcast %166 : vector<2x4x1xf32> to vector<2x4x64xf32>
    %168 = arith.mulf %167, %8 : vector<2x4x64xf32>
    %cst_91 = arith.constant dense<0.000000e+00> : vector<2x64xf32>
    %169 = vector.multi_reduction <add>, %168, %cst_91 [1] : vector<2x4x64xf32> to vector<2x64xf32>
    %c0_92 = arith.constant 0 : index
    %c0_93 = arith.constant 0 : index
    %c0_94 = arith.constant 0 : index
    %170 = vector.load %arg11[%c0_92, %c0_93, %c0_94] : memref<5x64x64xf32, #tpu.memory_space<vmem>>, vector<1x64x64xf32>
    %171 = vector.shape_cast %170 : vector<1x64x64xf32> to vector<64x64xf32>
    %cst_95 = arith.constant dense<0.000000e+00> : vector<2x64xf32>
    %172 = tpu.matmul %9, %171, %cst_95 {dimension_numbers = #tpu.dot_dimension_numbers<[1], [0], [0], [1], [0, 0, 1, 1], [], []>} : vector<2x64xf32>, vector<64x64xf32>, vector<2x64xf32> -> vector<2x64xf32>
    %c0_96 = arith.constant 0 : index
    %c0_97 = arith.constant 0 : index
    %c0_98 = arith.constant 0 : index
    %173 = vector.load %arg12[%c0_96, %c0_97, %c0_98] : memref<5x1x64xf32, #tpu.memory_space<vmem>>, vector<1x1x64xf32>
    %174 = vector.shape_cast %173 : vector<1x1x64xf32> to vector<1x64xf32>
    %175 = vector.broadcast %174 : vector<1x64xf32> to vector<2x64xf32>
    %176 = arith.addf %172, %175 : vector<2x64xf32>
    %cst_99 = arith.constant 0.000000e+00 : f32
    %177 = vector.broadcast %cst_99 : f32 to vector<2x64xf32>
    %178 = arith.maximumf %176, %177 : vector<2x64xf32>
    %c2_100 = arith.constant 2 : index
    %c0_101 = arith.constant 0 : index
    %c0_102 = arith.constant 0 : index
    %179 = vector.load %arg11[%c2_100, %c0_101, %c0_102] : memref<5x64x64xf32, #tpu.memory_space<vmem>>, vector<1x64x64xf32>
    %180 = vector.shape_cast %179 : vector<1x64x64xf32> to vector<64x64xf32>
    %cst_103 = arith.constant dense<0.000000e+00> : vector<2x64xf32>
    %181 = tpu.matmul %169, %180, %cst_103 {dimension_numbers = #tpu.dot_dimension_numbers<[1], [0], [0], [1], [0, 0, 1, 1], [], []>} : vector<2x64xf32>, vector<64x64xf32>, vector<2x64xf32> -> vector<2x64xf32>
    %c2_104 = arith.constant 2 : index
    %c0_105 = arith.constant 0 : index
    %c0_106 = arith.constant 0 : index
    %182 = vector.load %arg12[%c2_104, %c0_105, %c0_106] : memref<5x1x64xf32, #tpu.memory_space<vmem>>, vector<1x1x64xf32>
    %183 = vector.shape_cast %182 : vector<1x1x64xf32> to vector<1x64xf32>
    %184 = vector.broadcast %183 : vector<1x64xf32> to vector<2x64xf32>
    %185 = arith.addf %181, %184 : vector<2x64xf32>
    %cst_107 = arith.constant 0.000000e+00 : f32
    %186 = vector.broadcast %cst_107 : f32 to vector<2x64xf32>
    %187 = arith.maximumf %185, %186 : vector<2x64xf32>
    %188 = arith.mulf %178, %187 : vector<2x64xf32>
    %c1_108 = arith.constant 1 : index
    %c0_109 = arith.constant 0 : index
    %c0_110 = arith.constant 0 : index
    %189 = vector.load %arg11[%c1_108, %c0_109, %c0_110] : memref<5x64x64xf32, #tpu.memory_space<vmem>>, vector<1x64x64xf32>
    %190 = vector.shape_cast %189 : vector<1x64x64xf32> to vector<64x64xf32>
    %cst_111 = arith.constant dense<0.000000e+00> : vector<2x64xf32>
    %191 = tpu.matmul %129, %190, %cst_111 {dimension_numbers = #tpu.dot_dimension_numbers<[1], [0], [0], [1], [0, 0, 1, 1], [], []>} : vector<2x64xf32>, vector<64x64xf32>, vector<2x64xf32> -> vector<2x64xf32>
    %c1_112 = arith.constant 1 : index
    %c0_113 = arith.constant 0 : index
    %c0_114 = arith.constant 0 : index
    %192 = vector.load %arg12[%c1_112, %c0_113, %c0_114] : memref<5x1x64xf32, #tpu.memory_space<vmem>>, vector<1x1x64xf32>
    %193 = vector.shape_cast %192 : vector<1x1x64xf32> to vector<1x64xf32>
    %194 = vector.broadcast %193 : vector<1x64xf32> to vector<2x64xf32>
    %195 = arith.addf %191, %194 : vector<2x64xf32>
    %cst_115 = arith.constant 0.000000e+00 : f32
    %196 = vector.broadcast %cst_115 : f32 to vector<2x64xf32>
    %197 = arith.maximumf %195, %196 : vector<2x64xf32>
    %198 = arith.mulf %178, %197 : vector<2x64xf32>
    %199 = vector.shape_cast %7 : vector<2x16x64xf32> to vector<32x64xf32>
    %c4 = arith.constant 4 : index
    %c0_116 = arith.constant 0 : index
    %c0_117 = arith.constant 0 : index
    %200 = vector.load %arg6[%c4, %c0_116, %c0_117] : memref<6x64x64xf32, #tpu.memory_space<vmem>>, vector<1x64x64xf32>
    %201 = vector.shape_cast %200 : vector<1x64x64xf32> to vector<64x64xf32>
    %cst_118 = arith.constant dense<0.000000e+00> : vector<32x64xf32>
    %202 = tpu.matmul %199, %201, %cst_118 {dimension_numbers = #tpu.dot_dimension_numbers<[1], [0], [0], [1], [0, 0, 1, 1], [], []>} : vector<32x64xf32>, vector<64x64xf32>, vector<32x64xf32> -> vector<32x64xf32>
    %203 = vector.shape_cast %202 : vector<32x64xf32> to vector<2x16x64xf32>
    %c4_119 = arith.constant 4 : index
    %c0_120 = arith.constant 0 : index
    %c0_121 = arith.constant 0 : index
    %204 = vector.load %arg7[%c4_119, %c0_120, %c0_121] : memref<6x64x64xf32, #tpu.memory_space<vmem>>, vector<1x64x64xf32>
    %205 = vector.shape_cast %204 : vector<1x64x64xf32> to vector<64x64xf32>
    %cst_122 = arith.constant dense<0.000000e+00> : vector<2x64xf32>
    %206 = tpu.matmul %188, %205, %cst_122 {dimension_numbers = #tpu.dot_dimension_numbers<[1], [0], [0], [1], [0, 0, 1, 1], [], []>} : vector<2x64xf32>, vector<64x64xf32>, vector<2x64xf32> -> vector<2x64xf32>
    %c4_123 = arith.constant 4 : index
    %c0_124 = arith.constant 0 : index
    %c0_125 = arith.constant 0 : index
    %207 = vector.load %arg8[%c4_123, %c0_124, %c0_125] : memref<6x1x64xf32, #tpu.memory_space<vmem>>, vector<1x1x64xf32>
    %208 = vector.shape_cast %207 : vector<1x1x64xf32> to vector<1x64xf32>
    %209 = vector.broadcast %208 : vector<1x64xf32> to vector<2x64xf32>
    %210 = arith.addf %206, %209 : vector<2x64xf32>
    %211 = vector.shape_cast %210 : vector<2x64xf32> to vector<2x1x64xf32>
    %212 = vector.broadcast %211 : vector<2x1x64xf32> to vector<2x16x64xf32>
    %213 = arith.addf %203, %212 : vector<2x16x64xf32>
    %214 = math.tanh %213 : vector<2x16x64xf32>
    %c4_126 = arith.constant 4 : index
    %c0_127 = arith.constant 0 : index
    %c0_128 = arith.constant 0 : index
    %215 = vector.load %arg9[%c4_126, %c0_127, %c0_128] : memref<6x1x64xf32, #tpu.memory_space<vmem>>, vector<1x1x64xf32>
    %216 = vector.shape_cast %215 : vector<1x1x64xf32> to vector<1x64xf32>
    %217 = vector.shape_cast %216 : vector<1x64xf32> to vector<1x1x64xf32>
    %218 = vector.broadcast %217 : vector<1x1x64xf32> to vector<2x16x64xf32>
    %219 = arith.mulf %214, %218 : vector<2x16x64xf32>
    %cst_129 = arith.constant dense<0.000000e+00> : vector<2x16xf32>
    %220 = vector.multi_reduction <add>, %219, %cst_129 [2] : vector<2x16x64xf32> to vector<2x16xf32>
    %c4_130 = arith.constant 4 : index
    %c0_131 = arith.constant 0 : index
    %c0_132 = arith.constant 0 : index
    %221 = vector.load %arg10[%c4_130, %c0_131, %c0_132] : memref<6x1x1xf32, #tpu.memory_space<vmem>>, vector<1x1x1xf32>
    %222 = vector.shape_cast %221 : vector<1x1x1xf32> to vector<1x1xf32>
    %223 = vector.broadcast %222 : vector<1x1xf32> to vector<2x16xf32>
    %224 = arith.addf %220, %223 : vector<2x16xf32>
    %cst_133 = arith.constant dense<0xFF800000> : vector<2xf32>
    %225 = vector.multi_reduction <maximumf>, %224, %cst_133 [1] : vector<2x16xf32> to vector<2xf32>
    %226 = vector.shape_cast %225 : vector<2xf32> to vector<2x1xf32>
    %227 = vector.broadcast %226 : vector<2x1xf32> to vector<2x16xf32>
    %228 = arith.subf %224, %227 : vector<2x16xf32>
    %229 = math.exp %228 : vector<2x16xf32>
    %cst_134 = arith.constant dense<0.000000e+00> : vector<2xf32>
    %230 = vector.multi_reduction <add>, %229, %cst_134 [1] : vector<2x16xf32> to vector<2xf32>
    %231 = vector.shape_cast %230 : vector<2xf32> to vector<2x1xf32>
    %232 = tpu.reciprocal %231 {approx = true} : vector<2x1xf32> -> vector<2x1xf32>
    %233 = vector.broadcast %232 : vector<2x1xf32> to vector<2x16xf32>
    %234 = arith.mulf %229, %233 : vector<2x16xf32>
    %235 = vector.shape_cast %234 : vector<2x16xf32> to vector<2x16x1xf32>
    %236 = vector.broadcast %235 : vector<2x16x1xf32> to vector<2x16x64xf32>
    %237 = arith.mulf %236, %7 : vector<2x16x64xf32>
    %cst_135 = arith.constant dense<0.000000e+00> : vector<2x64xf32>
    %238 = vector.multi_reduction <add>, %237, %cst_135 [1] : vector<2x16x64xf32> to vector<2x64xf32>
    %239 = vector.shape_cast %8 : vector<2x4x64xf32> to vector<8x64xf32>
    %c5 = arith.constant 5 : index
    %c0_136 = arith.constant 0 : index
    %c0_137 = arith.constant 0 : index
    %240 = vector.load %arg6[%c5, %c0_136, %c0_137] : memref<6x64x64xf32, #tpu.memory_space<vmem>>, vector<1x64x64xf32>
    %241 = vector.shape_cast %240 : vector<1x64x64xf32> to vector<64x64xf32>
    %cst_138 = arith.constant dense<0.000000e+00> : vector<8x64xf32>
    %242 = tpu.matmul %239, %241, %cst_138 {dimension_numbers = #tpu.dot_dimension_numbers<[1], [0], [0], [1], [0, 0, 1, 1], [], []>} : vector<8x64xf32>, vector<64x64xf32>, vector<8x64xf32> -> vector<8x64xf32>
    %243 = vector.shape_cast %242 : vector<8x64xf32> to vector<2x4x64xf32>
    %c5_139 = arith.constant 5 : index
    %c0_140 = arith.constant 0 : index
    %c0_141 = arith.constant 0 : index
    %244 = vector.load %arg7[%c5_139, %c0_140, %c0_141] : memref<6x64x64xf32, #tpu.memory_space<vmem>>, vector<1x64x64xf32>
    %245 = vector.shape_cast %244 : vector<1x64x64xf32> to vector<64x64xf32>
    %cst_142 = arith.constant dense<0.000000e+00> : vector<2x64xf32>
    %246 = tpu.matmul %198, %245, %cst_142 {dimension_numbers = #tpu.dot_dimension_numbers<[1], [0], [0], [1], [0, 0, 1, 1], [], []>} : vector<2x64xf32>, vector<64x64xf32>, vector<2x64xf32> -> vector<2x64xf32>
    %c5_143 = arith.constant 5 : index
    %c0_144 = arith.constant 0 : index
    %c0_145 = arith.constant 0 : index
    %247 = vector.load %arg8[%c5_143, %c0_144, %c0_145] : memref<6x1x64xf32, #tpu.memory_space<vmem>>, vector<1x1x64xf32>
    %248 = vector.shape_cast %247 : vector<1x1x64xf32> to vector<1x64xf32>
    %249 = vector.broadcast %248 : vector<1x64xf32> to vector<2x64xf32>
    %250 = arith.addf %246, %249 : vector<2x64xf32>
    %251 = vector.shape_cast %250 : vector<2x64xf32> to vector<2x1x64xf32>
    %252 = vector.broadcast %251 : vector<2x1x64xf32> to vector<2x4x64xf32>
    %253 = arith.addf %243, %252 : vector<2x4x64xf32>
    %254 = math.tanh %253 : vector<2x4x64xf32>
    %c5_146 = arith.constant 5 : index
    %c0_147 = arith.constant 0 : index
    %c0_148 = arith.constant 0 : index
    %255 = vector.load %arg9[%c5_146, %c0_147, %c0_148] : memref<6x1x64xf32, #tpu.memory_space<vmem>>, vector<1x1x64xf32>
    %256 = vector.shape_cast %255 : vector<1x1x64xf32> to vector<1x64xf32>
    %257 = vector.shape_cast %256 : vector<1x64xf32> to vector<1x1x64xf32>
    %258 = vector.broadcast %257 : vector<1x1x64xf32> to vector<2x4x64xf32>
    %259 = arith.mulf %254, %258 : vector<2x4x64xf32>
    %cst_149 = arith.constant dense<0.000000e+00> : vector<2x4xf32>
    %260 = vector.multi_reduction <add>, %259, %cst_149 [2] : vector<2x4x64xf32> to vector<2x4xf32>
    %c5_150 = arith.constant 5 : index
    %c0_151 = arith.constant 0 : index
    %c0_152 = arith.constant 0 : index
    %261 = vector.load %arg10[%c5_150, %c0_151, %c0_152] : memref<6x1x1xf32, #tpu.memory_space<vmem>>, vector<1x1x1xf32>
    %262 = vector.shape_cast %261 : vector<1x1x1xf32> to vector<1x1xf32>
    %263 = vector.broadcast %262 : vector<1x1xf32> to vector<2x4xf32>
    %264 = arith.addf %260, %263 : vector<2x4xf32>
    %cst_153 = arith.constant dense<0xFF800000> : vector<2xf32>
    %265 = vector.multi_reduction <maximumf>, %264, %cst_153 [1] : vector<2x4xf32> to vector<2xf32>
    %266 = vector.shape_cast %265 : vector<2xf32> to vector<2x1xf32>
    %267 = vector.broadcast %266 : vector<2x1xf32> to vector<2x4xf32>
    %268 = arith.subf %264, %267 : vector<2x4xf32>
    %269 = math.exp %268 : vector<2x4xf32>
    %cst_154 = arith.constant dense<0.000000e+00> : vector<2xf32>
    %270 = vector.multi_reduction <add>, %269, %cst_154 [1] : vector<2x4xf32> to vector<2xf32>
    %271 = vector.shape_cast %270 : vector<2xf32> to vector<2x1xf32>
    %272 = tpu.reciprocal %271 {approx = true} : vector<2x1xf32> -> vector<2x1xf32>
    %273 = vector.broadcast %272 : vector<2x1xf32> to vector<2x4xf32>
    %274 = arith.mulf %269, %273 : vector<2x4xf32>
    %275 = vector.shape_cast %274 : vector<2x4xf32> to vector<2x4x1xf32>
    %276 = vector.broadcast %275 : vector<2x4x1xf32> to vector<2x4x64xf32>
    %277 = arith.mulf %276, %8 : vector<2x4x64xf32>
    %cst_155 = arith.constant dense<0.000000e+00> : vector<2x64xf32>
    %278 = vector.multi_reduction <add>, %277, %cst_155 [1] : vector<2x4x64xf32> to vector<2x64xf32>
    %c3_156 = arith.constant 3 : index
    %c0_157 = arith.constant 0 : index
    %c0_158 = arith.constant 0 : index
    %279 = vector.load %arg11[%c3_156, %c0_157, %c0_158] : memref<5x64x64xf32, #tpu.memory_space<vmem>>, vector<1x64x64xf32>
    %280 = vector.shape_cast %279 : vector<1x64x64xf32> to vector<64x64xf32>
    %cst_159 = arith.constant dense<0.000000e+00> : vector<2x64xf32>
    %281 = tpu.matmul %238, %280, %cst_159 {dimension_numbers = #tpu.dot_dimension_numbers<[1], [0], [0], [1], [0, 0, 1, 1], [], []>} : vector<2x64xf32>, vector<64x64xf32>, vector<2x64xf32> -> vector<2x64xf32>
    %c3_160 = arith.constant 3 : index
    %c0_161 = arith.constant 0 : index
    %c0_162 = arith.constant 0 : index
    %282 = vector.load %arg12[%c3_160, %c0_161, %c0_162] : memref<5x1x64xf32, #tpu.memory_space<vmem>>, vector<1x1x64xf32>
    %283 = vector.shape_cast %282 : vector<1x1x64xf32> to vector<1x64xf32>
    %284 = vector.broadcast %283 : vector<1x64xf32> to vector<2x64xf32>
    %285 = arith.addf %281, %284 : vector<2x64xf32>
    %cst_163 = arith.constant 0.000000e+00 : f32
    %286 = vector.broadcast %cst_163 : f32 to vector<2x64xf32>
    %287 = arith.maximumf %285, %286 : vector<2x64xf32>
    %c4_164 = arith.constant 4 : index
    %c0_165 = arith.constant 0 : index
    %c0_166 = arith.constant 0 : index
    %288 = vector.load %arg11[%c4_164, %c0_165, %c0_166] : memref<5x64x64xf32, #tpu.memory_space<vmem>>, vector<1x64x64xf32>
    %289 = vector.shape_cast %288 : vector<1x64x64xf32> to vector<64x64xf32>
    %cst_167 = arith.constant dense<0.000000e+00> : vector<2x64xf32>
    %290 = tpu.matmul %278, %289, %cst_167 {dimension_numbers = #tpu.dot_dimension_numbers<[1], [0], [0], [1], [0, 0, 1, 1], [], []>} : vector<2x64xf32>, vector<64x64xf32>, vector<2x64xf32> -> vector<2x64xf32>
    %c4_168 = arith.constant 4 : index
    %c0_169 = arith.constant 0 : index
    %c0_170 = arith.constant 0 : index
    %291 = vector.load %arg12[%c4_168, %c0_169, %c0_170] : memref<5x1x64xf32, #tpu.memory_space<vmem>>, vector<1x1x64xf32>
    %292 = vector.shape_cast %291 : vector<1x1x64xf32> to vector<1x64xf32>
    %293 = vector.broadcast %292 : vector<1x64xf32> to vector<2x64xf32>
    %294 = arith.addf %290, %293 : vector<2x64xf32>
    %cst_171 = arith.constant 0.000000e+00 : f32
    %295 = vector.broadcast %cst_171 : f32 to vector<2x64xf32>
    %296 = arith.maximumf %294, %295 : vector<2x64xf32>
    %297 = arith.mulf %178, %287 : vector<2x64xf32>
    %298 = arith.mulf %178, %296 : vector<2x64xf32>
    %c0_172 = arith.constant 0 : index
    %c0_173 = arith.constant 0 : index
    %299 = vector.load %arg13[%c0_172, %c0_173] : memref<64x64xf32, #tpu.memory_space<vmem>>, vector<64x64xf32>
    %cst_174 = arith.constant dense<0.000000e+00> : vector<2x64xf32>
    %300 = tpu.matmul %297, %299, %cst_174 {dimension_numbers = #tpu.dot_dimension_numbers<[1], [0], [0], [1], [0, 0, 1, 1], [], []>} : vector<2x64xf32>, vector<64x64xf32>, vector<2x64xf32> -> vector<2x64xf32>
    %c0_175 = arith.constant 0 : index
    %c0_176 = arith.constant 0 : index
    %301 = vector.load %arg14[%c0_175, %c0_176] : memref<1x64xf32, #tpu.memory_space<vmem>>, vector<1x64xf32>
    %302 = vector.broadcast %301 : vector<1x64xf32> to vector<2x64xf32>
    %303 = arith.addf %300, %302 : vector<2x64xf32>
    %c0_177 = arith.constant 0 : index
    %c0_178 = arith.constant 0 : index
    %304 = vector.load %arg15[%c0_177, %c0_178] : memref<64x64xf32, #tpu.memory_space<vmem>>, vector<64x64xf32>
    %cst_179 = arith.constant dense<0.000000e+00> : vector<2x64xf32>
    %305 = tpu.matmul %298, %304, %cst_179 {dimension_numbers = #tpu.dot_dimension_numbers<[1], [0], [0], [1], [0, 0, 1, 1], [], []>} : vector<2x64xf32>, vector<64x64xf32>, vector<2x64xf32> -> vector<2x64xf32>
    %c0_180 = arith.constant 0 : index
    %c0_181 = arith.constant 0 : index
    %306 = vector.load %arg16[%c0_180, %c0_181] : memref<1x64xf32, #tpu.memory_space<vmem>>, vector<1x64xf32>
    %307 = vector.broadcast %306 : vector<1x64xf32> to vector<2x64xf32>
    %308 = arith.addf %305, %307 : vector<2x64xf32>
    %c0_182 = arith.constant 0 : index
    %c0_183 = arith.constant 0 : index
    %309 = vector.load %arg17[%c0_182, %c0_183] : memref<128x32xf32, #tpu.memory_space<vmem>>, vector<64x32xf32>
    %cst_184 = arith.constant dense<0.000000e+00> : vector<2x32xf32>
    %310 = tpu.matmul %303, %309, %cst_184 {dimension_numbers = #tpu.dot_dimension_numbers<[1], [0], [0], [1], [0, 0, 1, 1], [], []>} : vector<2x64xf32>, vector<64x32xf32>, vector<2x32xf32> -> vector<2x32xf32>
    %c64 = arith.constant 64 : index
    %c0_185 = arith.constant 0 : index
    %311 = vector.load %arg17[%c64, %c0_185] : memref<128x32xf32, #tpu.memory_space<vmem>>, vector<64x32xf32>
    %cst_186 = arith.constant dense<0.000000e+00> : vector<2x32xf32>
    %312 = tpu.matmul %308, %311, %cst_186 {dimension_numbers = #tpu.dot_dimension_numbers<[1], [0], [0], [1], [0, 0, 1, 1], [], []>} : vector<2x64xf32>, vector<64x32xf32>, vector<2x32xf32> -> vector<2x32xf32>
    %313 = arith.addf %310, %312 : vector<2x32xf32>
    %c0_187 = arith.constant 0 : index
    %c0_188 = arith.constant 0 : index
    %314 = vector.load %arg18[%c0_187, %c0_188] : memref<1x32xf32, #tpu.memory_space<vmem>>, vector<1x32xf32>
    %315 = vector.broadcast %314 : vector<1x32xf32> to vector<2x32xf32>
    %316 = arith.addf %313, %315 : vector<2x32xf32>
    %317 = math.tanh %316 : vector<2x32xf32>
    %c0_189 = arith.constant 0 : index
    %c0_190 = arith.constant 0 : index
    %318 = vector.load %arg19[%c0_189, %c0_190] : memref<2x32xf32, #tpu.memory_space<vmem>>, vector<2x32xf32>
    tpu.vector_store %arg19[%c0_189, %c0_190], %317 {strides = array<i32>} : memref<2x32xf32, #tpu.memory_space<vmem>>, vector<2x32xf32>,
    return
  }
  func.func @transform_0(%arg0: i32) -> (i32, i32, i32) {
    %c0_i32 = arith.constant 0 : i32
    %c0_i32_0 = arith.constant 0 : i32
    %c0_i32_1 = arith.constant 0 : i32
    %c0_i32_2 = arith.constant 0 : i32
    return %c0_i32, %c0_i32_0, %c0_i32_1 : i32, i32, i32
  }
  func.func @transform_1(%arg0: i32) -> (i32, i32, i32) {
    %c0_i32 = arith.constant 0 : i32
    %c0_i32_0 = arith.constant 0 : i32
    %c0_i32_1 = arith.constant 0 : i32
    %c0_i32_2 = arith.constant 0 : i32
    return %c0_i32, %c0_i32_0, %c0_i32_1 : i32, i32, i32
  }
  func.func @transform_2(%arg0: i32) -> (i32, i32) {
    %c0_i32 = arith.constant 0 : i32
    %c0_i32_0 = arith.constant 0 : i32
    %c0_i32_1 = arith.constant 0 : i32
    return %c0_i32, %c0_i32_0 : i32, i32
  }
  func.func @transform_3(%arg0: i32) -> (i32, i32) {
    %c0_i32 = arith.constant 0 : i32
    %c0_i32_0 = arith.constant 0 : i32
    %c0_i32_1 = arith.constant 0 : i32
    return %c0_i32, %c0_i32_0 : i32, i32
  }
  func.func @transform_4(%arg0: i32) -> (i32, i32) {
    %c0_i32 = arith.constant 0 : i32
    %c0_i32_0 = arith.constant 0 : i32
    %c0_i32_1 = arith.constant 0 : i32
    return %c0_i32, %c0_i32_0 : i32, i32
  }
  func.func @transform_5(%arg0: i32) -> (i32, i32, i32) {
    %c0_i32 = arith.constant 0 : i32
    %c0_i32_0 = arith.constant 0 : i32
    %c0_i32_1 = arith.constant 0 : i32
    %c0_i32_2 = arith.constant 0 : i32
    return %c0_i32, %c0_i32_0, %c0_i32_1 : i32, i32, i32
  }
  func.func @transform_6(%arg0: i32) -> (i32, i32, i32) {
    %c0_i32 = arith.constant 0 : i32
    %c0_i32_0 = arith.constant 0 : i32
    %c0_i32_1 = arith.constant 0 : i32
    %c0_i32_2 = arith.constant 0 : i32
    return %c0_i32, %c0_i32_0, %c0_i32_1 : i32, i32, i32
  }
  func.func @transform_7(%arg0: i32) -> (i32, i32, i32) {
    %c0_i32 = arith.constant 0 : i32
    %c0_i32_0 = arith.constant 0 : i32
    %c0_i32_1 = arith.constant 0 : i32
    %c0_i32_2 = arith.constant 0 : i32
    return %c0_i32, %c0_i32_0, %c0_i32_1 : i32, i32, i32
  }
  func.func @transform_8(%arg0: i32) -> (i32, i32, i32) {
    %c0_i32 = arith.constant 0 : i32
    %c0_i32_0 = arith.constant 0 : i32
    %c0_i32_1 = arith.constant 0 : i32
    %c0_i32_2 = arith.constant 0 : i32
    return %c0_i32, %c0_i32_0, %c0_i32_1 : i32, i32, i32
  }
  func.func @transform_9(%arg0: i32) -> (i32, i32, i32) {
    %c0_i32 = arith.constant 0 : i32
    %c0_i32_0 = arith.constant 0 : i32
    %c0_i32_1 = arith.constant 0 : i32
    %c0_i32_2 = arith.constant 0 : i32
    return %c0_i32, %c0_i32_0, %c0_i32_1 : i32, i32, i32
  }
  func.func @transform_10(%arg0: i32) -> (i32, i32, i32) {
    %c0_i32 = arith.constant 0 : i32
    %c0_i32_0 = arith.constant 0 : i32
    %c0_i32_1 = arith.constant 0 : i32
    %c0_i32_2 = arith.constant 0 : i32
    return %c0_i32, %c0_i32_0, %c0_i32_1 : i32, i32, i32
  }
  func.func @transform_11(%arg0: i32) -> (i32, i32, i32) {
    %c0_i32 = arith.constant 0 : i32
    %c0_i32_0 = arith.constant 0 : i32
    %c0_i32_1 = arith.constant 0 : i32
    %c0_i32_2 = arith.constant 0 : i32
    return %c0_i32, %c0_i32_0, %c0_i32_1 : i32, i32, i32
  }
  func.func @transform_12(%arg0: i32) -> (i32, i32) {
    %c0_i32 = arith.constant 0 : i32
    %c0_i32_0 = arith.constant 0 : i32
    %c0_i32_1 = arith.constant 0 : i32
    return %c0_i32, %c0_i32_0 : i32, i32
  }
  func.func @transform_13(%arg0: i32) -> (i32, i32) {
    %c0_i32 = arith.constant 0 : i32
    %c0_i32_0 = arith.constant 0 : i32
    %c0_i32_1 = arith.constant 0 : i32
    return %c0_i32, %c0_i32_0 : i32, i32
  }
  func.func @transform_14(%arg0: i32) -> (i32, i32) {
    %c0_i32 = arith.constant 0 : i32
    %c0_i32_0 = arith.constant 0 : i32
    %c0_i32_1 = arith.constant 0 : i32
    return %c0_i32, %c0_i32_0 : i32, i32
  }
  func.func @transform_15(%arg0: i32) -> (i32, i32) {
    %c0_i32 = arith.constant 0 : i32
    %c0_i32_0 = arith.constant 0 : i32
    %c0_i32_1 = arith.constant 0 : i32
    return %c0_i32, %c0_i32_0 : i32, i32
  }
  func.func @transform_16(%arg0: i32) -> (i32, i32) {
    %c0_i32 = arith.constant 0 : i32
    %c0_i32_0 = arith.constant 0 : i32
    %c0_i32_1 = arith.constant 0 : i32
    return %c0_i32, %c0_i32_0 : i32, i32
  }
  func.func @transform_17(%arg0: i32) -> (i32, i32) {
    %c0_i32 = arith.constant 0 : i32
    %c0_i32_0 = arith.constant 0 : i32
    %c0_i32_1 = arith.constant 0 : i32
    return %c0_i32, %c0_i32_0 : i32, i32
  }
  func.func @transform_18(%arg0: i32) -> (i32, i32) {
    %c0_i32 = arith.constant 0 : i32
    %c0_i32_0 = arith.constant 0 : i32
    %c0_i32_1 = arith.constant 0 : i32
    return %c0_i32, %c0_i32_0 : i32, i32
  }
}

module attributes {stable_mosaic.version = 11 : i64} {
  func.func @_decoder_kernel(%arg0: i32, %arg1: memref<2x32xf32, #tpu.memory_space<vmem>>, %arg2: memref<6x2x32xf32, #tpu.memory_space<vmem>>, %arg3: memref<2x64xf32, #tpu.memory_space<vmem>>, %arg4: memref<2x64xf32, #tpu.memory_space<vmem>>, %arg5: memref<32x256xf32, #tpu.memory_space<vmem>>, %arg6: memref<64x256xf32, #tpu.memory_space<vmem>>, %arg7: memref<1x256xf32, #tpu.memory_space<vmem>>, %arg8: memref<64x100xf32, #tpu.memory_space<vmem>>, %arg9: memref<1x100xf32, #tpu.memory_space<vmem>>, %arg10: memref<6x2x100xf32, #tpu.memory_space<vmem>>, %arg11: memref<6x2x256xf32, #tpu.memory_space<vmem>>, %arg12: memref<6x2x64xf32, #tpu.memory_space<vmem>>, %arg13: memref<2x64xf32, #tpu.memory_space<vmem>>, %arg14: memref<2x64xf32, #tpu.memory_space<vmem>>) attributes {dimension_semantics = [#tpu.dimension_semantics<arbitrary>], iteration_bounds = array<i64: 1>, scalar_prefetch = 0 : i64, scratch_operands = 4 : i64, tpu.core_type = #tpu.core_type<tc>, window_params = [{pipeline_mode = #tpu.pipeline_mode<synchronous>, transform_indices = @transform_0, window_bounds = array<i64: 2, 32>}, {pipeline_mode = #tpu.pipeline_mode<synchronous>, transform_indices = @transform_1, window_bounds = array<i64: 6, 2, 32>}, {pipeline_mode = #tpu.pipeline_mode<synchronous>, transform_indices = @transform_2, window_bounds = array<i64: 2, 64>}, {pipeline_mode = #tpu.pipeline_mode<synchronous>, transform_indices = @transform_3, window_bounds = array<i64: 2, 64>}, {pipeline_mode = #tpu.pipeline_mode<synchronous>, transform_indices = @transform_4, window_bounds = array<i64: 32, 256>}, {pipeline_mode = #tpu.pipeline_mode<synchronous>, transform_indices = @transform_5, window_bounds = array<i64: 64, 256>}, {pipeline_mode = #tpu.pipeline_mode<synchronous>, transform_indices = @transform_6, window_bounds = array<i64: 1, 256>}, {pipeline_mode = #tpu.pipeline_mode<synchronous>, transform_indices = @transform_7, window_bounds = array<i64: 64, 100>}, {pipeline_mode = #tpu.pipeline_mode<synchronous>, transform_indices = @transform_8, window_bounds = array<i64: 1, 100>}, {pipeline_mode = #tpu.pipeline_mode<synchronous>, transform_indices = @transform_9, window_bounds = array<i64: 6, 2, 100>}]} {
    %c0 = arith.constant 0 : index
    %c0_0 = arith.constant 0 : index
    %0 = vector.load %arg1[%c0, %c0_0] : memref<2x32xf32, #tpu.memory_space<vmem>>, vector<2x32xf32>
    %c0_1 = arith.constant 0 : index
    %c0_2 = arith.constant 0 : index
    %1 = vector.load %arg5[%c0_1, %c0_2] : memref<32x256xf32, #tpu.memory_space<vmem>>, vector<32x256xf32>
    %cst = arith.constant dense<0.000000e+00> : vector<2x256xf32>
    %2 = tpu.matmul %0, %1, %cst {dimension_numbers = #tpu.dot_dimension_numbers<[1], [0], [0], [1], [0, 0, 1, 1], [], []>} : vector<2x32xf32>, vector<32x256xf32>, vector<2x256xf32> -> vector<2x256xf32>
    %c0_3 = arith.constant 0 : index
    %c0_4 = arith.constant 0 : index
    %3 = vector.load %arg7[%c0_3, %c0_4] : memref<1x256xf32, #tpu.memory_space<vmem>>, vector<1x256xf32>
    %4 = vector.broadcast %3 : vector<1x256xf32> to vector<2x256xf32>
    %5 = arith.addf %2, %4 : vector<2x256xf32>
    %c0_5 = arith.constant 0 : index
    %c0_6 = arith.constant 0 : index
    %6 = vector.load %arg3[%c0_5, %c0_6] : memref<2x64xf32, #tpu.memory_space<vmem>>, vector<2x64xf32>
    %c0_7 = arith.constant 0 : index
    %c0_8 = arith.constant 0 : index
    %7 = vector.load %arg4[%c0_7, %c0_8] : memref<2x64xf32, #tpu.memory_space<vmem>>, vector<2x64xf32>
    %c0_9 = arith.constant 0 : index
    %c0_10 = arith.constant 0 : index
    %8 = vector.load %arg6[%c0_9, %c0_10] : memref<64x256xf32, #tpu.memory_space<vmem>>, vector<64x256xf32>
    %cst_11 = arith.constant dense<0.000000e+00> : vector<2x256xf32>
    %9 = tpu.matmul %6, %8, %cst_11 {dimension_numbers = #tpu.dot_dimension_numbers<[1], [0], [0], [1], [0, 0, 1, 1], [], []>} : vector<2x64xf32>, vector<64x256xf32>, vector<2x256xf32> -> vector<2x256xf32>
    %10 = arith.addf %5, %9 : vector<2x256xf32>
    %11 = vector.extract_strided_slice %10 {offsets = [0, 0], sizes = [2, 64], strides = [1, 1]} : vector<2x256xf32> to vector<2x64xf32>
    %12 = arith.negf %11 : vector<2x64xf32>
    %13 = math.exp %12 : vector<2x64xf32>
    %cst_12 = arith.constant 1.000000e+00 : f32
    %14 = vector.broadcast %cst_12 : f32 to vector<2x64xf32>
    %15 = arith.addf %14, %13 : vector<2x64xf32>
    %16 = arith.divf %14, %15 : vector<2x64xf32>
    %17 = vector.extract_strided_slice %10 {offsets = [0, 64], sizes = [2, 64], strides = [1, 1]} : vector<2x256xf32> to vector<2x64xf32>
    %18 = arith.negf %17 : vector<2x64xf32>
    %19 = math.exp %18 : vector<2x64xf32>
    %cst_13 = arith.constant 1.000000e+00 : f32
    %20 = vector.broadcast %cst_13 : f32 to vector<2x64xf32>
    %21 = arith.addf %20, %19 : vector<2x64xf32>
    %22 = arith.divf %20, %21 : vector<2x64xf32>
    %23 = vector.extract_strided_slice %10 {offsets = [0, 128], sizes = [2, 64], strides = [1, 1]} : vector<2x256xf32> to vector<2x64xf32>
    %24 = math.tanh %23 : vector<2x64xf32>
    %25 = vector.extract_strided_slice %10 {offsets = [0, 192], sizes = [2, 64], strides = [1, 1]} : vector<2x256xf32> to vector<2x64xf32>
    %26 = arith.negf %25 : vector<2x64xf32>
    %27 = math.exp %26 : vector<2x64xf32>
    %cst_14 = arith.constant 1.000000e+00 : f32
    %28 = vector.broadcast %cst_14 : f32 to vector<2x64xf32>
    %29 = arith.addf %28, %27 : vector<2x64xf32>
    %30 = arith.divf %28, %29 : vector<2x64xf32>
    %31 = arith.mulf %22, %7 : vector<2x64xf32>
    %32 = arith.mulf %16, %24 : vector<2x64xf32>
    %33 = arith.addf %31, %32 : vector<2x64xf32>
    %34 = math.tanh %33 : vector<2x64xf32>
    %35 = arith.mulf %30, %34 : vector<2x64xf32>
    %c0_15 = arith.constant 0 : index
    %c0_16 = arith.constant 0 : index
    %36 = vector.load %arg13[%c0_15, %c0_16] : memref<2x64xf32, #tpu.memory_space<vmem>>, vector<2x64xf32>
    tpu.vector_store %arg13[%c0_15, %c0_16], %35 {strides = array<i32>} : memref<2x64xf32, #tpu.memory_space<vmem>>, vector<2x64xf32>,
    %c0_17 = arith.constant 0 : index
    %c0_18 = arith.constant 0 : index
    %37 = vector.load %arg14[%c0_17, %c0_18] : memref<2x64xf32, #tpu.memory_space<vmem>>, vector<2x64xf32>
    tpu.vector_store %arg14[%c0_17, %c0_18], %33 {strides = array<i32>} : memref<2x64xf32, #tpu.memory_space<vmem>>, vector<2x64xf32>,
    %c0_19 = arith.constant 0 : index
    %c0_20 = arith.constant 0 : index
    %c0_21 = arith.constant 0 : index
    %38 = vector.load %arg2[%c0_19, %c0_20, %c0_21] : memref<6x2x32xf32, #tpu.memory_space<vmem>>, vector<6x2x32xf32>
    %39 = vector.shape_cast %38 : vector<6x2x32xf32> to vector<12x32xf32>
    %c0_22 = arith.constant 0 : index
    %c0_23 = arith.constant 0 : index
    %40 = vector.load %arg5[%c0_22, %c0_23] : memref<32x256xf32, #tpu.memory_space<vmem>>, vector<32x256xf32>
    %cst_24 = arith.constant dense<0.000000e+00> : vector<12x256xf32>
    %41 = tpu.matmul %39, %40, %cst_24 {dimension_numbers = #tpu.dot_dimension_numbers<[1], [0], [0], [1], [0, 0, 1, 1], [], []>} : vector<12x32xf32>, vector<32x256xf32>, vector<12x256xf32> -> vector<12x256xf32>
    %c0_25 = arith.constant 0 : index
    %c0_26 = arith.constant 0 : index
    %42 = vector.load %arg7[%c0_25, %c0_26] : memref<1x256xf32, #tpu.memory_space<vmem>>, vector<1x256xf32>
    %43 = vector.broadcast %42 : vector<1x256xf32> to vector<12x256xf32>
    %44 = arith.addf %41, %43 : vector<12x256xf32>
    %45 = vector.shape_cast %44 : vector<12x256xf32> to vector<6x2x256xf32>
    %c0_27 = arith.constant 0 : index
    %c0_28 = arith.constant 0 : index
    %c0_29 = arith.constant 0 : index
    %46 = vector.load %arg11[%c0_27, %c0_28, %c0_29] : memref<6x2x256xf32, #tpu.memory_space<vmem>>, vector<6x2x256xf32>
    tpu.vector_store %arg11[%c0_27, %c0_28, %c0_29], %45 {strides = array<i32>} : memref<6x2x256xf32, #tpu.memory_space<vmem>>, vector<6x2x256xf32>,
    %c0_i32 = arith.constant 0 : i32
    %47 = arith.index_cast %c0_i32 : i32 to index
    %c0_30 = arith.constant 0 : index
    %c0_31 = arith.constant 0 : index
    %48 = vector.load %arg11[%47, %c0_30, %c0_31] : memref<6x2x256xf32, #tpu.memory_space<vmem>>, vector<1x2x256xf32>
    %49 = vector.shape_cast %48 : vector<1x2x256xf32> to vector<2x256xf32>
    %c0_32 = arith.constant 0 : index
    %c0_33 = arith.constant 0 : index
    %50 = vector.load %arg13[%c0_32, %c0_33] : memref<2x64xf32, #tpu.memory_space<vmem>>, vector<2x64xf32>
    %c0_34 = arith.constant 0 : index
    %c0_35 = arith.constant 0 : index
    %51 = vector.load %arg14[%c0_34, %c0_35] : memref<2x64xf32, #tpu.memory_space<vmem>>, vector<2x64xf32>
    %c0_36 = arith.constant 0 : index
    %c0_37 = arith.constant 0 : index
    %52 = vector.load %arg6[%c0_36, %c0_37] : memref<64x256xf32, #tpu.memory_space<vmem>>, vector<64x256xf32>
    %cst_38 = arith.constant dense<0.000000e+00> : vector<2x256xf32>
    %53 = tpu.matmul %50, %52, %cst_38 {dimension_numbers = #tpu.dot_dimension_numbers<[1], [0], [0], [1], [0, 0, 1, 1], [], []>} : vector<2x64xf32>, vector<64x256xf32>, vector<2x256xf32> -> vector<2x256xf32>
    %54 = arith.addf %49, %53 : vector<2x256xf32>
    %55 = vector.extract_strided_slice %54 {offsets = [0, 0], sizes = [2, 64], strides = [1, 1]} : vector<2x256xf32> to vector<2x64xf32>
    %56 = arith.negf %55 : vector<2x64xf32>
    %57 = math.exp %56 : vector<2x64xf32>
    %cst_39 = arith.constant 1.000000e+00 : f32
    %58 = vector.broadcast %cst_39 : f32 to vector<2x64xf32>
    %59 = arith.addf %58, %57 : vector<2x64xf32>
    %60 = arith.divf %58, %59 : vector<2x64xf32>
    %61 = vector.extract_strided_slice %54 {offsets = [0, 64], sizes = [2, 64], strides = [1, 1]} : vector<2x256xf32> to vector<2x64xf32>
    %62 = arith.negf %61 : vector<2x64xf32>
    %63 = math.exp %62 : vector<2x64xf32>
    %cst_40 = arith.constant 1.000000e+00 : f32
    %64 = vector.broadcast %cst_40 : f32 to vector<2x64xf32>
    %65 = arith.addf %64, %63 : vector<2x64xf32>
    %66 = arith.divf %64, %65 : vector<2x64xf32>
    %67 = vector.extract_strided_slice %54 {offsets = [0, 128], sizes = [2, 64], strides = [1, 1]} : vector<2x256xf32> to vector<2x64xf32>
    %68 = math.tanh %67 : vector<2x64xf32>
    %69 = vector.extract_strided_slice %54 {offsets = [0, 192], sizes = [2, 64], strides = [1, 1]} : vector<2x256xf32> to vector<2x64xf32>
    %70 = arith.negf %69 : vector<2x64xf32>
    %71 = math.exp %70 : vector<2x64xf32>
    %cst_41 = arith.constant 1.000000e+00 : f32
    %72 = vector.broadcast %cst_41 : f32 to vector<2x64xf32>
    %73 = arith.addf %72, %71 : vector<2x64xf32>
    %74 = arith.divf %72, %73 : vector<2x64xf32>
    %75 = arith.mulf %66, %51 : vector<2x64xf32>
    %76 = arith.mulf %60, %68 : vector<2x64xf32>
    %77 = arith.addf %75, %76 : vector<2x64xf32>
    %78 = math.tanh %77 : vector<2x64xf32>
    %79 = arith.mulf %74, %78 : vector<2x64xf32>
    %c0_42 = arith.constant 0 : index
    %c0_43 = arith.constant 0 : index
    %80 = vector.load %arg13[%c0_42, %c0_43] : memref<2x64xf32, #tpu.memory_space<vmem>>, vector<2x64xf32>
    tpu.vector_store %arg13[%c0_42, %c0_43], %79 {strides = array<i32>} : memref<2x64xf32, #tpu.memory_space<vmem>>, vector<2x64xf32>,
    %c0_44 = arith.constant 0 : index
    %c0_45 = arith.constant 0 : index
    %81 = vector.load %arg14[%c0_44, %c0_45] : memref<2x64xf32, #tpu.memory_space<vmem>>, vector<2x64xf32>
    tpu.vector_store %arg14[%c0_44, %c0_45], %77 {strides = array<i32>} : memref<2x64xf32, #tpu.memory_space<vmem>>, vector<2x64xf32>,
    %82 = arith.index_cast %c0_i32 : i32 to index
    %c0_46 = arith.constant 0 : index
    %c0_47 = arith.constant 0 : index
    %83 = vector.load %arg12[%82, %c0_46, %c0_47] : memref<6x2x64xf32, #tpu.memory_space<vmem>>, vector<1x2x64xf32>
    %84 = vector.shape_cast %83 : vector<1x2x64xf32> to vector<2x64xf32>
    %85 = vector.shape_cast %79 : vector<2x64xf32> to vector<1x2x64xf32>
    tpu.vector_store %arg12[%82, %c0_46, %c0_47], %85 {strides = array<i32>} : memref<6x2x64xf32, #tpu.memory_space<vmem>>, vector<1x2x64xf32>,
    %c1_i32 = arith.constant 1 : i32
    %86 = arith.index_cast %c1_i32 : i32 to index
    %c0_48 = arith.constant 0 : index
    %c0_49 = arith.constant 0 : index
    %87 = vector.load %arg11[%86, %c0_48, %c0_49] : memref<6x2x256xf32, #tpu.memory_space<vmem>>, vector<1x2x256xf32>
    %88 = vector.shape_cast %87 : vector<1x2x256xf32> to vector<2x256xf32>
    %c0_50 = arith.constant 0 : index
    %c0_51 = arith.constant 0 : index
    %89 = vector.load %arg13[%c0_50, %c0_51] : memref<2x64xf32, #tpu.memory_space<vmem>>, vector<2x64xf32>
    %c0_52 = arith.constant 0 : index
    %c0_53 = arith.constant 0 : index
    %90 = vector.load %arg14[%c0_52, %c0_53] : memref<2x64xf32, #tpu.memory_space<vmem>>, vector<2x64xf32>
    %c0_54 = arith.constant 0 : index
    %c0_55 = arith.constant 0 : index
    %91 = vector.load %arg6[%c0_54, %c0_55] : memref<64x256xf32, #tpu.memory_space<vmem>>, vector<64x256xf32>
    %cst_56 = arith.constant dense<0.000000e+00> : vector<2x256xf32>
    %92 = tpu.matmul %89, %91, %cst_56 {dimension_numbers = #tpu.dot_dimension_numbers<[1], [0], [0], [1], [0, 0, 1, 1], [], []>} : vector<2x64xf32>, vector<64x256xf32>, vector<2x256xf32> -> vector<2x256xf32>
    %93 = arith.addf %88, %92 : vector<2x256xf32>
    %94 = vector.extract_strided_slice %93 {offsets = [0, 0], sizes = [2, 64], strides = [1, 1]} : vector<2x256xf32> to vector<2x64xf32>
    %95 = arith.negf %94 : vector<2x64xf32>
    %96 = math.exp %95 : vector<2x64xf32>
    %cst_57 = arith.constant 1.000000e+00 : f32
    %97 = vector.broadcast %cst_57 : f32 to vector<2x64xf32>
    %98 = arith.addf %97, %96 : vector<2x64xf32>
    %99 = arith.divf %97, %98 : vector<2x64xf32>
    %100 = vector.extract_strided_slice %93 {offsets = [0, 64], sizes = [2, 64], strides = [1, 1]} : vector<2x256xf32> to vector<2x64xf32>
    %101 = arith.negf %100 : vector<2x64xf32>
    %102 = math.exp %101 : vector<2x64xf32>
    %cst_58 = arith.constant 1.000000e+00 : f32
    %103 = vector.broadcast %cst_58 : f32 to vector<2x64xf32>
    %104 = arith.addf %103, %102 : vector<2x64xf32>
    %105 = arith.divf %103, %104 : vector<2x64xf32>
    %106 = vector.extract_strided_slice %93 {offsets = [0, 128], sizes = [2, 64], strides = [1, 1]} : vector<2x256xf32> to vector<2x64xf32>
    %107 = math.tanh %106 : vector<2x64xf32>
    %108 = vector.extract_strided_slice %93 {offsets = [0, 192], sizes = [2, 64], strides = [1, 1]} : vector<2x256xf32> to vector<2x64xf32>
    %109 = arith.negf %108 : vector<2x64xf32>
    %110 = math.exp %109 : vector<2x64xf32>
    %cst_59 = arith.constant 1.000000e+00 : f32
    %111 = vector.broadcast %cst_59 : f32 to vector<2x64xf32>
    %112 = arith.addf %111, %110 : vector<2x64xf32>
    %113 = arith.divf %111, %112 : vector<2x64xf32>
    %114 = arith.mulf %105, %90 : vector<2x64xf32>
    %115 = arith.mulf %99, %107 : vector<2x64xf32>
    %116 = arith.addf %114, %115 : vector<2x64xf32>
    %117 = math.tanh %116 : vector<2x64xf32>
    %118 = arith.mulf %113, %117 : vector<2x64xf32>
    %c0_60 = arith.constant 0 : index
    %c0_61 = arith.constant 0 : index
    %119 = vector.load %arg13[%c0_60, %c0_61] : memref<2x64xf32, #tpu.memory_space<vmem>>, vector<2x64xf32>
    tpu.vector_store %arg13[%c0_60, %c0_61], %118 {strides = array<i32>} : memref<2x64xf32, #tpu.memory_space<vmem>>, vector<2x64xf32>,
    %c0_62 = arith.constant 0 : index
    %c0_63 = arith.constant 0 : index
    %120 = vector.load %arg14[%c0_62, %c0_63] : memref<2x64xf32, #tpu.memory_space<vmem>>, vector<2x64xf32>
    tpu.vector_store %arg14[%c0_62, %c0_63], %116 {strides = array<i32>} : memref<2x64xf32, #tpu.memory_space<vmem>>, vector<2x64xf32>,
    %121 = arith.index_cast %c1_i32 : i32 to index
    %c0_64 = arith.constant 0 : index
    %c0_65 = arith.constant 0 : index
    %122 = vector.load %arg12[%121, %c0_64, %c0_65] : memref<6x2x64xf32, #tpu.memory_space<vmem>>, vector<1x2x64xf32>
    %123 = vector.shape_cast %122 : vector<1x2x64xf32> to vector<2x64xf32>
    %124 = vector.shape_cast %118 : vector<2x64xf32> to vector<1x2x64xf32>
    tpu.vector_store %arg12[%121, %c0_64, %c0_65], %124 {strides = array<i32>} : memref<6x2x64xf32, #tpu.memory_space<vmem>>, vector<1x2x64xf32>,
    %c2_i32 = arith.constant 2 : i32
    %125 = arith.index_cast %c2_i32 : i32 to index
    %c0_66 = arith.constant 0 : index
    %c0_67 = arith.constant 0 : index
    %126 = vector.load %arg11[%125, %c0_66, %c0_67] : memref<6x2x256xf32, #tpu.memory_space<vmem>>, vector<1x2x256xf32>
    %127 = vector.shape_cast %126 : vector<1x2x256xf32> to vector<2x256xf32>
    %c0_68 = arith.constant 0 : index
    %c0_69 = arith.constant 0 : index
    %128 = vector.load %arg13[%c0_68, %c0_69] : memref<2x64xf32, #tpu.memory_space<vmem>>, vector<2x64xf32>
    %c0_70 = arith.constant 0 : index
    %c0_71 = arith.constant 0 : index
    %129 = vector.load %arg14[%c0_70, %c0_71] : memref<2x64xf32, #tpu.memory_space<vmem>>, vector<2x64xf32>
    %c0_72 = arith.constant 0 : index
    %c0_73 = arith.constant 0 : index
    %130 = vector.load %arg6[%c0_72, %c0_73] : memref<64x256xf32, #tpu.memory_space<vmem>>, vector<64x256xf32>
    %cst_74 = arith.constant dense<0.000000e+00> : vector<2x256xf32>
    %131 = tpu.matmul %128, %130, %cst_74 {dimension_numbers = #tpu.dot_dimension_numbers<[1], [0], [0], [1], [0, 0, 1, 1], [], []>} : vector<2x64xf32>, vector<64x256xf32>, vector<2x256xf32> -> vector<2x256xf32>
    %132 = arith.addf %127, %131 : vector<2x256xf32>
    %133 = vector.extract_strided_slice %132 {offsets = [0, 0], sizes = [2, 64], strides = [1, 1]} : vector<2x256xf32> to vector<2x64xf32>
    %134 = arith.negf %133 : vector<2x64xf32>
    %135 = math.exp %134 : vector<2x64xf32>
    %cst_75 = arith.constant 1.000000e+00 : f32
    %136 = vector.broadcast %cst_75 : f32 to vector<2x64xf32>
    %137 = arith.addf %136, %135 : vector<2x64xf32>
    %138 = arith.divf %136, %137 : vector<2x64xf32>
    %139 = vector.extract_strided_slice %132 {offsets = [0, 64], sizes = [2, 64], strides = [1, 1]} : vector<2x256xf32> to vector<2x64xf32>
    %140 = arith.negf %139 : vector<2x64xf32>
    %141 = math.exp %140 : vector<2x64xf32>
    %cst_76 = arith.constant 1.000000e+00 : f32
    %142 = vector.broadcast %cst_76 : f32 to vector<2x64xf32>
    %143 = arith.addf %142, %141 : vector<2x64xf32>
    %144 = arith.divf %142, %143 : vector<2x64xf32>
    %145 = vector.extract_strided_slice %132 {offsets = [0, 128], sizes = [2, 64], strides = [1, 1]} : vector<2x256xf32> to vector<2x64xf32>
    %146 = math.tanh %145 : vector<2x64xf32>
    %147 = vector.extract_strided_slice %132 {offsets = [0, 192], sizes = [2, 64], strides = [1, 1]} : vector<2x256xf32> to vector<2x64xf32>
    %148 = arith.negf %147 : vector<2x64xf32>
    %149 = math.exp %148 : vector<2x64xf32>
    %cst_77 = arith.constant 1.000000e+00 : f32
    %150 = vector.broadcast %cst_77 : f32 to vector<2x64xf32>
    %151 = arith.addf %150, %149 : vector<2x64xf32>
    %152 = arith.divf %150, %151 : vector<2x64xf32>
    %153 = arith.mulf %144, %129 : vector<2x64xf32>
    %154 = arith.mulf %138, %146 : vector<2x64xf32>
    %155 = arith.addf %153, %154 : vector<2x64xf32>
    %156 = math.tanh %155 : vector<2x64xf32>
    %157 = arith.mulf %152, %156 : vector<2x64xf32>
    %c0_78 = arith.constant 0 : index
    %c0_79 = arith.constant 0 : index
    %158 = vector.load %arg13[%c0_78, %c0_79] : memref<2x64xf32, #tpu.memory_space<vmem>>, vector<2x64xf32>
    tpu.vector_store %arg13[%c0_78, %c0_79], %157 {strides = array<i32>} : memref<2x64xf32, #tpu.memory_space<vmem>>, vector<2x64xf32>,
    %c0_80 = arith.constant 0 : index
    %c0_81 = arith.constant 0 : index
    %159 = vector.load %arg14[%c0_80, %c0_81] : memref<2x64xf32, #tpu.memory_space<vmem>>, vector<2x64xf32>
    tpu.vector_store %arg14[%c0_80, %c0_81], %155 {strides = array<i32>} : memref<2x64xf32, #tpu.memory_space<vmem>>, vector<2x64xf32>,
    %160 = arith.index_cast %c2_i32 : i32 to index
    %c0_82 = arith.constant 0 : index
    %c0_83 = arith.constant 0 : index
    %161 = vector.load %arg12[%160, %c0_82, %c0_83] : memref<6x2x64xf32, #tpu.memory_space<vmem>>, vector<1x2x64xf32>
    %162 = vector.shape_cast %161 : vector<1x2x64xf32> to vector<2x64xf32>
    %163 = vector.shape_cast %157 : vector<2x64xf32> to vector<1x2x64xf32>
    tpu.vector_store %arg12[%160, %c0_82, %c0_83], %163 {strides = array<i32>} : memref<6x2x64xf32, #tpu.memory_space<vmem>>, vector<1x2x64xf32>,
    %c3_i32 = arith.constant 3 : i32
    %164 = arith.index_cast %c3_i32 : i32 to index
    %c0_84 = arith.constant 0 : index
    %c0_85 = arith.constant 0 : index
    %165 = vector.load %arg11[%164, %c0_84, %c0_85] : memref<6x2x256xf32, #tpu.memory_space<vmem>>, vector<1x2x256xf32>
    %166 = vector.shape_cast %165 : vector<1x2x256xf32> to vector<2x256xf32>
    %c0_86 = arith.constant 0 : index
    %c0_87 = arith.constant 0 : index
    %167 = vector.load %arg13[%c0_86, %c0_87] : memref<2x64xf32, #tpu.memory_space<vmem>>, vector<2x64xf32>
    %c0_88 = arith.constant 0 : index
    %c0_89 = arith.constant 0 : index
    %168 = vector.load %arg14[%c0_88, %c0_89] : memref<2x64xf32, #tpu.memory_space<vmem>>, vector<2x64xf32>
    %c0_90 = arith.constant 0 : index
    %c0_91 = arith.constant 0 : index
    %169 = vector.load %arg6[%c0_90, %c0_91] : memref<64x256xf32, #tpu.memory_space<vmem>>, vector<64x256xf32>
    %cst_92 = arith.constant dense<0.000000e+00> : vector<2x256xf32>
    %170 = tpu.matmul %167, %169, %cst_92 {dimension_numbers = #tpu.dot_dimension_numbers<[1], [0], [0], [1], [0, 0, 1, 1], [], []>} : vector<2x64xf32>, vector<64x256xf32>, vector<2x256xf32> -> vector<2x256xf32>
    %171 = arith.addf %166, %170 : vector<2x256xf32>
    %172 = vector.extract_strided_slice %171 {offsets = [0, 0], sizes = [2, 64], strides = [1, 1]} : vector<2x256xf32> to vector<2x64xf32>
    %173 = arith.negf %172 : vector<2x64xf32>
    %174 = math.exp %173 : vector<2x64xf32>
    %cst_93 = arith.constant 1.000000e+00 : f32
    %175 = vector.broadcast %cst_93 : f32 to vector<2x64xf32>
    %176 = arith.addf %175, %174 : vector<2x64xf32>
    %177 = arith.divf %175, %176 : vector<2x64xf32>
    %178 = vector.extract_strided_slice %171 {offsets = [0, 64], sizes = [2, 64], strides = [1, 1]} : vector<2x256xf32> to vector<2x64xf32>
    %179 = arith.negf %178 : vector<2x64xf32>
    %180 = math.exp %179 : vector<2x64xf32>
    %cst_94 = arith.constant 1.000000e+00 : f32
    %181 = vector.broadcast %cst_94 : f32 to vector<2x64xf32>
    %182 = arith.addf %181, %180 : vector<2x64xf32>
    %183 = arith.divf %181, %182 : vector<2x64xf32>
    %184 = vector.extract_strided_slice %171 {offsets = [0, 128], sizes = [2, 64], strides = [1, 1]} : vector<2x256xf32> to vector<2x64xf32>
    %185 = math.tanh %184 : vector<2x64xf32>
    %186 = vector.extract_strided_slice %171 {offsets = [0, 192], sizes = [2, 64], strides = [1, 1]} : vector<2x256xf32> to vector<2x64xf32>
    %187 = arith.negf %186 : vector<2x64xf32>
    %188 = math.exp %187 : vector<2x64xf32>
    %cst_95 = arith.constant 1.000000e+00 : f32
    %189 = vector.broadcast %cst_95 : f32 to vector<2x64xf32>
    %190 = arith.addf %189, %188 : vector<2x64xf32>
    %191 = arith.divf %189, %190 : vector<2x64xf32>
    %192 = arith.mulf %183, %168 : vector<2x64xf32>
    %193 = arith.mulf %177, %185 : vector<2x64xf32>
    %194 = arith.addf %192, %193 : vector<2x64xf32>
    %195 = math.tanh %194 : vector<2x64xf32>
    %196 = arith.mulf %191, %195 : vector<2x64xf32>
    %c0_96 = arith.constant 0 : index
    %c0_97 = arith.constant 0 : index
    %197 = vector.load %arg13[%c0_96, %c0_97] : memref<2x64xf32, #tpu.memory_space<vmem>>, vector<2x64xf32>
    tpu.vector_store %arg13[%c0_96, %c0_97], %196 {strides = array<i32>} : memref<2x64xf32, #tpu.memory_space<vmem>>, vector<2x64xf32>,
    %c0_98 = arith.constant 0 : index
    %c0_99 = arith.constant 0 : index
    %198 = vector.load %arg14[%c0_98, %c0_99] : memref<2x64xf32, #tpu.memory_space<vmem>>, vector<2x64xf32>
    tpu.vector_store %arg14[%c0_98, %c0_99], %194 {strides = array<i32>} : memref<2x64xf32, #tpu.memory_space<vmem>>, vector<2x64xf32>,
    %199 = arith.index_cast %c3_i32 : i32 to index
    %c0_100 = arith.constant 0 : index
    %c0_101 = arith.constant 0 : index
    %200 = vector.load %arg12[%199, %c0_100, %c0_101] : memref<6x2x64xf32, #tpu.memory_space<vmem>>, vector<1x2x64xf32>
    %201 = vector.shape_cast %200 : vector<1x2x64xf32> to vector<2x64xf32>
    %202 = vector.shape_cast %196 : vector<2x64xf32> to vector<1x2x64xf32>
    tpu.vector_store %arg12[%199, %c0_100, %c0_101], %202 {strides = array<i32>} : memref<6x2x64xf32, #tpu.memory_space<vmem>>, vector<1x2x64xf32>,
    %c4_i32 = arith.constant 4 : i32
    %203 = arith.index_cast %c4_i32 : i32 to index
    %c0_102 = arith.constant 0 : index
    %c0_103 = arith.constant 0 : index
    %204 = vector.load %arg11[%203, %c0_102, %c0_103] : memref<6x2x256xf32, #tpu.memory_space<vmem>>, vector<1x2x256xf32>
    %205 = vector.shape_cast %204 : vector<1x2x256xf32> to vector<2x256xf32>
    %c0_104 = arith.constant 0 : index
    %c0_105 = arith.constant 0 : index
    %206 = vector.load %arg13[%c0_104, %c0_105] : memref<2x64xf32, #tpu.memory_space<vmem>>, vector<2x64xf32>
    %c0_106 = arith.constant 0 : index
    %c0_107 = arith.constant 0 : index
    %207 = vector.load %arg14[%c0_106, %c0_107] : memref<2x64xf32, #tpu.memory_space<vmem>>, vector<2x64xf32>
    %c0_108 = arith.constant 0 : index
    %c0_109 = arith.constant 0 : index
    %208 = vector.load %arg6[%c0_108, %c0_109] : memref<64x256xf32, #tpu.memory_space<vmem>>, vector<64x256xf32>
    %cst_110 = arith.constant dense<0.000000e+00> : vector<2x256xf32>
    %209 = tpu.matmul %206, %208, %cst_110 {dimension_numbers = #tpu.dot_dimension_numbers<[1], [0], [0], [1], [0, 0, 1, 1], [], []>} : vector<2x64xf32>, vector<64x256xf32>, vector<2x256xf32> -> vector<2x256xf32>
    %210 = arith.addf %205, %209 : vector<2x256xf32>
    %211 = vector.extract_strided_slice %210 {offsets = [0, 0], sizes = [2, 64], strides = [1, 1]} : vector<2x256xf32> to vector<2x64xf32>
    %212 = arith.negf %211 : vector<2x64xf32>
    %213 = math.exp %212 : vector<2x64xf32>
    %cst_111 = arith.constant 1.000000e+00 : f32
    %214 = vector.broadcast %cst_111 : f32 to vector<2x64xf32>
    %215 = arith.addf %214, %213 : vector<2x64xf32>
    %216 = arith.divf %214, %215 : vector<2x64xf32>
    %217 = vector.extract_strided_slice %210 {offsets = [0, 64], sizes = [2, 64], strides = [1, 1]} : vector<2x256xf32> to vector<2x64xf32>
    %218 = arith.negf %217 : vector<2x64xf32>
    %219 = math.exp %218 : vector<2x64xf32>
    %cst_112 = arith.constant 1.000000e+00 : f32
    %220 = vector.broadcast %cst_112 : f32 to vector<2x64xf32>
    %221 = arith.addf %220, %219 : vector<2x64xf32>
    %222 = arith.divf %220, %221 : vector<2x64xf32>
    %223 = vector.extract_strided_slice %210 {offsets = [0, 128], sizes = [2, 64], strides = [1, 1]} : vector<2x256xf32> to vector<2x64xf32>
    %224 = math.tanh %223 : vector<2x64xf32>
    %225 = vector.extract_strided_slice %210 {offsets = [0, 192], sizes = [2, 64], strides = [1, 1]} : vector<2x256xf32> to vector<2x64xf32>
    %226 = arith.negf %225 : vector<2x64xf32>
    %227 = math.exp %226 : vector<2x64xf32>
    %cst_113 = arith.constant 1.000000e+00 : f32
    %228 = vector.broadcast %cst_113 : f32 to vector<2x64xf32>
    %229 = arith.addf %228, %227 : vector<2x64xf32>
    %230 = arith.divf %228, %229 : vector<2x64xf32>
    %231 = arith.mulf %222, %207 : vector<2x64xf32>
    %232 = arith.mulf %216, %224 : vector<2x64xf32>
    %233 = arith.addf %231, %232 : vector<2x64xf32>
    %234 = math.tanh %233 : vector<2x64xf32>
    %235 = arith.mulf %230, %234 : vector<2x64xf32>
    %c0_114 = arith.constant 0 : index
    %c0_115 = arith.constant 0 : index
    %236 = vector.load %arg13[%c0_114, %c0_115] : memref<2x64xf32, #tpu.memory_space<vmem>>, vector<2x64xf32>
    tpu.vector_store %arg13[%c0_114, %c0_115], %235 {strides = array<i32>} : memref<2x64xf32, #tpu.memory_space<vmem>>, vector<2x64xf32>,
    %c0_116 = arith.constant 0 : index
    %c0_117 = arith.constant 0 : index
    %237 = vector.load %arg14[%c0_116, %c0_117] : memref<2x64xf32, #tpu.memory_space<vmem>>, vector<2x64xf32>
    tpu.vector_store %arg14[%c0_116, %c0_117], %233 {strides = array<i32>} : memref<2x64xf32, #tpu.memory_space<vmem>>, vector<2x64xf32>,
    %238 = arith.index_cast %c4_i32 : i32 to index
    %c0_118 = arith.constant 0 : index
    %c0_119 = arith.constant 0 : index
    %239 = vector.load %arg12[%238, %c0_118, %c0_119] : memref<6x2x64xf32, #tpu.memory_space<vmem>>, vector<1x2x64xf32>
    %240 = vector.shape_cast %239 : vector<1x2x64xf32> to vector<2x64xf32>
    %241 = vector.shape_cast %235 : vector<2x64xf32> to vector<1x2x64xf32>
    tpu.vector_store %arg12[%238, %c0_118, %c0_119], %241 {strides = array<i32>} : memref<6x2x64xf32, #tpu.memory_space<vmem>>, vector<1x2x64xf32>,
    %c5_i32 = arith.constant 5 : i32
    %242 = arith.index_cast %c5_i32 : i32 to index
    %c0_120 = arith.constant 0 : index
    %c0_121 = arith.constant 0 : index
    %243 = vector.load %arg11[%242, %c0_120, %c0_121] : memref<6x2x256xf32, #tpu.memory_space<vmem>>, vector<1x2x256xf32>
    %244 = vector.shape_cast %243 : vector<1x2x256xf32> to vector<2x256xf32>
    %c0_122 = arith.constant 0 : index
    %c0_123 = arith.constant 0 : index
    %245 = vector.load %arg13[%c0_122, %c0_123] : memref<2x64xf32, #tpu.memory_space<vmem>>, vector<2x64xf32>
    %c0_124 = arith.constant 0 : index
    %c0_125 = arith.constant 0 : index
    %246 = vector.load %arg14[%c0_124, %c0_125] : memref<2x64xf32, #tpu.memory_space<vmem>>, vector<2x64xf32>
    %c0_126 = arith.constant 0 : index
    %c0_127 = arith.constant 0 : index
    %247 = vector.load %arg6[%c0_126, %c0_127] : memref<64x256xf32, #tpu.memory_space<vmem>>, vector<64x256xf32>
    %cst_128 = arith.constant dense<0.000000e+00> : vector<2x256xf32>
    %248 = tpu.matmul %245, %247, %cst_128 {dimension_numbers = #tpu.dot_dimension_numbers<[1], [0], [0], [1], [0, 0, 1, 1], [], []>} : vector<2x64xf32>, vector<64x256xf32>, vector<2x256xf32> -> vector<2x256xf32>
    %249 = arith.addf %244, %248 : vector<2x256xf32>
    %250 = vector.extract_strided_slice %249 {offsets = [0, 0], sizes = [2, 64], strides = [1, 1]} : vector<2x256xf32> to vector<2x64xf32>
    %251 = arith.negf %250 : vector<2x64xf32>
    %252 = math.exp %251 : vector<2x64xf32>
    %cst_129 = arith.constant 1.000000e+00 : f32
    %253 = vector.broadcast %cst_129 : f32 to vector<2x64xf32>
    %254 = arith.addf %253, %252 : vector<2x64xf32>
    %255 = arith.divf %253, %254 : vector<2x64xf32>
    %256 = vector.extract_strided_slice %249 {offsets = [0, 64], sizes = [2, 64], strides = [1, 1]} : vector<2x256xf32> to vector<2x64xf32>
    %257 = arith.negf %256 : vector<2x64xf32>
    %258 = math.exp %257 : vector<2x64xf32>
    %cst_130 = arith.constant 1.000000e+00 : f32
    %259 = vector.broadcast %cst_130 : f32 to vector<2x64xf32>
    %260 = arith.addf %259, %258 : vector<2x64xf32>
    %261 = arith.divf %259, %260 : vector<2x64xf32>
    %262 = vector.extract_strided_slice %249 {offsets = [0, 128], sizes = [2, 64], strides = [1, 1]} : vector<2x256xf32> to vector<2x64xf32>
    %263 = math.tanh %262 : vector<2x64xf32>
    %264 = vector.extract_strided_slice %249 {offsets = [0, 192], sizes = [2, 64], strides = [1, 1]} : vector<2x256xf32> to vector<2x64xf32>
    %265 = arith.negf %264 : vector<2x64xf32>
    %266 = math.exp %265 : vector<2x64xf32>
    %cst_131 = arith.constant 1.000000e+00 : f32
    %267 = vector.broadcast %cst_131 : f32 to vector<2x64xf32>
    %268 = arith.addf %267, %266 : vector<2x64xf32>
    %269 = arith.divf %267, %268 : vector<2x64xf32>
    %270 = arith.mulf %261, %246 : vector<2x64xf32>
    %271 = arith.mulf %255, %263 : vector<2x64xf32>
    %272 = arith.addf %270, %271 : vector<2x64xf32>
    %273 = math.tanh %272 : vector<2x64xf32>
    %274 = arith.mulf %269, %273 : vector<2x64xf32>
    %c0_132 = arith.constant 0 : index
    %c0_133 = arith.constant 0 : index
    %275 = vector.load %arg13[%c0_132, %c0_133] : memref<2x64xf32, #tpu.memory_space<vmem>>, vector<2x64xf32>
    tpu.vector_store %arg13[%c0_132, %c0_133], %274 {strides = array<i32>} : memref<2x64xf32, #tpu.memory_space<vmem>>, vector<2x64xf32>,
    %c0_134 = arith.constant 0 : index
    %c0_135 = arith.constant 0 : index
    %276 = vector.load %arg14[%c0_134, %c0_135] : memref<2x64xf32, #tpu.memory_space<vmem>>, vector<2x64xf32>
    tpu.vector_store %arg14[%c0_134, %c0_135], %272 {strides = array<i32>} : memref<2x64xf32, #tpu.memory_space<vmem>>, vector<2x64xf32>,
    %277 = arith.index_cast %c5_i32 : i32 to index
    %c0_136 = arith.constant 0 : index
    %c0_137 = arith.constant 0 : index
    %278 = vector.load %arg12[%277, %c0_136, %c0_137] : memref<6x2x64xf32, #tpu.memory_space<vmem>>, vector<1x2x64xf32>
    %279 = vector.shape_cast %278 : vector<1x2x64xf32> to vector<2x64xf32>
    %280 = vector.shape_cast %274 : vector<2x64xf32> to vector<1x2x64xf32>
    tpu.vector_store %arg12[%277, %c0_136, %c0_137], %280 {strides = array<i32>} : memref<6x2x64xf32, #tpu.memory_space<vmem>>, vector<1x2x64xf32>,
    %c6_i32 = arith.constant 6 : i32
    %c0_138 = arith.constant 0 : index
    %c0_139 = arith.constant 0 : index
    %c0_140 = arith.constant 0 : index
    %281 = vector.load %arg12[%c0_138, %c0_139, %c0_140] : memref<6x2x64xf32, #tpu.memory_space<vmem>>, vector<6x2x64xf32>
    %282 = vector.shape_cast %281 : vector<6x2x64xf32> to vector<12x64xf32>
    %c0_141 = arith.constant 0 : index
    %c0_142 = arith.constant 0 : index
    %283 = vector.load %arg8[%c0_141, %c0_142] : memref<64x100xf32, #tpu.memory_space<vmem>>, vector<64x100xf32>
    %cst_143 = arith.constant dense<0.000000e+00> : vector<12x100xf32>
    %284 = tpu.matmul %282, %283, %cst_143 {dimension_numbers = #tpu.dot_dimension_numbers<[1], [0], [0], [1], [0, 0, 1, 1], [], []>} : vector<12x64xf32>, vector<64x100xf32>, vector<12x100xf32> -> vector<12x100xf32>
    %c0_144 = arith.constant 0 : index
    %c0_145 = arith.constant 0 : index
    %285 = vector.load %arg9[%c0_144, %c0_145] : memref<1x100xf32, #tpu.memory_space<vmem>>, vector<1x100xf32>
    %286 = vector.broadcast %285 : vector<1x100xf32> to vector<12x100xf32>
    %287 = arith.addf %284, %286 : vector<12x100xf32>
    %288 = vector.shape_cast %287 : vector<12x100xf32> to vector<6x2x100xf32>
    %c0_146 = arith.constant 0 : index
    %c0_147 = arith.constant 0 : index
    %c0_148 = arith.constant 0 : index
    %289 = vector.load %arg10[%c0_146, %c0_147, %c0_148] : memref<6x2x100xf32, #tpu.memory_space<vmem>>, vector<6x2x100xf32>
    tpu.vector_store %arg10[%c0_146, %c0_147, %c0_148], %288 {strides = array<i32>} : memref<6x2x100xf32, #tpu.memory_space<vmem>>, vector<6x2x100xf32>,
    return
  }
  func.func @transform_0(%arg0: i32) -> (i32, i32) {
    %c0_i32 = arith.constant 0 : i32
    %c0_i32_0 = arith.constant 0 : i32
    %c0_i32_1 = arith.constant 0 : i32
    return %c0_i32, %c0_i32_0 : i32, i32
  }
  func.func @transform_1(%arg0: i32) -> (i32, i32, i32) {
    %c0_i32 = arith.constant 0 : i32
    %c0_i32_0 = arith.constant 0 : i32
    %c0_i32_1 = arith.constant 0 : i32
    %c0_i32_2 = arith.constant 0 : i32
    return %c0_i32, %c0_i32_0, %c0_i32_1 : i32, i32, i32
  }
  func.func @transform_2(%arg0: i32) -> (i32, i32) {
    %c0_i32 = arith.constant 0 : i32
    %c0_i32_0 = arith.constant 0 : i32
    %c0_i32_1 = arith.constant 0 : i32
    return %c0_i32, %c0_i32_0 : i32, i32
  }
  func.func @transform_3(%arg0: i32) -> (i32, i32) {
    %c0_i32 = arith.constant 0 : i32
    %c0_i32_0 = arith.constant 0 : i32
    %c0_i32_1 = arith.constant 0 : i32
    return %c0_i32, %c0_i32_0 : i32, i32
  }
  func.func @transform_4(%arg0: i32) -> (i32, i32) {
    %c0_i32 = arith.constant 0 : i32
    %c0_i32_0 = arith.constant 0 : i32
    %c0_i32_1 = arith.constant 0 : i32
    return %c0_i32, %c0_i32_0 : i32, i32
  }
  func.func @transform_5(%arg0: i32) -> (i32, i32) {
    %c0_i32 = arith.constant 0 : i32
    %c0_i32_0 = arith.constant 0 : i32
    %c0_i32_1 = arith.constant 0 : i32
    return %c0_i32, %c0_i32_0 : i32, i32
  }
  func.func @transform_6(%arg0: i32) -> (i32, i32) {
    %c0_i32 = arith.constant 0 : i32
    %c0_i32_0 = arith.constant 0 : i32
    %c0_i32_1 = arith.constant 0 : i32
    return %c0_i32, %c0_i32_0 : i32, i32
  }
  func.func @transform_7(%arg0: i32) -> (i32, i32) {
    %c0_i32 = arith.constant 0 : i32
    %c0_i32_0 = arith.constant 0 : i32
    %c0_i32_1 = arith.constant 0 : i32
    return %c0_i32, %c0_i32_0 : i32, i32
  }
  func.func @transform_8(%arg0: i32) -> (i32, i32) {
    %c0_i32 = arith.constant 0 : i32
    %c0_i32_0 = arith.constant 0 : i32
    %c0_i32_1 = arith.constant 0 : i32
    return %c0_i32, %c0_i32_0 : i32, i32
  }
  func.func @transform_9(%arg0: i32) -> (i32, i32, i32) {
    %c0_i32 = arith.constant 0 : i32
    %c0_i32_0 = arith.constant 0 : i32
    %c0_i32_1 = arith.constant 0 : i32
    %c0_i32_2 = arith.constant 0 : i32
    return %c0_i32, %c0_i32_0, %c0_i32_1 : i32, i32, i32
  }
}

</mosaic_0001>

<llo_original>
// kernel: forward.5
$region0: #{forward.5}
  #allocation0 [shape = 'u32[]', space=smem, size = 0x4, offset = 0x4, fixed_abs, tag = 'smem constant byte address 0x4 - core index']
  #allocation1 [shape = 'u32[144,128]{1,0:T(1,128)}', space=vmem, size = 0x12000, scoped, tag = 'internal scratch']
  #allocation2 [shape = 'f32[8,8,256]{2,1,0:T(8,128)}', space=vmem, size = 0x10000, scoped, tag = 'scratch operand']
  #allocation3 [shape = 'f32[8,64]{1,0:T(8,128)}', space=vmem, size = 0x1000, scoped, tag = 'scratch operand']
  #allocation4 [shape = 'f32[8,64]{1,0:T(8,128)}', space=vmem, size = 0x1000, scoped, tag = 'scratch operand']
  %s0 = inlined_call_operand.vmem [shape: f32[8,8,32], index: 0, kind: input, shape index: {}]
  %s1 = inlined_call_operand.vmem [shape: f32[32,256], index: 1, kind: input, shape index: {}]
  %s2 = inlined_call_operand.vmem [shape: f32[64,256], index: 2, kind: input, shape index: {}]
  %s3 = inlined_call_operand.vmem [shape: f32[1,256], index: 3, kind: input, shape index: {}]
  %s4 = inlined_call_operand.vmem [shape: f32[8,64], index: 4, kind: output, shape index: {0}]
  %s5 = inlined_call_operand.hbm [shape: f32[8,64], index: 5, kind: output, shape index: {1}]
  %6 = xla_tuple %s4, %s5
  %s7 = sld [smem:[#allocation0]]
  $region34: #{forward.5} parent=0
    _
  %s9 = ssub.s32 1, %s7
  %s10 = scalar_select 0, %s9, %s7
  $region1: #{forward.5} parent=0
    #allocation5 [shape = 'u8[4096]{0}', space=vmem, size = 0x1000, scoped, tag = 'output window, operand 1, single buffered']
    #allocation6 [shape = 's32[1]{0}', space=sflag, size = 0x4, scoped, tag = 'scoped memory for forward.5']
    %11 = vsyncpa [#allocation6], 0
    // Predicated region
    $region2: #{forward.5} parent=1 // pred_check
      _
    $region3: #{forward.5} parent=1 // pred_check_branch
      %13 = sbr.rel (0) target = $region5
    $region4: #{forward.5} parent=1 // pred_region
      _
    $region5: #{forward.5} parent=1 // pred_fallthru
      _
    // Predicated region
    $region6: #{forward.5} parent=1 // pred_check
      _
    $region7: #{forward.5} parent=1 // pred_check_branch
      %15 = sbr.rel (0) target = $region9
    $region8: #{forward.5} parent=1 // pred_region
      _
    $region9: #{forward.5} parent=1 // pred_fallthru
      _
    // Predicated region
    $region10: #{forward.5} parent=1 // pred_check
      _
    $region11: #{forward.5} parent=1 // pred_check_branch
      %17 = sbr.rel (0) target = $region13
    $region12: #{forward.5} parent=1 // pred_region
      _
    $region13: #{forward.5} parent=1 // pred_fallthru
      _
    // Predicated region
    $region14: #{forward.5} parent=1 // pred_check
      _
    $region15: #{forward.5} parent=1 // pred_check_branch
      %19 = sbr.rel (0) target = $region17
    $region16: #{forward.5} parent=1 // pred_region
      _
    $region17: #{forward.5} parent=1 // pred_fallthru
      _
    %v20 = vld [vmem:[%s0] sm:$0xff]
    %v21 = vld [vmem:[%s0 + $0x8] sm:$0xff]
    %v22 = vld [vmem:[%s0 + $0x10] sm:$0xff]
    %v23 = vld [vmem:[%s0 + $0x18] sm:$0xff]
    %v24 = vld [vmem:[%s0 + $0x20] sm:$0xff]
    %v25 = vld [vmem:[%s0 + $0x28] sm:$0xff]
    %v26 = vld [vmem:[%s0 + $0x30] sm:$0xff]
    %v27 = vld [vmem:[%s0 + $0x38] sm:$0xff]
    %v28 = vld [vmem:[%s1] sm:$0xff]
    %v29 = vld [vmem:[%s1 + $0x8] sm:$0xff]
    %v30 = vld [vmem:[%s1 + $0x10] sm:$0xff]
    %v31 = vld [vmem:[%s1 + $0x18] sm:$0xff]
    %v32 = vld [vmem:[%s1 + $0x20] sm:$0xff]
    %v33 = vld [vmem:[%s1 + $0x28] sm:$0xff]
    %v34 = vld [vmem:[%s1 + $0x30] sm:$0xff]
    %v35 = vld [vmem:[%s1 + $0x38] sm:$0xff]
    %v36 = vld [vmem:[%s3] sm:$0x3]
    %v38 = vlaneseq
    %v39 = vshrl.u32 %v38, 7
    %v40 = vsub.s32 0, %v39
    %v41 = vrot.slane %v36, %v40
    %v42 = vlaneseq
    %v43 = vshrl.u32 %v42, 7
    %v44 = vsub.s32 1, %v43
    %v45 = vrot.slane %v36, %v44
    %vm48 = vcmask 261120
    %v50 = vsel %vm48, %v20, 0
    %v53 = vsel %vm48, %v21, 0
    %v56 = vsel %vm48, %v22, 0
    %v59 = vsel %vm48, %v23, 0
    %v62 = vsel %vm48, %v24, 0
    %v65 = vsel %vm48, %v25, 0
    %v68 = vsel %vm48, %v26, 0
    %v71 = vsel %vm48, %v27, 0
    %73 = vmatprep.subr.mxu0 0.0
    %74 = vmatpush1.msra.mxu0 0.0
    %75 = vmatprep.subr.mxu0 0.0
    %76 = vmatpush1.msra.mxu0 0.0
    %77 = vmatprep.subr.mxu0 0.0
    %78 = vmatpush1.msra.mxu0 0.0
    %79 = vmatprep.subr.mxu0 0.0
    %80 = vmatpush1.msra.mxu0 0.0
    %81 = vmatprep.subr.mxu0 0.0
    %82 = vmatpush1.msra.mxu0 0.0
    %83 = vmatprep.subr.mxu0 0.0
    %84 = vmatpush1.msra.mxu0 0.0
    %85 = vmatprep.subr.mxu0 0.0
    %86 = vmatpush1.msra.mxu0 0.0
    %87 = vmatprep.subr.mxu0 0.0
    %88 = vmatpush1.msra.mxu0 0.0
    %89 = vmatprep.subr.mxu0 0.0
    %90 = vmatpush1.msra.mxu0 0.0
    %91 = vmatprep.subr.mxu0 0.0
    %92 = vmatpush1.msra.mxu0 0.0
    %93 = vmatprep.subr.mxu0 0.0
    %94 = vmatpush1.msra.mxu0 0.0
    %95 = vmatprep.subr.mxu0 0.0
    %96 = vmatpush1.msra.mxu0 0.0
    %97 = vmatprep.subr.mxu0 %v35
    %98 = vmatpush1.msra.mxu0 %v34
    %99 = vmatprep.subr.mxu0 %v33
    %100 = vmatpush1.msra.mxu0 %v32
    %101 = vmatprep.subr.mxu0 %v31
    %102 = vmatpush1.msra.mxu0 %v30
    %103 = vmatprep.subr.mxu0 %v29
    %104 = vmatpush1.msra.mxu0 %v28
    %105 = vmatprep.subr.mxu0 0.0
    %106 = vmatpush2.msra.mxu0 0.0
    %107 = vmatprep.subr.mxu0 0.0
    %108 = vmatpush2.msra.mxu0 0.0
    %109 = vmatprep.subr.mxu0 0.0
    %110 = vmatpush2.msra.mxu0 0.0
    %111 = vmatprep.subr.mxu0 0.0
    %112 = vmatpush2.msra.mxu0 0.0
    %113 = vmatprep.subr.mxu0 0.0
    %114 = vmatpush2.msra.mxu0 0.0
    %115 = vmatprep.subr.mxu0 0.0
    %116 = vmatpush2.msra.mxu0 0.0
    %117 = vmatprep.subr.mxu0 0.0
    %118 = vmatpush2.msra.mxu0 0.0
    %119 = vmatprep.subr.mxu0 0.0
    %120 = vmatpush2.msra.mxu0 0.0
    %121 = vmatprep.subr.mxu0 0.0
    %122 = vmatpush2.msra.mxu0 0.0
    %123 = vmatprep.subr.mxu0 0.0
    %124 = vmatpush2.msra.mxu0 0.0
    %125 = vmatprep.subr.mxu0 0.0
    %126 = vmatpush2.msra.mxu0 0.0
    %127 = vmatprep.subr.mxu0 0.0
    %128 = vmatpush2.msra.mxu0 0.0
    %129 = vmatprep.subr.mxu0 0.0
    %130 = vmatpush2.msra.mxu0 0.0
    %131 = vmatprep.subr.mxu0 0.0
    %132 = vmatpush2.msra.mxu0 0.0
    %133 = vmatprep.subr.mxu0 0.0
    %134 = vmatpush2.msra.mxu0 0.0
    %135 = vmatprep.subr.mxu0 0.0
    %136 = vmatpush2.msra.mxu0 0.0
    %137 = vmatprep.mubr.f32.mxu0 0.0
    %138 = vmatmul.mubr.f32.gmra.mxu0 %v50
    %v139 = vpop.f32.mrf.mxu0
    %v140 = vadd.f32 %v41, %v139
    %v141 = vpop.f32.mrf.mxu0
    %v142 = vadd.f32 %v45, %v141
    %143 = vmatprep.mubr.f32.mxu0 0.0
    %144 = vmatmul.mubr.f32.gmra.mxu0 %v53
    %v145 = vpop.f32.mrf.mxu0
    %v146 = vadd.f32 %v41, %v145
    %v147 = vpop.f32.mrf.mxu0
    %v148 = vadd.f32 %v45, %v147
    %149 = vmatprep.mubr.f32.mxu0 0.0
    %150 = vmatmul.mubr.f32.gmra.mxu0 %v56
    %v151 = vpop.f32.mrf.mxu0
    %v152 = vadd.f32 %v41, %v151
    %v153 = vpop.f32.mrf.mxu0
    %v154 = vadd.f32 %v45, %v153
    %155 = vmatprep.mubr.f32.mxu0 0.0
    %156 = vmatmul.mubr.f32.gmra.mxu0 %v59
    %v157 = vpop.f32.mrf.mxu0
    %v158 = vadd.f32 %v41, %v157
    %v159 = vpop.f32.mrf.mxu0
    %v160 = vadd.f32 %v45, %v159
    %161 = vmatprep.mubr.f32.mxu0 0.0
    %162 = vmatmul.mubr.f32.gmra.mxu0 %v62
    %v163 = vpop.f32.mrf.mxu0
    %v164 = vadd.f32 %v41, %v163
    %v165 = vpop.f32.mrf.mxu0
    %v166 = vadd.f32 %v45, %v165
    %167 = vmatprep.mubr.f32.mxu0 0.0
    %168 = vmatmul.mubr.f32.gmra.mxu0 %v65
    %v169 = vpop.f32.mrf.mxu0
    %v170 = vadd.f32 %v41, %v169
    %v171 = vpop.f32.mrf.mxu0
    %v172 = vadd.f32 %v45, %v171
    %173 = vmatprep.mubr.f32.mxu0 0.0
    %174 = vmatmul.mubr.f32.gmra.mxu0 %v68
    %v175 = vpop.f32.mrf.mxu0
    %v176 = vadd.f32 %v41, %v175
    %v177 = vpop.f32.mrf.mxu0
    %v178 = vadd.f32 %v45, %v177
    %179 = vmatprep.mubr.f32.mxu0 0.0
    %180 = vmatmul.mubr.f32.gmra.mxu0 %v71
    %v181 = vpop.f32.mrf.mxu0
    %v182 = vadd.f32 %v41, %v181
    %v183 = vpop.f32.mrf.mxu0
    %v184 = vadd.f32 %v45, %v183
    %185 = vdwg.mxu0
    %186 = vst [vmem:[#allocation2] sm:$0xff] %v140
    %187 = vst [vmem:[#allocation2 + $0x8] sm:$0xff] %v142
    %188 = vst [vmem:[#allocation2 + $0x10] sm:$0xff] %v146
    %189 = vst [vmem:[#allocation2 + $0x18] sm:$0xff] %v148
    %190 = vst [vmem:[#allocation2 + $0x20] sm:$0xff] %v152
    %191 = vst [vmem:[#allocation2 + $0x28] sm:$0xff] %v154
    %192 = vst [vmem:[#allocation2 + $0x30] sm:$0xff] %v158
    %193 = vst [vmem:[#allocation2 + $0x38] sm:$0xff] %v160
    %194 = vst [vmem:[#allocation2 + $0x40] sm:$0xff] %v164
    %195 = vst [vmem:[#allocation2 + $0x48] sm:$0xff] %v166
    %196 = vst [vmem:[#allocation2 + $0x50] sm:$0xff] %v170
    %197 = vst [vmem:[#allocation2 + $0x58] sm:$0xff] %v172
    %198 = vst [vmem:[#allocation2 + $0x60] sm:$0xff] %v176
    %199 = vst [vmem:[#allocation2 + $0x68] sm:$0xff] %v178
    %200 = vst [vmem:[#allocation2 + $0x70] sm:$0xff] %v182
    %201 = vst [vmem:[#allocation2 + $0x78] sm:$0xff] %v184
    %vm202 = vcmask 523264
    %203 = vst.msk [vmem:[#allocation3] sm:$0xff] %vm202, 0.0
    %204 = vst.msk [vmem:[#allocation4] sm:$0xff] %vm202, 0.0
    %v205 = vld [vmem:[#allocation2] sm:$0xff]
    %v206 = vld [vmem:[#allocation2 + $0x8] sm:$0xff]
    %v207 = vld [vmem:[#allocation3] sm:$0xff]
    %v208 = vld [vmem:[#allocation4] sm:$0xff]
    %v209 = vld [vmem:[%s2] sm:$0xff]
    %v210 = vld [vmem:[%s2 + $0x8] sm:$0xff]
    %v211 = vld [vmem:[%s2 + $0x10] sm:$0xff]
    %v212 = vld [vmem:[%s2 + $0x18] sm:$0xff]
    %v213 = vld [vmem:[%s2 + $0x20] sm:$0xff]
    %v214 = vld [vmem:[%s2 + $0x28] sm:$0xff]
    %v215 = vld [vmem:[%s2 + $0x30] sm:$0xff]
    %v216 = vld [vmem:[%s2 + $0x38] sm:$0xff]
    %v217 = vld [vmem:[%s2 + $0x40] sm:$0xff]
    %v218 = vld [vmem:[%s2 + $0x48] sm:$0xff]
    %v219 = vld [vmem:[%s2 + $0x50] sm:$0xff]
    %v220 = vld [vmem:[%s2 + $0x58] sm:$0xff]
    %v221 = vld [vmem:[%s2 + $0x60] sm:$0xff]
    %v222 = vld [vmem:[%s2 + $0x68] sm:$0xff]
    %v223 = vld [vmem:[%s2 + $0x70] sm:$0xff]
    %v224 = vld [vmem:[%s2 + $0x78] sm:$0xff]
    %v226 = vsel %vm202, %v207, 0
    %228 = vmatprep.subr.mxu0 0.0
    %229 = vmatpush1.msra.mxu0 0.0
    %230 = vmatprep.subr.mxu0 0.0
    %231 = vmatpush1.msra.mxu0 0.0
    %232 = vmatprep.subr.mxu0 0.0
    %233 = vmatpush1.msra.mxu0 0.0
    %234 = vmatprep.subr.mxu0 0.0
    %235 = vmatpush1.msra.mxu0 0.0
    %236 = vmatprep.subr.mxu0 0.0
    %237 = vmatpush1.msra.mxu0 0.0
    %238 = vmatprep.subr.mxu0 0.0
    %239 = vmatpush1.msra.mxu0 0.0
    %240 = vmatprep.subr.mxu0 0.0
    %241 = vmatpush1.msra.mxu0 0.0
    %242 = vmatprep.subr.mxu0 0.0
    %243 = vmatpush1.msra.mxu0 0.0
    %244 = vmatprep.subr.mxu0 %v224
    %245 = vmatpush1.msra.mxu0 %v223
    %246 = vmatprep.subr.mxu0 %v222
    %247 = vmatpush1.msra.mxu0 %v221
    %248 = vmatprep.subr.mxu0 %v220
    %249 = vmatpush1.msra.mxu0 %v219
    %250 = vmatprep.subr.mxu0 %v218
    %251 = vmatpush1.msra.mxu0 %v217
    %252 = vmatprep.subr.mxu0 %v216
    %253 = vmatpush1.msra.mxu0 %v215
    %254 = vmatprep.subr.mxu0 %v214
    %255 = vmatpush1.msra.mxu0 %v213
    %256 = vmatprep.subr.mxu0 %v212
    %257 = vmatpush1.msra.mxu0 %v211
    %258 = vmatprep.subr.mxu0 %v210
    %259 = vmatpush1.msra.mxu0 %v209
    %260 = vmatprep.subr.mxu0 0.0
    %261 = vmatpush2.msra.mxu0 0.0
    %262 = vmatprep.subr.mxu0 0.0
    %263 = vmatpush2.msra.mxu0 0.0
    %264 = vmatprep.subr.mxu0 0.0
    %265 = vmatpush2.msra.mxu0 0.0
    %266 = vmatprep.subr.mxu0 0.0
    %267 = vmatpush2.msra.mxu0 0.0
    %268 = vmatprep.subr.mxu0 0.0
    %269 = vmatpush2.msra.mxu0 0.0
    %270 = vmatprep.subr.mxu0 0.0
    %271 = vmatpush2.msra.mxu0 0.0
    %272 = vmatprep.subr.mxu0 0.0
    %273 = vmatpush2.msra.mxu0 0.0
    %274 = vmatprep.subr.mxu0 0.0
    %275 = vmatpush2.msra.mxu0 0.0
    %276 = vmatprep.subr.mxu0 0.0
    %277 = vmatpush2.msra.mxu0 0.0
    %278 = vmatprep.subr.mxu0 0.0
    %279 = vmatpush2.msra.mxu0 0.0
    %280 = vmatprep.subr.mxu0 0.0
    %281 = vmatpush2.msra.mxu0 0.0
    %282 = vmatprep.subr.mxu0 0.0
    %283 = vmatpush2.msra.mxu0 0.0
    %284 = vmatprep.subr.mxu0 0.0
    %285 = vmatpush2.msra.mxu0 0.0
    %286 = vmatprep.subr.mxu0 0.0
    %287 = vmatpush2.msra.mxu0 0.0
    %288 = vmatprep.subr.mxu0 0.0
    %289 = vmatpush2.msra.mxu0 0.0
    %290 = vmatprep.subr.mxu0 0.0
    %291 = vmatpush2.msra.mxu0 0.0
    %292 = vmatprep.mubr.f32.mxu0 0.0
    %293 = vmatmul.mubr.f32.gmra.mxu0 %v226
    %v294 = vpop.f32.mrf.mxu0
    %v295 = vadd.f32 0.0, %v294
    %v296 = vpop.f32.mrf.mxu0
    %v297 = vadd.f32 0.0, %v296
    %298 = vdwg.mxu0
    %v299 = vadd.f32 %v205, %v295
    %v300 = vadd.f32 %v206, %v297
    %v301 = vxor.u32 %v299, 2147483648
    %v302 = vmul.f32 %v301, 1.442695
    %v303 = vpow.pop %v302
    %v304 = vadd.f32 %v303, 1.0
    %v305 = vrcp.pop %v304
    %v306 = vmul.f32 1.0, %v305
    %v307 = vtanh.pop %v300
    %v308 = vxor.u32 %v300, 2147483648
    %v309 = vmul.f32 %v308, 1.442695
    %v310 = vpow.pop %v309
    %v311 = vadd.f32 %v310, 1.0
    %v312 = vrcp.pop %v311
    %v313 = vmul.f32 1.0, %v312
    %315 = vrot.lane.b32.xlu0 %v208, 64
    %v316 = vpop.permute.xlu0 %315
    %v318 = vmul.f32 %v306, %v316
    %v319 = vmul.f32 %v306, %v307
    %321 = vrot.lane.b32.xlu0 %v319, 64
    %v322 = vpop.permute.xlu0 %321
    %v324 = vadd.f32 %v318, %v322
    %v325 = vtanh.pop %v324
    %v326 = vmul.f32 %v313, %v325
    %328 = vrot.lane.b32.xlu0 %v326, 64
    %v329 = vpop.permute.xlu0 %328
    %331 = vst.msk [vmem:[#allocation3] sm:$0xff] %vm202, %v329
    %333 = vrot.lane.b32.xlu0 %v324, 64
    %v334 = vpop.permute.xlu0 %333
    %336 = vst.msk [vmem:[#allocation4] sm:$0xff] %vm202, %v334
    %s337 = scalar_lea.vmem [#allocation2], 16
    %v338 = vld [vmem:[%s337] sm:$0xff]
    %v339 = vld [vmem:[%s337 + $0x8] sm:$0xff]
    %v340 = vld [vmem:[#allocation3] sm:$0xff]
    %v341 = vld [vmem:[#allocation4] sm:$0xff]
    %v342 = vld [vmem:[%s2] sm:$0xff]
    %v343 = vld [vmem:[%s2 + $0x8] sm:$0xff]
    %v344 = vld [vmem:[%s2 + $0x10] sm:$0xff]
    %v345 = vld [vmem:[%s2 + $0x18] sm:$0xff]
    %v346 = vld [vmem:[%s2 + $0x20] sm:$0xff]
    %v347 = vld [vmem:[%s2 + $0x28] sm:$0xff]
    %v348 = vld [vmem:[%s2 + $0x30] sm:$0xff]
    %v349 = vld [vmem:[%s2 + $0x38] sm:$0xff]
    %v350 = vld [vmem:[%s2 + $0x40] sm:$0xff]
    %v351 = vld [vmem:[%s2 + $0x48] sm:$0xff]
    %v352 = vld [vmem:[%s2 + $0x50] sm:$0xff]
    %v353 = vld [vmem:[%s2 + $0x58] sm:$0xff]
    %v354 = vld [vmem:[%s2 + $0x60] sm:$0xff]
    %v355 = vld [vmem:[%s2 + $0x68] sm:$0xff]
    %v356 = vld [vmem:[%s2 + $0x70] sm:$0xff]
    %v357 = vld [vmem:[%s2 + $0x78] sm:$0xff]
    %v359 = vsel %vm202, %v340, 0
    %361 = vmatprep.subr.mxu0 0.0
    %362 = vmatpush1.msra.mxu0 0.0
    %363 = vmatprep.subr.mxu0 0.0
    %364 = vmatpush1.msra.mxu0 0.0
    %365 = vmatprep.subr.mxu0 0.0
    %366 = vmatpush1.msra.mxu0 0.0
    %367 = vmatprep.subr.mxu0 0.0
    %368 = vmatpush1.msra.mxu0 0.0
    %369 = vmatprep.subr.mxu0 0.0
    %370 = vmatpush1.msra.mxu0 0.0
    %371 = vmatprep.subr.mxu0 0.0
    %372 = vmatpush1.msra.mxu0 0.0
    %373 = vmatprep.subr.mxu0 0.0
    %374 = vmatpush1.msra.mxu0 0.0
    %375 = vmatprep.subr.mxu0 0.0
    %376 = vmatpush1.msra.mxu0 0.0
    %377 = vmatprep.subr.mxu0 %v357
    %378 = vmatpush1.msra.mxu0 %v356
    %379 = vmatprep.subr.mxu0 %v355
    %380 = vmatpush1.msra.mxu0 %v354
    %381 = vmatprep.subr.mxu0 %v353
    %382 = vmatpush1.msra.mxu0 %v352
    %383 = vmatprep.subr.mxu0 %v351
    %384 = vmatpush1.msra.mxu0 %v350
    %385 = vmatprep.subr.mxu0 %v349
    %386 = vmatpush1.msra.mxu0 %v348
    %387 = vmatprep.subr.mxu0 %v347
    %388 = vmatpush1.msra.mxu0 %v346
    %389 = vmatprep.subr.mxu0 %v345
    %390 = vmatpush1.msra.mxu0 %v344
    %391 = vmatprep.subr.mxu0 %v343
    %392 = vmatpush1.msra.mxu0 %v342
    %393 = vmatprep.subr.mxu0 0.0
    %394 = vmatpush2.msra.mxu0 0.0
    %395 = vmatprep.subr.mxu0 0.0
    %396 = vmatpush2.msra.mxu0 0.0
    %397 = vmatprep.subr.mxu0 0.0
    %398 = vmatpush2.msra.mxu0 0.0
    %399 = vmatprep.subr.mxu0 0.0
    %400 = vmatpush2.msra.mxu0 0.0
    %401 = vmatprep.subr.mxu0 0.0
    %402 = vmatpush2.msra.mxu0 0.0
    %403 = vmatprep.subr.mxu0 0.0
    %404 = vmatpush2.msra.mxu0 0.0
    %405 = vmatprep.subr.mxu0 0.0
    %406 = vmatpush2.msra.mxu0 0.0
    %407 = vmatprep.subr.mxu0 0.0
    %408 = vmatpush2.msra.mxu0 0.0
    %409 = vmatprep.subr.mxu0 0.0
    %410 = vmatpush2.msra.mxu0 0.0
    %411 = vmatprep.subr.mxu0 0.0
    %412 = vmatpush2.msra.mxu0 0.0
    %413 = vmatprep.subr.mxu0 0.0
    %414 = vmatpush2.msra.mxu0 0.0
    %415 = vmatprep.subr.mxu0 0.0
    %416 = vmatpush2.msra.mxu0 0.0
    %417 = vmatprep.subr.mxu0 0.0
    %418 = vmatpush2.msra.mxu0 0.0
    %419 = vmatprep.subr.mxu0 0.0
    %420 = vmatpush2.msra.mxu0 0.0
    %421 = vmatprep.subr.mxu0 0.0
    %422 = vmatpush2.msra.mxu0 0.0
    %423 = vmatprep.subr.mxu0 0.0
    %424 = vmatpush2.msra.mxu0 0.0
    %425 = vmatprep.mubr.f32.mxu0 0.0
    %426 = vmatmul.mubr.f32.gmra.mxu0 %v359
    %v427 = vpop.f32.mrf.mxu0
    %v428 = vadd.f32 0.0, %v427
    %v429 = vpop.f32.mrf.mxu0
    %v430 = vadd.f32 0.0, %v429
    %431 = vdwg.mxu0
    %v432 = vadd.f32 %v338, %v428
    %v433 = vadd.f32 %v339, %v430
    %v434 = vxor.u32 %v432, 2147483648
    %v435 = vmul.f32 %v434, 1.442695
    %v436 = vpow.pop %v435
    %v437 = vadd.f32 %v436, 1.0
    %v438 = vrcp.pop %v437
    %v439 = vmul.f32 1.0, %v438
    %v440 = vtanh.pop %v433
    %v441 = vxor.u32 %v433, 2147483648
    %v442 = vmul.f32 %v441, 1.442695
    %v443 = vpow.pop %v442
    %v444 = vadd.f32 %v443, 1.0
    %v445 = vrcp.pop %v444
    %v446 = vmul.f32 1.0, %v445
    %448 = vrot.lane.b32.xlu0 %v341, 64
    %v449 = vpop.permute.xlu0 %448
    %v451 = vmul.f32 %v439, %v449
    %v452 = vmul.f32 %v439, %v440
    %454 = vrot.lane.b32.xlu0 %v452, 64
    %v455 = vpop.permute.xlu0 %454
    %v457 = vadd.f32 %v451, %v455
    %v458 = vtanh.pop %v457
    %v459 = vmul.f32 %v446, %v458
    %461 = vrot.lane.b32.xlu0 %v459, 64
    %v462 = vpop.permute.xlu0 %461
    %464 = vst.msk [vmem:[#allocation3] sm:$0xff] %vm202, %v462
    %466 = vrot.lane.b32.xlu0 %v457, 64
    %v467 = vpop.permute.xlu0 %466
    %469 = vst.msk [vmem:[#allocation4] sm:$0xff] %vm202, %v467
    %s470 = scalar_lea.vmem [#allocation2], 32
    %v471 = vld [vmem:[%s470] sm:$0xff]
    %v472 = vld [vmem:[%s470 + $0x8] sm:$0xff]
    %v473 = vld [vmem:[#allocation3] sm:$0xff]
    %v474 = vld [vmem:[#allocation4] sm:$0xff]
    %v475 = vld [vmem:[%s2] sm:$0xff]
    %v476 = vld [vmem:[%s2 + $0x8] sm:$0xff]
    %v477 = vld [vmem:[%s2 + $0x10] sm:$0xff]
    %v478 = vld [vmem:[%s2 + $0x18] sm:$0xff]
    %v479 = vld [vmem:[%s2 + $0x20] sm:$0xff]
    %v480 = vld [vmem:[%s2 + $0x28] sm:$0xff]
    %v481 = vld [vmem:[%s2 + $0x30] sm:$0xff]
    %v482 = vld [vmem:[%s2 + $0x38] sm:$0xff]
    %v483 = vld [vmem:[%s2 + $0x40] sm:$0xff]
    %v484 = vld [vmem:[%s2 + $0x48] sm:$0xff]
    %v485 = vld [vmem:[%s2 + $0x50] sm:$0xff]
    %v486 = vld [vmem:[%s2 + $0x58] sm:$0xff]
    %v487 = vld [vmem:[%s2 + $0x60] sm:$0xff]
    %v488 = vld [vmem:[%s2 + $0x68] sm:$0xff]
    %v489 = vld [vmem:[%s2 + $0x70] sm:$0xff]
    %v490 = vld [vmem:[%s2 + $0x78] sm:$0xff]
    %v492 = vsel %vm202, %v473, 0
    %494 = vmatprep.subr.mxu0 0.0
    %495 = vmatpush1.msra.mxu0 0.0
    %496 = vmatprep.subr.mxu0 0.0
    %497 = vmatpush1.msra.mxu0 0.0
    %498 = vmatprep.subr.mxu0 0.0
    %499 = vmatpush1.msra.mxu0 0.0
    %500 = vmatprep.subr.mxu0 0.0
    %501 = vmatpush1.msra.mxu0 0.0
    %502 = vmatprep.subr.mxu0 0.0
    %503 = vmatpush1.msra.mxu0 0.0
    %504 = vmatprep.subr.mxu0 0.0
    %505 = vmatpush1.msra.mxu0 0.0
    %506 = vmatprep.subr.mxu0 0.0
    %507 = vmatpush1.msra.mxu0 0.0
    %508 = vmatprep.subr.mxu0 0.0
    %509 = vmatpush1.msra.mxu0 0.0
    %510 = vmatprep.subr.mxu0 %v490
    %511 = vmatpush1.msra.mxu0 %v489
    %512 = vmatprep.subr.mxu0 %v488
    %513 = vmatpush1.msra.mxu0 %v487
    %514 = vmatprep.subr.mxu0 %v486
    %515 = vmatpush1.msra.mxu0 %v485
    %516 = vmatprep.subr.mxu0 %v484
    %517 = vmatpush1.msra.mxu0 %v483
    %518 = vmatprep.subr.mxu0 %v482
    %519 = vmatpush1.msra.mxu0 %v481
    %520 = vmatprep.subr.mxu0 %v480
    %521 = vmatpush1.msra.mxu0 %v479
    %522 = vmatprep.subr.mxu0 %v478
    %523 = vmatpush1.msra.mxu0 %v477
    %524 = vmatprep.subr.mxu0 %v476
    %525 = vmatpush1.msra.mxu0 %v475
    %526 = vmatprep.subr.mxu0 0.0
    %527 = vmatpush2.msra.mxu0 0.0
    %528 = vmatprep.subr.mxu0 0.0
    %529 = vmatpush2.msra.mxu0 0.0
    %530 = vmatprep.subr.mxu0 0.0
    %531 = vmatpush2.msra.mxu0 0.0
    %532 = vmatprep.subr.mxu0 0.0
    %533 = vmatpush2.msra.mxu0 0.0
    %534 = vmatprep.subr.mxu0 0.0
    %535 = vmatpush2.msra.mxu0 0.0
    %536 = vmatprep.subr.mxu0 0.0
    %537 = vmatpush2.msra.mxu0 0.0
    %538 = vmatprep.subr.mxu0 0.0
    %539 = vmatpush2.msra.mxu0 0.0
    %540 = vmatprep.subr.mxu0 0.0
    %541 = vmatpush2.msra.mxu0 0.0
    %542 = vmatprep.subr.mxu0 0.0
    %543 = vmatpush2.msra.mxu0 0.0
    %544 = vmatprep.subr.mxu0 0.0
    %545 = vmatpush2.msra.mxu0 0.0
    %546 = vmatprep.subr.mxu0 0.0
    %547 = vmatpush2.msra.mxu0 0.0
    %548 = vmatprep.subr.mxu0 0.0
    %549 = vmatpush2.msra.mxu0 0.0
    %550 = vmatprep.subr.mxu0 0.0
    %551 = vmatpush2.msra.mxu0 0.0
    %552 = vmatprep.subr.mxu0 0.0
    %553 = vmatpush2.msra.mxu0 0.0
    %554 = vmatprep.subr.mxu0 0.0
    %555 = vmatpush2.msra.mxu0 0.0
    %556 = vmatprep.subr.mxu0 0.0
    %557 = vmatpush2.msra.mxu0 0.0
    %558 = vmatprep.mubr.f32.mxu0 0.0
    %559 = vmatmul.mubr.f32.gmra.mxu0 %v492
    %v560 = vpop.f32.mrf.mxu0
    %v561 = vadd.f32 0.0, %v560
    %v562 = vpop.f32.mrf.mxu0
    %v563 = vadd.f32 0.0, %v562
    %564 = vdwg.mxu0
    %v565 = vadd.f32 %v471, %v561
    %v566 = vadd.f32 %v472, %v563
    %v567 = vxor.u32 %v565, 2147483648
    %v568 = vmul.f32 %v567, 1.442695
    %v569 = vpow.pop %v568
    %v570 = vadd.f32 %v569, 1.0
    %v571 = vrcp.pop %v570
    %v572 = vmul.f32 1.0, %v571
    %v573 = vtanh.pop %v566
    %v574 = vxor.u32 %v566, 2147483648
    %v575 = vmul.f32 %v574, 1.442695
    %v576 = vpow.pop %v575
    %v577 = vadd.f32 %v576, 1.0
    %v578 = vrcp.pop %v577
    %v579 = vmul.f32 1.0, %v578
    %581 = vrot.lane.b32.xlu0 %v474, 64
    %v582 = vpop.permute.xlu0 %581
    %v584 = vmul.f32 %v572, %v582
    %v585 = vmul.f32 %v572, %v573
    %587 = vrot.lane.b32.xlu0 %v585, 64
    %v588 = vpop.permute.xlu0 %587
    %v590 = vadd.f32 %v584, %v588
    %v591 = vtanh.pop %v590
    %v592 = vmul.f32 %v579, %v591
    %594 = vrot.lane.b32.xlu0 %v592, 64
    %v595 = vpop.permute.xlu0 %594
    %597 = vst.msk [vmem:[#allocation3] sm:$0xff] %vm202, %v595
    %599 = vrot.lane.b32.xlu0 %v590, 64
    %v600 = vpop.permute.xlu0 %599
    %602 = vst.msk [vmem:[#allocation4] sm:$0xff] %vm202, %v600
    %s603 = scalar_lea.vmem [#allocation2], 48
    %v604 = vld [vmem:[%s603] sm:$0xff]
    %v605 = vld [vmem:[%s603 + $0x8] sm:$0xff]
    %v606 = vld [vmem:[#allocation3] sm:$0xff]
    %v607 = vld [vmem:[#allocation4] sm:$0xff]
    %v608 = vld [vmem:[%s2] sm:$0xff]
    %v609 = vld [vmem:[%s2 + $0x8] sm:$0xff]
    %v610 = vld [vmem:[%s2 + $0x10] sm:$0xff]
    %v611 = vld [vmem:[%s2 + $0x18] sm:$0xff]
    %v612 = vld [vmem:[%s2 + $0x20] sm:$0xff]
    %v613 = vld [vmem:[%s2 + $0x28] sm:$0xff]
    %v614 = vld [vmem:[%s2 + $0x30] sm:$0xff]
    %v615 = vld [vmem:[%s2 + $0x38] sm:$0xff]
    %v616 = vld [vmem:[%s2 + $0x40] sm:$0xff]
    %v617 = vld [vmem:[%s2 + $0x48] sm:$0xff]
    %v618 = vld [vmem:[%s2 + $0x50] sm:$0xff]
    %v619 = vld [vmem:[%s2 + $0x58] sm:$0xff]
    %v620 = vld [vmem:[%s2 + $0x60] sm:$0xff]
    %v621 = vld [vmem:[%s2 + $0x68] sm:$0xff]
    %v622 = vld [vmem:[%s2 + $0x70] sm:$0xff]
    %v623 = vld [vmem:[%s2 + $0x78] sm:$0xff]
    %v625 = vsel %vm202, %v606, 0
    %627 = vmatprep.subr.mxu0 0.0
    %628 = vmatpush1.msra.mxu0 0.0
    %629 = vmatprep.subr.mxu0 0.0
    %630 = vmatpush1.msra.mxu0 0.0
    %631 = vmatprep.subr.mxu0 0.0
    %632 = vmatpush1.msra.mxu0 0.0
    %633 = vmatprep.subr.mxu0 0.0
    %634 = vmatpush1.msra.mxu0 0.0
    %635 = vmatprep.subr.mxu0 0.0
    %636 = vmatpush1.msra.mxu0 0.0
    %637 = vmatprep.subr.mxu0 0.0
    %638 = vmatpush1.msra.mxu0 0.0
    %639 = vmatprep.subr.mxu0 0.0
    %640 = vmatpush1.msra.mxu0 0.0
    %641 = vmatprep.subr.mxu0 0.0
    %642 = vmatpush1.msra.mxu0 0.0
    %643 = vmatprep.subr.mxu0 %v623
    %644 = vmatpush1.msra.mxu0 %v622
    %645 = vmatprep.subr.mxu0 %v621
    %646 = vmatpush1.msra.mxu0 %v620
    %647 = vmatprep.subr.mxu0 %v619
    %648 = vmatpush1.msra.mxu0 %v618
    %649 = vmatprep.subr.mxu0 %v617
    %650 = vmatpush1.msra.mxu0 %v616
    %651 = vmatprep.subr.mxu0 %v615
    %652 = vmatpush1.msra.mxu0 %v614
    %653 = vmatprep.subr.mxu0 %v613
    %654 = vmatpush1.msra.mxu0 %v612
    %655 = vmatprep.subr.mxu0 %v611
    %656 = vmatpush1.msra.mxu0 %v610
    %657 = vmatprep.subr.mxu0 %v609
    %658 = vmatpush1.msra.mxu0 %v608
    %659 = vmatprep.subr.mxu0 0.0
    %660 = vmatpush2.msra.mxu0 0.0
    %661 = vmatprep.subr.mxu0 0.0
    %662 = vmatpush2.msra.mxu0 0.0
    %663 = vmatprep.subr.mxu0 0.0
    %664 = vmatpush2.msra.mxu0 0.0
    %665 = vmatprep.subr.mxu0 0.0
    %666 = vmatpush2.msra.mxu0 0.0
    %667 = vmatprep.subr.mxu0 0.0
    %668 = vmatpush2.msra.mxu0 0.0
    %669 = vmatprep.subr.mxu0 0.0
    %670 = vmatpush2.msra.mxu0 0.0
    %671 = vmatprep.subr.mxu0 0.0
    %672 = vmatpush2.msra.mxu0 0.0
    %673 = vmatprep.subr.mxu0 0.0
    %674 = vmatpush2.msra.mxu0 0.0
    %675 = vmatprep.subr.mxu0 0.0
    %676 = vmatpush2.msra.mxu0 0.0
    %677 = vmatprep.subr.mxu0 0.0
    %678 = vmatpush2.msra.mxu0 0.0
    %679 = vmatprep.subr.mxu0 0.0
    %680 = vmatpush2.msra.mxu0 0.0
    %681 = vmatprep.subr.mxu0 0.0
    %682 = vmatpush2.msra.mxu0 0.0
    %683 = vmatprep.subr.mxu0 0.0
    %684 = vmatpush2.msra.mxu0 0.0
    %685 = vmatprep.subr.mxu0 0.0
    %686 = vmatpush2.msra.mxu0 0.0
    %687 = vmatprep.subr.mxu0 0.0
    %688 = vmatpush2.msra.mxu0 0.0
    %689 = vmatprep.subr.mxu0 0.0
    %690 = vmatpush2.msra.mxu0 0.0
    %691 = vmatprep.mubr.f32.mxu0 0.0
    %692 = vmatmul.mubr.f32.gmra.mxu0 %v625
    %v693 = vpop.f32.mrf.mxu0
    %v694 = vadd.f32 0.0, %v693
    %v695 = vpop.f32.mrf.mxu0
    %v696 = vadd.f32 0.0, %v695
    %697 = vdwg.mxu0
    %v698 = vadd.f32 %v604, %v694
    %v699 = vadd.f32 %v605, %v696
    %v700 = vxor.u32 %v698, 2147483648
    %v701 = vmul.f32 %v700, 1.442695
    %v702 = vpow.pop %v701
    %v703 = vadd.f32 %v702, 1.0
    %v704 = vrcp.pop %v703
    %v705 = vmul.f32 1.0, %v704
    %v706 = vtanh.pop %v699
    %v707 = vxor.u32 %v699, 2147483648
    %v708 = vmul.f32 %v707, 1.442695
    %v709 = vpow.pop %v708
    %v710 = vadd.f32 %v709, 1.0
    %v711 = vrcp.pop %v710
    %v712 = vmul.f32 1.0, %v711
    %714 = vrot.lane.b32.xlu0 %v607, 64
    %v715 = vpop.permute.xlu0 %714
    %v717 = vmul.f32 %v705, %v715
    %v718 = vmul.f32 %v705, %v706
    %720 = vrot.lane.b32.xlu0 %v718, 64
    %v721 = vpop.permute.xlu0 %720
    %v723 = vadd.f32 %v717, %v721
    %v724 = vtanh.pop %v723
    %v725 = vmul.f32 %v712, %v724
    %727 = vrot.lane.b32.xlu0 %v725, 64
    %v728 = vpop.permute.xlu0 %727
    %730 = vst.msk [vmem:[#allocation3] sm:$0xff] %vm202, %v728
    %732 = vrot.lane.b32.xlu0 %v723, 64
    %v733 = vpop.permute.xlu0 %732
    %735 = vst.msk [vmem:[#allocation4] sm:$0xff] %vm202, %v733
    %s736 = scalar_lea.vmem [#allocation2], 64
    %v737 = vld [vmem:[%s736] sm:$0xff]
    %v738 = vld [vmem:[%s736 + $0x8] sm:$0xff]
    %v739 = vld [vmem:[#allocation3] sm:$0xff]
    %v740 = vld [vmem:[#allocation4] sm:$0xff]
    %v741 = vld [vmem:[%s2] sm:$0xff]
    %v742 = vld [vmem:[%s2 + $0x8] sm:$0xff]
    %v743 = vld [vmem:[%s2 + $0x10] sm:$0xff]
    %v744 = vld [vmem:[%s2 + $0x18] sm:$0xff]
    %v745 = vld [vmem:[%s2 + $0x20] sm:$0xff]
    %v746 = vld [vmem:[%s2 + $0x28] sm:$0xff]
    %v747 = vld [vmem:[%s2 + $0x30] sm:$0xff]
    %v748 = vld [vmem:[%s2 + $0x38] sm:$0xff]
    %v749 = vld [vmem:[%s2 + $0x40] sm:$0xff]
    %v750 = vld [vmem:[%s2 + $0x48] sm:$0xff]
    %v751 = vld [vmem:[%s2 + $0x50] sm:$0xff]
    %v752 = vld [vmem:[%s2 + $0x58] sm:$0xff]
    %v753 = vld [vmem:[%s2 + $0x60] sm:$0xff]
    %v754 = vld [vmem:[%s2 + $0x68] sm:$0xff]
    %v755 = vld [vmem:[%s2 + $0x70] sm:$0xff]
    %v756 = vld [vmem:[%s2 + $0x78] sm:$0xff]
    %v758 = vsel %vm202, %v739, 0
    %760 = vmatprep.subr.mxu0 0.0
    %761 = vmatpush1.msra.mxu0 0.0
    %762 = vmatprep.subr.mxu0 0.0
    %763 = vmatpush1.msra.mxu0 0.0
    %764 = vmatprep.subr.mxu0 0.0
    %765 = vmatpush1.msra.mxu0 0.0
    %766 = vmatprep.subr.mxu0 0.0
    %767 = vmatpush1.msra.mxu0 0.0
    %768 = vmatprep.subr.mxu0 0.0
    %769 = vmatpush1.msra.mxu0 0.0
    %770 = vmatprep.subr.mxu0 0.0
    %771 = vmatpush1.msra.mxu0 0.0
    %772 = vmatprep.subr.mxu0 0.0
    %773 = vmatpush1.msra.mxu0 0.0
    %774 = vmatprep.subr.mxu0 0.0
    %775 = vmatpush1.msra.mxu0 0.0
    %776 = vmatprep.subr.mxu0 %v756
    %777 = vmatpush1.msra.mxu0 %v755
    %778 = vmatprep.subr.mxu0 %v754
    %779 = vmatpush1.msra.mxu0 %v753
    %780 = vmatprep.subr.mxu0 %v752
    %781 = vmatpush1.msra.mxu0 %v751
    %782 = vmatprep.subr.mxu0 %v750
    %783 = vmatpush1.msra.mxu0 %v749
    %784 = vmatprep.subr.mxu0 %v748
    %785 = vmatpush1.msra.mxu0 %v747
    %786 = vmatprep.subr.mxu0 %v746
    %787 = vmatpush1.msra.mxu0 %v745
    %788 = vmatprep.subr.mxu0 %v744
    %789 = vmatpush1.msra.mxu0 %v743
    %790 = vmatprep.subr.mxu0 %v742
    %791 = vmatpush1.msra.mxu0 %v741
    %792 = vmatprep.subr.mxu0 0.0
    %793 = vmatpush2.msra.mxu0 0.0
    %794 = vmatprep.subr.mxu0 0.0
    %795 = vmatpush2.msra.mxu0 0.0
    %796 = vmatprep.subr.mxu0 0.0
    %797 = vmatpush2.msra.mxu0 0.0
    %798 = vmatprep.subr.mxu0 0.0
    %799 = vmatpush2.msra.mxu0 0.0
    %800 = vmatprep.subr.mxu0 0.0
    %801 = vmatpush2.msra.mxu0 0.0
    %802 = vmatprep.subr.mxu0 0.0
    %803 = vmatpush2.msra.mxu0 0.0
    %804 = vmatprep.subr.mxu0 0.0
    %805 = vmatpush2.msra.mxu0 0.0
    %806 = vmatprep.subr.mxu0 0.0
    %807 = vmatpush2.msra.mxu0 0.0
    %808 = vmatprep.subr.mxu0 0.0
    %809 = vmatpush2.msra.mxu0 0.0
    %810 = vmatprep.subr.mxu0 0.0
    %811 = vmatpush2.msra.mxu0 0.0
    %812 = vmatprep.subr.mxu0 0.0
    %813 = vmatpush2.msra.mxu0 0.0
    %814 = vmatprep.subr.mxu0 0.0
    %815 = vmatpush2.msra.mxu0 0.0
    %816 = vmatprep.subr.mxu0 0.0
    %817 = vmatpush2.msra.mxu0 0.0
    %818 = vmatprep.subr.mxu0 0.0
    %819 = vmatpush2.msra.mxu0 0.0
    %820 = vmatprep.subr.mxu0 0.0
    %821 = vmatpush2.msra.mxu0 0.0
    %822 = vmatprep.subr.mxu0 0.0
    %823 = vmatpush2.msra.mxu0 0.0
    %824 = vmatprep.mubr.f32.mxu0 0.0
    %825 = vmatmul.mubr.f32.gmra.mxu0 %v758
    %v826 = vpop.f32.mrf.mxu0
    %v827 = vadd.f32 0.0, %v826
    %v828 = vpop.f32.mrf.mxu0
    %v829 = vadd.f32 0.0, %v828
    %830 = vdwg.mxu0
    %v831 = vadd.f32 %v737, %v827
    %v832 = vadd.f32 %v738, %v829
    %v833 = vxor.u32 %v831, 2147483648
    %v834 = vmul.f32 %v833, 1.442695
    %v835 = vpow.pop %v834
    %v836 = vadd.f32 %v835, 1.0
    %v837 = vrcp.pop %v836
    %v838 = vmul.f32 1.0, %v837
    %v839 = vtanh.pop %v832
    %v840 = vxor.u32 %v832, 2147483648
    %v841 = vmul.f32 %v840, 1.442695
    %v842 = vpow.pop %v841
    %v843 = vadd.f32 %v842, 1.0
    %v844 = vrcp.pop %v843
    %v845 = vmul.f32 1.0, %v844
    %847 = vrot.lane.b32.xlu0 %v740, 64
    %v848 = vpop.permute.xlu0 %847
    %v850 = vmul.f32 %v838, %v848
    %v851 = vmul.f32 %v838, %v839
    %853 = vrot.lane.b32.xlu0 %v851, 64
    %v854 = vpop.permute.xlu0 %853
    %v856 = vadd.f32 %v850, %v854
    %v857 = vtanh.pop %v856
    %v858 = vmul.f32 %v845, %v857
    %860 = vrot.lane.b32.xlu0 %v858, 64
    %v861 = vpop.permute.xlu0 %860
    %863 = vst.msk [vmem:[#allocation3] sm:$0xff] %vm202, %v861
    %865 = vrot.lane.b32.xlu0 %v856, 64
    %v866 = vpop.permute.xlu0 %865
    %868 = vst.msk [vmem:[#allocation4] sm:$0xff] %vm202, %v866
    %s869 = scalar_lea.vmem [#allocation2], 80
    %v870 = vld [vmem:[%s869] sm:$0xff]
    %v871 = vld [vmem:[%s869 + $0x8] sm:$0xff]
    %v872 = vld [vmem:[#allocation3] sm:$0xff]
    %v873 = vld [vmem:[#allocation4] sm:$0xff]
    %v874 = vld [vmem:[%s2] sm:$0xff]
    %v875 = vld [vmem:[%s2 + $0x8] sm:$0xff]
    %v876 = vld [vmem:[%s2 + $0x10] sm:$0xff]
    %v877 = vld [vmem:[%s2 + $0x18] sm:$0xff]
    %v878 = vld [vmem:[%s2 + $0x20] sm:$0xff]
    %v879 = vld [vmem:[%s2 + $0x28] sm:$0xff]
    %v880 = vld [vmem:[%s2 + $0x30] sm:$0xff]
    %v881 = vld [vmem:[%s2 + $0x38] sm:$0xff]
    %v882 = vld [vmem:[%s2 + $0x40] sm:$0xff]
    %v883 = vld [vmem:[%s2 + $0x48] sm:$0xff]
    %v884 = vld [vmem:[%s2 + $0x50] sm:$0xff]
    %v885 = vld [vmem:[%s2 + $0x58] sm:$0xff]
    %v886 = vld [vmem:[%s2 + $0x60] sm:$0xff]
    %v887 = vld [vmem:[%s2 + $0x68] sm:$0xff]
    %v888 = vld [vmem:[%s2 + $0x70] sm:$0xff]
    %v889 = vld [vmem:[%s2 + $0x78] sm:$0xff]
    %v891 = vsel %vm202, %v872, 0
    %893 = vmatprep.subr.mxu0 0.0
    %894 = vmatpush1.msra.mxu0 0.0
    %895 = vmatprep.subr.mxu0 0.0
    %896 = vmatpush1.msra.mxu0 0.0
    %897 = vmatprep.subr.mxu0 0.0
    %898 = vmatpush1.msra.mxu0 0.0
    %899 = vmatprep.subr.mxu0 0.0
    %900 = vmatpush1.msra.mxu0 0.0
    %901 = vmatprep.subr.mxu0 0.0
    %902 = vmatpush1.msra.mxu0 0.0
    %903 = vmatprep.subr.mxu0 0.0
    %904 = vmatpush1.msra.mxu0 0.0
    %905 = vmatprep.subr.mxu0 0.0
    %906 = vmatpush1.msra.mxu0 0.0
    %907 = vmatprep.subr.mxu0 0.0
    %908 = vmatpush1.msra.mxu0 0.0
    %909 = vmatprep.subr.mxu0 %v889
    %910 = vmatpush1.msra.mxu0 %v888
    %911 = vmatprep.subr.mxu0 %v887
    %912 = vmatpush1.msra.mxu0 %v886
    %913 = vmatprep.subr.mxu0 %v885
    %914 = vmatpush1.msra.mxu0 %v884
    %915 = vmatprep.subr.mxu0 %v883
    %916 = vmatpush1.msra.mxu0 %v882
    %917 = vmatprep.subr.mxu0 %v881
    %918 = vmatpush1.msra.mxu0 %v880
    %919 = vmatprep.subr.mxu0 %v879
    %920 = vmatpush1.msra.mxu0 %v878
    %921 = vmatprep.subr.mxu0 %v877
    %922 = vmatpush1.msra.mxu0 %v876
    %923 = vmatprep.subr.mxu0 %v875
    %924 = vmatpush1.msra.mxu0 %v874
    %925 = vmatprep.subr.mxu0 0.0
    %926 = vmatpush2.msra.mxu0 0.0
    %927 = vmatprep.subr.mxu0 0.0
    %928 = vmatpush2.msra.mxu0 0.0
    %929 = vmatprep.subr.mxu0 0.0
    %930 = vmatpush2.msra.mxu0 0.0
    %931 = vmatprep.subr.mxu0 0.0
    %932 = vmatpush2.msra.mxu0 0.0
    %933 = vmatprep.subr.mxu0 0.0
    %934 = vmatpush2.msra.mxu0 0.0
    %935 = vmatprep.subr.mxu0 0.0
    %936 = vmatpush2.msra.mxu0 0.0
    %937 = vmatprep.subr.mxu0 0.0
    %938 = vmatpush2.msra.mxu0 0.0
    %939 = vmatprep.subr.mxu0 0.0
    %940 = vmatpush2.msra.mxu0 0.0
    %941 = vmatprep.subr.mxu0 0.0
    %942 = vmatpush2.msra.mxu0 0.0
    %943 = vmatprep.subr.mxu0 0.0
    %944 = vmatpush2.msra.mxu0 0.0
    %945 = vmatprep.subr.mxu0 0.0
    %946 = vmatpush2.msra.mxu0 0.0
    %947 = vmatprep.subr.mxu0 0.0
    %948 = vmatpush2.msra.mxu0 0.0
    %949 = vmatprep.subr.mxu0 0.0
    %950 = vmatpush2.msra.mxu0 0.0
    %951 = vmatprep.subr.mxu0 0.0
    %952 = vmatpush2.msra.mxu0 0.0
    %953 = vmatprep.subr.mxu0 0.0
    %954 = vmatpush2.msra.mxu0 0.0
    %955 = vmatprep.subr.mxu0 0.0
    %956 = vmatpush2.msra.mxu0 0.0
    %957 = vmatprep.mubr.f32.mxu0 0.0
    %958 = vmatmul.mubr.f32.gmra.mxu0 %v891
    %v959 = vpop.f32.mrf.mxu0
    %v960 = vadd.f32 0.0, %v959
    %v961 = vpop.f32.mrf.mxu0
    %v962 = vadd.f32 0.0, %v961
    %963 = vdwg.mxu0
    %v964 = vadd.f32 %v870, %v960
    %v965 = vadd.f32 %v871, %v962
    %v966 = vxor.u32 %v964, 2147483648
    %v967 = vmul.f32 %v966, 1.442695
    %v968 = vpow.pop %v967
    %v969 = vadd.f32 %v968, 1.0
    %v970 = vrcp.pop %v969
    %v971 = vmul.f32 1.0, %v970
    %v972 = vtanh.pop %v965
    %v973 = vxor.u32 %v965, 2147483648
    %v974 = vmul.f32 %v973, 1.442695
    %v975 = vpow.pop %v974
    %v976 = vadd.f32 %v975, 1.0
    %v977 = vrcp.pop %v976
    %v978 = vmul.f32 1.0, %v977
    %980 = vrot.lane.b32.xlu0 %v873, 64
    %v981 = vpop.permute.xlu0 %980
    %v983 = vmul.f32 %v971, %v981
    %v984 = vmul.f32 %v971, %v972
    %986 = vrot.lane.b32.xlu0 %v984, 64
    %v987 = vpop.permute.xlu0 %986
    %v989 = vadd.f32 %v983, %v987
    %v990 = vtanh.pop %v989
    %v991 = vmul.f32 %v978, %v990
    %993 = vrot.lane.b32.xlu0 %v991, 64
    %v994 = vpop.permute.xlu0 %993
    %996 = vst.msk [vmem:[#allocation3] sm:$0xff] %vm202, %v994
    %998 = vrot.lane.b32.xlu0 %v989, 64
    %v999 = vpop.permute.xlu0 %998
    %1001 = vst.msk [vmem:[#allocation4] sm:$0xff] %vm202, %v999
    %s1002 = scalar_lea.vmem [#allocation2], 96
    %v1003 = vld [vmem:[%s1002] sm:$0xff]
    %v1004 = vld [vmem:[%s1002 + $0x8] sm:$0xff]
    %v1005 = vld [vmem:[#allocation3] sm:$0xff]
    %v1006 = vld [vmem:[#allocation4] sm:$0xff]
    %v1007 = vld [vmem:[%s2] sm:$0xff]
    %v1008 = vld [vmem:[%s2 + $0x8] sm:$0xff]
    %v1009 = vld [vmem:[%s2 + $0x10] sm:$0xff]
    %v1010 = vld [vmem:[%s2 + $0x18] sm:$0xff]
    %v1011 = vld [vmem:[%s2 + $0x20] sm:$0xff]
    %v1012 = vld [vmem:[%s2 + $0x28] sm:$0xff]
    %v1013 = vld [vmem:[%s2 + $0x30] sm:$0xff]
    %v1014 = vld [vmem:[%s2 + $0x38] sm:$0xff]
    %v1015 = vld [vmem:[%s2 + $0x40] sm:$0xff]
    %v1016 = vld [vmem:[%s2 + $0x48] sm:$0xff]
    %v1017 = vld [vmem:[%s2 + $0x50] sm:$0xff]
    %v1018 = vld [vmem:[%s2 + $0x58] sm:$0xff]
    %v1019 = vld [vmem:[%s2 + $0x60] sm:$0xff]
    %v1020 = vld [vmem:[%s2 + $0x68] sm:$0xff]
    %v1021 = vld [vmem:[%s2 + $0x70] sm:$0xff]
    %v1022 = vld [vmem:[%s2 + $0x78] sm:$0xff]
    %v1024 = vsel %vm202, %v1005, 0
    %1026 = vmatprep.subr.mxu0 0.0
    %1027 = vmatpush1.msra.mxu0 0.0
    %1028 = vmatprep.subr.mxu0 0.0
    %1029 = vmatpush1.msra.mxu0 0.0
    %1030 = vmatprep.subr.mxu0 0.0
    %1031 = vmatpush1.msra.mxu0 0.0
    %1032 = vmatprep.subr.mxu0 0.0
    %1033 = vmatpush1.msra.mxu0 0.0
    %1034 = vmatprep.subr.mxu0 0.0
    %1035 = vmatpush1.msra.mxu0 0.0
    %1036 = vmatprep.subr.mxu0 0.0
    %1037 = vmatpush1.msra.mxu0 0.0
    %1038 = vmatprep.subr.mxu0 0.0
    %1039 = vmatpush1.msra.mxu0 0.0
    %1040 = vmatprep.subr.mxu0 0.0
    %1041 = vmatpush1.msra.mxu0 0.0
    %1042 = vmatprep.subr.mxu0 %v1022
    %1043 = vmatpush1.msra.mxu0 %v1021
    %1044 = vmatprep.subr.mxu0 %v1020
    %1045 = vmatpush1.msra.mxu0 %v1019
    %1046 = vmatprep.subr.mxu0 %v1018
    %1047 = vmatpush1.msra.mxu0 %v1017
    %1048 = vmatprep.subr.mxu0 %v1016
    %1049 = vmatpush1.msra.mxu0 %v1015
    %1050 = vmatprep.subr.mxu0 %v1014
    %1051 = vmatpush1.msra.mxu0 %v1013
    %1052 = vmatprep.subr.mxu0 %v1012
    %1053 = vmatpush1.msra.mxu0 %v1011
    %1054 = vmatprep.subr.mxu0 %v1010
    %1055 = vmatpush1.msra.mxu0 %v1009
    %1056 = vmatprep.subr.mxu0 %v1008
    %1057 = vmatpush1.msra.mxu0 %v1007
    %1058 = vmatprep.subr.mxu0 0.0
    %1059 = vmatpush2.msra.mxu0 0.0
    %1060 = vmatprep.subr.mxu0 0.0
    %1061 = vmatpush2.msra.mxu0 0.0
    %1062 = vmatprep.subr.mxu0 0.0
    %1063 = vmatpush2.msra.mxu0 0.0
    %1064 = vmatprep.subr.mxu0 0.0
    %1065 = vmatpush2.msra.mxu0 0.0
    %1066 = vmatprep.subr.mxu0 0.0
    %1067 = vmatpush2.msra.mxu0 0.0
    %1068 = vmatprep.subr.mxu0 0.0
    %1069 = vmatpush2.msra.mxu0 0.0
    %1070 = vmatprep.subr.mxu0 0.0
    %1071 = vmatpush2.msra.mxu0 0.0
    %1072 = vmatprep.subr.mxu0 0.0
    %1073 = vmatpush2.msra.mxu0 0.0
    %1074 = vmatprep.subr.mxu0 0.0
    %1075 = vmatpush2.msra.mxu0 0.0
    %1076 = vmatprep.subr.mxu0 0.0
    %1077 = vmatpush2.msra.mxu0 0.0
    %1078 = vmatprep.subr.mxu0 0.0
    %1079 = vmatpush2.msra.mxu0 0.0
    %1080 = vmatprep.subr.mxu0 0.0
    %1081 = vmatpush2.msra.mxu0 0.0
    %1082 = vmatprep.subr.mxu0 0.0
    %1083 = vmatpush2.msra.mxu0 0.0
    %1084 = vmatprep.subr.mxu0 0.0
    %1085 = vmatpush2.msra.mxu0 0.0
    %1086 = vmatprep.subr.mxu0 0.0
    %1087 = vmatpush2.msra.mxu0 0.0
    %1088 = vmatprep.subr.mxu0 0.0
    %1089 = vmatpush2.msra.mxu0 0.0
    %1090 = vmatprep.mubr.f32.mxu0 0.0
    %1091 = vmatmul.mubr.f32.gmra.mxu0 %v1024
    %v1092 = vpop.f32.mrf.mxu0
    %v1093 = vadd.f32 0.0, %v1092
    %v1094 = vpop.f32.mrf.mxu0
    %v1095 = vadd.f32 0.0, %v1094
    %1096 = vdwg.mxu0
    %v1097 = vadd.f32 %v1003, %v1093
    %v1098 = vadd.f32 %v1004, %v1095
    %v1099 = vxor.u32 %v1097, 2147483648
    %v1100 = vmul.f32 %v1099, 1.442695
    %v1101 = vpow.pop %v1100
    %v1102 = vadd.f32 %v1101, 1.0
    %v1103 = vrcp.pop %v1102
    %v1104 = vmul.f32 1.0, %v1103
    %v1105 = vtanh.pop %v1098
    %v1106 = vxor.u32 %v1098, 2147483648
    %v1107 = vmul.f32 %v1106, 1.442695
    %v1108 = vpow.pop %v1107
    %v1109 = vadd.f32 %v1108, 1.0
    %v1110 = vrcp.pop %v1109
    %v1111 = vmul.f32 1.0, %v1110
    %1113 = vrot.lane.b32.xlu0 %v1006, 64
    %v1114 = vpop.permute.xlu0 %1113
    %v1116 = vmul.f32 %v1104, %v1114
    %v1117 = vmul.f32 %v1104, %v1105
    %1119 = vrot.lane.b32.xlu0 %v1117, 64
    %v1120 = vpop.permute.xlu0 %1119
    %v1122 = vadd.f32 %v1116, %v1120
    %v1123 = vtanh.pop %v1122
    %v1124 = vmul.f32 %v1111, %v1123
    %1126 = vrot.lane.b32.xlu0 %v1124, 64
    %v1127 = vpop.permute.xlu0 %1126
    %1129 = vst.msk [vmem:[#allocation3] sm:$0xff] %vm202, %v1127
    %1131 = vrot.lane.b32.xlu0 %v1122, 64
    %v1132 = vpop.permute.xlu0 %1131
    %1134 = vst.msk [vmem:[#allocation4] sm:$0xff] %vm202, %v1132
    %s1135 = scalar_lea.vmem [#allocation2], 112
    %v1136 = vld [vmem:[%s1135] sm:$0xff]
    %v1137 = vld [vmem:[%s1135 + $0x8] sm:$0xff]
    %v1138 = vld [vmem:[#allocation3] sm:$0xff]
    %v1139 = vld [vmem:[#allocation4] sm:$0xff]
    %v1140 = vld [vmem:[%s2] sm:$0xff]
    %v1141 = vld [vmem:[%s2 + $0x8] sm:$0xff]
    %v1142 = vld [vmem:[%s2 + $0x10] sm:$0xff]
    %v1143 = vld [vmem:[%s2 + $0x18] sm:$0xff]
    %v1144 = vld [vmem:[%s2 + $0x20] sm:$0xff]
    %v1145 = vld [vmem:[%s2 + $0x28] sm:$0xff]
    %v1146 = vld [vmem:[%s2 + $0x30] sm:$0xff]
    %v1147 = vld [vmem:[%s2 + $0x38] sm:$0xff]
    %v1148 = vld [vmem:[%s2 + $0x40] sm:$0xff]
    %v1149 = vld [vmem:[%s2 + $0x48] sm:$0xff]
    %v1150 = vld [vmem:[%s2 + $0x50] sm:$0xff]
    %v1151 = vld [vmem:[%s2 + $0x58] sm:$0xff]
    %v1152 = vld [vmem:[%s2 + $0x60] sm:$0xff]
    %v1153 = vld [vmem:[%s2 + $0x68] sm:$0xff]
    %v1154 = vld [vmem:[%s2 + $0x70] sm:$0xff]
    %v1155 = vld [vmem:[%s2 + $0x78] sm:$0xff]
    %v1157 = vsel %vm202, %v1138, 0
    %1159 = vmatprep.subr.mxu0 0.0
    %1160 = vmatpush1.msra.mxu0 0.0
    %1161 = vmatprep.subr.mxu0 0.0
    %1162 = vmatpush1.msra.mxu0 0.0
    %1163 = vmatprep.subr.mxu0 0.0
    %1164 = vmatpush1.msra.mxu0 0.0
    %1165 = vmatprep.subr.mxu0 0.0
    %1166 = vmatpush1.msra.mxu0 0.0
    %1167 = vmatprep.subr.mxu0 0.0
    %1168 = vmatpush1.msra.mxu0 0.0
    %1169 = vmatprep.subr.mxu0 0.0
    %1170 = vmatpush1.msra.mxu0 0.0
    %1171 = vmatprep.subr.mxu0 0.0
    %1172 = vmatpush1.msra.mxu0 0.0
    %1173 = vmatprep.subr.mxu0 0.0
    %1174 = vmatpush1.msra.mxu0 0.0
    %1175 = vmatprep.subr.mxu0 %v1155
    %1176 = vmatpush1.msra.mxu0 %v1154
    %1177 = vmatprep.subr.mxu0 %v1153
    %1178 = vmatpush1.msra.mxu0 %v1152
    %1179 = vmatprep.subr.mxu0 %v1151
    %1180 = vmatpush1.msra.mxu0 %v1150
    %1181 = vmatprep.subr.mxu0 %v1149
    %1182 = vmatpush1.msra.mxu0 %v1148
    %1183 = vmatprep.subr.mxu0 %v1147
    %1184 = vmatpush1.msra.mxu0 %v1146
    %1185 = vmatprep.subr.mxu0 %v1145
    %1186 = vmatpush1.msra.mxu0 %v1144
    %1187 = vmatprep.subr.mxu0 %v1143
    %1188 = vmatpush1.msra.mxu0 %v1142
    %1189 = vmatprep.subr.mxu0 %v1141
    %1190 = vmatpush1.msra.mxu0 %v1140
    %1191 = vmatprep.subr.mxu0 0.0
    %1192 = vmatpush2.msra.mxu0 0.0
    %1193 = vmatprep.subr.mxu0 0.0
    %1194 = vmatpush2.msra.mxu0 0.0
    %1195 = vmatprep.subr.mxu0 0.0
    %1196 = vmatpush2.msra.mxu0 0.0
    %1197 = vmatprep.subr.mxu0 0.0
    %1198 = vmatpush2.msra.mxu0 0.0
    %1199 = vmatprep.subr.mxu0 0.0
    %1200 = vmatpush2.msra.mxu0 0.0
    %1201 = vmatprep.subr.mxu0 0.0
    %1202 = vmatpush2.msra.mxu0 0.0
    %1203 = vmatprep.subr.mxu0 0.0
    %1204 = vmatpush2.msra.mxu0 0.0
    %1205 = vmatprep.subr.mxu0 0.0
    %1206 = vmatpush2.msra.mxu0 0.0
    %1207 = vmatprep.subr.mxu0 0.0
    %1208 = vmatpush2.msra.mxu0 0.0
    %1209 = vmatprep.subr.mxu0 0.0
    %1210 = vmatpush2.msra.mxu0 0.0
    %1211 = vmatprep.subr.mxu0 0.0
    %1212 = vmatpush2.msra.mxu0 0.0
    %1213 = vmatprep.subr.mxu0 0.0
    %1214 = vmatpush2.msra.mxu0 0.0
    %1215 = vmatprep.subr.mxu0 0.0
    %1216 = vmatpush2.msra.mxu0 0.0
    %1217 = vmatprep.subr.mxu0 0.0
    %1218 = vmatpush2.msra.mxu0 0.0
    %1219 = vmatprep.subr.mxu0 0.0
    %1220 = vmatpush2.msra.mxu0 0.0
    %1221 = vmatprep.subr.mxu0 0.0
    %1222 = vmatpush2.msra.mxu0 0.0
    %1223 = vmatprep.mubr.f32.mxu0 0.0
    %1224 = vmatmul.mubr.f32.gmra.mxu0 %v1157
    %v1225 = vpop.f32.mrf.mxu0
    %v1226 = vadd.f32 0.0, %v1225
    %v1227 = vpop.f32.mrf.mxu0
    %v1228 = vadd.f32 0.0, %v1227
    %1229 = vdwg.mxu0
    %v1230 = vadd.f32 %v1136, %v1226
    %v1231 = vadd.f32 %v1137, %v1228
    %v1232 = vxor.u32 %v1230, 2147483648
    %v1233 = vmul.f32 %v1232, 1.442695
    %v1234 = vpow.pop %v1233
    %v1235 = vadd.f32 %v1234, 1.0
    %v1236 = vrcp.pop %v1235
    %v1237 = vmul.f32 1.0, %v1236
    %v1238 = vtanh.pop %v1231
    %v1239 = vxor.u32 %v1231, 2147483648
    %v1240 = vmul.f32 %v1239, 1.442695
    %v1241 = vpow.pop %v1240
    %v1242 = vadd.f32 %v1241, 1.0
    %v1243 = vrcp.pop %v1242
    %v1244 = vmul.f32 1.0, %v1243
    %1246 = vrot.lane.b32.xlu0 %v1139, 64
    %v1247 = vpop.permute.xlu0 %1246
    %v1249 = vmul.f32 %v1237, %v1247
    %v1250 = vmul.f32 %v1237, %v1238
    %1252 = vrot.lane.b32.xlu0 %v1250, 64
    %v1253 = vpop.permute.xlu0 %1252
    %v1255 = vadd.f32 %v1249, %v1253
    %v1256 = vtanh.pop %v1255
    %v1257 = vmul.f32 %v1244, %v1256
    %1259 = vrot.lane.b32.xlu0 %v1257, 64
    %v1260 = vpop.permute.xlu0 %1259
    %1262 = vst.msk [vmem:[#allocation3] sm:$0xff] %vm202, %v1260
    %1264 = vrot.lane.b32.xlu0 %v1255, 64
    %v1265 = vpop.permute.xlu0 %1264
    %1267 = vst.msk [vmem:[#allocation4] sm:$0xff] %vm202, %v1265
    %v1268 = vld [vmem:[#allocation3] sm:$0xff]
    %1269 = vst.msk [vmem:[%s4] sm:$0xff] %vm202, %v1268
    %v1270 = vld [vmem:[#allocation4] sm:$0xff]
    %1271 = vst.msk [vmem:[#allocation5] sm:$0xff] %vm202, %v1270
    // Predicated region
    $region18: #{forward.5} parent=1 // pred_check
      _
    $region19: #{forward.5} parent=1 // pred_check_branch
      %1273 = sbr.rel (0) target = $region21
    $region20: #{forward.5} parent=1 // pred_region
      _
    $region21: #{forward.5} parent=1 // pred_fallthru
      _
    // Predicated region
    $region22: #{forward.5} parent=1 // pred_check
      _
    $region23: #{forward.5} parent=1 // pred_check_branch
      %1275 = sbr.rel (0) target = $region25
    $region24: #{forward.5} parent=1 // pred_region
      %s1277 = ssub.s32 128, 128
      %1278 = vsyncadd [#allocation6], %s1277
      %s1280 = sshll.u32 [#allocation5], 4
      %s1281 = int_to_ptr.vmem [resolvable:$true] %s1280
      %1283 = dma.vmem_to_hbm [thread:$0]  %s1281, 128, %s5, [#allocation6]
    $region25: #{forward.5} parent=1 // pred_fallthru
      _
    // Predicated region
    $region26: #{forward.5} parent=1 // pred_check
      _
    $region27: #{forward.5} parent=1 // pred_check_branch
      %1285 = sbr.rel (0) target = $region29
    $region28: #{forward.5} parent=1 // pred_region
      _
    $region29: #{forward.5} parent=1 // pred_fallthru
      _
    // Predicated region
    $region30: #{forward.5} parent=1 // pred_check
      _
    $region31: #{forward.5} parent=1 // pred_check_branch
      %1287 = sbr.rel (0) target = $region33
    $region32: #{forward.5} parent=1 // pred_region
      %1288 = dma.done [#allocation6], 128
    $region33: #{forward.5} parent=1 // pred_fallthru
      _
    %1289 = vsyncpa [#allocation6], 1

// kernel: forward.4
$region0: #{forward.4}
  #allocation0 [shape = 'u32[]', space=smem, size = 0x4, offset = 0x4, fixed_abs, tag = 'smem constant byte address 0x4 - core index']
  #allocation1 [shape = 'u32[144,128]{1,0:T(1,128)}', space=vmem, size = 0x12000, scoped, tag = 'internal scratch']
  #allocation2 [shape = 'f32[8,2,256]{2,1,0:T(2,128)}', space=vmem, size = 0x4000, scoped, tag = 'scratch operand']
  #allocation3 [shape = 'f32[2,64]{1,0:T(2,128)}', space=vmem, size = 0x400, scoped, tag = 'scratch operand']
  #allocation4 [shape = 'f32[2,64]{1,0:T(2,128)}', space=vmem, size = 0x400, scoped, tag = 'scratch operand']
  %s0 = inlined_call_operand.vmem [shape: f32[8,2,32], index: 0, kind: input, shape index: {}]
  %s1 = inlined_call_operand.vmem [shape: f32[32,256], index: 1, kind: input, shape index: {}]
  %s2 = inlined_call_operand.vmem [shape: f32[64,256], index: 2, kind: input, shape index: {}]
  %s3 = inlined_call_operand.vmem [shape: f32[1,256], index: 3, kind: input, shape index: {}]
  %s4 = inlined_call_operand.vmem [shape: f32[2,64], index: 4, kind: output, shape index: {0}]
  %s5 = inlined_call_operand.vmem [shape: f32[2,64], index: 5, kind: output, shape index: {1}]
  %6 = xla_tuple %s4, %s5
  %s7 = sld [smem:[#allocation0]]
  $region34: #{forward.4} parent=0
    _
  %s9 = ssub.s32 1, %s7
  %s10 = scalar_select 0, %s9, %s7
  // Predicated region
  $region2: #{forward.4} parent=0 // pred_check
    _
  $region3: #{forward.4} parent=0 // pred_check_branch
    %12 = sbr.rel (0) target = $region5
  $region4: #{forward.4} parent=0 // pred_region
    _
  $region5: #{forward.4} parent=0 // pred_fallthru
    _
  // Predicated region
  $region6: #{forward.4} parent=0 // pred_check
    _
  $region7: #{forward.4} parent=0 // pred_check_branch
    %14 = sbr.rel (0) target = $region9
  $region8: #{forward.4} parent=0 // pred_region
    _
  $region9: #{forward.4} parent=0 // pred_fallthru
    _
  // Predicated region
  $region10: #{forward.4} parent=0 // pred_check
    _
  $region11: #{forward.4} parent=0 // pred_check_branch
    %16 = sbr.rel (0) target = $region13
  $region12: #{forward.4} parent=0 // pred_region
    _
  $region13: #{forward.4} parent=0 // pred_fallthru
    _
  // Predicated region
  $region14: #{forward.4} parent=0 // pred_check
    _
  $region15: #{forward.4} parent=0 // pred_check_branch
    %18 = sbr.rel (0) target = $region17
  $region16: #{forward.4} parent=0 // pred_region
    _
  $region17: #{forward.4} parent=0 // pred_fallthru
    _
  %v19 = vld [vmem:[%s0] sm:$0x3]
  %v20 = vld [vmem:[%s0 + $0x2] sm:$0x3]
  %v21 = vld [vmem:[%s0 + $0x4] sm:$0x3]
  %v22 = vld [vmem:[%s0 + $0x6] sm:$0x3]
  %v23 = vld [vmem:[%s0 + $0x8] sm:$0x3]
  %v24 = vld [vmem:[%s0 + $0xa] sm:$0x3]
  %v25 = vld [vmem:[%s0 + $0xc] sm:$0x3]
  %v26 = vld [vmem:[%s0 + $0xe] sm:$0x3]
  %v27 = vld [vmem:[%s1] sm:$0xff]
  %v28 = vld [vmem:[%s1 + $0x8] sm:$0xff]
  %v29 = vld [vmem:[%s1 + $0x10] sm:$0xff]
  %v30 = vld [vmem:[%s1 + $0x18] sm:$0xff]
  %v31 = vld [vmem:[%s1 + $0x20] sm:$0xff]
  %v32 = vld [vmem:[%s1 + $0x28] sm:$0xff]
  %v33 = vld [vmem:[%s1 + $0x30] sm:$0xff]
  %v34 = vld [vmem:[%s1 + $0x38] sm:$0xff]
  %v35 = vld [vmem:[%s3] sm:$0x3]
  %v37 = vlaneseq
  %v38 = vshrl.u32 %v37, 7
  %v39 = vsub.s32 0, %v38
  %v40 = vrot.slane %v35, %v39
  %v41 = vlaneseq
  %v42 = vshrl.u32 %v41, 7
  %v43 = vsub.s32 1, %v42
  %v44 = vrot.slane %v35, %v43
  %v55 = vcombine.low %v19, %v20
  %v56 = vcombine.low %v21, %v22
  %v58 = vunpack.c.l.s4 1983009808
  %v59 = vunpack.c.0.s8 %v58
  %v60 = vlaneseq
  %v61 = vshrl.u32 %v60, 7
  %v62 = vsub.s32 %v59, %v61
  %v63 = vrot.slane %v55, %v62
  %v65 = vunpack.c.l.s4 1983009808
  %v66 = vunpack.c.0.s8 %v65
  %v67 = vlaneseq
  %v68 = vshrl.u32 %v67, 7
  %v69 = vsub.s32 %v66, %v68
  %v70 = vrot.slane %v56, %v69
  %v71 = vcombine.low %v63, %v70
  %v72 = vcombine.low %v23, %v24
  %v73 = vcombine.low %v25, %v26
  %v75 = vunpack.c.l.s4 1983009808
  %v76 = vunpack.c.0.s8 %v75
  %v77 = vlaneseq
  %v78 = vshrl.u32 %v77, 7
  %v79 = vsub.s32 %v76, %v78
  %v80 = vrot.slane %v72, %v79
  %v82 = vunpack.c.l.s4 1983009808
  %v83 = vunpack.c.0.s8 %v82
  %v84 = vlaneseq
  %v85 = vshrl.u32 %v84, 7
  %v86 = vsub.s32 %v83, %v85
  %v87 = vrot.slane %v73, %v86
  %v88 = vcombine.low %v80, %v87
  %vm89 = vcmask 261120
  %v90 = vsel %vm89, %v71, 0
  %v92 = vsel %vm89, %v88, 0
  %94 = vmatprep.subr.mxu0 0.0
  %95 = vmatpush1.msra.mxu0 0.0
  %96 = vmatprep.subr.mxu0 0.0
  %97 = vmatpush1.msra.mxu0 0.0
  %98 = vmatprep.subr.mxu0 0.0
  %99 = vmatpush1.msra.mxu0 0.0
  %100 = vmatprep.subr.mxu0 0.0
  %101 = vmatpush1.msra.mxu0 0.0
  %102 = vmatprep.subr.mxu0 0.0
  %103 = vmatpush1.msra.mxu0 0.0
  %104 = vmatprep.subr.mxu0 0.0
  %105 = vmatpush1.msra.mxu0 0.0
  %106 = vmatprep.subr.mxu0 0.0
  %107 = vmatpush1.msra.mxu0 0.0
  %108 = vmatprep.subr.mxu0 0.0
  %109 = vmatpush1.msra.mxu0 0.0
  %110 = vmatprep.subr.mxu0 0.0
  %111 = vmatpush1.msra.mxu0 0.0
  %112 = vmatprep.subr.mxu0 0.0
  %113 = vmatpush1.msra.mxu0 0.0
  %114 = vmatprep.subr.mxu0 0.0
  %115 = vmatpush1.msra.mxu0 0.0
  %116 = vmatprep.subr.mxu0 0.0
  %117 = vmatpush1.msra.mxu0 0.0
  %118 = vmatprep.subr.mxu0 %v34
  %119 = vmatpush1.msra.mxu0 %v33
  %120 = vmatprep.subr.mxu0 %v32
  %121 = vmatpush1.msra.mxu0 %v31
  %122 = vmatprep.subr.mxu0 %v30
  %123 = vmatpush1.msra.mxu0 %v29
  %124 = vmatprep.subr.mxu0 %v28
  %125 = vmatpush1.msra.mxu0 %v27
  %126 = vmatprep.subr.mxu0 0.0
  %127 = vmatpush2.msra.mxu0 0.0
  %128 = vmatprep.subr.mxu0 0.0
  %129 = vmatpush2.msra.mxu0 0.0
  %130 = vmatprep.subr.mxu0 0.0
  %131 = vmatpush2.msra.mxu0 0.0
  %132 = vmatprep.subr.mxu0 0.0
  %133 = vmatpush2.msra.mxu0 0.0
  %134 = vmatprep.subr.mxu0 0.0
  %135 = vmatpush2.msra.mxu0 0.0
  %136 = vmatprep.subr.mxu0 0.0
  %137 = vmatpush2.msra.mxu0 0.0
  %138 = vmatprep.subr.mxu0 0.0
  %139 = vmatpush2.msra.mxu0 0.0
  %140 = vmatprep.subr.mxu0 0.0
  %141 = vmatpush2.msra.mxu0 0.0
  %142 = vmatprep.subr.mxu0 0.0
  %143 = vmatpush2.msra.mxu0 0.0
  %144 = vmatprep.subr.mxu0 0.0
  %145 = vmatpush2.msra.mxu0 0.0
  %146 = vmatprep.subr.mxu0 0.0
  %147 = vmatpush2.msra.mxu0 0.0
  %148 = vmatprep.subr.mxu0 0.0
  %149 = vmatpush2.msra.mxu0 0.0
  %150 = vmatprep.subr.mxu0 0.0
  %151 = vmatpush2.msra.mxu0 0.0
  %152 = vmatprep.subr.mxu0 0.0
  %153 = vmatpush2.msra.mxu0 0.0
  %154 = vmatprep.subr.mxu0 0.0
  %155 = vmatpush2.msra.mxu0 0.0
  %156 = vmatprep.subr.mxu0 0.0
  %157 = vmatpush2.msra.mxu0 0.0
  %158 = vmatprep.mubr.f32.mxu0 0.0
  %159 = vmatmul.mubr.f32.gmra.mxu0 %v90
  %v160 = vpop.f32.mrf.mxu0
  %v161 = vadd.f32 %v40, %v160
  %v162 = vpop.f32.mrf.mxu0
  %v163 = vadd.f32 %v44, %v162
  %164 = vmatprep.mubr.f32.mxu0 0.0
  %165 = vmatmul.mubr.f32.gmra.mxu0 %v92
  %v166 = vpop.f32.mrf.mxu0
  %v167 = vadd.f32 %v40, %v166
  %v168 = vpop.f32.mrf.mxu0
  %v169 = vadd.f32 %v44, %v168
  %170 = vdwg.mxu0
  %v175 = vcombine.low %v161, %v163
  %v176 = vcombine.high %v161, %v163
  %v178 = vunpack.c.l.s4 1983009808
  %v179 = vunpack.c.0.s8 %v178
  %v180 = vlaneseq
  %v181 = vshrl.u32 %v180, 7
  %v182 = vsub.s32 %v179, %v181
  %v183 = vrot.slane %v175, %v182
  %v185 = vunpack.c.l.s4 1983009808
  %v186 = vunpack.c.0.s8 %v185
  %v187 = vlaneseq
  %v188 = vshrl.u32 %v187, 7
  %v189 = vsub.s32 %v186, %v188
  %v190 = vrot.slane %v176, %v189
  %v191 = vcombine.high %v183, %v183
  %v192 = vcombine.high %v190, %v190
  %v193 = vcombine.low %v167, %v169
  %v194 = vcombine.high %v167, %v169
  %v196 = vunpack.c.l.s4 1983009808
  %v197 = vunpack.c.0.s8 %v196
  %v198 = vlaneseq
  %v199 = vshrl.u32 %v198, 7
  %v200 = vsub.s32 %v197, %v199
  %v201 = vrot.slane %v193, %v200
  %v203 = vunpack.c.l.s4 1983009808
  %v204 = vunpack.c.0.s8 %v203
  %v205 = vlaneseq
  %v206 = vshrl.u32 %v205, 7
  %v207 = vsub.s32 %v204, %v206
  %v208 = vrot.slane %v194, %v207
  %v209 = vcombine.high %v201, %v201
  %v210 = vcombine.high %v208, %v208
  %219 = vst [vmem:[#allocation2] sm:$0xf] %v183
  %220 = vst [vmem:[#allocation2 + $0x4] sm:$0xf] %v191
  %221 = vst [vmem:[#allocation2 + $0x8] sm:$0xf] %v190
  %222 = vst [vmem:[#allocation2 + $0xc] sm:$0xf] %v192
  %223 = vst [vmem:[#allocation2 + $0x10] sm:$0xf] %v201
  %224 = vst [vmem:[#allocation2 + $0x14] sm:$0xf] %v209
  %225 = vst [vmem:[#allocation2 + $0x18] sm:$0xf] %v208
  %226 = vst [vmem:[#allocation2 + $0x1c] sm:$0xf] %v210
  %vm227 = vcmask 517120
  %228 = vst.msk [vmem:[#allocation3] sm:$0x3] %vm227, 0.0
  %229 = vst.msk [vmem:[#allocation4] sm:$0x3] %vm227, 0.0
  %v230 = vld [vmem:[#allocation2] sm:$0xf]
  %v231 = vld [vmem:[#allocation3] sm:$0x3]
  %v232 = vld [vmem:[#allocation4] sm:$0x3]
  %v233 = vld [vmem:[%s2] sm:$0xff]
  %v234 = vld [vmem:[%s2 + $0x8] sm:$0xff]
  %v235 = vld [vmem:[%s2 + $0x10] sm:$0xff]
  %v236 = vld [vmem:[%s2 + $0x18] sm:$0xff]
  %v237 = vld [vmem:[%s2 + $0x20] sm:$0xff]
  %v238 = vld [vmem:[%s2 + $0x28] sm:$0xff]
  %v239 = vld [vmem:[%s2 + $0x30] sm:$0xff]
  %v240 = vld [vmem:[%s2 + $0x38] sm:$0xff]
  %v241 = vld [vmem:[%s2 + $0x40] sm:$0xff]
  %v242 = vld [vmem:[%s2 + $0x48] sm:$0xff]
  %v243 = vld [vmem:[%s2 + $0x50] sm:$0xff]
  %v244 = vld [vmem:[%s2 + $0x58] sm:$0xff]
  %v245 = vld [vmem:[%s2 + $0x60] sm:$0xff]
  %v246 = vld [vmem:[%s2 + $0x68] sm:$0xff]
  %v247 = vld [vmem:[%s2 + $0x70] sm:$0xff]
  %v248 = vld [vmem:[%s2 + $0x78] sm:$0xff]
  %vm249 = vcmask 523264
  %v251 = vsel %vm249, %v231, 0
  %253 = vmatprep.subr.mxu0 0.0
  %254 = vmatpush1.msra.mxu0 0.0
  %255 = vmatprep.subr.mxu0 0.0
  %256 = vmatpush1.msra.mxu0 0.0
  %257 = vmatprep.subr.mxu0 0.0
  %258 = vmatpush1.msra.mxu0 0.0
  %259 = vmatprep.subr.mxu0 0.0
  %260 = vmatpush1.msra.mxu0 0.0
  %261 = vmatprep.subr.mxu0 0.0
  %262 = vmatpush1.msra.mxu0 0.0
  %263 = vmatprep.subr.mxu0 0.0
  %264 = vmatpush1.msra.mxu0 0.0
  %265 = vmatprep.subr.mxu0 0.0
  %266 = vmatpush1.msra.mxu0 0.0
  %267 = vmatprep.subr.mxu0 0.0
  %268 = vmatpush1.msra.mxu0 0.0
  %269 = vmatprep.subr.mxu0 %v248
  %270 = vmatpush1.msra.mxu0 %v247
  %271 = vmatprep.subr.mxu0 %v246
  %272 = vmatpush1.msra.mxu0 %v245
  %273 = vmatprep.subr.mxu0 %v244
  %274 = vmatpush1.msra.mxu0 %v243
  %275 = vmatprep.subr.mxu0 %v242
  %276 = vmatpush1.msra.mxu0 %v241
  %277 = vmatprep.subr.mxu0 %v240
  %278 = vmatpush1.msra.mxu0 %v239
  %279 = vmatprep.subr.mxu0 %v238
  %280 = vmatpush1.msra.mxu0 %v237
  %281 = vmatprep.subr.mxu0 %v236
  %282 = vmatpush1.msra.mxu0 %v235
  %283 = vmatprep.subr.mxu0 %v234
  %284 = vmatpush1.msra.mxu0 %v233
  %285 = vmatprep.subr.mxu0 0.0
  %286 = vmatpush2.msra.mxu0 0.0
  %287 = vmatprep.subr.mxu0 0.0
  %288 = vmatpush2.msra.mxu0 0.0
  %289 = vmatprep.subr.mxu0 0.0
  %290 = vmatpush2.msra.mxu0 0.0
  %291 = vmatprep.subr.mxu0 0.0
  %292 = vmatpush2.msra.mxu0 0.0
  %293 = vmatprep.subr.mxu0 0.0
  %294 = vmatpush2.msra.mxu0 0.0
  %295 = vmatprep.subr.mxu0 0.0
  %296 = vmatpush2.msra.mxu0 0.0
  %297 = vmatprep.subr.mxu0 0.0
  %298 = vmatpush2.msra.mxu0 0.0
  %299 = vmatprep.subr.mxu0 0.0
  %300 = vmatpush2.msra.mxu0 0.0
  %301 = vmatprep.subr.mxu0 0.0
  %302 = vmatpush2.msra.mxu0 0.0
  %303 = vmatprep.subr.mxu0 0.0
  %304 = vmatpush2.msra.mxu0 0.0
  %305 = vmatprep.subr.mxu0 0.0
  %306 = vmatpush2.msra.mxu0 0.0
  %307 = vmatprep.subr.mxu0 0.0
  %308 = vmatpush2.msra.mxu0 0.0
  %309 = vmatprep.subr.mxu0 0.0
  %310 = vmatpush2.msra.mxu0 0.0
  %311 = vmatprep.subr.mxu0 0.0
  %312 = vmatpush2.msra.mxu0 0.0
  %313 = vmatprep.subr.mxu0 0.0
  %314 = vmatpush2.msra.mxu0 0.0
  %315 = vmatprep.subr.mxu0 0.0
  %316 = vmatpush2.msra.mxu0 0.0
  %317 = vmatprep.mubr.f32.mxu0 0.0
  %318 = vmatmul.mubr.f32.gmra.mxu0 %v251
  %v319 = vpop.f32.mrf.mxu0
  %v320 = vadd.f32 0.0, %v319
  %v321 = vpop.f32.mrf.mxu0
  %v322 = vadd.f32 0.0, %v321
  %323 = vdwg.mxu0
  %v326 = vcombine.low %v320, %v322
  %v328 = vunpack.c.l.s4 1983009808
  %v329 = vunpack.c.0.s8 %v328
  %v330 = vlaneseq
  %v331 = vshrl.u32 %v330, 7
  %v332 = vsub.s32 %v329, %v331
  %v333 = vrot.slane %v326, %v332
  %v335 = vadd.f32 %v230, %v333
  %v336 = vxor.u32 %v335, 2147483648
  %v337 = vmul.f32 %v336, 1.442695
  %v338 = vpow.pop %v337
  %v339 = vadd.f32 %v338, 1.0
  %v340 = vrcp.pop %v339
  %v341 = vmul.f32 1.0, %v340
  %v343 = vrot.slane %v335, 2
  %v345 = vtanh.pop %v343
  %346 = vrot.lane.b32.xlu0 %v335, 64
  %v347 = vpop.permute.xlu0 %346
  %v348 = vrot.slane %v347, 2
  %v350 = vxor.u32 %v348, 2147483648
  %v351 = vmul.f32 %v350, 1.442695
  %v352 = vpow.pop %v351
  %v353 = vadd.f32 %v352, 1.0
  %v354 = vrcp.pop %v353
  %v355 = vmul.f32 1.0, %v354
  %v358 = vunpack.c.l.s4 1983009808
  %v359 = vunpack.c.0.s8 %v358
  %v360 = vlaneseq
  %v361 = vshrl.u32 %v360, 7
  %v362 = vsub.s32 %v359, %v361
  %v363 = vrot.slane %v232, %v362
  %364 = vrot.lane.b32.xlu0 %v363, 64
  %v365 = vpop.permute.xlu0 %364
  %v367 = vmul.f32 %v341, %v365
  %v368 = vmul.f32 %v341, %v345
  %370 = vrot.lane.b32.xlu0 %v368, 64
  %v371 = vpop.permute.xlu0 %370
  %v373 = vadd.f32 %v367, %v371
  %v374 = vtanh.pop %v373
  %376 = vrot.lane.b32.xlu0 %v374, 64
  %v377 = vpop.permute.xlu0 %376
  %v379 = vmul.f32 %v355, %v377
  %380 = vst.msk [vmem:[#allocation3] sm:$0x3] %vm227, %v379
  %v383 = vunpack.c.l.s4 1983009808
  %v384 = vunpack.c.0.s8 %v383
  %v385 = vlaneseq
  %v386 = vshrl.u32 %v385, 7
  %v387 = vsub.s32 %v384, %v386
  %v388 = vrot.slane %v373, %v387
  %389 = vrot.lane.b32.xlu0 %v388, 64
  %v390 = vpop.permute.xlu0 %389
  %392 = vst.msk [vmem:[#allocation4] sm:$0x3] %vm227, %v390
  %s393 = scalar_lea.vmem [#allocation2], 4
  %v394 = vld [vmem:[%s393] sm:$0xf]
  %v395 = vld [vmem:[#allocation3] sm:$0x3]
  %v396 = vld [vmem:[#allocation4] sm:$0x3]
  %v397 = vld [vmem:[%s2] sm:$0xff]
  %v398 = vld [vmem:[%s2 + $0x8] sm:$0xff]
  %v399 = vld [vmem:[%s2 + $0x10] sm:$0xff]
  %v400 = vld [vmem:[%s2 + $0x18] sm:$0xff]
  %v401 = vld [vmem:[%s2 + $0x20] sm:$0xff]
  %v402 = vld [vmem:[%s2 + $0x28] sm:$0xff]
  %v403 = vld [vmem:[%s2 + $0x30] sm:$0xff]
  %v404 = vld [vmem:[%s2 + $0x38] sm:$0xff]
  %v405 = vld [vmem:[%s2 + $0x40] sm:$0xff]
  %v406 = vld [vmem:[%s2 + $0x48] sm:$0xff]
  %v407 = vld [vmem:[%s2 + $0x50] sm:$0xff]
  %v408 = vld [vmem:[%s2 + $0x58] sm:$0xff]
  %v409 = vld [vmem:[%s2 + $0x60] sm:$0xff]
  %v410 = vld [vmem:[%s2 + $0x68] sm:$0xff]
  %v411 = vld [vmem:[%s2 + $0x70] sm:$0xff]
  %v412 = vld [vmem:[%s2 + $0x78] sm:$0xff]
  %v414 = vsel %vm249, %v395, 0
  %416 = vmatprep.subr.mxu0 0.0
  %417 = vmatpush1.msra.mxu0 0.0
  %418 = vmatprep.subr.mxu0 0.0
  %419 = vmatpush1.msra.mxu0 0.0
  %420 = vmatprep.subr.mxu0 0.0
  %421 = vmatpush1.msra.mxu0 0.0
  %422 = vmatprep.subr.mxu0 0.0
  %423 = vmatpush1.msra.mxu0 0.0
  %424 = vmatprep.subr.mxu0 0.0
  %425 = vmatpush1.msra.mxu0 0.0
  %426 = vmatprep.subr.mxu0 0.0
  %427 = vmatpush1.msra.mxu0 0.0
  %428 = vmatprep.subr.mxu0 0.0
  %429 = vmatpush1.msra.mxu0 0.0
  %430 = vmatprep.subr.mxu0 0.0
  %431 = vmatpush1.msra.mxu0 0.0
  %432 = vmatprep.subr.mxu0 %v412
  %433 = vmatpush1.msra.mxu0 %v411
  %434 = vmatprep.subr.mxu0 %v410
  %435 = vmatpush1.msra.mxu0 %v409
  %436 = vmatprep.subr.mxu0 %v408
  %437 = vmatpush1.msra.mxu0 %v407
  %438 = vmatprep.subr.mxu0 %v406
  %439 = vmatpush1.msra.mxu0 %v405
  %440 = vmatprep.subr.mxu0 %v404
  %441 = vmatpush1.msra.mxu0 %v403
  %442 = vmatprep.subr.mxu0 %v402
  %443 = vmatpush1.msra.mxu0 %v401
  %444 = vmatprep.subr.mxu0 %v400
  %445 = vmatpush1.msra.mxu0 %v399
  %446 = vmatprep.subr.mxu0 %v398
  %447 = vmatpush1.msra.mxu0 %v397
  %448 = vmatprep.subr.mxu0 0.0
  %449 = vmatpush2.msra.mxu0 0.0
  %450 = vmatprep.subr.mxu0 0.0
  %451 = vmatpush2.msra.mxu0 0.0
  %452 = vmatprep.subr.mxu0 0.0
  %453 = vmatpush2.msra.mxu0 0.0
  %454 = vmatprep.subr.mxu0 0.0
  %455 = vmatpush2.msra.mxu0 0.0
  %456 = vmatprep.subr.mxu0 0.0
  %457 = vmatpush2.msra.mxu0 0.0
  %458 = vmatprep.subr.mxu0 0.0
  %459 = vmatpush2.msra.mxu0 0.0
  %460 = vmatprep.subr.mxu0 0.0
  %461 = vmatpush2.msra.mxu0 0.0
  %462 = vmatprep.subr.mxu0 0.0
  %463 = vmatpush2.msra.mxu0 0.0
  %464 = vmatprep.subr.mxu0 0.0
  %465 = vmatpush2.msra.mxu0 0.0
  %466 = vmatprep.subr.mxu0 0.0
  %467 = vmatpush2.msra.mxu0 0.0
  %468 = vmatprep.subr.mxu0 0.0
  %469 = vmatpush2.msra.mxu0 0.0
  %470 = vmatprep.subr.mxu0 0.0
  %471 = vmatpush2.msra.mxu0 0.0
  %472 = vmatprep.subr.mxu0 0.0
  %473 = vmatpush2.msra.mxu0 0.0
  %474 = vmatprep.subr.mxu0 0.0
  %475 = vmatpush2.msra.mxu0 0.0
  %476 = vmatprep.subr.mxu0 0.0
  %477 = vmatpush2.msra.mxu0 0.0
  %478 = vmatprep.subr.mxu0 0.0
  %479 = vmatpush2.msra.mxu0 0.0
  %480 = vmatprep.mubr.f32.mxu0 0.0
  %481 = vmatmul.mubr.f32.gmra.mxu0 %v414
  %v482 = vpop.f32.mrf.mxu0
  %v483 = vadd.f32 0.0, %v482
  %v484 = vpop.f32.mrf.mxu0
  %v485 = vadd.f32 0.0, %v484
  %486 = vdwg.mxu0
  %v489 = vcombine.low %v483, %v485
  %v491 = vunpack.c.l.s4 1983009808
  %v492 = vunpack.c.0.s8 %v491
  %v493 = vlaneseq
  %v494 = vshrl.u32 %v493, 7
  %v495 = vsub.s32 %v492, %v494
  %v496 = vrot.slane %v489, %v495
  %v498 = vadd.f32 %v394, %v496
  %v499 = vxor.u32 %v498, 2147483648
  %v500 = vmul.f32 %v499, 1.442695
  %v501 = vpow.pop %v500
  %v502 = vadd.f32 %v501, 1.0
  %v503 = vrcp.pop %v502
  %v504 = vmul.f32 1.0, %v503
  %v506 = vrot.slane %v498, 2
  %v508 = vtanh.pop %v506
  %509 = vrot.lane.b32.xlu0 %v498, 64
  %v510 = vpop.permute.xlu0 %509
  %v511 = vrot.slane %v510, 2
  %v513 = vxor.u32 %v511, 2147483648
  %v514 = vmul.f32 %v513, 1.442695
  %v515 = vpow.pop %v514
  %v516 = vadd.f32 %v515, 1.0
  %v517 = vrcp.pop %v516
  %v518 = vmul.f32 1.0, %v517
  %v521 = vunpack.c.l.s4 1983009808
  %v522 = vunpack.c.0.s8 %v521
  %v523 = vlaneseq
  %v524 = vshrl.u32 %v523, 7
  %v525 = vsub.s32 %v522, %v524
  %v526 = vrot.slane %v396, %v525
  %527 = vrot.lane.b32.xlu0 %v526, 64
  %v528 = vpop.permute.xlu0 %527
  %v530 = vmul.f32 %v504, %v528
  %v531 = vmul.f32 %v504, %v508
  %533 = vrot.lane.b32.xlu0 %v531, 64
  %v534 = vpop.permute.xlu0 %533
  %v536 = vadd.f32 %v530, %v534
  %v537 = vtanh.pop %v536
  %539 = vrot.lane.b32.xlu0 %v537, 64
  %v540 = vpop.permute.xlu0 %539
  %v542 = vmul.f32 %v518, %v540
  %543 = vst.msk [vmem:[#allocation3] sm:$0x3] %vm227, %v542
  %v546 = vunpack.c.l.s4 1983009808
  %v547 = vunpack.c.0.s8 %v546
  %v548 = vlaneseq
  %v549 = vshrl.u32 %v548, 7
  %v550 = vsub.s32 %v547, %v549
  %v551 = vrot.slane %v536, %v550
  %552 = vrot.lane.b32.xlu0 %v551, 64
  %v553 = vpop.permute.xlu0 %552
  %555 = vst.msk [vmem:[#allocation4] sm:$0x3] %vm227, %v553
  %s556 = scalar_lea.vmem [#allocation2], 8
  %v557 = vld [vmem:[%s556] sm:$0xf]
  %v558 = vld [vmem:[#allocation3] sm:$0x3]
  %v559 = vld [vmem:[#allocation4] sm:$0x3]
  %v560 = vld [vmem:[%s2] sm:$0xff]
  %v561 = vld [vmem:[%s2 + $0x8] sm:$0xff]
  %v562 = vld [vmem:[%s2 + $0x10] sm:$0xff]
  %v563 = vld [vmem:[%s2 + $0x18] sm:$0xff]
  %v564 = vld [vmem:[%s2 + $0x20] sm:$0xff]
  %v565 = vld [vmem:[%s2 + $0x28] sm:$0xff]
  %v566 = vld [vmem:[%s2 + $0x30] sm:$0xff]
  %v567 = vld [vmem:[%s2 + $0x38] sm:$0xff]
  %v568 = vld [vmem:[%s2 + $0x40] sm:$0xff]
  %v569 = vld [vmem:[%s2 + $0x48] sm:$0xff]
  %v570 = vld [vmem:[%s2 + $0x50] sm:$0xff]
  %v571 = vld [vmem:[%s2 + $0x58] sm:$0xff]
  %v572 = vld [vmem:[%s2 + $0x60] sm:$0xff]
  %v573 = vld [vmem:[%s2 + $0x68] sm:$0xff]
  %v574 = vld [vmem:[%s2 + $0x70] sm:$0xff]
  %v575 = vld [vmem:[%s2 + $0x78] sm:$0xff]
  %v577 = vsel %vm249, %v558, 0
  %579 = vmatprep.subr.mxu0 0.0
  %580 = vmatpush1.msra.mxu0 0.0
  %581 = vmatprep.subr.mxu0 0.0
  %582 = vmatpush1.msra.mxu0 0.0
  %583 = vmatprep.subr.mxu0 0.0
  %584 = vmatpush1.msra.mxu0 0.0
  %585 = vmatprep.subr.mxu0 0.0
  %586 = vmatpush1.msra.mxu0 0.0
  %587 = vmatprep.subr.mxu0 0.0
  %588 = vmatpush1.msra.mxu0 0.0
  %589 = vmatprep.subr.mxu0 0.0
  %590 = vmatpush1.msra.mxu0 0.0
  %591 = vmatprep.subr.mxu0 0.0
  %592 = vmatpush1.msra.mxu0 0.0
  %593 = vmatprep.subr.mxu0 0.0
  %594 = vmatpush1.msra.mxu0 0.0
  %595 = vmatprep.subr.mxu0 %v575
  %596 = vmatpush1.msra.mxu0 %v574
  %597 = vmatprep.subr.mxu0 %v573
  %598 = vmatpush1.msra.mxu0 %v572
  %599 = vmatprep.subr.mxu0 %v571
  %600 = vmatpush1.msra.mxu0 %v570
  %601 = vmatprep.subr.mxu0 %v569
  %602 = vmatpush1.msra.mxu0 %v568
  %603 = vmatprep.subr.mxu0 %v567
  %604 = vmatpush1.msra.mxu0 %v566
  %605 = vmatprep.subr.mxu0 %v565
  %606 = vmatpush1.msra.mxu0 %v564
  %607 = vmatprep.subr.mxu0 %v563
  %608 = vmatpush1.msra.mxu0 %v562
  %609 = vmatprep.subr.mxu0 %v561
  %610 = vmatpush1.msra.mxu0 %v560
  %611 = vmatprep.subr.mxu0 0.0
  %612 = vmatpush2.msra.mxu0 0.0
  %613 = vmatprep.subr.mxu0 0.0
  %614 = vmatpush2.msra.mxu0 0.0
  %615 = vmatprep.subr.mxu0 0.0
  %616 = vmatpush2.msra.mxu0 0.0
  %617 = vmatprep.subr.mxu0 0.0
  %618 = vmatpush2.msra.mxu0 0.0
  %619 = vmatprep.subr.mxu0 0.0
  %620 = vmatpush2.msra.mxu0 0.0
  %621 = vmatprep.subr.mxu0 0.0
  %622 = vmatpush2.msra.mxu0 0.0
  %623 = vmatprep.subr.mxu0 0.0
  %624 = vmatpush2.msra.mxu0 0.0
  %625 = vmatprep.subr.mxu0 0.0
  %626 = vmatpush2.msra.mxu0 0.0
  %627 = vmatprep.subr.mxu0 0.0
  %628 = vmatpush2.msra.mxu0 0.0
  %629 = vmatprep.subr.mxu0 0.0
  %630 = vmatpush2.msra.mxu0 0.0
  %631 = vmatprep.subr.mxu0 0.0
  %632 = vmatpush2.msra.mxu0 0.0
  %633 = vmatprep.subr.mxu0 0.0
  %634 = vmatpush2.msra.mxu0 0.0
  %635 = vmatprep.subr.mxu0 0.0
  %636 = vmatpush2.msra.mxu0 0.0
  %637 = vmatprep.subr.mxu0 0.0
  %638 = vmatpush2.msra.mxu0 0.0
  %639 = vmatprep.subr.mxu0 0.0
  %640 = vmatpush2.msra.mxu0 0.0
  %641 = vmatprep.subr.mxu0 0.0
  %642 = vmatpush2.msra.mxu0 0.0
  %643 = vmatprep.mubr.f32.mxu0 0.0
  %644 = vmatmul.mubr.f32.gmra.mxu0 %v577
  %v645 = vpop.f32.mrf.mxu0
  %v646 = vadd.f32 0.0, %v645
  %v647 = vpop.f32.mrf.mxu0
  %v648 = vadd.f32 0.0, %v647
  %649 = vdwg.mxu0
  %v652 = vcombine.low %v646, %v648
  %v654 = vunpack.c.l.s4 1983009808
  %v655 = vunpack.c.0.s8 %v654
  %v656 = vlaneseq
  %v657 = vshrl.u32 %v656, 7
  %v658 = vsub.s32 %v655, %v657
  %v659 = vrot.slane %v652, %v658
  %v661 = vadd.f32 %v557, %v659
  %v662 = vxor.u32 %v661, 2147483648
  %v663 = vmul.f32 %v662, 1.442695
  %v664 = vpow.pop %v663
  %v665 = vadd.f32 %v664, 1.0
  %v666 = vrcp.pop %v665
  %v667 = vmul.f32 1.0, %v666
  %v669 = vrot.slane %v661, 2
  %v671 = vtanh.pop %v669
  %672 = vrot.lane.b32.xlu0 %v661, 64
  %v673 = vpop.permute.xlu0 %672
  %v674 = vrot.slane %v673, 2
  %v676 = vxor.u32 %v674, 2147483648
  %v677 = vmul.f32 %v676, 1.442695
  %v678 = vpow.pop %v677
  %v679 = vadd.f32 %v678, 1.0
  %v680 = vrcp.pop %v679
  %v681 = vmul.f32 1.0, %v680
  %v684 = vunpack.c.l.s4 1983009808
  %v685 = vunpack.c.0.s8 %v684
  %v686 = vlaneseq
  %v687 = vshrl.u32 %v686, 7
  %v688 = vsub.s32 %v685, %v687
  %v689 = vrot.slane %v559, %v688
  %690 = vrot.lane.b32.xlu0 %v689, 64
  %v691 = vpop.permute.xlu0 %690
  %v693 = vmul.f32 %v667, %v691
  %v694 = vmul.f32 %v667, %v671
  %696 = vrot.lane.b32.xlu0 %v694, 64
  %v697 = vpop.permute.xlu0 %696
  %v699 = vadd.f32 %v693, %v697
  %v700 = vtanh.pop %v699
  %702 = vrot.lane.b32.xlu0 %v700, 64
  %v703 = vpop.permute.xlu0 %702
  %v705 = vmul.f32 %v681, %v703
  %706 = vst.msk [vmem:[#allocation3] sm:$0x3] %vm227, %v705
  %v709 = vunpack.c.l.s4 1983009808
  %v710 = vunpack.c.0.s8 %v709
  %v711 = vlaneseq
  %v712 = vshrl.u32 %v711, 7
  %v713 = vsub.s32 %v710, %v712
  %v714 = vrot.slane %v699, %v713
  %715 = vrot.lane.b32.xlu0 %v714, 64
  %v716 = vpop.permute.xlu0 %715
  %718 = vst.msk [vmem:[#allocation4] sm:$0x3] %vm227, %v716
  %s719 = scalar_lea.vmem [#allocation2], 12
  %v720 = vld [vmem:[%s719] sm:$0xf]
  %v721 = vld [vmem:[#allocation3] sm:$0x3]
  %v722 = vld [vmem:[#allocation4] sm:$0x3]
  %v723 = vld [vmem:[%s2] sm:$0xff]
  %v724 = vld [vmem:[%s2 + $0x8] sm:$0xff]
  %v725 = vld [vmem:[%s2 + $0x10] sm:$0xff]
  %v726 = vld [vmem:[%s2 + $0x18] sm:$0xff]
  %v727 = vld [vmem:[%s2 + $0x20] sm:$0xff]
  %v728 = vld [vmem:[%s2 + $0x28] sm:$0xff]
  %v729 = vld [vmem:[%s2 + $0x30] sm:$0xff]
  %v730 = vld [vmem:[%s2 + $0x38] sm:$0xff]
  %v731 = vld [vmem:[%s2 + $0x40] sm:$0xff]
  %v732 = vld [vmem:[%s2 + $0x48] sm:$0xff]
  %v733 = vld [vmem:[%s2 + $0x50] sm:$0xff]
  %v734 = vld [vmem:[%s2 + $0x58] sm:$0xff]
  %v735 = vld [vmem:[%s2 + $0x60] sm:$0xff]
  %v736 = vld [vmem:[%s2 + $0x68] sm:$0xff]
  %v737 = vld [vmem:[%s2 + $0x70] sm:$0xff]
  %v738 = vld [vmem:[%s2 + $0x78] sm:$0xff]
  %v740 = vsel %vm249, %v721, 0
  %742 = vmatprep.subr.mxu0 0.0
  %743 = vmatpush1.msra.mxu0 0.0
  %744 = vmatprep.subr.mxu0 0.0
  %745 = vmatpush1.msra.mxu0 0.0
  %746 = vmatprep.subr.mxu0 0.0
  %747 = vmatpush1.msra.mxu0 0.0
  %748 = vmatprep.subr.mxu0 0.0
  %749 = vmatpush1.msra.mxu0 0.0
  %750 = vmatprep.subr.mxu0 0.0
  %751 = vmatpush1.msra.mxu0 0.0
  %752 = vmatprep.subr.mxu0 0.0
  %753 = vmatpush1.msra.mxu0 0.0
  %754 = vmatprep.subr.mxu0 0.0
  %755 = vmatpush1.msra.mxu0 0.0
  %756 = vmatprep.subr.mxu0 0.0
  %757 = vmatpush1.msra.mxu0 0.0
  %758 = vmatprep.subr.mxu0 %v738
  %759 = vmatpush1.msra.mxu0 %v737
  %760 = vmatprep.subr.mxu0 %v736
  %761 = vmatpush1.msra.mxu0 %v735
  %762 = vmatprep.subr.mxu0 %v734
  %763 = vmatpush1.msra.mxu0 %v733
  %764 = vmatprep.subr.mxu0 %v732
  %765 = vmatpush1.msra.mxu0 %v731
  %766 = vmatprep.subr.mxu0 %v730
  %767 = vmatpush1.msra.mxu0 %v729
  %768 = vmatprep.subr.mxu0 %v728
  %769 = vmatpush1.msra.mxu0 %v727
  %770 = vmatprep.subr.mxu0 %v726
  %771 = vmatpush1.msra.mxu0 %v725
  %772 = vmatprep.subr.mxu0 %v724
  %773 = vmatpush1.msra.mxu0 %v723
  %774 = vmatprep.subr.mxu0 0.0
  %775 = vmatpush2.msra.mxu0 0.0
  %776 = vmatprep.subr.mxu0 0.0
  %777 = vmatpush2.msra.mxu0 0.0
  %778 = vmatprep.subr.mxu0 0.0
  %779 = vmatpush2.msra.mxu0 0.0
  %780 = vmatprep.subr.mxu0 0.0
  %781 = vmatpush2.msra.mxu0 0.0
  %782 = vmatprep.subr.mxu0 0.0
  %783 = vmatpush2.msra.mxu0 0.0
  %784 = vmatprep.subr.mxu0 0.0
  %785 = vmatpush2.msra.mxu0 0.0
  %786 = vmatprep.subr.mxu0 0.0
  %787 = vmatpush2.msra.mxu0 0.0
  %788 = vmatprep.subr.mxu0 0.0
  %789 = vmatpush2.msra.mxu0 0.0
  %790 = vmatprep.subr.mxu0 0.0
  %791 = vmatpush2.msra.mxu0 0.0
  %792 = vmatprep.subr.mxu0 0.0
  %793 = vmatpush2.msra.mxu0 0.0
  %794 = vmatprep.subr.mxu0 0.0
  %795 = vmatpush2.msra.mxu0 0.0
  %796 = vmatprep.subr.mxu0 0.0
  %797 = vmatpush2.msra.mxu0 0.0
  %798 = vmatprep.subr.mxu0 0.0
  %799 = vmatpush2.msra.mxu0 0.0
  %800 = vmatprep.subr.mxu0 0.0
  %801 = vmatpush2.msra.mxu0 0.0
  %802 = vmatprep.subr.mxu0 0.0
  %803 = vmatpush2.msra.mxu0 0.0
  %804 = vmatprep.subr.mxu0 0.0
  %805 = vmatpush2.msra.mxu0 0.0
  %806 = vmatprep.mubr.f32.mxu0 0.0
  %807 = vmatmul.mubr.f32.gmra.mxu0 %v740
  %v808 = vpop.f32.mrf.mxu0
  %v809 = vadd.f32 0.0, %v808
  %v810 = vpop.f32.mrf.mxu0
  %v811 = vadd.f32 0.0, %v810
  %812 = vdwg.mxu0
  %v815 = vcombine.low %v809, %v811
  %v817 = vunpack.c.l.s4 1983009808
  %v818 = vunpack.c.0.s8 %v817
  %v819 = vlaneseq
  %v820 = vshrl.u32 %v819, 7
  %v821 = vsub.s32 %v818, %v820
  %v822 = vrot.slane %v815, %v821
  %v824 = vadd.f32 %v720, %v822
  %v825 = vxor.u32 %v824, 2147483648
  %v826 = vmul.f32 %v825, 1.442695
  %v827 = vpow.pop %v826
  %v828 = vadd.f32 %v827, 1.0
  %v829 = vrcp.pop %v828
  %v830 = vmul.f32 1.0, %v829
  %v832 = vrot.slane %v824, 2
  %v834 = vtanh.pop %v832
  %835 = vrot.lane.b32.xlu0 %v824, 64
  %v836 = vpop.permute.xlu0 %835
  %v837 = vrot.slane %v836, 2
  %v839 = vxor.u32 %v837, 2147483648
  %v840 = vmul.f32 %v839, 1.442695
  %v841 = vpow.pop %v840
  %v842 = vadd.f32 %v841, 1.0
  %v843 = vrcp.pop %v842
  %v844 = vmul.f32 1.0, %v843
  %v847 = vunpack.c.l.s4 1983009808
  %v848 = vunpack.c.0.s8 %v847
  %v849 = vlaneseq
  %v850 = vshrl.u32 %v849, 7
  %v851 = vsub.s32 %v848, %v850
  %v852 = vrot.slane %v722, %v851
  %853 = vrot.lane.b32.xlu0 %v852, 64
  %v854 = vpop.permute.xlu0 %853
  %v856 = vmul.f32 %v830, %v854
  %v857 = vmul.f32 %v830, %v834
  %859 = vrot.lane.b32.xlu0 %v857, 64
  %v860 = vpop.permute.xlu0 %859
  %v862 = vadd.f32 %v856, %v860
  %v863 = vtanh.pop %v862
  %865 = vrot.lane.b32.xlu0 %v863, 64
  %v866 = vpop.permute.xlu0 %865
  %v868 = vmul.f32 %v844, %v866
  %869 = vst.msk [vmem:[#allocation3] sm:$0x3] %vm227, %v868
  %v872 = vunpack.c.l.s4 1983009808
  %v873 = vunpack.c.0.s8 %v872
  %v874 = vlaneseq
  %v875 = vshrl.u32 %v874, 7
  %v876 = vsub.s32 %v873, %v875
  %v877 = vrot.slane %v862, %v876
  %878 = vrot.lane.b32.xlu0 %v877, 64
  %v879 = vpop.permute.xlu0 %878
  %881 = vst.msk [vmem:[#allocation4] sm:$0x3] %vm227, %v879
  %s882 = scalar_lea.vmem [#allocation2], 16
  %v883 = vld [vmem:[%s882] sm:$0xf]
  %v884 = vld [vmem:[#allocation3] sm:$0x3]
  %v885 = vld [vmem:[#allocation4] sm:$0x3]
  %v886 = vld [vmem:[%s2] sm:$0xff]
  %v887 = vld [vmem:[%s2 + $0x8] sm:$0xff]
  %v888 = vld [vmem:[%s2 + $0x10] sm:$0xff]
  %v889 = vld [vmem:[%s2 + $0x18] sm:$0xff]
  %v890 = vld [vmem:[%s2 + $0x20] sm:$0xff]
  %v891 = vld [vmem:[%s2 + $0x28] sm:$0xff]
  %v892 = vld [vmem:[%s2 + $0x30] sm:$0xff]
  %v893 = vld [vmem:[%s2 + $0x38] sm:$0xff]
  %v894 = vld [vmem:[%s2 + $0x40] sm:$0xff]
  %v895 = vld [vmem:[%s2 + $0x48] sm:$0xff]
  %v896 = vld [vmem:[%s2 + $0x50] sm:$0xff]
  %v897 = vld [vmem:[%s2 + $0x58] sm:$0xff]
  %v898 = vld [vmem:[%s2 + $0x60] sm:$0xff]
  %v899 = vld [vmem:[%s2 + $0x68] sm:$0xff]
  %v900 = vld [vmem:[%s2 + $0x70] sm:$0xff]
  %v901 = vld [vmem:[%s2 + $0x78] sm:$0xff]
  %v903 = vsel %vm249, %v884, 0
  %905 = vmatprep.subr.mxu0 0.0
  %906 = vmatpush1.msra.mxu0 0.0
  %907 = vmatprep.subr.mxu0 0.0
  %908 = vmatpush1.msra.mxu0 0.0
  %909 = vmatprep.subr.mxu0 0.0
  %910 = vmatpush1.msra.mxu0 0.0
  %911 = vmatprep.subr.mxu0 0.0
  %912 = vmatpush1.msra.mxu0 0.0
  %913 = vmatprep.subr.mxu0 0.0
  %914 = vmatpush1.msra.mxu0 0.0
  %915 = vmatprep.subr.mxu0 0.0
  %916 = vmatpush1.msra.mxu0 0.0
  %917 = vmatprep.subr.mxu0 0.0
  %918 = vmatpush1.msra.mxu0 0.0
  %919 = vmatprep.subr.mxu0 0.0
  %920 = vmatpush1.msra.mxu0 0.0
  %921 = vmatprep.subr.mxu0 %v901
  %922 = vmatpush1.msra.mxu0 %v900
  %923 = vmatprep.subr.mxu0 %v899
  %924 = vmatpush1.msra.mxu0 %v898
  %925 = vmatprep.subr.mxu0 %v897
  %926 = vmatpush1.msra.mxu0 %v896
  %927 = vmatprep.subr.mxu0 %v895
  %928 = vmatpush1.msra.mxu0 %v894
  %929 = vmatprep.subr.mxu0 %v893
  %930 = vmatpush1.msra.mxu0 %v892
  %931 = vmatprep.subr.mxu0 %v891
  %932 = vmatpush1.msra.mxu0 %v890
  %933 = vmatprep.subr.mxu0 %v889
  %934 = vmatpush1.msra.mxu0 %v888
  %935 = vmatprep.subr.mxu0 %v887
  %936 = vmatpush1.msra.mxu0 %v886
  %937 = vmatprep.subr.mxu0 0.0
  %938 = vmatpush2.msra.mxu0 0.0
  %939 = vmatprep.subr.mxu0 0.0
  %940 = vmatpush2.msra.mxu0 0.0
  %941 = vmatprep.subr.mxu0 0.0
  %942 = vmatpush2.msra.mxu0 0.0
  %943 = vmatprep.subr.mxu0 0.0
  %944 = vmatpush2.msra.mxu0 0.0
  %945 = vmatprep.subr.mxu0 0.0
  %946 = vmatpush2.msra.mxu0 0.0
  %947 = vmatprep.subr.mxu0 0.0
  %948 = vmatpush2.msra.mxu0 0.0
  %949 = vmatprep.subr.mxu0 0.0
  %950 = vmatpush2.msra.mxu0 0.0
  %951 = vmatprep.subr.mxu0 0.0
  %952 = vmatpush2.msra.mxu0 0.0
  %953 = vmatprep.subr.mxu0 0.0
  %954 = vmatpush2.msra.mxu0 0.0
  %955 = vmatprep.subr.mxu0 0.0
  %956 = vmatpush2.msra.mxu0 0.0
  %957 = vmatprep.subr.mxu0 0.0
  %958 = vmatpush2.msra.mxu0 0.0
  %959 = vmatprep.subr.mxu0 0.0
  %960 = vmatpush2.msra.mxu0 0.0
  %961 = vmatprep.subr.mxu0 0.0
  %962 = vmatpush2.msra.mxu0 0.0
  %963 = vmatprep.subr.mxu0 0.0
  %964 = vmatpush2.msra.mxu0 0.0
  %965 = vmatprep.subr.mxu0 0.0
  %966 = vmatpush2.msra.mxu0 0.0
  %967 = vmatprep.subr.mxu0 0.0
  %968 = vmatpush2.msra.mxu0 0.0
  %969 = vmatprep.mubr.f32.mxu0 0.0
  %970 = vmatmul.mubr.f32.gmra.mxu0 %v903
  %v971 = vpop.f32.mrf.mxu0
  %v972 = vadd.f32 0.0, %v971
  %v973 = vpop.f32.mrf.mxu0
  %v974 = vadd.f32 0.0, %v973
  %975 = vdwg.mxu0
  %v978 = vcombine.low %v972, %v974
  %v980 = vunpack.c.l.s4 1983009808
  %v981 = vunpack.c.0.s8 %v980
  %v982 = vlaneseq
  %v983 = vshrl.u32 %v982, 7
  %v984 = vsub.s32 %v981, %v983
  %v985 = vrot.slane %v978, %v984
  %v987 = vadd.f32 %v883, %v985
  %v988 = vxor.u32 %v987, 2147483648
  %v989 = vmul.f32 %v988, 1.442695
  %v990 = vpow.pop %v989
  %v991 = vadd.f32 %v990, 1.0
  %v992 = vrcp.pop %v991
  %v993 = vmul.f32 1.0, %v992
  %v995 = vrot.slane %v987, 2
  %v997 = vtanh.pop %v995
  %998 = vrot.lane.b32.xlu0 %v987, 64
  %v999 = vpop.permute.xlu0 %998
  %v1000 = vrot.slane %v999, 2
  %v1002 = vxor.u32 %v1000, 2147483648
  %v1003 = vmul.f32 %v1002, 1.442695
  %v1004 = vpow.pop %v1003
  %v1005 = vadd.f32 %v1004, 1.0
  %v1006 = vrcp.pop %v1005
  %v1007 = vmul.f32 1.0, %v1006
  %v1010 = vunpack.c.l.s4 1983009808
  %v1011 = vunpack.c.0.s8 %v1010
  %v1012 = vlaneseq
  %v1013 = vshrl.u32 %v1012, 7
  %v1014 = vsub.s32 %v1011, %v1013
  %v1015 = vrot.slane %v885, %v1014
  %1016 = vrot.lane.b32.xlu0 %v1015, 64
  %v1017 = vpop.permute.xlu0 %1016
  %v1019 = vmul.f32 %v993, %v1017
  %v1020 = vmul.f32 %v993, %v997
  %1022 = vrot.lane.b32.xlu0 %v1020, 64
  %v1023 = vpop.permute.xlu0 %1022
  %v1025 = vadd.f32 %v1019, %v1023
  %v1026 = vtanh.pop %v1025
  %1028 = vrot.lane.b32.xlu0 %v1026, 64
  %v1029 = vpop.permute.xlu0 %1028
  %v1031 = vmul.f32 %v1007, %v1029
  %1032 = vst.msk [vmem:[#allocation3] sm:$0x3] %vm227, %v1031
  %v1035 = vunpack.c.l.s4 1983009808
  %v1036 = vunpack.c.0.s8 %v1035
  %v1037 = vlaneseq
  %v1038 = vshrl.u32 %v1037, 7
  %v1039 = vsub.s32 %v1036, %v1038
  %v1040 = vrot.slane %v1025, %v1039
  %1041 = vrot.lane.b32.xlu0 %v1040, 64
  %v1042 = vpop.permute.xlu0 %1041
  %1044 = vst.msk [vmem:[#allocation4] sm:$0x3] %vm227, %v1042
  %s1045 = scalar_lea.vmem [#allocation2], 20
  %v1046 = vld [vmem:[%s1045] sm:$0xf]
  %v1047 = vld [vmem:[#allocation3] sm:$0x3]
  %v1048 = vld [vmem:[#allocation4] sm:$0x3]
  %v1049 = vld [vmem:[%s2] sm:$0xff]
  %v1050 = vld [vmem:[%s2 + $0x8] sm:$0xff]
  %v1051 = vld [vmem:[%s2 + $0x10] sm:$0xff]
  %v1052 = vld [vmem:[%s2 + $0x18] sm:$0xff]
  %v1053 = vld [vmem:[%s2 + $0x20] sm:$0xff]
  %v1054 = vld [vmem:[%s2 + $0x28] sm:$0xff]
  %v1055 = vld [vmem:[%s2 + $0x30] sm:$0xff]
  %v1056 = vld [vmem:[%s2 + $0x38] sm:$0xff]
  %v1057 = vld [vmem:[%s2 + $0x40] sm:$0xff]
  %v1058 = vld [vmem:[%s2 + $0x48] sm:$0xff]
  %v1059 = vld [vmem:[%s2 + $0x50] sm:$0xff]
  %v1060 = vld [vmem:[%s2 + $0x58] sm:$0xff]
  %v1061 = vld [vmem:[%s2 + $0x60] sm:$0xff]
  %v1062 = vld [vmem:[%s2 + $0x68] sm:$0xff]
  %v1063 = vld [vmem:[%s2 + $0x70] sm:$0xff]
  %v1064 = vld [vmem:[%s2 + $0x78] sm:$0xff]
  %v1066 = vsel %vm249, %v1047, 0
  %1068 = vmatprep.subr.mxu0 0.0
  %1069 = vmatpush1.msra.mxu0 0.0
  %1070 = vmatprep.subr.mxu0 0.0
  %1071 = vmatpush1.msra.mxu0 0.0
  %1072 = vmatprep.subr.mxu0 0.0
  %1073 = vmatpush1.msra.mxu0 0.0
  %1074 = vmatprep.subr.mxu0 0.0
  %1075 = vmatpush1.msra.mxu0 0.0
  %1076 = vmatprep.subr.mxu0 0.0
  %1077 = vmatpush1.msra.mxu0 0.0
  %1078 = vmatprep.subr.mxu0 0.0
  %1079 = vmatpush1.msra.mxu0 0.0
  %1080 = vmatprep.subr.mxu0 0.0
  %1081 = vmatpush1.msra.mxu0 0.0
  %1082 = vmatprep.subr.mxu0 0.0
  %1083 = vmatpush1.msra.mxu0 0.0
  %1084 = vmatprep.subr.mxu0 %v1064
  %1085 = vmatpush1.msra.mxu0 %v1063
  %1086 = vmatprep.subr.mxu0 %v1062
  %1087 = vmatpush1.msra.mxu0 %v1061
  %1088 = vmatprep.subr.mxu0 %v1060
  %1089 = vmatpush1.msra.mxu0 %v1059
  %1090 = vmatprep.subr.mxu0 %v1058
  %1091 = vmatpush1.msra.mxu0 %v1057
  %1092 = vmatprep.subr.mxu0 %v1056
  %1093 = vmatpush1.msra.mxu0 %v1055
  %1094 = vmatprep.subr.mxu0 %v1054
  %1095 = vmatpush1.msra.mxu0 %v1053
  %1096 = vmatprep.subr.mxu0 %v1052
  %1097 = vmatpush1.msra.mxu0 %v1051
  %1098 = vmatprep.subr.mxu0 %v1050
  %1099 = vmatpush1.msra.mxu0 %v1049
  %1100 = vmatprep.subr.mxu0 0.0
  %1101 = vmatpush2.msra.mxu0 0.0
  %1102 = vmatprep.subr.mxu0 0.0
  %1103 = vmatpush2.msra.mxu0 0.0
  %1104 = vmatprep.subr.mxu0 0.0
  %1105 = vmatpush2.msra.mxu0 0.0
  %1106 = vmatprep.subr.mxu0 0.0
  %1107 = vmatpush2.msra.mxu0 0.0
  %1108 = vmatprep.subr.mxu0 0.0
  %1109 = vmatpush2.msra.mxu0 0.0
  %1110 = vmatprep.subr.mxu0 0.0
  %1111 = vmatpush2.msra.mxu0 0.0
  %1112 = vmatprep.subr.mxu0 0.0
  %1113 = vmatpush2.msra.mxu0 0.0
  %1114 = vmatprep.subr.mxu0 0.0
  %1115 = vmatpush2.msra.mxu0 0.0
  %1116 = vmatprep.subr.mxu0 0.0
  %1117 = vmatpush2.msra.mxu0 0.0
  %1118 = vmatprep.subr.mxu0 0.0
  %1119 = vmatpush2.msra.mxu0 0.0
  %1120 = vmatprep.subr.mxu0 0.0
  %1121 = vmatpush2.msra.mxu0 0.0
  %1122 = vmatprep.subr.mxu0 0.0
  %1123 = vmatpush2.msra.mxu0 0.0
  %1124 = vmatprep.subr.mxu0 0.0
  %1125 = vmatpush2.msra.mxu0 0.0
  %1126 = vmatprep.subr.mxu0 0.0
  %1127 = vmatpush2.msra.mxu0 0.0
  %1128 = vmatprep.subr.mxu0 0.0
  %1129 = vmatpush2.msra.mxu0 0.0
  %1130 = vmatprep.subr.mxu0 0.0
  %1131 = vmatpush2.msra.mxu0 0.0
  %1132 = vmatprep.mubr.f32.mxu0 0.0
  %1133 = vmatmul.mubr.f32.gmra.mxu0 %v1066
  %v1134 = vpop.f32.mrf.mxu0
  %v1135 = vadd.f32 0.0, %v1134
  %v1136 = vpop.f32.mrf.mxu0
  %v1137 = vadd.f32 0.0, %v1136
  %1138 = vdwg.mxu0
  %v1141 = vcombine.low %v1135, %v1137
  %v1143 = vunpack.c.l.s4 1983009808
  %v1144 = vunpack.c.0.s8 %v1143
  %v1145 = vlaneseq
  %v1146 = vshrl.u32 %v1145, 7
  %v1147 = vsub.s32 %v1144, %v1146
  %v1148 = vrot.slane %v1141, %v1147
  %v1150 = vadd.f32 %v1046, %v1148
  %v1151 = vxor.u32 %v1150, 2147483648
  %v1152 = vmul.f32 %v1151, 1.442695
  %v1153 = vpow.pop %v1152
  %v1154 = vadd.f32 %v1153, 1.0
  %v1155 = vrcp.pop %v1154
  %v1156 = vmul.f32 1.0, %v1155
  %v1158 = vrot.slane %v1150, 2
  %v1160 = vtanh.pop %v1158
  %1161 = vrot.lane.b32.xlu0 %v1150, 64
  %v1162 = vpop.permute.xlu0 %1161
  %v1163 = vrot.slane %v1162, 2
  %v1165 = vxor.u32 %v1163, 2147483648
  %v1166 = vmul.f32 %v1165, 1.442695
  %v1167 = vpow.pop %v1166
  %v1168 = vadd.f32 %v1167, 1.0
  %v1169 = vrcp.pop %v1168
  %v1170 = vmul.f32 1.0, %v1169
  %v1173 = vunpack.c.l.s4 1983009808
  %v1174 = vunpack.c.0.s8 %v1173
  %v1175 = vlaneseq
  %v1176 = vshrl.u32 %v1175, 7
  %v1177 = vsub.s32 %v1174, %v1176
  %v1178 = vrot.slane %v1048, %v1177
  %1179 = vrot.lane.b32.xlu0 %v1178, 64
  %v1180 = vpop.permute.xlu0 %1179
  %v1182 = vmul.f32 %v1156, %v1180
  %v1183 = vmul.f32 %v1156, %v1160
  %1185 = vrot.lane.b32.xlu0 %v1183, 64
  %v1186 = vpop.permute.xlu0 %1185
  %v1188 = vadd.f32 %v1182, %v1186
  %v1189 = vtanh.pop %v1188
  %1191 = vrot.lane.b32.xlu0 %v1189, 64
  %v1192 = vpop.permute.xlu0 %1191
  %v1194 = vmul.f32 %v1170, %v1192
  %1195 = vst.msk [vmem:[#allocation3] sm:$0x3] %vm227, %v1194
  %v1198 = vunpack.c.l.s4 1983009808
  %v1199 = vunpack.c.0.s8 %v1198
  %v1200 = vlaneseq
  %v1201 = vshrl.u32 %v1200, 7
  %v1202 = vsub.s32 %v1199, %v1201
  %v1203 = vrot.slane %v1188, %v1202
  %1204 = vrot.lane.b32.xlu0 %v1203, 64
  %v1205 = vpop.permute.xlu0 %1204
  %1207 = vst.msk [vmem:[#allocation4] sm:$0x3] %vm227, %v1205
  %s1208 = scalar_lea.vmem [#allocation2], 24
  %v1209 = vld [vmem:[%s1208] sm:$0xf]
  %v1210 = vld [vmem:[#allocation3] sm:$0x3]
  %v1211 = vld [vmem:[#allocation4] sm:$0x3]
  %v1212 = vld [vmem:[%s2] sm:$0xff]
  %v1213 = vld [vmem:[%s2 + $0x8] sm:$0xff]
  %v1214 = vld [vmem:[%s2 + $0x10] sm:$0xff]
  %v1215 = vld [vmem:[%s2 + $0x18] sm:$0xff]
  %v1216 = vld [vmem:[%s2 + $0x20] sm:$0xff]
  %v1217 = vld [vmem:[%s2 + $0x28] sm:$0xff]
  %v1218 = vld [vmem:[%s2 + $0x30] sm:$0xff]
  %v1219 = vld [vmem:[%s2 + $0x38] sm:$0xff]
  %v1220 = vld [vmem:[%s2 + $0x40] sm:$0xff]
  %v1221 = vld [vmem:[%s2 + $0x48] sm:$0xff]
  %v1222 = vld [vmem:[%s2 + $0x50] sm:$0xff]
  %v1223 = vld [vmem:[%s2 + $0x58] sm:$0xff]
  %v1224 = vld [vmem:[%s2 + $0x60] sm:$0xff]
  %v1225 = vld [vmem:[%s2 + $0x68] sm:$0xff]
  %v1226 = vld [vmem:[%s2 + $0x70] sm:$0xff]
  %v1227 = vld [vmem:[%s2 + $0x78] sm:$0xff]
  %v1229 = vsel %vm249, %v1210, 0
  %1231 = vmatprep.subr.mxu0 0.0
  %1232 = vmatpush1.msra.mxu0 0.0
  %1233 = vmatprep.subr.mxu0 0.0
  %1234 = vmatpush1.msra.mxu0 0.0
  %1235 = vmatprep.subr.mxu0 0.0
  %1236 = vmatpush1.msra.mxu0 0.0
  %1237 = vmatprep.subr.mxu0 0.0
  %1238 = vmatpush1.msra.mxu0 0.0
  %1239 = vmatprep.subr.mxu0 0.0
  %1240 = vmatpush1.msra.mxu0 0.0
  %1241 = vmatprep.subr.mxu0 0.0
  %1242 = vmatpush1.msra.mxu0 0.0
  %1243 = vmatprep.subr.mxu0 0.0
  %1244 = vmatpush1.msra.mxu0 0.0
  %1245 = vmatprep.subr.mxu0 0.0
  %1246 = vmatpush1.msra.mxu0 0.0
  %1247 = vmatprep.subr.mxu0 %v1227
  %1248 = vmatpush1.msra.mxu0 %v1226
  %1249 = vmatprep.subr.mxu0 %v1225
  %1250 = vmatpush1.msra.mxu0 %v1224
  %1251 = vmatprep.subr.mxu0 %v1223
  %1252 = vmatpush1.msra.mxu0 %v1222
  %1253 = vmatprep.subr.mxu0 %v1221
  %1254 = vmatpush1.msra.mxu0 %v1220
  %1255 = vmatprep.subr.mxu0 %v1219
  %1256 = vmatpush1.msra.mxu0 %v1218
  %1257 = vmatprep.subr.mxu0 %v1217
  %1258 = vmatpush1.msra.mxu0 %v1216
  %1259 = vmatprep.subr.mxu0 %v1215
  %1260 = vmatpush1.msra.mxu0 %v1214
  %1261 = vmatprep.subr.mxu0 %v1213
  %1262 = vmatpush1.msra.mxu0 %v1212
  %1263 = vmatprep.subr.mxu0 0.0
  %1264 = vmatpush2.msra.mxu0 0.0
  %1265 = vmatprep.subr.mxu0 0.0
  %1266 = vmatpush2.msra.mxu0 0.0
  %1267 = vmatprep.subr.mxu0 0.0
  %1268 = vmatpush2.msra.mxu0 0.0
  %1269 = vmatprep.subr.mxu0 0.0
  %1270 = vmatpush2.msra.mxu0 0.0
  %1271 = vmatprep.subr.mxu0 0.0
  %1272 = vmatpush2.msra.mxu0 0.0
  %1273 = vmatprep.subr.mxu0 0.0
  %1274 = vmatpush2.msra.mxu0 0.0
  %1275 = vmatprep.subr.mxu0 0.0
  %1276 = vmatpush2.msra.mxu0 0.0
  %1277 = vmatprep.subr.mxu0 0.0
  %1278 = vmatpush2.msra.mxu0 0.0
  %1279 = vmatprep.subr.mxu0 0.0
  %1280 = vmatpush2.msra.mxu0 0.0
  %1281 = vmatprep.subr.mxu0 0.0
  %1282 = vmatpush2.msra.mxu0 0.0
  %1283 = vmatprep.subr.mxu0 0.0
  %1284 = vmatpush2.msra.mxu0 0.0
  %1285 = vmatprep.subr.mxu0 0.0
  %1286 = vmatpush2.msra.mxu0 0.0
  %1287 = vmatprep.subr.mxu0 0.0
  %1288 = vmatpush2.msra.mxu0 0.0
  %1289 = vmatprep.subr.mxu0 0.0
  %1290 = vmatpush2.msra.mxu0 0.0
  %1291 = vmatprep.subr.mxu0 0.0
  %1292 = vmatpush2.msra.mxu0 0.0
  %1293 = vmatprep.subr.mxu0 0.0
  %1294 = vmatpush2.msra.mxu0 0.0
  %1295 = vmatprep.mubr.f32.mxu0 0.0
  %1296 = vmatmul.mubr.f32.gmra.mxu0 %v1229
  %v1297 = vpop.f32.mrf.mxu0
  %v1298 = vadd.f32 0.0, %v1297
  %v1299 = vpop.f32.mrf.mxu0
  %v1300 = vadd.f32 0.0, %v1299
  %1301 = vdwg.mxu0
  %v1304 = vcombine.low %v1298, %v1300
  %v1306 = vunpack.c.l.s4 1983009808
  %v1307 = vunpack.c.0.s8 %v1306
  %v1308 = vlaneseq
  %v1309 = vshrl.u32 %v1308, 7
  %v1310 = vsub.s32 %v1307, %v1309
  %v1311 = vrot.slane %v1304, %v1310
  %v1313 = vadd.f32 %v1209, %v1311
  %v1314 = vxor.u32 %v1313, 2147483648
  %v1315 = vmul.f32 %v1314, 1.442695
  %v1316 = vpow.pop %v1315
  %v1317 = vadd.f32 %v1316, 1.0
  %v1318 = vrcp.pop %v1317
  %v1319 = vmul.f32 1.0, %v1318
  %v1321 = vrot.slane %v1313, 2
  %v1323 = vtanh.pop %v1321
  %1324 = vrot.lane.b32.xlu0 %v1313, 64
  %v1325 = vpop.permute.xlu0 %1324
  %v1326 = vrot.slane %v1325, 2
  %v1328 = vxor.u32 %v1326, 2147483648
  %v1329 = vmul.f32 %v1328, 1.442695
  %v1330 = vpow.pop %v1329
  %v1331 = vadd.f32 %v1330, 1.0
  %v1332 = vrcp.pop %v1331
  %v1333 = vmul.f32 1.0, %v1332
  %v1336 = vunpack.c.l.s4 1983009808
  %v1337 = vunpack.c.0.s8 %v1336
  %v1338 = vlaneseq
  %v1339 = vshrl.u32 %v1338, 7
  %v1340 = vsub.s32 %v1337, %v1339
  %v1341 = vrot.slane %v1211, %v1340
  %1342 = vrot.lane.b32.xlu0 %v1341, 64
  %v1343 = vpop.permute.xlu0 %1342
  %v1345 = vmul.f32 %v1319, %v1343
  %v1346 = vmul.f32 %v1319, %v1323
  %1348 = vrot.lane.b32.xlu0 %v1346, 64
  %v1349 = vpop.permute.xlu0 %1348
  %v1351 = vadd.f32 %v1345, %v1349
  %v1352 = vtanh.pop %v1351
  %1354 = vrot.lane.b32.xlu0 %v1352, 64
  %v1355 = vpop.permute.xlu0 %1354
  %v1357 = vmul.f32 %v1333, %v1355
  %1358 = vst.msk [vmem:[#allocation3] sm:$0x3] %vm227, %v1357
  %v1361 = vunpack.c.l.s4 1983009808
  %v1362 = vunpack.c.0.s8 %v1361
  %v1363 = vlaneseq
  %v1364 = vshrl.u32 %v1363, 7
  %v1365 = vsub.s32 %v1362, %v1364
  %v1366 = vrot.slane %v1351, %v1365
  %1367 = vrot.lane.b32.xlu0 %v1366, 64
  %v1368 = vpop.permute.xlu0 %1367
  %1370 = vst.msk [vmem:[#allocation4] sm:$0x3] %vm227, %v1368
  %s1371 = scalar_lea.vmem [#allocation2], 28
  %v1372 = vld [vmem:[%s1371] sm:$0xf]
  %v1373 = vld [vmem:[#allocation3] sm:$0x3]
  %v1374 = vld [vmem:[#allocation4] sm:$0x3]
  %v1375 = vld [vmem:[%s2] sm:$0xff]
  %v1376 = vld [vmem:[%s2 + $0x8] sm:$0xff]
  %v1377 = vld [vmem:[%s2 + $0x10] sm:$0xff]
  %v1378 = vld [vmem:[%s2 + $0x18] sm:$0xff]
  %v1379 = vld [vmem:[%s2 + $0x20] sm:$0xff]
  %v1380 = vld [vmem:[%s2 + $0x28] sm:$0xff]
  %v1381 = vld [vmem:[%s2 + $0x30] sm:$0xff]
  %v1382 = vld [vmem:[%s2 + $0x38] sm:$0xff]
  %v1383 = vld [vmem:[%s2 + $0x40] sm:$0xff]
  %v1384 = vld [vmem:[%s2 + $0x48] sm:$0xff]
  %v1385 = vld [vmem:[%s2 + $0x50] sm:$0xff]
  %v1386 = vld [vmem:[%s2 + $0x58] sm:$0xff]
  %v1387 = vld [vmem:[%s2 + $0x60] sm:$0xff]
  %v1388 = vld [vmem:[%s2 + $0x68] sm:$0xff]
  %v1389 = vld [vmem:[%s2 + $0x70] sm:$0xff]
  %v1390 = vld [vmem:[%s2 + $0x78] sm:$0xff]
  %v1392 = vsel %vm249, %v1373, 0
  %1394 = vmatprep.subr.mxu0 0.0
  %1395 = vmatpush1.msra.mxu0 0.0
  %1396 = vmatprep.subr.mxu0 0.0
  %1397 = vmatpush1.msra.mxu0 0.0
  %1398 = vmatprep.subr.mxu0 0.0
  %1399 = vmatpush1.msra.mxu0 0.0
  %1400 = vmatprep.subr.mxu0 0.0
  %1401 = vmatpush1.msra.mxu0 0.0
  %1402 = vmatprep.subr.mxu0 0.0
  %1403 = vmatpush1.msra.mxu0 0.0
  %1404 = vmatprep.subr.mxu0 0.0
  %1405 = vmatpush1.msra.mxu0 0.0
  %1406 = vmatprep.subr.mxu0 0.0
  %1407 = vmatpush1.msra.mxu0 0.0
  %1408 = vmatprep.subr.mxu0 0.0
  %1409 = vmatpush1.msra.mxu0 0.0
  %1410 = vmatprep.subr.mxu0 %v1390
  %1411 = vmatpush1.msra.mxu0 %v1389
  %1412 = vmatprep.subr.mxu0 %v1388
  %1413 = vmatpush1.msra.mxu0 %v1387
  %1414 = vmatprep.subr.mxu0 %v1386
  %1415 = vmatpush1.msra.mxu0 %v1385
  %1416 = vmatprep.subr.mxu0 %v1384
  %1417 = vmatpush1.msra.mxu0 %v1383
  %1418 = vmatprep.subr.mxu0 %v1382
  %1419 = vmatpush1.msra.mxu0 %v1381
  %1420 = vmatprep.subr.mxu0 %v1380
  %1421 = vmatpush1.msra.mxu0 %v1379
  %1422 = vmatprep.subr.mxu0 %v1378
  %1423 = vmatpush1.msra.mxu0 %v1377
  %1424 = vmatprep.subr.mxu0 %v1376
  %1425 = vmatpush1.msra.mxu0 %v1375
  %1426 = vmatprep.subr.mxu0 0.0
  %1427 = vmatpush2.msra.mxu0 0.0
  %1428 = vmatprep.subr.mxu0 0.0
  %1429 = vmatpush2.msra.mxu0 0.0
  %1430 = vmatprep.subr.mxu0 0.0
  %1431 = vmatpush2.msra.mxu0 0.0
  %1432 = vmatprep.subr.mxu0 0.0
  %1433 = vmatpush2.msra.mxu0 0.0
  %1434 = vmatprep.subr.mxu0 0.0
  %1435 = vmatpush2.msra.mxu0 0.0
  %1436 = vmatprep.subr.mxu0 0.0
  %1437 = vmatpush2.msra.mxu0 0.0
  %1438 = vmatprep.subr.mxu0 0.0
  %1439 = vmatpush2.msra.mxu0 0.0
  %1440 = vmatprep.subr.mxu0 0.0
  %1441 = vmatpush2.msra.mxu0 0.0
  %1442 = vmatprep.subr.mxu0 0.0
  %1443 = vmatpush2.msra.mxu0 0.0
  %1444 = vmatprep.subr.mxu0 0.0
  %1445 = vmatpush2.msra.mxu0 0.0
  %1446 = vmatprep.subr.mxu0 0.0
  %1447 = vmatpush2.msra.mxu0 0.0
  %1448 = vmatprep.subr.mxu0 0.0
  %1449 = vmatpush2.msra.mxu0 0.0
  %1450 = vmatprep.subr.mxu0 0.0
  %1451 = vmatpush2.msra.mxu0 0.0
  %1452 = vmatprep.subr.mxu0 0.0
  %1453 = vmatpush2.msra.mxu0 0.0
  %1454 = vmatprep.subr.mxu0 0.0
  %1455 = vmatpush2.msra.mxu0 0.0
  %1456 = vmatprep.subr.mxu0 0.0
  %1457 = vmatpush2.msra.mxu0 0.0
  %1458 = vmatprep.mubr.f32.mxu0 0.0
  %1459 = vmatmul.mubr.f32.gmra.mxu0 %v1392
  %v1460 = vpop.f32.mrf.mxu0
  %v1461 = vadd.f32 0.0, %v1460
  %v1462 = vpop.f32.mrf.mxu0
  %v1463 = vadd.f32 0.0, %v1462
  %1464 = vdwg.mxu0
  %v1467 = vcombine.low %v1461, %v1463
  %v1469 = vunpack.c.l.s4 1983009808
  %v1470 = vunpack.c.0.s8 %v1469
  %v1471 = vlaneseq
  %v1472 = vshrl.u32 %v1471, 7
  %v1473 = vsub.s32 %v1470, %v1472
  %v1474 = vrot.slane %v1467, %v1473
  %v1476 = vadd.f32 %v1372, %v1474
  %v1477 = vxor.u32 %v1476, 2147483648
  %v1478 = vmul.f32 %v1477, 1.442695
  %v1479 = vpow.pop %v1478
  %v1480 = vadd.f32 %v1479, 1.0
  %v1481 = vrcp.pop %v1480
  %v1482 = vmul.f32 1.0, %v1481
  %v1484 = vrot.slane %v1476, 2
  %v1486 = vtanh.pop %v1484
  %1487 = vrot.lane.b32.xlu0 %v1476, 64
  %v1488 = vpop.permute.xlu0 %1487
  %v1489 = vrot.slane %v1488, 2
  %v1491 = vxor.u32 %v1489, 2147483648
  %v1492 = vmul.f32 %v1491, 1.442695
  %v1493 = vpow.pop %v1492
  %v1494 = vadd.f32 %v1493, 1.0
  %v1495 = vrcp.pop %v1494
  %v1496 = vmul.f32 1.0, %v1495
  %v1499 = vunpack.c.l.s4 1983009808
  %v1500 = vunpack.c.0.s8 %v1499
  %v1501 = vlaneseq
  %v1502 = vshrl.u32 %v1501, 7
  %v1503 = vsub.s32 %v1500, %v1502
  %v1504 = vrot.slane %v1374, %v1503
  %1505 = vrot.lane.b32.xlu0 %v1504, 64
  %v1506 = vpop.permute.xlu0 %1505
  %v1508 = vmul.f32 %v1482, %v1506
  %v1509 = vmul.f32 %v1482, %v1486
  %1511 = vrot.lane.b32.xlu0 %v1509, 64
  %v1512 = vpop.permute.xlu0 %1511
  %v1514 = vadd.f32 %v1508, %v1512
  %v1515 = vtanh.pop %v1514
  %1517 = vrot.lane.b32.xlu0 %v1515, 64
  %v1518 = vpop.permute.xlu0 %1517
  %v1520 = vmul.f32 %v1496, %v1518
  %1521 = vst.msk [vmem:[#allocation3] sm:$0x3] %vm227, %v1520
  %v1524 = vunpack.c.l.s4 1983009808
  %v1525 = vunpack.c.0.s8 %v1524
  %v1526 = vlaneseq
  %v1527 = vshrl.u32 %v1526, 7
  %v1528 = vsub.s32 %v1525, %v1527
  %v1529 = vrot.slane %v1514, %v1528
  %1530 = vrot.lane.b32.xlu0 %v1529, 64
  %v1531 = vpop.permute.xlu0 %1530
  %1533 = vst.msk [vmem:[#allocation4] sm:$0x3] %vm227, %v1531
  %v1534 = vld [vmem:[#allocation3] sm:$0x3]
  %1535 = vst.msk [vmem:[%s4] sm:$0x3] %vm227, %v1534
  %v1536 = vld [vmem:[#allocation4] sm:$0x3]
  %1537 = vst.msk [vmem:[%s5] sm:$0x3] %vm227, %v1536
  // Predicated region
  $region18: #{forward.4} parent=0 // pred_check
    _
  $region19: #{forward.4} parent=0 // pred_check_branch
    %1539 = sbr.rel (0) target = $region21
  $region20: #{forward.4} parent=0 // pred_region
    _
  $region21: #{forward.4} parent=0 // pred_fallthru
    _
  // Predicated region
  $region22: #{forward.4} parent=0 // pred_check
    _
  $region23: #{forward.4} parent=0 // pred_check_branch
    %1541 = sbr.rel (0) target = $region25
  $region24: #{forward.4} parent=0 // pred_region
    _
  $region25: #{forward.4} parent=0 // pred_fallthru
    _
  // Predicated region
  $region26: #{forward.4} parent=0 // pred_check
    _
  $region27: #{forward.4} parent=0 // pred_check_branch
    %1543 = sbr.rel (0) target = $region29
  $region28: #{forward.4} parent=0 // pred_region
    _
  $region29: #{forward.4} parent=0 // pred_fallthru
    _
  // Predicated region
  $region30: #{forward.4} parent=0 // pred_check
    _
  $region31: #{forward.4} parent=0 // pred_check_branch
    %1545 = sbr.rel (0) target = $region33
  $region32: #{forward.4} parent=0 // pred_region
    _
  $region33: #{forward.4} parent=0 // pred_fallthru
    _

// kernel: forward.7
$region0: #{forward.7}
  #allocation0 [shape = 'u32[]', space=smem, size = 0x4, offset = 0x4, fixed_abs, tag = 'smem constant byte address 0x4 - core index']
  #allocation1 [shape = 'u32[144,128]{1,0:T(1,128)}', space=vmem, size = 0x12000, scoped, tag = 'internal scratch']
  #allocation2 [shape = 'f32[6,2,256]{2,1,0:T(2,128)}', space=vmem, size = 0x3000, scoped, tag = 'scratch operand']
  #allocation3 [shape = 'f32[6,2,64]{2,1,0:T(2,128)}', space=vmem, size = 0x1800, scoped, tag = 'scratch operand']
  #allocation4 [shape = 'f32[2,64]{1,0:T(2,128)}', space=vmem, size = 0x400, scoped, tag = 'scratch operand']
  #allocation5 [shape = 'f32[2,64]{1,0:T(2,128)}', space=vmem, size = 0x400, scoped, tag = 'scratch operand']
  %s0 = inlined_call_operand.vmem [shape: f32[2,32], index: 0, kind: input, shape index: {}]
  %s1 = inlined_call_operand.vmem [shape: f32[6,2,32], index: 1, kind: input, shape index: {}]
  %s2 = inlined_call_operand.vmem [shape: f32[2,64], index: 2, kind: input, shape index: {}]
  %s3 = inlined_call_operand.vmem [shape: f32[2,64], index: 3, kind: input, shape index: {}]
  %s4 = inlined_call_operand.vmem [shape: f32[32,256], index: 4, kind: input, shape index: {}]
  %s5 = inlined_call_operand.vmem [shape: f32[64,256], index: 5, kind: input, shape index: {}]
  %s6 = inlined_call_operand.vmem [shape: f32[1,256], index: 6, kind: input, shape index: {}]
  %s7 = inlined_call_operand.vmem [shape: f32[64,100], index: 7, kind: input, shape index: {}]
  %s8 = inlined_call_operand.vmem [shape: f32[1,100], index: 8, kind: input, shape index: {}]
  %s9 = inlined_call_operand.hbm [shape: f32[6,2,100], index: 9, kind: output, shape index: {}]
  %s10 = sld [smem:[#allocation0]]
  $region46: #{forward.7} parent=0
    _
  %s12 = ssub.s32 1, %s10
  %s13 = scalar_select 0, %s12, %s10
  $region1: #{forward.7} parent=0
    #allocation6 [shape = 'u8[6144]{0}', space=vmem, size = 0x1800, scoped, tag = 'output window, operand 0, single buffered']
    #allocation7 [shape = 's32[1]{0}', space=sflag, size = 0x4, scoped, tag = 'scoped memory for forward.7']
    %14 = vsyncpa [#allocation7], 0
    // Predicated region
    $region2: #{forward.7} parent=1 // pred_check
      _
    $region3: #{forward.7} parent=1 // pred_check_branch
      %16 = sbr.rel (0) target = $region5
    $region4: #{forward.7} parent=1 // pred_region
      _
    $region5: #{forward.7} parent=1 // pred_fallthru
      _
    // Predicated region
    $region6: #{forward.7} parent=1 // pred_check
      _
    $region7: #{forward.7} parent=1 // pred_check_branch
      %18 = sbr.rel (0) target = $region9
    $region8: #{forward.7} parent=1 // pred_region
      _
    $region9: #{forward.7} parent=1 // pred_fallthru
      _
    // Predicated region
    $region10: #{forward.7} parent=1 // pred_check
      _
    $region11: #{forward.7} parent=1 // pred_check_branch
      %20 = sbr.rel (0) target = $region13
    $region12: #{forward.7} parent=1 // pred_region
      _
    $region13: #{forward.7} parent=1 // pred_fallthru
      _
    // Predicated region
    $region14: #{forward.7} parent=1 // pred_check
      _
    $region15: #{forward.7} parent=1 // pred_check_branch
      %22 = sbr.rel (0) target = $region17
    $region16: #{forward.7} parent=1 // pred_region
      _
    $region17: #{forward.7} parent=1 // pred_fallthru
      _
    // Predicated region
    $region18: #{forward.7} parent=1 // pred_check
      _
    $region19: #{forward.7} parent=1 // pred_check_branch
      %24 = sbr.rel (0) target = $region21
    $region20: #{forward.7} parent=1 // pred_region
      _
    $region21: #{forward.7} parent=1 // pred_fallthru
      _
    // Predicated region
    $region22: #{forward.7} parent=1 // pred_check
      _
    $region23: #{forward.7} parent=1 // pred_check_branch
      %26 = sbr.rel (0) target = $region25
    $region24: #{forward.7} parent=1 // pred_region
      _
    $region25: #{forward.7} parent=1 // pred_fallthru
      _
    // Predicated region
    $region26: #{forward.7} parent=1 // pred_check
      _
    $region27: #{forward.7} parent=1 // pred_check_branch
      %28 = sbr.rel (0) target = $region29
    $region28: #{forward.7} parent=1 // pred_region
      _
    $region29: #{forward.7} parent=1 // pred_fallthru
      _
    // Predicated region
    $region30: #{forward.7} parent=1 // pred_check
      _
    $region31: #{forward.7} parent=1 // pred_check_branch
      %30 = sbr.rel (0) target = $region33
    $region32: #{forward.7} parent=1 // pred_region
      _
    $region33: #{forward.7} parent=1 // pred_fallthru
      _
    // Predicated region
    $region34: #{forward.7} parent=1 // pred_check
      _
    $region35: #{forward.7} parent=1 // pred_check_branch
      %32 = sbr.rel (0) target = $region37
    $region36: #{forward.7} parent=1 // pred_region
      _
    $region37: #{forward.7} parent=1 // pred_fallthru
      _
    %v33 = vld [vmem:[%s0] sm:$0x3]
    %v34 = vld [vmem:[%s4] sm:$0xff]
    %v35 = vld [vmem:[%s4 + $0x8] sm:$0xff]
    %v36 = vld [vmem:[%s4 + $0x10] sm:$0xff]
    %v37 = vld [vmem:[%s4 + $0x18] sm:$0xff]
    %v38 = vld [vmem:[%s4 + $0x20] sm:$0xff]
    %v39 = vld [vmem:[%s4 + $0x28] sm:$0xff]
    %v40 = vld [vmem:[%s4 + $0x30] sm:$0xff]
    %v41 = vld [vmem:[%s4 + $0x38] sm:$0xff]
    %v42 = vld [vmem:[%s6] sm:$0x3]
    %v44 = vlaneseq
    %v45 = vshrl.u32 %v44, 7
    %v46 = vsub.s32 0, %v45
    %v47 = vrot.slane %v42, %v46
    %v48 = vlaneseq
    %v49 = vshrl.u32 %v48, 7
    %v50 = vsub.s32 1, %v49
    %v51 = vrot.slane %v42, %v50
    %vm54 = vcmask 261120
    %v56 = vsel %vm54, %v33, 0
    %58 = vmatprep.subr.mxu0 0.0
    %59 = vmatpush1.msra.mxu0 0.0
    %60 = vmatprep.subr.mxu0 0.0
    %61 = vmatpush1.msra.mxu0 0.0
    %62 = vmatprep.subr.mxu0 0.0
    %63 = vmatpush1.msra.mxu0 0.0
    %64 = vmatprep.subr.mxu0 0.0
    %65 = vmatpush1.msra.mxu0 0.0
    %66 = vmatprep.subr.mxu0 0.0
    %67 = vmatpush1.msra.mxu0 0.0
    %68 = vmatprep.subr.mxu0 0.0
    %69 = vmatpush1.msra.mxu0 0.0
    %70 = vmatprep.subr.mxu0 0.0
    %71 = vmatpush1.msra.mxu0 0.0
    %72 = vmatprep.subr.mxu0 0.0
    %73 = vmatpush1.msra.mxu0 0.0
    %74 = vmatprep.subr.mxu0 0.0
    %75 = vmatpush1.msra.mxu0 0.0
    %76 = vmatprep.subr.mxu0 0.0
    %77 = vmatpush1.msra.mxu0 0.0
    %78 = vmatprep.subr.mxu0 0.0
    %79 = vmatpush1.msra.mxu0 0.0
    %80 = vmatprep.subr.mxu0 0.0
    %81 = vmatpush1.msra.mxu0 0.0
    %82 = vmatprep.subr.mxu0 %v41
    %83 = vmatpush1.msra.mxu0 %v40
    %84 = vmatprep.subr.mxu0 %v39
    %85 = vmatpush1.msra.mxu0 %v38
    %86 = vmatprep.subr.mxu0 %v37
    %87 = vmatpush1.msra.mxu0 %v36
    %88 = vmatprep.subr.mxu0 %v35
    %89 = vmatpush1.msra.mxu0 %v34
    %90 = vmatprep.subr.mxu0 0.0
    %91 = vmatpush2.msra.mxu0 0.0
    %92 = vmatprep.subr.mxu0 0.0
    %93 = vmatpush2.msra.mxu0 0.0
    %94 = vmatprep.subr.mxu0 0.0
    %95 = vmatpush2.msra.mxu0 0.0
    %96 = vmatprep.subr.mxu0 0.0
    %97 = vmatpush2.msra.mxu0 0.0
    %98 = vmatprep.subr.mxu0 0.0
    %99 = vmatpush2.msra.mxu0 0.0
    %100 = vmatprep.subr.mxu0 0.0
    %101 = vmatpush2.msra.mxu0 0.0
    %102 = vmatprep.subr.mxu0 0.0
    %103 = vmatpush2.msra.mxu0 0.0
    %104 = vmatprep.subr.mxu0 0.0
    %105 = vmatpush2.msra.mxu0 0.0
    %106 = vmatprep.subr.mxu0 0.0
    %107 = vmatpush2.msra.mxu0 0.0
    %108 = vmatprep.subr.mxu0 0.0
    %109 = vmatpush2.msra.mxu0 0.0
    %110 = vmatprep.subr.mxu0 0.0
    %111 = vmatpush2.msra.mxu0 0.0
    %112 = vmatprep.subr.mxu0 0.0
    %113 = vmatpush2.msra.mxu0 0.0
    %114 = vmatprep.subr.mxu0 0.0
    %115 = vmatpush2.msra.mxu0 0.0
    %116 = vmatprep.subr.mxu0 0.0
    %117 = vmatpush2.msra.mxu0 0.0
    %118 = vmatprep.subr.mxu0 0.0
    %119 = vmatpush2.msra.mxu0 0.0
    %120 = vmatprep.subr.mxu0 0.0
    %121 = vmatpush2.msra.mxu0 0.0
    %122 = vmatprep.mubr.f32.mxu0 0.0
    %123 = vmatmul.mubr.f32.gmra.mxu0 %v56
    %v124 = vpop.f32.mrf.mxu0
    %v125 = vadd.f32 %v47, %v124
    %v126 = vpop.f32.mrf.mxu0
    %v127 = vadd.f32 %v51, %v126
    %128 = vdwg.mxu0
    %v129 = vld [vmem:[%s2] sm:$0x3]
    %v130 = vld [vmem:[%s3] sm:$0x3]
    %v131 = vld [vmem:[%s5] sm:$0xff]
    %v132 = vld [vmem:[%s5 + $0x8] sm:$0xff]
    %v133 = vld [vmem:[%s5 + $0x10] sm:$0xff]
    %v134 = vld [vmem:[%s5 + $0x18] sm:$0xff]
    %v135 = vld [vmem:[%s5 + $0x20] sm:$0xff]
    %v136 = vld [vmem:[%s5 + $0x28] sm:$0xff]
    %v137 = vld [vmem:[%s5 + $0x30] sm:$0xff]
    %v138 = vld [vmem:[%s5 + $0x38] sm:$0xff]
    %v139 = vld [vmem:[%s5 + $0x40] sm:$0xff]
    %v140 = vld [vmem:[%s5 + $0x48] sm:$0xff]
    %v141 = vld [vmem:[%s5 + $0x50] sm:$0xff]
    %v142 = vld [vmem:[%s5 + $0x58] sm:$0xff]
    %v143 = vld [vmem:[%s5 + $0x60] sm:$0xff]
    %v144 = vld [vmem:[%s5 + $0x68] sm:$0xff]
    %v145 = vld [vmem:[%s5 + $0x70] sm:$0xff]
    %v146 = vld [vmem:[%s5 + $0x78] sm:$0xff]
    %vm147 = vcmask 523264
    %v149 = vsel %vm147, %v129, 0
    %151 = vmatprep.subr.mxu0 0.0
    %152 = vmatpush1.msra.mxu0 0.0
    %153 = vmatprep.subr.mxu0 0.0
    %154 = vmatpush1.msra.mxu0 0.0
    %155 = vmatprep.subr.mxu0 0.0
    %156 = vmatpush1.msra.mxu0 0.0
    %157 = vmatprep.subr.mxu0 0.0
    %158 = vmatpush1.msra.mxu0 0.0
    %159 = vmatprep.subr.mxu0 0.0
    %160 = vmatpush1.msra.mxu0 0.0
    %161 = vmatprep.subr.mxu0 0.0
    %162 = vmatpush1.msra.mxu0 0.0
    %163 = vmatprep.subr.mxu0 0.0
    %164 = vmatpush1.msra.mxu0 0.0
    %165 = vmatprep.subr.mxu0 0.0
    %166 = vmatpush1.msra.mxu0 0.0
    %167 = vmatprep.subr.mxu0 %v146
    %168 = vmatpush1.msra.mxu0 %v145
    %169 = vmatprep.subr.mxu0 %v144
    %170 = vmatpush1.msra.mxu0 %v143
    %171 = vmatprep.subr.mxu0 %v142
    %172 = vmatpush1.msra.mxu0 %v141
    %173 = vmatprep.subr.mxu0 %v140
    %174 = vmatpush1.msra.mxu0 %v139
    %175 = vmatprep.subr.mxu0 %v138
    %176 = vmatpush1.msra.mxu0 %v137
    %177 = vmatprep.subr.mxu0 %v136
    %178 = vmatpush1.msra.mxu0 %v135
    %179 = vmatprep.subr.mxu0 %v134
    %180 = vmatpush1.msra.mxu0 %v133
    %181 = vmatprep.subr.mxu0 %v132
    %182 = vmatpush1.msra.mxu0 %v131
    %183 = vmatprep.subr.mxu0 0.0
    %184 = vmatpush2.msra.mxu0 0.0
    %185 = vmatprep.subr.mxu0 0.0
    %186 = vmatpush2.msra.mxu0 0.0
    %187 = vmatprep.subr.mxu0 0.0
    %188 = vmatpush2.msra.mxu0 0.0
    %189 = vmatprep.subr.mxu0 0.0
    %190 = vmatpush2.msra.mxu0 0.0
    %191 = vmatprep.subr.mxu0 0.0
    %192 = vmatpush2.msra.mxu0 0.0
    %193 = vmatprep.subr.mxu0 0.0
    %194 = vmatpush2.msra.mxu0 0.0
    %195 = vmatprep.subr.mxu0 0.0
    %196 = vmatpush2.msra.mxu0 0.0
    %197 = vmatprep.subr.mxu0 0.0
    %198 = vmatpush2.msra.mxu0 0.0
    %199 = vmatprep.subr.mxu0 0.0
    %200 = vmatpush2.msra.mxu0 0.0
    %201 = vmatprep.subr.mxu0 0.0
    %202 = vmatpush2.msra.mxu0 0.0
    %203 = vmatprep.subr.mxu0 0.0
    %204 = vmatpush2.msra.mxu0 0.0
    %205 = vmatprep.subr.mxu0 0.0
    %206 = vmatpush2.msra.mxu0 0.0
    %207 = vmatprep.subr.mxu0 0.0
    %208 = vmatpush2.msra.mxu0 0.0
    %209 = vmatprep.subr.mxu0 0.0
    %210 = vmatpush2.msra.mxu0 0.0
    %211 = vmatprep.subr.mxu0 0.0
    %212 = vmatpush2.msra.mxu0 0.0
    %213 = vmatprep.subr.mxu0 0.0
    %214 = vmatpush2.msra.mxu0 0.0
    %215 = vmatprep.mubr.f32.mxu0 0.0
    %216 = vmatmul.mubr.f32.gmra.mxu0 %v149
    %v217 = vpop.f32.mrf.mxu0
    %v218 = vadd.f32 0.0, %v217
    %v219 = vpop.f32.mrf.mxu0
    %v220 = vadd.f32 0.0, %v219
    %221 = vdwg.mxu0
    %v222 = vadd.f32 %v125, %v218
    %v223 = vadd.f32 %v127, %v220
    %v224 = vxor.u32 %v222, 2147483648
    %v225 = vmul.f32 %v224, 1.442695
    %v226 = vpow.pop %v225
    %v227 = vadd.f32 %v226, 1.0
    %v228 = vrcp.pop %v227
    %v229 = vmul.f32 1.0, %v228
    %v230 = vtanh.pop %v223
    %v231 = vxor.u32 %v223, 2147483648
    %v232 = vmul.f32 %v231, 1.442695
    %v233 = vpow.pop %v232
    %v234 = vadd.f32 %v233, 1.0
    %v235 = vrcp.pop %v234
    %v236 = vmul.f32 1.0, %v235
    %238 = vrot.lane.b32.xlu0 %v130, 64
    %v239 = vpop.permute.xlu0 %238
    %v241 = vmul.f32 %v229, %v239
    %v242 = vmul.f32 %v229, %v230
    %244 = vrot.lane.b32.xlu0 %v242, 64
    %v245 = vpop.permute.xlu0 %244
    %v247 = vadd.f32 %v241, %v245
    %v248 = vtanh.pop %v247
    %v249 = vmul.f32 %v236, %v248
    %251 = vrot.lane.b32.xlu0 %v249, 64
    %v252 = vpop.permute.xlu0 %251
    %vm254 = vcmask 517120
    %255 = vst.msk [vmem:[#allocation4] sm:$0x3] %vm254, %v252
    %257 = vrot.lane.b32.xlu0 %v247, 64
    %v258 = vpop.permute.xlu0 %257
    %260 = vst.msk [vmem:[#allocation5] sm:$0x3] %vm254, %v258
    %v261 = vld [vmem:[%s1] sm:$0x3]
    %v262 = vld [vmem:[%s1 + $0x2] sm:$0x3]
    %v263 = vld [vmem:[%s1 + $0x4] sm:$0x3]
    %v264 = vld [vmem:[%s1 + $0x6] sm:$0x3]
    %v265 = vld [vmem:[%s1 + $0x8] sm:$0x3]
    %v266 = vld [vmem:[%s1 + $0xa] sm:$0x3]
    %v267 = vld [vmem:[%s4] sm:$0xff]
    %v268 = vld [vmem:[%s4 + $0x8] sm:$0xff]
    %v269 = vld [vmem:[%s4 + $0x10] sm:$0xff]
    %v270 = vld [vmem:[%s4 + $0x18] sm:$0xff]
    %v271 = vld [vmem:[%s4 + $0x20] sm:$0xff]
    %v272 = vld [vmem:[%s4 + $0x28] sm:$0xff]
    %v273 = vld [vmem:[%s4 + $0x30] sm:$0xff]
    %v274 = vld [vmem:[%s4 + $0x38] sm:$0xff]
    %v275 = vld [vmem:[%s6] sm:$0x3]
    %v277 = vlaneseq
    %v278 = vshrl.u32 %v277, 7
    %v279 = vsub.s32 0, %v278
    %v280 = vrot.slane %v275, %v279
    %v281 = vlaneseq
    %v282 = vshrl.u32 %v281, 7
    %v283 = vsub.s32 1, %v282
    %v284 = vrot.slane %v275, %v283
    %v293 = vcombine.low %v261, %v262
    %v294 = vcombine.low %v263, %v264
    %v296 = vunpack.c.l.s4 1983009808
    %v297 = vunpack.c.0.s8 %v296
    %v298 = vlaneseq
    %v299 = vshrl.u32 %v298, 7
    %v300 = vsub.s32 %v297, %v299
    %v301 = vrot.slane %v293, %v300
    %v303 = vunpack.c.l.s4 1983009808
    %v304 = vunpack.c.0.s8 %v303
    %v305 = vlaneseq
    %v306 = vshrl.u32 %v305, 7
    %v307 = vsub.s32 %v304, %v306
    %v308 = vrot.slane %v294, %v307
    %v309 = vcombine.low %v301, %v308
    %v310 = vcombine.low %v265, %v266
    %v312 = vunpack.c.l.s4 1983009808
    %v313 = vunpack.c.0.s8 %v312
    %v314 = vlaneseq
    %v315 = vshrl.u32 %v314, 7
    %v316 = vsub.s32 %v313, %v315
    %v317 = vrot.slane %v310, %v316
    %v318 = vsel %vm54, %v309, 0
    %v320 = vsel %vm54, %v317, 0
    %322 = vmatprep.subr.mxu0 0.0
    %323 = vmatpush1.msra.mxu0 0.0
    %324 = vmatprep.subr.mxu0 0.0
    %325 = vmatpush1.msra.mxu0 0.0
    %326 = vmatprep.subr.mxu0 0.0
    %327 = vmatpush1.msra.mxu0 0.0
    %328 = vmatprep.subr.mxu0 0.0
    %329 = vmatpush1.msra.mxu0 0.0
    %330 = vmatprep.subr.mxu0 0.0
    %331 = vmatpush1.msra.mxu0 0.0
    %332 = vmatprep.subr.mxu0 0.0
    %333 = vmatpush1.msra.mxu0 0.0
    %334 = vmatprep.subr.mxu0 0.0
    %335 = vmatpush1.msra.mxu0 0.0
    %336 = vmatprep.subr.mxu0 0.0
    %337 = vmatpush1.msra.mxu0 0.0
    %338 = vmatprep.subr.mxu0 0.0
    %339 = vmatpush1.msra.mxu0 0.0
    %340 = vmatprep.subr.mxu0 0.0
    %341 = vmatpush1.msra.mxu0 0.0
    %342 = vmatprep.subr.mxu0 0.0
    %343 = vmatpush1.msra.mxu0 0.0
    %344 = vmatprep.subr.mxu0 0.0
    %345 = vmatpush1.msra.mxu0 0.0
    %346 = vmatprep.subr.mxu0 %v274
    %347 = vmatpush1.msra.mxu0 %v273
    %348 = vmatprep.subr.mxu0 %v272
    %349 = vmatpush1.msra.mxu0 %v271
    %350 = vmatprep.subr.mxu0 %v270
    %351 = vmatpush1.msra.mxu0 %v269
    %352 = vmatprep.subr.mxu0 %v268
    %353 = vmatpush1.msra.mxu0 %v267
    %354 = vmatprep.subr.mxu0 0.0
    %355 = vmatpush2.msra.mxu0 0.0
    %356 = vmatprep.subr.mxu0 0.0
    %357 = vmatpush2.msra.mxu0 0.0
    %358 = vmatprep.subr.mxu0 0.0
    %359 = vmatpush2.msra.mxu0 0.0
    %360 = vmatprep.subr.mxu0 0.0
    %361 = vmatpush2.msra.mxu0 0.0
    %362 = vmatprep.subr.mxu0 0.0
    %363 = vmatpush2.msra.mxu0 0.0
    %364 = vmatprep.subr.mxu0 0.0
    %365 = vmatpush2.msra.mxu0 0.0
    %366 = vmatprep.subr.mxu0 0.0
    %367 = vmatpush2.msra.mxu0 0.0
    %368 = vmatprep.subr.mxu0 0.0
    %369 = vmatpush2.msra.mxu0 0.0
    %370 = vmatprep.subr.mxu0 0.0
    %371 = vmatpush2.msra.mxu0 0.0
    %372 = vmatprep.subr.mxu0 0.0
    %373 = vmatpush2.msra.mxu0 0.0
    %374 = vmatprep.subr.mxu0 0.0
    %375 = vmatpush2.msra.mxu0 0.0
    %376 = vmatprep.subr.mxu0 0.0
    %377 = vmatpush2.msra.mxu0 0.0
    %378 = vmatprep.subr.mxu0 0.0
    %379 = vmatpush2.msra.mxu0 0.0
    %380 = vmatprep.subr.mxu0 0.0
    %381 = vmatpush2.msra.mxu0 0.0
    %382 = vmatprep.subr.mxu0 0.0
    %383 = vmatpush2.msra.mxu0 0.0
    %384 = vmatprep.subr.mxu0 0.0
    %385 = vmatpush2.msra.mxu0 0.0
    %386 = vmatprep.mubr.f32.mxu0 0.0
    %387 = vmatmul.mubr.f32.gmra.mxu0 %v318
    %v388 = vpop.f32.mrf.mxu0
    %v389 = vadd.f32 %v280, %v388
    %v390 = vpop.f32.mrf.mxu0
    %v391 = vadd.f32 %v284, %v390
    %392 = vmatprep.mubr.f32.mxu0 0.0
    %393 = vmatmul.mubr.f32.gmra.mxu0 %v320
    %v394 = vpop.f32.mrf.mxu0
    %v395 = vadd.f32 %v280, %v394
    %v396 = vpop.f32.mrf.mxu0
    %v397 = vadd.f32 %v284, %v396
    %398 = vdwg.mxu0
    %v403 = vcombine.low %v389, %v391
    %v404 = vcombine.high %v389, %v391
    %v406 = vunpack.c.l.s4 1983009808
    %v407 = vunpack.c.0.s8 %v406
    %v408 = vlaneseq
    %v409 = vshrl.u32 %v408, 7
    %v410 = vsub.s32 %v407, %v409
    %v411 = vrot.slane %v403, %v410
    %v413 = vunpack.c.l.s4 1983009808
    %v414 = vunpack.c.0.s8 %v413
    %v415 = vlaneseq
    %v416 = vshrl.u32 %v415, 7
    %v417 = vsub.s32 %v414, %v416
    %v418 = vrot.slane %v404, %v417
    %v419 = vcombine.high %v411, %v411
    %v420 = vcombine.high %v418, %v418
    %v421 = vcombine.low %v395, %v397
    %v423 = vunpack.c.l.s4 1983009808
    %v424 = vunpack.c.0.s8 %v423
    %v425 = vlaneseq
    %v426 = vshrl.u32 %v425, 7
    %v427 = vsub.s32 %v424, %v426
    %v428 = vrot.slane %v421, %v427
    %v429 = vcombine.high %v428, %v428
    %436 = vst [vmem:[#allocation2] sm:$0xf] %v411
    %437 = vst [vmem:[#allocation2 + $0x4] sm:$0xf] %v419
    %438 = vst [vmem:[#allocation2 + $0x8] sm:$0xf] %v418
    %439 = vst [vmem:[#allocation2 + $0xc] sm:$0xf] %v420
    %440 = vst [vmem:[#allocation2 + $0x10] sm:$0xf] %v428
    %441 = vst [vmem:[#allocation2 + $0x14] sm:$0xf] %v429
    %v442 = vld [vmem:[#allocation2] sm:$0xf]
    %v443 = vld [vmem:[#allocation4] sm:$0x3]
    %v444 = vld [vmem:[#allocation5] sm:$0x3]
    %v445 = vld [vmem:[%s5] sm:$0xff]
    %v446 = vld [vmem:[%s5 + $0x8] sm:$0xff]
    %v447 = vld [vmem:[%s5 + $0x10] sm:$0xff]
    %v448 = vld [vmem:[%s5 + $0x18] sm:$0xff]
    %v449 = vld [vmem:[%s5 + $0x20] sm:$0xff]
    %v450 = vld [vmem:[%s5 + $0x28] sm:$0xff]
    %v451 = vld [vmem:[%s5 + $0x30] sm:$0xff]
    %v452 = vld [vmem:[%s5 + $0x38] sm:$0xff]
    %v453 = vld [vmem:[%s5 + $0x40] sm:$0xff]
    %v454 = vld [vmem:[%s5 + $0x48] sm:$0xff]
    %v455 = vld [vmem:[%s5 + $0x50] sm:$0xff]
    %v456 = vld [vmem:[%s5 + $0x58] sm:$0xff]
    %v457 = vld [vmem:[%s5 + $0x60] sm:$0xff]
    %v458 = vld [vmem:[%s5 + $0x68] sm:$0xff]
    %v459 = vld [vmem:[%s5 + $0x70] sm:$0xff]
    %v460 = vld [vmem:[%s5 + $0x78] sm:$0xff]
    %v462 = vsel %vm147, %v443, 0
    %464 = vmatprep.subr.mxu0 0.0
    %465 = vmatpush1.msra.mxu0 0.0
    %466 = vmatprep.subr.mxu0 0.0
    %467 = vmatpush1.msra.mxu0 0.0
    %468 = vmatprep.subr.mxu0 0.0
    %469 = vmatpush1.msra.mxu0 0.0
    %470 = vmatprep.subr.mxu0 0.0
    %471 = vmatpush1.msra.mxu0 0.0
    %472 = vmatprep.subr.mxu0 0.0
    %473 = vmatpush1.msra.mxu0 0.0
    %474 = vmatprep.subr.mxu0 0.0
    %475 = vmatpush1.msra.mxu0 0.0
    %476 = vmatprep.subr.mxu0 0.0
    %477 = vmatpush1.msra.mxu0 0.0
    %478 = vmatprep.subr.mxu0 0.0
    %479 = vmatpush1.msra.mxu0 0.0
    %480 = vmatprep.subr.mxu0 %v460
    %481 = vmatpush1.msra.mxu0 %v459
    %482 = vmatprep.subr.mxu0 %v458
    %483 = vmatpush1.msra.mxu0 %v457
    %484 = vmatprep.subr.mxu0 %v456
    %485 = vmatpush1.msra.mxu0 %v455
    %486 = vmatprep.subr.mxu0 %v454
    %487 = vmatpush1.msra.mxu0 %v453
    %488 = vmatprep.subr.mxu0 %v452
    %489 = vmatpush1.msra.mxu0 %v451
    %490 = vmatprep.subr.mxu0 %v450
    %491 = vmatpush1.msra.mxu0 %v449
    %492 = vmatprep.subr.mxu0 %v448
    %493 = vmatpush1.msra.mxu0 %v447
    %494 = vmatprep.subr.mxu0 %v446
    %495 = vmatpush1.msra.mxu0 %v445
    %496 = vmatprep.subr.mxu0 0.0
    %497 = vmatpush2.msra.mxu0 0.0
    %498 = vmatprep.subr.mxu0 0.0
    %499 = vmatpush2.msra.mxu0 0.0
    %500 = vmatprep.subr.mxu0 0.0
    %501 = vmatpush2.msra.mxu0 0.0
    %502 = vmatprep.subr.mxu0 0.0
    %503 = vmatpush2.msra.mxu0 0.0
    %504 = vmatprep.subr.mxu0 0.0
    %505 = vmatpush2.msra.mxu0 0.0
    %506 = vmatprep.subr.mxu0 0.0
    %507 = vmatpush2.msra.mxu0 0.0
    %508 = vmatprep.subr.mxu0 0.0
    %509 = vmatpush2.msra.mxu0 0.0
    %510 = vmatprep.subr.mxu0 0.0
    %511 = vmatpush2.msra.mxu0 0.0
    %512 = vmatprep.subr.mxu0 0.0
    %513 = vmatpush2.msra.mxu0 0.0
    %514 = vmatprep.subr.mxu0 0.0
    %515 = vmatpush2.msra.mxu0 0.0
    %516 = vmatprep.subr.mxu0 0.0
    %517 = vmatpush2.msra.mxu0 0.0
    %518 = vmatprep.subr.mxu0 0.0
    %519 = vmatpush2.msra.mxu0 0.0
    %520 = vmatprep.subr.mxu0 0.0
    %521 = vmatpush2.msra.mxu0 0.0
    %522 = vmatprep.subr.mxu0 0.0
    %523 = vmatpush2.msra.mxu0 0.0
    %524 = vmatprep.subr.mxu0 0.0
    %525 = vmatpush2.msra.mxu0 0.0
    %526 = vmatprep.subr.mxu0 0.0
    %527 = vmatpush2.msra.mxu0 0.0
    %528 = vmatprep.mubr.f32.mxu0 0.0
    %529 = vmatmul.mubr.f32.gmra.mxu0 %v462
    %v530 = vpop.f32.mrf.mxu0
    %v531 = vadd.f32 0.0, %v530
    %v532 = vpop.f32.mrf.mxu0
    %v533 = vadd.f32 0.0, %v532
    %534 = vdwg.mxu0
    %v537 = vcombine.low %v531, %v533
    %v539 = vunpack.c.l.s4 1983009808
    %v540 = vunpack.c.0.s8 %v539
    %v541 = vlaneseq
    %v542 = vshrl.u32 %v541, 7
    %v543 = vsub.s32 %v540, %v542
    %v544 = vrot.slane %v537, %v543
    %v546 = vadd.f32 %v442, %v544
    %v547 = vxor.u32 %v546, 2147483648
    %v548 = vmul.f32 %v547, 1.442695
    %v549 = vpow.pop %v548
    %v550 = vadd.f32 %v549, 1.0
    %v551 = vrcp.pop %v550
    %v552 = vmul.f32 1.0, %v551
    %v554 = vrot.slane %v546, 2
    %v556 = vtanh.pop %v554
    %557 = vrot.lane.b32.xlu0 %v546, 64
    %v558 = vpop.permute.xlu0 %557
    %v559 = vrot.slane %v558, 2
    %v561 = vxor.u32 %v559, 2147483648
    %v562 = vmul.f32 %v561, 1.442695
    %v563 = vpow.pop %v562
    %v564 = vadd.f32 %v563, 1.0
    %v565 = vrcp.pop %v564
    %v566 = vmul.f32 1.0, %v565
    %v569 = vunpack.c.l.s4 1983009808
    %v570 = vunpack.c.0.s8 %v569
    %v571 = vlaneseq
    %v572 = vshrl.u32 %v571, 7
    %v573 = vsub.s32 %v570, %v572
    %v574 = vrot.slane %v444, %v573
    %575 = vrot.lane.b32.xlu0 %v574, 64
    %v576 = vpop.permute.xlu0 %575
    %v578 = vmul.f32 %v552, %v576
    %v579 = vmul.f32 %v552, %v556
    %581 = vrot.lane.b32.xlu0 %v579, 64
    %v582 = vpop.permute.xlu0 %581
    %v584 = vadd.f32 %v578, %v582
    %v585 = vtanh.pop %v584
    %587 = vrot.lane.b32.xlu0 %v585, 64
    %v588 = vpop.permute.xlu0 %587
    %v590 = vmul.f32 %v566, %v588
    %591 = vst.msk [vmem:[#allocation4] sm:$0x3] %vm254, %v590
    %v594 = vunpack.c.l.s4 1983009808
    %v595 = vunpack.c.0.s8 %v594
    %v596 = vlaneseq
    %v597 = vshrl.u32 %v596, 7
    %v598 = vsub.s32 %v595, %v597
    %v599 = vrot.slane %v584, %v598
    %600 = vrot.lane.b32.xlu0 %v599, 64
    %v601 = vpop.permute.xlu0 %600
    %603 = vst.msk [vmem:[#allocation5] sm:$0x3] %vm254, %v601
    %604 = vst.msk [vmem:[#allocation3] sm:$0x3] %vm254, %v590
    %s605 = scalar_lea.vmem [#allocation2], 4
    %v606 = vld [vmem:[%s605] sm:$0xf]
    %v607 = vld [vmem:[#allocation4] sm:$0x3]
    %v608 = vld [vmem:[#allocation5] sm:$0x3]
    %v609 = vld [vmem:[%s5] sm:$0xff]
    %v610 = vld [vmem:[%s5 + $0x8] sm:$0xff]
    %v611 = vld [vmem:[%s5 + $0x10] sm:$0xff]
    %v612 = vld [vmem:[%s5 + $0x18] sm:$0xff]
    %v613 = vld [vmem:[%s5 + $0x20] sm:$0xff]
    %v614 = vld [vmem:[%s5 + $0x28] sm:$0xff]
    %v615 = vld [vmem:[%s5 + $0x30] sm:$0xff]
    %v616 = vld [vmem:[%s5 + $0x38] sm:$0xff]
    %v617 = vld [vmem:[%s5 + $0x40] sm:$0xff]
    %v618 = vld [vmem:[%s5 + $0x48] sm:$0xff]
    %v619 = vld [vmem:[%s5 + $0x50] sm:$0xff]
    %v620 = vld [vmem:[%s5 + $0x58] sm:$0xff]
    %v621 = vld [vmem:[%s5 + $0x60] sm:$0xff]
    %v622 = vld [vmem:[%s5 + $0x68] sm:$0xff]
    %v623 = vld [vmem:[%s5 + $0x70] sm:$0xff]
    %v624 = vld [vmem:[%s5 + $0x78] sm:$0xff]
    %v626 = vsel %vm147, %v607, 0
    %628 = vmatprep.subr.mxu0 0.0
    %629 = vmatpush1.msra.mxu0 0.0
    %630 = vmatprep.subr.mxu0 0.0
    %631 = vmatpush1.msra.mxu0 0.0
    %632 = vmatprep.subr.mxu0 0.0
    %633 = vmatpush1.msra.mxu0 0.0
    %634 = vmatprep.subr.mxu0 0.0
    %635 = vmatpush1.msra.mxu0 0.0
    %636 = vmatprep.subr.mxu0 0.0
    %637 = vmatpush1.msra.mxu0 0.0
    %638 = vmatprep.subr.mxu0 0.0
    %639 = vmatpush1.msra.mxu0 0.0
    %640 = vmatprep.subr.mxu0 0.0
    %641 = vmatpush1.msra.mxu0 0.0
    %642 = vmatprep.subr.mxu0 0.0
    %643 = vmatpush1.msra.mxu0 0.0
    %644 = vmatprep.subr.mxu0 %v624
    %645 = vmatpush1.msra.mxu0 %v623
    %646 = vmatprep.subr.mxu0 %v622
    %647 = vmatpush1.msra.mxu0 %v621
    %648 = vmatprep.subr.mxu0 %v620
    %649 = vmatpush1.msra.mxu0 %v619
    %650 = vmatprep.subr.mxu0 %v618
    %651 = vmatpush1.msra.mxu0 %v617
    %652 = vmatprep.subr.mxu0 %v616
    %653 = vmatpush1.msra.mxu0 %v615
    %654 = vmatprep.subr.mxu0 %v614
    %655 = vmatpush1.msra.mxu0 %v613
    %656 = vmatprep.subr.mxu0 %v612
    %657 = vmatpush1.msra.mxu0 %v611
    %658 = vmatprep.subr.mxu0 %v610
    %659 = vmatpush1.msra.mxu0 %v609
    %660 = vmatprep.subr.mxu0 0.0
    %661 = vmatpush2.msra.mxu0 0.0
    %662 = vmatprep.subr.mxu0 0.0
    %663 = vmatpush2.msra.mxu0 0.0
    %664 = vmatprep.subr.mxu0 0.0
    %665 = vmatpush2.msra.mxu0 0.0
    %666 = vmatprep.subr.mxu0 0.0
    %667 = vmatpush2.msra.mxu0 0.0
    %668 = vmatprep.subr.mxu0 0.0
    %669 = vmatpush2.msra.mxu0 0.0
    %670 = vmatprep.subr.mxu0 0.0
    %671 = vmatpush2.msra.mxu0 0.0
    %672 = vmatprep.subr.mxu0 0.0
    %673 = vmatpush2.msra.mxu0 0.0
    %674 = vmatprep.subr.mxu0 0.0
    %675 = vmatpush2.msra.mxu0 0.0
    %676 = vmatprep.subr.mxu0 0.0
    %677 = vmatpush2.msra.mxu0 0.0
    %678 = vmatprep.subr.mxu0 0.0
    %679 = vmatpush2.msra.mxu0 0.0
    %680 = vmatprep.subr.mxu0 0.0
    %681 = vmatpush2.msra.mxu0 0.0
    %682 = vmatprep.subr.mxu0 0.0
    %683 = vmatpush2.msra.mxu0 0.0
    %684 = vmatprep.subr.mxu0 0.0
    %685 = vmatpush2.msra.mxu0 0.0
    %686 = vmatprep.subr.mxu0 0.0
    %687 = vmatpush2.msra.mxu0 0.0
    %688 = vmatprep.subr.mxu0 0.0
    %689 = vmatpush2.msra.mxu0 0.0
    %690 = vmatprep.subr.mxu0 0.0
    %691 = vmatpush2.msra.mxu0 0.0
    %692 = vmatprep.mubr.f32.mxu0 0.0
    %693 = vmatmul.mubr.f32.gmra.mxu0 %v626
    %v694 = vpop.f32.mrf.mxu0
    %v695 = vadd.f32 0.0, %v694
    %v696 = vpop.f32.mrf.mxu0
    %v697 = vadd.f32 0.0, %v696
    %698 = vdwg.mxu0
    %v701 = vcombine.low %v695, %v697
    %v703 = vunpack.c.l.s4 1983009808
    %v704 = vunpack.c.0.s8 %v703
    %v705 = vlaneseq
    %v706 = vshrl.u32 %v705, 7
    %v707 = vsub.s32 %v704, %v706
    %v708 = vrot.slane %v701, %v707
    %v710 = vadd.f32 %v606, %v708
    %v711 = vxor.u32 %v710, 2147483648
    %v712 = vmul.f32 %v711, 1.442695
    %v713 = vpow.pop %v712
    %v714 = vadd.f32 %v713, 1.0
    %v715 = vrcp.pop %v714
    %v716 = vmul.f32 1.0, %v715
    %v718 = vrot.slane %v710, 2
    %v720 = vtanh.pop %v718
    %721 = vrot.lane.b32.xlu0 %v710, 64
    %v722 = vpop.permute.xlu0 %721
    %v723 = vrot.slane %v722, 2
    %v725 = vxor.u32 %v723, 2147483648
    %v726 = vmul.f32 %v725, 1.442695
    %v727 = vpow.pop %v726
    %v728 = vadd.f32 %v727, 1.0
    %v729 = vrcp.pop %v728
    %v730 = vmul.f32 1.0, %v729
    %v733 = vunpack.c.l.s4 1983009808
    %v734 = vunpack.c.0.s8 %v733
    %v735 = vlaneseq
    %v736 = vshrl.u32 %v735, 7
    %v737 = vsub.s32 %v734, %v736
    %v738 = vrot.slane %v608, %v737
    %739 = vrot.lane.b32.xlu0 %v738, 64
    %v740 = vpop.permute.xlu0 %739
    %v742 = vmul.f32 %v716, %v740
    %v743 = vmul.f32 %v716, %v720
    %745 = vrot.lane.b32.xlu0 %v743, 64
    %v746 = vpop.permute.xlu0 %745
    %v748 = vadd.f32 %v742, %v746
    %v749 = vtanh.pop %v748
    %751 = vrot.lane.b32.xlu0 %v749, 64
    %v752 = vpop.permute.xlu0 %751
    %v754 = vmul.f32 %v730, %v752
    %755 = vst.msk [vmem:[#allocation4] sm:$0x3] %vm254, %v754
    %v758 = vunpack.c.l.s4 1983009808
    %v759 = vunpack.c.0.s8 %v758
    %v760 = vlaneseq
    %v761 = vshrl.u32 %v760, 7
    %v762 = vsub.s32 %v759, %v761
    %v763 = vrot.slane %v748, %v762
    %764 = vrot.lane.b32.xlu0 %v763, 64
    %v765 = vpop.permute.xlu0 %764
    %767 = vst.msk [vmem:[#allocation5] sm:$0x3] %vm254, %v765
    %s768 = scalar_lea.vmem [#allocation3], 2
    %769 = vst.msk [vmem:[%s768] sm:$0x3] %vm254, %v754
    %s770 = scalar_lea.vmem [#allocation2], 8
    %v771 = vld [vmem:[%s770] sm:$0xf]
    %v772 = vld [vmem:[#allocation4] sm:$0x3]
    %v773 = vld [vmem:[#allocation5] sm:$0x3]
    %v774 = vld [vmem:[%s5] sm:$0xff]
    %v775 = vld [vmem:[%s5 + $0x8] sm:$0xff]
    %v776 = vld [vmem:[%s5 + $0x10] sm:$0xff]
    %v777 = vld [vmem:[%s5 + $0x18] sm:$0xff]
    %v778 = vld [vmem:[%s5 + $0x20] sm:$0xff]
    %v779 = vld [vmem:[%s5 + $0x28] sm:$0xff]
    %v780 = vld [vmem:[%s5 + $0x30] sm:$0xff]
    %v781 = vld [vmem:[%s5 + $0x38] sm:$0xff]
    %v782 = vld [vmem:[%s5 + $0x40] sm:$0xff]
    %v783 = vld [vmem:[%s5 + $0x48] sm:$0xff]
    %v784 = vld [vmem:[%s5 + $0x50] sm:$0xff]
    %v785 = vld [vmem:[%s5 + $0x58] sm:$0xff]
    %v786 = vld [vmem:[%s5 + $0x60] sm:$0xff]
    %v787 = vld [vmem:[%s5 + $0x68] sm:$0xff]
    %v788 = vld [vmem:[%s5 + $0x70] sm:$0xff]
    %v789 = vld [vmem:[%s5 + $0x78] sm:$0xff]
    %v791 = vsel %vm147, %v772, 0
    %793 = vmatprep.subr.mxu0 0.0
    %794 = vmatpush1.msra.mxu0 0.0
    %795 = vmatprep.subr.mxu0 0.0
    %796 = vmatpush1.msra.mxu0 0.0
    %797 = vmatprep.subr.mxu0 0.0
    %798 = vmatpush1.msra.mxu0 0.0
    %799 = vmatprep.subr.mxu0 0.0
    %800 = vmatpush1.msra.mxu0 0.0
    %801 = vmatprep.subr.mxu0 0.0
    %802 = vmatpush1.msra.mxu0 0.0
    %803 = vmatprep.subr.mxu0 0.0
    %804 = vmatpush1.msra.mxu0 0.0
    %805 = vmatprep.subr.mxu0 0.0
    %806 = vmatpush1.msra.mxu0 0.0
    %807 = vmatprep.subr.mxu0 0.0
    %808 = vmatpush1.msra.mxu0 0.0
    %809 = vmatprep.subr.mxu0 %v789
    %810 = vmatpush1.msra.mxu0 %v788
    %811 = vmatprep.subr.mxu0 %v787
    %812 = vmatpush1.msra.mxu0 %v786
    %813 = vmatprep.subr.mxu0 %v785
    %814 = vmatpush1.msra.mxu0 %v784
    %815 = vmatprep.subr.mxu0 %v783
    %816 = vmatpush1.msra.mxu0 %v782
    %817 = vmatprep.subr.mxu0 %v781
    %818 = vmatpush1.msra.mxu0 %v780
    %819 = vmatprep.subr.mxu0 %v779
    %820 = vmatpush1.msra.mxu0 %v778
    %821 = vmatprep.subr.mxu0 %v777
    %822 = vmatpush1.msra.mxu0 %v776
    %823 = vmatprep.subr.mxu0 %v775
    %824 = vmatpush1.msra.mxu0 %v774
    %825 = vmatprep.subr.mxu0 0.0
    %826 = vmatpush2.msra.mxu0 0.0
    %827 = vmatprep.subr.mxu0 0.0
    %828 = vmatpush2.msra.mxu0 0.0
    %829 = vmatprep.subr.mxu0 0.0
    %830 = vmatpush2.msra.mxu0 0.0
    %831 = vmatprep.subr.mxu0 0.0
    %832 = vmatpush2.msra.mxu0 0.0
    %833 = vmatprep.subr.mxu0 0.0
    %834 = vmatpush2.msra.mxu0 0.0
    %835 = vmatprep.subr.mxu0 0.0
    %836 = vmatpush2.msra.mxu0 0.0
    %837 = vmatprep.subr.mxu0 0.0
    %838 = vmatpush2.msra.mxu0 0.0
    %839 = vmatprep.subr.mxu0 0.0
    %840 = vmatpush2.msra.mxu0 0.0
    %841 = vmatprep.subr.mxu0 0.0
    %842 = vmatpush2.msra.mxu0 0.0
    %843 = vmatprep.subr.mxu0 0.0
    %844 = vmatpush2.msra.mxu0 0.0
    %845 = vmatprep.subr.mxu0 0.0
    %846 = vmatpush2.msra.mxu0 0.0
    %847 = vmatprep.subr.mxu0 0.0
    %848 = vmatpush2.msra.mxu0 0.0
    %849 = vmatprep.subr.mxu0 0.0
    %850 = vmatpush2.msra.mxu0 0.0
    %851 = vmatprep.subr.mxu0 0.0
    %852 = vmatpush2.msra.mxu0 0.0
    %853 = vmatprep.subr.mxu0 0.0
    %854 = vmatpush2.msra.mxu0 0.0
    %855 = vmatprep.subr.mxu0 0.0
    %856 = vmatpush2.msra.mxu0 0.0
    %857 = vmatprep.mubr.f32.mxu0 0.0
    %858 = vmatmul.mubr.f32.gmra.mxu0 %v791
    %v859 = vpop.f32.mrf.mxu0
    %v860 = vadd.f32 0.0, %v859
    %v861 = vpop.f32.mrf.mxu0
    %v862 = vadd.f32 0.0, %v861
    %863 = vdwg.mxu0
    %v866 = vcombine.low %v860, %v862
    %v868 = vunpack.c.l.s4 1983009808
    %v869 = vunpack.c.0.s8 %v868
    %v870 = vlaneseq
    %v871 = vshrl.u32 %v870, 7
    %v872 = vsub.s32 %v869, %v871
    %v873 = vrot.slane %v866, %v872
    %v875 = vadd.f32 %v771, %v873
    %v876 = vxor.u32 %v875, 2147483648
    %v877 = vmul.f32 %v876, 1.442695
    %v878 = vpow.pop %v877
    %v879 = vadd.f32 %v878, 1.0
    %v880 = vrcp.pop %v879
    %v881 = vmul.f32 1.0, %v880
    %v883 = vrot.slane %v875, 2
    %v885 = vtanh.pop %v883
    %886 = vrot.lane.b32.xlu0 %v875, 64
    %v887 = vpop.permute.xlu0 %886
    %v888 = vrot.slane %v887, 2
    %v890 = vxor.u32 %v888, 2147483648
    %v891 = vmul.f32 %v890, 1.442695
    %v892 = vpow.pop %v891
    %v893 = vadd.f32 %v892, 1.0
    %v894 = vrcp.pop %v893
    %v895 = vmul.f32 1.0, %v894
    %v898 = vunpack.c.l.s4 1983009808
    %v899 = vunpack.c.0.s8 %v898
    %v900 = vlaneseq
    %v901 = vshrl.u32 %v900, 7
    %v902 = vsub.s32 %v899, %v901
    %v903 = vrot.slane %v773, %v902
    %904 = vrot.lane.b32.xlu0 %v903, 64
    %v905 = vpop.permute.xlu0 %904
    %v907 = vmul.f32 %v881, %v905
    %v908 = vmul.f32 %v881, %v885
    %910 = vrot.lane.b32.xlu0 %v908, 64
    %v911 = vpop.permute.xlu0 %910
    %v913 = vadd.f32 %v907, %v911
    %v914 = vtanh.pop %v913
    %916 = vrot.lane.b32.xlu0 %v914, 64
    %v917 = vpop.permute.xlu0 %916
    %v919 = vmul.f32 %v895, %v917
    %920 = vst.msk [vmem:[#allocation4] sm:$0x3] %vm254, %v919
    %v923 = vunpack.c.l.s4 1983009808
    %v924 = vunpack.c.0.s8 %v923
    %v925 = vlaneseq
    %v926 = vshrl.u32 %v925, 7
    %v927 = vsub.s32 %v924, %v926
    %v928 = vrot.slane %v913, %v927
    %929 = vrot.lane.b32.xlu0 %v928, 64
    %v930 = vpop.permute.xlu0 %929
    %932 = vst.msk [vmem:[#allocation5] sm:$0x3] %vm254, %v930
    %s933 = scalar_lea.vmem [#allocation3], 4
    %934 = vst.msk [vmem:[%s933] sm:$0x3] %vm254, %v919
    %s935 = scalar_lea.vmem [#allocation2], 12
    %v936 = vld [vmem:[%s935] sm:$0xf]
    %v937 = vld [vmem:[#allocation4] sm:$0x3]
    %v938 = vld [vmem:[#allocation5] sm:$0x3]
    %v939 = vld [vmem:[%s5] sm:$0xff]
    %v940 = vld [vmem:[%s5 + $0x8] sm:$0xff]
    %v941 = vld [vmem:[%s5 + $0x10] sm:$0xff]
    %v942 = vld [vmem:[%s5 + $0x18] sm:$0xff]
    %v943 = vld [vmem:[%s5 + $0x20] sm:$0xff]
    %v944 = vld [vmem:[%s5 + $0x28] sm:$0xff]
    %v945 = vld [vmem:[%s5 + $0x30] sm:$0xff]
    %v946 = vld [vmem:[%s5 + $0x38] sm:$0xff]
    %v947 = vld [vmem:[%s5 + $0x40] sm:$0xff]
    %v948 = vld [vmem:[%s5 + $0x48] sm:$0xff]
    %v949 = vld [vmem:[%s5 + $0x50] sm:$0xff]
    %v950 = vld [vmem:[%s5 + $0x58] sm:$0xff]
    %v951 = vld [vmem:[%s5 + $0x60] sm:$0xff]
    %v952 = vld [vmem:[%s5 + $0x68] sm:$0xff]
    %v953 = vld [vmem:[%s5 + $0x70] sm:$0xff]
    %v954 = vld [vmem:[%s5 + $0x78] sm:$0xff]
    %v956 = vsel %vm147, %v937, 0
    %958 = vmatprep.subr.mxu0 0.0
    %959 = vmatpush1.msra.mxu0 0.0
    %960 = vmatprep.subr.mxu0 0.0
    %961 = vmatpush1.msra.mxu0 0.0
    %962 = vmatprep.subr.mxu0 0.0
    %963 = vmatpush1.msra.mxu0 0.0
    %964 = vmatprep.subr.mxu0 0.0
    %965 = vmatpush1.msra.mxu0 0.0
    %966 = vmatprep.subr.mxu0 0.0
    %967 = vmatpush1.msra.mxu0 0.0
    %968 = vmatprep.subr.mxu0 0.0
    %969 = vmatpush1.msra.mxu0 0.0
    %970 = vmatprep.subr.mxu0 0.0
    %971 = vmatpush1.msra.mxu0 0.0
    %972 = vmatprep.subr.mxu0 0.0
    %973 = vmatpush1.msra.mxu0 0.0
    %974 = vmatprep.subr.mxu0 %v954
    %975 = vmatpush1.msra.mxu0 %v953
    %976 = vmatprep.subr.mxu0 %v952
    %977 = vmatpush1.msra.mxu0 %v951
    %978 = vmatprep.subr.mxu0 %v950
    %979 = vmatpush1.msra.mxu0 %v949
    %980 = vmatprep.subr.mxu0 %v948
    %981 = vmatpush1.msra.mxu0 %v947
    %982 = vmatprep.subr.mxu0 %v946
    %983 = vmatpush1.msra.mxu0 %v945
    %984 = vmatprep.subr.mxu0 %v944
    %985 = vmatpush1.msra.mxu0 %v943
    %986 = vmatprep.subr.mxu0 %v942
    %987 = vmatpush1.msra.mxu0 %v941
    %988 = vmatprep.subr.mxu0 %v940
    %989 = vmatpush1.msra.mxu0 %v939
    %990 = vmatprep.subr.mxu0 0.0
    %991 = vmatpush2.msra.mxu0 0.0
    %992 = vmatprep.subr.mxu0 0.0
    %993 = vmatpush2.msra.mxu0 0.0
    %994 = vmatprep.subr.mxu0 0.0
    %995 = vmatpush2.msra.mxu0 0.0
    %996 = vmatprep.subr.mxu0 0.0
    %997 = vmatpush2.msra.mxu0 0.0
    %998 = vmatprep.subr.mxu0 0.0
    %999 = vmatpush2.msra.mxu0 0.0
    %1000 = vmatprep.subr.mxu0 0.0
    %1001 = vmatpush2.msra.mxu0 0.0
    %1002 = vmatprep.subr.mxu0 0.0
    %1003 = vmatpush2.msra.mxu0 0.0
    %1004 = vmatprep.subr.mxu0 0.0
    %1005 = vmatpush2.msra.mxu0 0.0
    %1006 = vmatprep.subr.mxu0 0.0
    %1007 = vmatpush2.msra.mxu0 0.0
    %1008 = vmatprep.subr.mxu0 0.0
    %1009 = vmatpush2.msra.mxu0 0.0
    %1010 = vmatprep.subr.mxu0 0.0
    %1011 = vmatpush2.msra.mxu0 0.0
    %1012 = vmatprep.subr.mxu0 0.0
    %1013 = vmatpush2.msra.mxu0 0.0
    %1014 = vmatprep.subr.mxu0 0.0
    %1015 = vmatpush2.msra.mxu0 0.0
    %1016 = vmatprep.subr.mxu0 0.0
    %1017 = vmatpush2.msra.mxu0 0.0
    %1018 = vmatprep.subr.mxu0 0.0
    %1019 = vmatpush2.msra.mxu0 0.0
    %1020 = vmatprep.subr.mxu0 0.0
    %1021 = vmatpush2.msra.mxu0 0.0
    %1022 = vmatprep.mubr.f32.mxu0 0.0
    %1023 = vmatmul.mubr.f32.gmra.mxu0 %v956
    %v1024 = vpop.f32.mrf.mxu0
    %v1025 = vadd.f32 0.0, %v1024
    %v1026 = vpop.f32.mrf.mxu0
    %v1027 = vadd.f32 0.0, %v1026
    %1028 = vdwg.mxu0
    %v1031 = vcombine.low %v1025, %v1027
    %v1033 = vunpack.c.l.s4 1983009808
    %v1034 = vunpack.c.0.s8 %v1033
    %v1035 = vlaneseq
    %v1036 = vshrl.u32 %v1035, 7
    %v1037 = vsub.s32 %v1034, %v1036
    %v1038 = vrot.slane %v1031, %v1037
    %v1040 = vadd.f32 %v936, %v1038
    %v1041 = vxor.u32 %v1040, 2147483648
    %v1042 = vmul.f32 %v1041, 1.442695
    %v1043 = vpow.pop %v1042
    %v1044 = vadd.f32 %v1043, 1.0
    %v1045 = vrcp.pop %v1044
    %v1046 = vmul.f32 1.0, %v1045
    %v1048 = vrot.slane %v1040, 2
    %v1050 = vtanh.pop %v1048
    %1051 = vrot.lane.b32.xlu0 %v1040, 64
    %v1052 = vpop.permute.xlu0 %1051
    %v1053 = vrot.slane %v1052, 2
    %v1055 = vxor.u32 %v1053, 2147483648
    %v1056 = vmul.f32 %v1055, 1.442695
    %v1057 = vpow.pop %v1056
    %v1058 = vadd.f32 %v1057, 1.0
    %v1059 = vrcp.pop %v1058
    %v1060 = vmul.f32 1.0, %v1059
    %v1063 = vunpack.c.l.s4 1983009808
    %v1064 = vunpack.c.0.s8 %v1063
    %v1065 = vlaneseq
    %v1066 = vshrl.u32 %v1065, 7
    %v1067 = vsub.s32 %v1064, %v1066
    %v1068 = vrot.slane %v938, %v1067
    %1069 = vrot.lane.b32.xlu0 %v1068, 64
    %v1070 = vpop.permute.xlu0 %1069
    %v1072 = vmul.f32 %v1046, %v1070
    %v1073 = vmul.f32 %v1046, %v1050
    %1075 = vrot.lane.b32.xlu0 %v1073, 64
    %v1076 = vpop.permute.xlu0 %1075
    %v1078 = vadd.f32 %v1072, %v1076
    %v1079 = vtanh.pop %v1078
    %1081 = vrot.lane.b32.xlu0 %v1079, 64
    %v1082 = vpop.permute.xlu0 %1081
    %v1084 = vmul.f32 %v1060, %v1082
    %1085 = vst.msk [vmem:[#allocation4] sm:$0x3] %vm254, %v1084
    %v1088 = vunpack.c.l.s4 1983009808
    %v1089 = vunpack.c.0.s8 %v1088
    %v1090 = vlaneseq
    %v1091 = vshrl.u32 %v1090, 7
    %v1092 = vsub.s32 %v1089, %v1091
    %v1093 = vrot.slane %v1078, %v1092
    %1094 = vrot.lane.b32.xlu0 %v1093, 64
    %v1095 = vpop.permute.xlu0 %1094
    %1097 = vst.msk [vmem:[#allocation5] sm:$0x3] %vm254, %v1095
    %s1098 = scalar_lea.vmem [#allocation3], 6
    %1099 = vst.msk [vmem:[%s1098] sm:$0x3] %vm254, %v1084
    %s1100 = scalar_lea.vmem [#allocation2], 16
    %v1101 = vld [vmem:[%s1100] sm:$0xf]
    %v1102 = vld [vmem:[#allocation4] sm:$0x3]
    %v1103 = vld [vmem:[#allocation5] sm:$0x3]
    %v1104 = vld [vmem:[%s5] sm:$0xff]
    %v1105 = vld [vmem:[%s5 + $0x8] sm:$0xff]
    %v1106 = vld [vmem:[%s5 + $0x10] sm:$0xff]
    %v1107 = vld [vmem:[%s5 + $0x18] sm:$0xff]
    %v1108 = vld [vmem:[%s5 + $0x20] sm:$0xff]
    %v1109 = vld [vmem:[%s5 + $0x28] sm:$0xff]
    %v1110 = vld [vmem:[%s5 + $0x30] sm:$0xff]
    %v1111 = vld [vmem:[%s5 + $0x38] sm:$0xff]
    %v1112 = vld [vmem:[%s5 + $0x40] sm:$0xff]
    %v1113 = vld [vmem:[%s5 + $0x48] sm:$0xff]
    %v1114 = vld [vmem:[%s5 + $0x50] sm:$0xff]
    %v1115 = vld [vmem:[%s5 + $0x58] sm:$0xff]
    %v1116 = vld [vmem:[%s5 + $0x60] sm:$0xff]
    %v1117 = vld [vmem:[%s5 + $0x68] sm:$0xff]
    %v1118 = vld [vmem:[%s5 + $0x70] sm:$0xff]
    %v1119 = vld [vmem:[%s5 + $0x78] sm:$0xff]
    %v1121 = vsel %vm147, %v1102, 0
    %1123 = vmatprep.subr.mxu0 0.0
    %1124 = vmatpush1.msra.mxu0 0.0
    %1125 = vmatprep.subr.mxu0 0.0
    %1126 = vmatpush1.msra.mxu0 0.0
    %1127 = vmatprep.subr.mxu0 0.0
    %1128 = vmatpush1.msra.mxu0 0.0
    %1129 = vmatprep.subr.mxu0 0.0
    %1130 = vmatpush1.msra.mxu0 0.0
    %1131 = vmatprep.subr.mxu0 0.0
    %1132 = vmatpush1.msra.mxu0 0.0
    %1133 = vmatprep.subr.mxu0 0.0
    %1134 = vmatpush1.msra.mxu0 0.0
    %1135 = vmatprep.subr.mxu0 0.0
    %1136 = vmatpush1.msra.mxu0 0.0
    %1137 = vmatprep.subr.mxu0 0.0
    %1138 = vmatpush1.msra.mxu0 0.0
    %1139 = vmatprep.subr.mxu0 %v1119
    %1140 = vmatpush1.msra.mxu0 %v1118
    %1141 = vmatprep.subr.mxu0 %v1117
    %1142 = vmatpush1.msra.mxu0 %v1116
    %1143 = vmatprep.subr.mxu0 %v1115
    %1144 = vmatpush1.msra.mxu0 %v1114
    %1145 = vmatprep.subr.mxu0 %v1113
    %1146 = vmatpush1.msra.mxu0 %v1112
    %1147 = vmatprep.subr.mxu0 %v1111
    %1148 = vmatpush1.msra.mxu0 %v1110
    %1149 = vmatprep.subr.mxu0 %v1109
    %1150 = vmatpush1.msra.mxu0 %v1108
    %1151 = vmatprep.subr.mxu0 %v1107
    %1152 = vmatpush1.msra.mxu0 %v1106
    %1153 = vmatprep.subr.mxu0 %v1105
    %1154 = vmatpush1.msra.mxu0 %v1104
    %1155 = vmatprep.subr.mxu0 0.0
    %1156 = vmatpush2.msra.mxu0 0.0
    %1157 = vmatprep.subr.mxu0 0.0
    %1158 = vmatpush2.msra.mxu0 0.0
    %1159 = vmatprep.subr.mxu0 0.0
    %1160 = vmatpush2.msra.mxu0 0.0
    %1161 = vmatprep.subr.mxu0 0.0
    %1162 = vmatpush2.msra.mxu0 0.0
    %1163 = vmatprep.subr.mxu0 0.0
    %1164 = vmatpush2.msra.mxu0 0.0
    %1165 = vmatprep.subr.mxu0 0.0
    %1166 = vmatpush2.msra.mxu0 0.0
    %1167 = vmatprep.subr.mxu0 0.0
    %1168 = vmatpush2.msra.mxu0 0.0
    %1169 = vmatprep.subr.mxu0 0.0
    %1170 = vmatpush2.msra.mxu0 0.0
    %1171 = vmatprep.subr.mxu0 0.0
    %1172 = vmatpush2.msra.mxu0 0.0
    %1173 = vmatprep.subr.mxu0 0.0
    %1174 = vmatpush2.msra.mxu0 0.0
    %1175 = vmatprep.subr.mxu0 0.0
    %1176 = vmatpush2.msra.mxu0 0.0
    %1177 = vmatprep.subr.mxu0 0.0
    %1178 = vmatpush2.msra.mxu0 0.0
    %1179 = vmatprep.subr.mxu0 0.0
    %1180 = vmatpush2.msra.mxu0 0.0
    %1181 = vmatprep.subr.mxu0 0.0
    %1182 = vmatpush2.msra.mxu0 0.0
    %1183 = vmatprep.subr.mxu0 0.0
    %1184 = vmatpush2.msra.mxu0 0.0
    %1185 = vmatprep.subr.mxu0 0.0
    %1186 = vmatpush2.msra.mxu0 0.0
    %1187 = vmatprep.mubr.f32.mxu0 0.0
    %1188 = vmatmul.mubr.f32.gmra.mxu0 %v1121
    %v1189 = vpop.f32.mrf.mxu0
    %v1190 = vadd.f32 0.0, %v1189
    %v1191 = vpop.f32.mrf.mxu0
    %v1192 = vadd.f32 0.0, %v1191
    %1193 = vdwg.mxu0
    %v1196 = vcombine.low %v1190, %v1192
    %v1198 = vunpack.c.l.s4 1983009808
    %v1199 = vunpack.c.0.s8 %v1198
    %v1200 = vlaneseq
    %v1201 = vshrl.u32 %v1200, 7
    %v1202 = vsub.s32 %v1199, %v1201
    %v1203 = vrot.slane %v1196, %v1202
    %v1205 = vadd.f32 %v1101, %v1203
    %v1206 = vxor.u32 %v1205, 2147483648
    %v1207 = vmul.f32 %v1206, 1.442695
    %v1208 = vpow.pop %v1207
    %v1209 = vadd.f32 %v1208, 1.0
    %v1210 = vrcp.pop %v1209
    %v1211 = vmul.f32 1.0, %v1210
    %v1213 = vrot.slane %v1205, 2
    %v1215 = vtanh.pop %v1213
    %1216 = vrot.lane.b32.xlu0 %v1205, 64
    %v1217 = vpop.permute.xlu0 %1216
    %v1218 = vrot.slane %v1217, 2
    %v1220 = vxor.u32 %v1218, 2147483648
    %v1221 = vmul.f32 %v1220, 1.442695
    %v1222 = vpow.pop %v1221
    %v1223 = vadd.f32 %v1222, 1.0
    %v1224 = vrcp.pop %v1223
    %v1225 = vmul.f32 1.0, %v1224
    %v1228 = vunpack.c.l.s4 1983009808
    %v1229 = vunpack.c.0.s8 %v1228
    %v1230 = vlaneseq
    %v1231 = vshrl.u32 %v1230, 7
    %v1232 = vsub.s32 %v1229, %v1231
    %v1233 = vrot.slane %v1103, %v1232
    %1234 = vrot.lane.b32.xlu0 %v1233, 64
    %v1235 = vpop.permute.xlu0 %1234
    %v1237 = vmul.f32 %v1211, %v1235
    %v1238 = vmul.f32 %v1211, %v1215
    %1240 = vrot.lane.b32.xlu0 %v1238, 64
    %v1241 = vpop.permute.xlu0 %1240
    %v1243 = vadd.f32 %v1237, %v1241
    %v1244 = vtanh.pop %v1243
    %1246 = vrot.lane.b32.xlu0 %v1244, 64
    %v1247 = vpop.permute.xlu0 %1246
    %v1249 = vmul.f32 %v1225, %v1247
    %1250 = vst.msk [vmem:[#allocation4] sm:$0x3] %vm254, %v1249
    %v1253 = vunpack.c.l.s4 1983009808
    %v1254 = vunpack.c.0.s8 %v1253
    %v1255 = vlaneseq
    %v1256 = vshrl.u32 %v1255, 7
    %v1257 = vsub.s32 %v1254, %v1256
    %v1258 = vrot.slane %v1243, %v1257
    %1259 = vrot.lane.b32.xlu0 %v1258, 64
    %v1260 = vpop.permute.xlu0 %1259
    %1262 = vst.msk [vmem:[#allocation5] sm:$0x3] %vm254, %v1260
    %s1263 = scalar_lea.vmem [#allocation3], 8
    %1264 = vst.msk [vmem:[%s1263] sm:$0x3] %vm254, %v1249
    %s1265 = scalar_lea.vmem [#allocation2], 20
    %v1266 = vld [vmem:[%s1265] sm:$0xf]
    %v1267 = vld [vmem:[#allocation4] sm:$0x3]
    %v1268 = vld [vmem:[#allocation5] sm:$0x3]
    %v1269 = vld [vmem:[%s5] sm:$0xff]
    %v1270 = vld [vmem:[%s5 + $0x8] sm:$0xff]
    %v1271 = vld [vmem:[%s5 + $0x10] sm:$0xff]
    %v1272 = vld [vmem:[%s5 + $0x18] sm:$0xff]
    %v1273 = vld [vmem:[%s5 + $0x20] sm:$0xff]
    %v1274 = vld [vmem:[%s5 + $0x28] sm:$0xff]
    %v1275 = vld [vmem:[%s5 + $0x30] sm:$0xff]
    %v1276 = vld [vmem:[%s5 + $0x38] sm:$0xff]
    %v1277 = vld [vmem:[%s5 + $0x40] sm:$0xff]
    %v1278 = vld [vmem:[%s5 + $0x48] sm:$0xff]
    %v1279 = vld [vmem:[%s5 + $0x50] sm:$0xff]
    %v1280 = vld [vmem:[%s5 + $0x58] sm:$0xff]
    %v1281 = vld [vmem:[%s5 + $0x60] sm:$0xff]
    %v1282 = vld [vmem:[%s5 + $0x68] sm:$0xff]
    %v1283 = vld [vmem:[%s5 + $0x70] sm:$0xff]
    %v1284 = vld [vmem:[%s5 + $0x78] sm:$0xff]
    %v1286 = vsel %vm147, %v1267, 0
    %1288 = vmatprep.subr.mxu0 0.0
    %1289 = vmatpush1.msra.mxu0 0.0
    %1290 = vmatprep.subr.mxu0 0.0
    %1291 = vmatpush1.msra.mxu0 0.0
    %1292 = vmatprep.subr.mxu0 0.0
    %1293 = vmatpush1.msra.mxu0 0.0
    %1294 = vmatprep.subr.mxu0 0.0
    %1295 = vmatpush1.msra.mxu0 0.0
    %1296 = vmatprep.subr.mxu0 0.0
    %1297 = vmatpush1.msra.mxu0 0.0
    %1298 = vmatprep.subr.mxu0 0.0
    %1299 = vmatpush1.msra.mxu0 0.0
    %1300 = vmatprep.subr.mxu0 0.0
    %1301 = vmatpush1.msra.mxu0 0.0
    %1302 = vmatprep.subr.mxu0 0.0
    %1303 = vmatpush1.msra.mxu0 0.0
    %1304 = vmatprep.subr.mxu0 %v1284
    %1305 = vmatpush1.msra.mxu0 %v1283
    %1306 = vmatprep.subr.mxu0 %v1282
    %1307 = vmatpush1.msra.mxu0 %v1281
    %1308 = vmatprep.subr.mxu0 %v1280
    %1309 = vmatpush1.msra.mxu0 %v1279
    %1310 = vmatprep.subr.mxu0 %v1278
    %1311 = vmatpush1.msra.mxu0 %v1277
    %1312 = vmatprep.subr.mxu0 %v1276
    %1313 = vmatpush1.msra.mxu0 %v1275
    %1314 = vmatprep.subr.mxu0 %v1274
    %1315 = vmatpush1.msra.mxu0 %v1273
    %1316 = vmatprep.subr.mxu0 %v1272
    %1317 = vmatpush1.msra.mxu0 %v1271
    %1318 = vmatprep.subr.mxu0 %v1270
    %1319 = vmatpush1.msra.mxu0 %v1269
    %1320 = vmatprep.subr.mxu0 0.0
    %1321 = vmatpush2.msra.mxu0 0.0
    %1322 = vmatprep.subr.mxu0 0.0
    %1323 = vmatpush2.msra.mxu0 0.0
    %1324 = vmatprep.subr.mxu0 0.0
    %1325 = vmatpush2.msra.mxu0 0.0
    %1326 = vmatprep.subr.mxu0 0.0
    %1327 = vmatpush2.msra.mxu0 0.0
    %1328 = vmatprep.subr.mxu0 0.0
    %1329 = vmatpush2.msra.mxu0 0.0
    %1330 = vmatprep.subr.mxu0 0.0
    %1331 = vmatpush2.msra.mxu0 0.0
    %1332 = vmatprep.subr.mxu0 0.0
    %1333 = vmatpush2.msra.mxu0 0.0
    %1334 = vmatprep.subr.mxu0 0.0
    %1335 = vmatpush2.msra.mxu0 0.0
    %1336 = vmatprep.subr.mxu0 0.0
    %1337 = vmatpush2.msra.mxu0 0.0
    %1338 = vmatprep.subr.mxu0 0.0
    %1339 = vmatpush2.msra.mxu0 0.0
    %1340 = vmatprep.subr.mxu0 0.0
    %1341 = vmatpush2.msra.mxu0 0.0
    %1342 = vmatprep.subr.mxu0 0.0
    %1343 = vmatpush2.msra.mxu0 0.0
    %1344 = vmatprep.subr.mxu0 0.0
    %1345 = vmatpush2.msra.mxu0 0.0
    %1346 = vmatprep.subr.mxu0 0.0
    %1347 = vmatpush2.msra.mxu0 0.0
    %1348 = vmatprep.subr.mxu0 0.0
    %1349 = vmatpush2.msra.mxu0 0.0
    %1350 = vmatprep.subr.mxu0 0.0
    %1351 = vmatpush2.msra.mxu0 0.0
    %1352 = vmatprep.mubr.f32.mxu0 0.0
    %1353 = vmatmul.mubr.f32.gmra.mxu0 %v1286
    %v1354 = vpop.f32.mrf.mxu0
    %v1355 = vadd.f32 0.0, %v1354
    %v1356 = vpop.f32.mrf.mxu0
    %v1357 = vadd.f32 0.0, %v1356
    %1358 = vdwg.mxu0
    %v1361 = vcombine.low %v1355, %v1357
    %v1363 = vunpack.c.l.s4 1983009808
    %v1364 = vunpack.c.0.s8 %v1363
    %v1365 = vlaneseq
    %v1366 = vshrl.u32 %v1365, 7
    %v1367 = vsub.s32 %v1364, %v1366
    %v1368 = vrot.slane %v1361, %v1367
    %v1370 = vadd.f32 %v1266, %v1368
    %v1371 = vxor.u32 %v1370, 2147483648
    %v1372 = vmul.f32 %v1371, 1.442695
    %v1373 = vpow.pop %v1372
    %v1374 = vadd.f32 %v1373, 1.0
    %v1375 = vrcp.pop %v1374
    %v1376 = vmul.f32 1.0, %v1375
    %v1378 = vrot.slane %v1370, 2
    %v1380 = vtanh.pop %v1378
    %1381 = vrot.lane.b32.xlu0 %v1370, 64
    %v1382 = vpop.permute.xlu0 %1381
    %v1383 = vrot.slane %v1382, 2
    %v1385 = vxor.u32 %v1383, 2147483648
    %v1386 = vmul.f32 %v1385, 1.442695
    %v1387 = vpow.pop %v1386
    %v1388 = vadd.f32 %v1387, 1.0
    %v1389 = vrcp.pop %v1388
    %v1390 = vmul.f32 1.0, %v1389
    %v1393 = vunpack.c.l.s4 1983009808
    %v1394 = vunpack.c.0.s8 %v1393
    %v1395 = vlaneseq
    %v1396 = vshrl.u32 %v1395, 7
    %v1397 = vsub.s32 %v1394, %v1396
    %v1398 = vrot.slane %v1268, %v1397
    %1399 = vrot.lane.b32.xlu0 %v1398, 64
    %v1400 = vpop.permute.xlu0 %1399
    %v1402 = vmul.f32 %v1376, %v1400
    %v1403 = vmul.f32 %v1376, %v1380
    %1405 = vrot.lane.b32.xlu0 %v1403, 64
    %v1406 = vpop.permute.xlu0 %1405
    %v1408 = vadd.f32 %v1402, %v1406
    %v1409 = vtanh.pop %v1408
    %1411 = vrot.lane.b32.xlu0 %v1409, 64
    %v1412 = vpop.permute.xlu0 %1411
    %v1414 = vmul.f32 %v1390, %v1412
    %1415 = vst.msk [vmem:[#allocation4] sm:$0x3] %vm254, %v1414
    %v1418 = vunpack.c.l.s4 1983009808
    %v1419 = vunpack.c.0.s8 %v1418
    %v1420 = vlaneseq
    %v1421 = vshrl.u32 %v1420, 7
    %v1422 = vsub.s32 %v1419, %v1421
    %v1423 = vrot.slane %v1408, %v1422
    %1424 = vrot.lane.b32.xlu0 %v1423, 64
    %v1425 = vpop.permute.xlu0 %1424
    %1427 = vst.msk [vmem:[#allocation5] sm:$0x3] %vm254, %v1425
    %s1428 = scalar_lea.vmem [#allocation3], 10
    %1429 = vst.msk [vmem:[%s1428] sm:$0x3] %vm254, %v1414
    %v1430 = vld [vmem:[#allocation3] sm:$0x3]
    %v1431 = vld [vmem:[#allocation3 + $0x2] sm:$0x3]
    %v1432 = vld [vmem:[#allocation3 + $0x4] sm:$0x3]
    %v1433 = vld [vmem:[#allocation3 + $0x6] sm:$0x3]
    %v1434 = vld [vmem:[#allocation3 + $0x8] sm:$0x3]
    %v1435 = vld [vmem:[#allocation3 + $0xa] sm:$0x3]
    %v1436 = vld [vmem:[%s7] sm:$0xff]
    %v1437 = vld [vmem:[%s7 + $0x8] sm:$0xff]
    %v1438 = vld [vmem:[%s7 + $0x10] sm:$0xff]
    %v1439 = vld [vmem:[%s7 + $0x18] sm:$0xff]
    %v1440 = vld [vmem:[%s7 + $0x20] sm:$0xff]
    %v1441 = vld [vmem:[%s7 + $0x28] sm:$0xff]
    %v1442 = vld [vmem:[%s7 + $0x30] sm:$0xff]
    %v1443 = vld [vmem:[%s7 + $0x38] sm:$0xff]
    %v1444 = vld [vmem:[%s8] sm:$0x1]
    %v1446 = vlaneseq
    %v1447 = vshrl.u32 %v1446, 7
    %v1448 = vsub.s32 0, %v1447
    %v1449 = vrot.slane %v1444, %v1448
    %v1457 = vcombine.low %v1430, %v1431
    %v1458 = vcombine.low %v1432, %v1433
    %v1460 = vunpack.c.l.s4 1983009808
    %v1461 = vunpack.c.0.s8 %v1460
    %v1462 = vlaneseq
    %v1463 = vshrl.u32 %v1462, 7
    %v1464 = vsub.s32 %v1461, %v1463
    %v1465 = vrot.slane %v1457, %v1464
    %v1467 = vunpack.c.l.s4 1983009808
    %v1468 = vunpack.c.0.s8 %v1467
    %v1469 = vlaneseq
    %v1470 = vshrl.u32 %v1469, 7
    %v1471 = vsub.s32 %v1468, %v1470
    %v1472 = vrot.slane %v1458, %v1471
    %v1473 = vcombine.low %v1465, %v1472
    %v1474 = vcombine.low %v1434, %v1435
    %v1476 = vunpack.c.l.s4 1983009808
    %v1477 = vunpack.c.0.s8 %v1476
    %v1478 = vlaneseq
    %v1479 = vshrl.u32 %v1478, 7
    %v1480 = vsub.s32 %v1477, %v1479
    %v1481 = vrot.slane %v1474, %v1480
    %v1482 = vsel %vm147, %v1473, 0
    %v1484 = vsel %vm147, %v1481, 0
    %1486 = vmatprep.subr.mxu0 0.0
    %1487 = vmatpush1.msra.mxu0 0.0
    %1488 = vmatprep.subr.mxu0 0.0
    %1489 = vmatpush1.msra.mxu0 0.0
    %1490 = vmatprep.subr.mxu0 0.0
    %1491 = vmatpush1.msra.mxu0 0.0
    %1492 = vmatprep.subr.mxu0 0.0
    %1493 = vmatpush1.msra.mxu0 0.0
    %1494 = vmatprep.subr.mxu0 0.0
    %1495 = vmatpush1.msra.mxu0 0.0
    %1496 = vmatprep.subr.mxu0 0.0
    %1497 = vmatpush1.msra.mxu0 0.0
    %1498 = vmatprep.subr.mxu0 0.0
    %1499 = vmatpush1.msra.mxu0 0.0
    %1500 = vmatprep.subr.mxu0 0.0
    %1501 = vmatpush1.msra.mxu0 0.0
    %1502 = vmatprep.subr.mxu0 0.0
    %1503 = vmatpush1.msra.mxu0 %v1443
    %1504 = vmatprep.subr.mxu0 0.0
    %1505 = vmatpush1.msra.mxu0 %v1442
    %1506 = vmatprep.subr.mxu0 0.0
    %1507 = vmatpush1.msra.mxu0 %v1441
    %1508 = vmatprep.subr.mxu0 0.0
    %1509 = vmatpush1.msra.mxu0 %v1440
    %1510 = vmatprep.subr.mxu0 0.0
    %1511 = vmatpush1.msra.mxu0 %v1439
    %1512 = vmatprep.subr.mxu0 0.0
    %1513 = vmatpush1.msra.mxu0 %v1438
    %1514 = vmatprep.subr.mxu0 0.0
    %1515 = vmatpush1.msra.mxu0 %v1437
    %1516 = vmatprep.subr.mxu0 0.0
    %1517 = vmatpush1.msra.mxu0 %v1436
    %1518 = vmatprep.subr.mxu0 0.0
    %1519 = vmatpush2.msra.mxu0 0.0
    %1520 = vmatprep.subr.mxu0 0.0
    %1521 = vmatpush2.msra.mxu0 0.0
    %1522 = vmatprep.subr.mxu0 0.0
    %1523 = vmatpush2.msra.mxu0 0.0
    %1524 = vmatprep.subr.mxu0 0.0
    %1525 = vmatpush2.msra.mxu0 0.0
    %1526 = vmatprep.subr.mxu0 0.0
    %1527 = vmatpush2.msra.mxu0 0.0
    %1528 = vmatprep.subr.mxu0 0.0
    %1529 = vmatpush2.msra.mxu0 0.0
    %1530 = vmatprep.subr.mxu0 0.0
    %1531 = vmatpush2.msra.mxu0 0.0
    %1532 = vmatprep.subr.mxu0 0.0
    %1533 = vmatpush2.msra.mxu0 0.0
    %1534 = vmatprep.subr.mxu0 0.0
    %1535 = vmatpush2.msra.mxu0 0.0
    %1536 = vmatprep.subr.mxu0 0.0
    %1537 = vmatpush2.msra.mxu0 0.0
    %1538 = vmatprep.subr.mxu0 0.0
    %1539 = vmatpush2.msra.mxu0 0.0
    %1540 = vmatprep.subr.mxu0 0.0
    %1541 = vmatpush2.msra.mxu0 0.0
    %1542 = vmatprep.subr.mxu0 0.0
    %1543 = vmatpush2.msra.mxu0 0.0
    %1544 = vmatprep.subr.mxu0 0.0
    %1545 = vmatpush2.msra.mxu0 0.0
    %1546 = vmatprep.subr.mxu0 0.0
    %1547 = vmatpush2.msra.mxu0 0.0
    %1548 = vmatprep.subr.mxu0 0.0
    %1549 = vmatpush2.msra.mxu0 0.0
    %1550 = vmatprep.mubr.f32.mxu0 0.0
    %1551 = vmatmul.mubr.f32.gmra.mxu0 %v1482
    %v1552 = vpop.f32.mrf.mxu0
    %v1553 = vadd.f32 %v1449, %v1552
    %v1554 = vpop.f32.mrf.mxu0
    %1555 = vmatprep.mubr.f32.mxu0 0.0
    %1556 = vmatmul.mubr.f32.gmra.mxu0 %v1484
    %v1557 = vpop.f32.mrf.mxu0
    %v1558 = vadd.f32 %v1449, %v1557
    %v1559 = vpop.f32.mrf.mxu0
    %1560 = vdwg.mxu0
    %v1563 = vcombine.high %v1553, %v1553
    %v1565 = vunpack.c.l.s4 1983009808
    %v1566 = vunpack.c.0.s8 %v1565
    %v1567 = vlaneseq
    %v1568 = vshrl.u32 %v1567, 7
    %v1569 = vsub.s32 %v1566, %v1568
    %v1570 = vrot.slane %v1553, %v1569
    %v1572 = vunpack.c.l.s4 1983009808
    %v1573 = vunpack.c.0.s8 %v1572
    %v1574 = vlaneseq
    %v1575 = vshrl.u32 %v1574, 7
    %v1576 = vsub.s32 %v1573, %v1575
    %v1577 = vrot.slane %v1563, %v1576
    %v1578 = vcombine.high %v1570, %v1570
    %v1579 = vcombine.high %v1577, %v1577
    %v1581 = vunpack.c.l.s4 1983009808
    %v1582 = vunpack.c.0.s8 %v1581
    %v1583 = vlaneseq
    %v1584 = vshrl.u32 %v1583, 7
    %v1585 = vsub.s32 %v1582, %v1584
    %v1586 = vrot.slane %v1558, %v1585
    %v1587 = vcombine.high %v1586, %v1586
    %vm1594 = vcmask 812032
    %1595 = vst.msk [vmem:[#allocation6] sm:$0x3] %vm1594, %v1570
    %1596 = vst.msk [vmem:[#allocation6 + $0x2] sm:$0x3] %vm1594, %v1578
    %1597 = vst.msk [vmem:[#allocation6 + $0x4] sm:$0x3] %vm1594, %v1577
    %1598 = vst.msk [vmem:[#allocation6 + $0x6] sm:$0x3] %vm1594, %v1579
    %1599 = vst.msk [vmem:[#allocation6 + $0x8] sm:$0x3] %vm1594, %v1586
    %1600 = vst.msk [vmem:[#allocation6 + $0xa] sm:$0x3] %vm1594, %v1587
    // Predicated region
    $region38: #{forward.7} parent=1 // pred_check
      _
    $region39: #{forward.7} parent=1 // pred_check_branch
      %1602 = sbr.rel (0) target = $region41
    $region40: #{forward.7} parent=1 // pred_region
      %s1604 = ssub.s32 192, 192
      %1605 = vsyncadd [#allocation7], %s1604
      %s1606 = sshll.u32 [#allocation6], 4
      %s1607 = int_to_ptr.vmem [resolvable:$true] %s1606
      %1612 = dma.vmem_to_hbm [thread:$0]  %s1607, 192, %s9, [#allocation7], 32, 32, 2
    $region41: #{forward.7} parent=1 // pred_fallthru
      _
    // Predicated region
    $region42: #{forward.7} parent=1 // pred_check
      _
    $region43: #{forward.7} parent=1 // pred_check_branch
      %1614 = sbr.rel (0) target = $region45
    $region44: #{forward.7} parent=1 // pred_region
      %1615 = dma.done [#allocation7], 192
    $region45: #{forward.7} parent=1 // pred_fallthru
      _
    %1616 = vsyncpa [#allocation7], 1

// kernel: forward.6
$region0: #{forward.6}
  #allocation0 [shape = 'u32[]', space=smem, size = 0x4, offset = 0x4, fixed_abs, tag = 'smem constant byte address 0x4 - core index']
  #allocation1 [shape = 'u32[144,128]{1,0:T(1,128)}', space=vmem, size = 0x12000, scoped, tag = 'internal scratch']
  %s0 = inlined_call_operand.vmem [shape: f32[2,16,64], index: 0, kind: input, shape index: {}]
  %s1 = inlined_call_operand.vmem [shape: f32[2,4,64], index: 1, kind: input, shape index: {}]
  %s2 = inlined_call_operand.vmem [shape: f32[2,64], index: 2, kind: input, shape index: {}]
  %s3 = inlined_call_operand.vmem [shape: f32[64,64], index: 3, kind: input, shape index: {}]
  %s4 = inlined_call_operand.vmem [shape: f32[1,64], index: 4, kind: input, shape index: {}]
  %s5 = inlined_call_operand.vmem [shape: f32[6,64,64], index: 5, kind: input, shape index: {}]
  %s6 = inlined_call_operand.vmem [shape: f32[6,64,64], index: 6, kind: input, shape index: {}]
  %s7 = inlined_call_operand.vmem [shape: f32[6,1,64], index: 7, kind: input, shape index: {}]
  %s8 = inlined_call_operand.vmem [shape: f32[6,1,64], index: 8, kind: input, shape index: {}]
  %s9 = inlined_call_operand.vmem [shape: f32[6,1,1], index: 9, kind: input, shape index: {}]
  %s10 = inlined_call_operand.vmem [shape: f32[5,64,64], index: 10, kind: input, shape index: {}]
  %s11 = inlined_call_operand.vmem [shape: f32[5,1,64], index: 11, kind: input, shape index: {}]
  %s12 = inlined_call_operand.vmem [shape: f32[64,64], index: 12, kind: input, shape index: {}]
  %s13 = inlined_call_operand.vmem [shape: f32[1,64], index: 13, kind: input, shape index: {}]
  %s14 = inlined_call_operand.vmem [shape: f32[64,64], index: 14, kind: input, shape index: {}]
  %s15 = inlined_call_operand.vmem [shape: f32[1,64], index: 15, kind: input, shape index: {}]
  %s16 = inlined_call_operand.vmem [shape: f32[128,32], index: 16, kind: input, shape index: {}]
  %s17 = inlined_call_operand.vmem [shape: f32[1,32], index: 17, kind: input, shape index: {}]
  %s18 = inlined_call_operand.vmem [shape: f32[2,32], index: 18, kind: output, shape index: {}]
  %s19 = sld [smem:[#allocation0]]
  $region82: #{forward.6} parent=0
    _
  %s21 = ssub.s32 1, %s19
  %s22 = scalar_select 0, %s21, %s19
  // Predicated region
  $region2: #{forward.6} parent=0 // pred_check
    _
  $region3: #{forward.6} parent=0 // pred_check_branch
    %24 = sbr.rel (0) target = $region5
  $region4: #{forward.6} parent=0 // pred_region
    _
  $region5: #{forward.6} parent=0 // pred_fallthru
    _
  // Predicated region
  $region6: #{forward.6} parent=0 // pred_check
    _
  $region7: #{forward.6} parent=0 // pred_check_branch
    %26 = sbr.rel (0) target = $region9
  $region8: #{forward.6} parent=0 // pred_region
    _
  $region9: #{forward.6} parent=0 // pred_fallthru
    _
  // Predicated region
  $region10: #{forward.6} parent=0 // pred_check
    _
  $region11: #{forward.6} parent=0 // pred_check_branch
    %28 = sbr.rel (0) target = $region13
  $region12: #{forward.6} parent=0 // pred_region
    _
  $region13: #{forward.6} parent=0 // pred_fallthru
    _
  // Predicated region
  $region14: #{forward.6} parent=0 // pred_check
    _
  $region15: #{forward.6} parent=0 // pred_check_branch
    %30 = sbr.rel (0) target = $region17
  $region16: #{forward.6} parent=0 // pred_region
    _
  $region17: #{forward.6} parent=0 // pred_fallthru
    _
  // Predicated region
  $region18: #{forward.6} parent=0 // pred_check
    _
  $region19: #{forward.6} parent=0 // pred_check_branch
    %32 = sbr.rel (0) target = $region21
  $region20: #{forward.6} parent=0 // pred_region
    _
  $region21: #{forward.6} parent=0 // pred_fallthru
    _
  // Predicated region
  $region22: #{forward.6} parent=0 // pred_check
    _
  $region23: #{forward.6} parent=0 // pred_check_branch
    %34 = sbr.rel (0) target = $region25
  $region24: #{forward.6} parent=0 // pred_region
    _
  $region25: #{forward.6} parent=0 // pred_fallthru
    _
  // Predicated region
  $region26: #{forward.6} parent=0 // pred_check
    _
  $region27: #{forward.6} parent=0 // pred_check_branch
    %36 = sbr.rel (0) target = $region29
  $region28: #{forward.6} parent=0 // pred_region
    _
  $region29: #{forward.6} parent=0 // pred_fallthru
    _
  // Predicated region
  $region30: #{forward.6} parent=0 // pred_check
    _
  $region31: #{forward.6} parent=0 // pred_check_branch
    %38 = sbr.rel (0) target = $region33
  $region32: #{forward.6} parent=0 // pred_region
    _
  $region33: #{forward.6} parent=0 // pred_fallthru
    _
  // Predicated region
  $region34: #{forward.6} parent=0 // pred_check
    _
  $region35: #{forward.6} parent=0 // pred_check_branch
    %40 = sbr.rel (0) target = $region37
  $region36: #{forward.6} parent=0 // pred_region
    _
  $region37: #{forward.6} parent=0 // pred_fallthru
    _
  // Predicated region
  $region38: #{forward.6} parent=0 // pred_check
    _
  $region39: #{forward.6} parent=0 // pred_check_branch
    %42 = sbr.rel (0) target = $region41
  $region40: #{forward.6} parent=0 // pred_region
    _
  $region41: #{forward.6} parent=0 // pred_fallthru
    _
  // Predicated region
  $region42: #{forward.6} parent=0 // pred_check
    _
  $region43: #{forward.6} parent=0 // pred_check_branch
    %44 = sbr.rel (0) target = $region45
  $region44: #{forward.6} parent=0 // pred_region
    _
  $region45: #{forward.6} parent=0 // pred_fallthru
    _
  // Predicated region
  $region46: #{forward.6} parent=0 // pred_check
    _
  $region47: #{forward.6} parent=0 // pred_check_branch
    %46 = sbr.rel (0) target = $region49
  $region48: #{forward.6} parent=0 // pred_region
    _
  $region49: #{forward.6} parent=0 // pred_fallthru
    _
  // Predicated region
  $region50: #{forward.6} parent=0 // pred_check
    _
  $region51: #{forward.6} parent=0 // pred_check_branch
    %48 = sbr.rel (0) target = $region53
  $region52: #{forward.6} parent=0 // pred_region
    _
  $region53: #{forward.6} parent=0 // pred_fallthru
    _
  // Predicated region
  $region54: #{forward.6} parent=0 // pred_check
    _
  $region55: #{forward.6} parent=0 // pred_check_branch
    %50 = sbr.rel (0) target = $region57
  $region56: #{forward.6} parent=0 // pred_region
    _
  $region57: #{forward.6} parent=0 // pred_fallthru
    _
  // Predicated region
  $region58: #{forward.6} parent=0 // pred_check
    _
  $region59: #{forward.6} parent=0 // pred_check_branch
    %52 = sbr.rel (0) target = $region61
  $region60: #{forward.6} parent=0 // pred_region
    _
  $region61: #{forward.6} parent=0 // pred_fallthru
    _
  // Predicated region
  $region62: #{forward.6} parent=0 // pred_check
    _
  $region63: #{forward.6} parent=0 // pred_check_branch
    %54 = sbr.rel (0) target = $region65
  $region64: #{forward.6} parent=0 // pred_region
    _
  $region65: #{forward.6} parent=0 // pred_fallthru
    _
  // Predicated region
  $region66: #{forward.6} parent=0 // pred_check
    _
  $region67: #{forward.6} parent=0 // pred_check_branch
    %56 = sbr.rel (0) target = $region69
  $region68: #{forward.6} parent=0 // pred_region
    _
  $region69: #{forward.6} parent=0 // pred_fallthru
    _
  // Predicated region
  $region70: #{forward.6} parent=0 // pred_check
    _
  $region71: #{forward.6} parent=0 // pred_check_branch
    %58 = sbr.rel (0) target = $region73
  $region72: #{forward.6} parent=0 // pred_region
    _
  $region73: #{forward.6} parent=0 // pred_fallthru
    _
  %v59 = vld [vmem:[%s0] sm:$0xff]
  %v60 = vld [vmem:[%s0 + $0x8] sm:$0xff]
  %v61 = vld [vmem:[%s0 + $0x10] sm:$0xff]
  %v62 = vld [vmem:[%s0 + $0x18] sm:$0xff]
  %v63 = vld [vmem:[%s3] sm:$0xff]
  %v64 = vld [vmem:[%s3 + $0x8] sm:$0xff]
  %v65 = vld [vmem:[%s3 + $0x10] sm:$0xff]
  %v66 = vld [vmem:[%s3 + $0x18] sm:$0xff]
  %v67 = vld [vmem:[%s3 + $0x20] sm:$0xff]
  %v68 = vld [vmem:[%s3 + $0x28] sm:$0xff]
  %v69 = vld [vmem:[%s3 + $0x30] sm:$0xff]
  %v70 = vld [vmem:[%s3 + $0x38] sm:$0xff]
  %v71 = vld [vmem:[%s4] sm:$0x1]
  %v73 = vlaneseq
  %v74 = vshrl.u32 %v73, 7
  %v75 = vsub.s32 0, %v74
  %v76 = vrot.slane %v71, %v75
  %vm78 = vcmask 523264
  %v80 = vsel %vm78, %v59, 0
  %v83 = vsel %vm78, %v60, 0
  %v86 = vsel %vm78, %v61, 0
  %v89 = vsel %vm78, %v62, 0
  %91 = vmatprep.subr.mxu0 0.0
  %92 = vmatpush1.msra.mxu0 0.0
  %93 = vmatprep.subr.mxu0 0.0
  %94 = vmatpush1.msra.mxu0 0.0
  %95 = vmatprep.subr.mxu0 0.0
  %96 = vmatpush1.msra.mxu0 0.0
  %97 = vmatprep.subr.mxu0 0.0
  %98 = vmatpush1.msra.mxu0 0.0
  %99 = vmatprep.subr.mxu0 0.0
  %100 = vmatpush1.msra.mxu0 0.0
  %101 = vmatprep.subr.mxu0 0.0
  %102 = vmatpush1.msra.mxu0 0.0
  %103 = vmatprep.subr.mxu0 0.0
  %104 = vmatpush1.msra.mxu0 0.0
  %105 = vmatprep.subr.mxu0 0.0
  %106 = vmatpush1.msra.mxu0 0.0
  %107 = vmatprep.subr.mxu0 0.0
  %108 = vmatpush1.msra.mxu0 %v70
  %109 = vmatprep.subr.mxu0 0.0
  %110 = vmatpush1.msra.mxu0 %v69
  %111 = vmatprep.subr.mxu0 0.0
  %112 = vmatpush1.msra.mxu0 %v68
  %113 = vmatprep.subr.mxu0 0.0
  %114 = vmatpush1.msra.mxu0 %v67
  %115 = vmatprep.subr.mxu0 0.0
  %116 = vmatpush1.msra.mxu0 %v66
  %117 = vmatprep.subr.mxu0 0.0
  %118 = vmatpush1.msra.mxu0 %v65
  %119 = vmatprep.subr.mxu0 0.0
  %120 = vmatpush1.msra.mxu0 %v64
  %121 = vmatprep.subr.mxu0 0.0
  %122 = vmatpush1.msra.mxu0 %v63
  %123 = vmatprep.subr.mxu0 0.0
  %124 = vmatpush2.msra.mxu0 0.0
  %125 = vmatprep.subr.mxu0 0.0
  %126 = vmatpush2.msra.mxu0 0.0
  %127 = vmatprep.subr.mxu0 0.0
  %128 = vmatpush2.msra.mxu0 0.0
  %129 = vmatprep.subr.mxu0 0.0
  %130 = vmatpush2.msra.mxu0 0.0
  %131 = vmatprep.subr.mxu0 0.0
  %132 = vmatpush2.msra.mxu0 0.0
  %133 = vmatprep.subr.mxu0 0.0
  %134 = vmatpush2.msra.mxu0 0.0
  %135 = vmatprep.subr.mxu0 0.0
  %136 = vmatpush2.msra.mxu0 0.0
  %137 = vmatprep.subr.mxu0 0.0
  %138 = vmatpush2.msra.mxu0 0.0
  %139 = vmatprep.subr.mxu0 0.0
  %140 = vmatpush2.msra.mxu0 0.0
  %141 = vmatprep.subr.mxu0 0.0
  %142 = vmatpush2.msra.mxu0 0.0
  %143 = vmatprep.subr.mxu0 0.0
  %144 = vmatpush2.msra.mxu0 0.0
  %145 = vmatprep.subr.mxu0 0.0
  %146 = vmatpush2.msra.mxu0 0.0
  %147 = vmatprep.subr.mxu0 0.0
  %148 = vmatpush2.msra.mxu0 0.0
  %149 = vmatprep.subr.mxu0 0.0
  %150 = vmatpush2.msra.mxu0 0.0
  %151 = vmatprep.subr.mxu0 0.0
  %152 = vmatpush2.msra.mxu0 0.0
  %153 = vmatprep.subr.mxu0 0.0
  %154 = vmatpush2.msra.mxu0 0.0
  %155 = vmatprep.mubr.f32.mxu0 0.0
  %156 = vmatmul.mubr.f32.gmra.mxu0 %v80
  %v157 = vpop.f32.mrf.mxu0
  %v158 = vadd.f32 %v76, %v157
  %v159 = vpop.f32.mrf.mxu0
  %160 = vmatprep.mubr.f32.mxu0 0.0
  %161 = vmatmul.mubr.f32.gmra.mxu0 %v83
  %v162 = vpop.f32.mrf.mxu0
  %v163 = vadd.f32 %v76, %v162
  %v164 = vpop.f32.mrf.mxu0
  %165 = vmatprep.mubr.f32.mxu0 0.0
  %166 = vmatmul.mubr.f32.gmra.mxu0 %v86
  %v167 = vpop.f32.mrf.mxu0
  %v168 = vadd.f32 %v76, %v167
  %v169 = vpop.f32.mrf.mxu0
  %170 = vmatprep.mubr.f32.mxu0 0.0
  %171 = vmatmul.mubr.f32.gmra.mxu0 %v89
  %v172 = vpop.f32.mrf.mxu0
  %v173 = vadd.f32 %v76, %v172
  %v174 = vpop.f32.mrf.mxu0
  %175 = vdwg.mxu0
  %v176 = vld [vmem:[%s1] sm:$0xf]
  %v177 = vld [vmem:[%s1 + $0x4] sm:$0xf]
  %v178 = vld [vmem:[%s2] sm:$0x3]
  %v179 = vld [vmem:[%s5] sm:$0xff]
  %v180 = vld [vmem:[%s5 + $0x8] sm:$0xff]
  %v181 = vld [vmem:[%s5 + $0x10] sm:$0xff]
  %v182 = vld [vmem:[%s5 + $0x18] sm:$0xff]
  %v183 = vld [vmem:[%s5 + $0x20] sm:$0xff]
  %v184 = vld [vmem:[%s5 + $0x28] sm:$0xff]
  %v185 = vld [vmem:[%s5 + $0x30] sm:$0xff]
  %v186 = vld [vmem:[%s5 + $0x38] sm:$0xff]
  %v188 = vsel %vm78, %v158, 0
  %v191 = vsel %vm78, %v163, 0
  %v194 = vsel %vm78, %v168, 0
  %v197 = vsel %vm78, %v173, 0
  %199 = vmatprep.subr.mxu0 0.0
  %200 = vmatpush1.msra.mxu0 0.0
  %201 = vmatprep.subr.mxu0 0.0
  %202 = vmatpush1.msra.mxu0 0.0
  %203 = vmatprep.subr.mxu0 0.0
  %204 = vmatpush1.msra.mxu0 0.0
  %205 = vmatprep.subr.mxu0 0.0
  %206 = vmatpush1.msra.mxu0 0.0
  %207 = vmatprep.subr.mxu0 0.0
  %208 = vmatpush1.msra.mxu0 0.0
  %209 = vmatprep.subr.mxu0 0.0
  %210 = vmatpush1.msra.mxu0 0.0
  %211 = vmatprep.subr.mxu0 0.0
  %212 = vmatpush1.msra.mxu0 0.0
  %213 = vmatprep.subr.mxu0 0.0
  %214 = vmatpush1.msra.mxu0 0.0
  %215 = vmatprep.subr.mxu0 0.0
  %216 = vmatpush1.msra.mxu0 %v186
  %217 = vmatprep.subr.mxu0 0.0
  %218 = vmatpush1.msra.mxu0 %v185
  %219 = vmatprep.subr.mxu0 0.0
  %220 = vmatpush1.msra.mxu0 %v184
  %221 = vmatprep.subr.mxu0 0.0
  %222 = vmatpush1.msra.mxu0 %v183
  %223 = vmatprep.subr.mxu0 0.0
  %224 = vmatpush1.msra.mxu0 %v182
  %225 = vmatprep.subr.mxu0 0.0
  %226 = vmatpush1.msra.mxu0 %v181
  %227 = vmatprep.subr.mxu0 0.0
  %228 = vmatpush1.msra.mxu0 %v180
  %229 = vmatprep.subr.mxu0 0.0
  %230 = vmatpush1.msra.mxu0 %v179
  %231 = vmatprep.subr.mxu0 0.0
  %232 = vmatpush2.msra.mxu0 0.0
  %233 = vmatprep.subr.mxu0 0.0
  %234 = vmatpush2.msra.mxu0 0.0
  %235 = vmatprep.subr.mxu0 0.0
  %236 = vmatpush2.msra.mxu0 0.0
  %237 = vmatprep.subr.mxu0 0.0
  %238 = vmatpush2.msra.mxu0 0.0
  %239 = vmatprep.subr.mxu0 0.0
  %240 = vmatpush2.msra.mxu0 0.0
  %241 = vmatprep.subr.mxu0 0.0
  %242 = vmatpush2.msra.mxu0 0.0
  %243 = vmatprep.subr.mxu0 0.0
  %244 = vmatpush2.msra.mxu0 0.0
  %245 = vmatprep.subr.mxu0 0.0
  %246 = vmatpush2.msra.mxu0 0.0
  %247 = vmatprep.subr.mxu0 0.0
  %248 = vmatpush2.msra.mxu0 0.0
  %249 = vmatprep.subr.mxu0 0.0
  %250 = vmatpush2.msra.mxu0 0.0
  %251 = vmatprep.subr.mxu0 0.0
  %252 = vmatpush2.msra.mxu0 0.0
  %253 = vmatprep.subr.mxu0 0.0
  %254 = vmatpush2.msra.mxu0 0.0
  %255 = vmatprep.subr.mxu0 0.0
  %256 = vmatpush2.msra.mxu0 0.0
  %257 = vmatprep.subr.mxu0 0.0
  %258 = vmatpush2.msra.mxu0 0.0
  %259 = vmatprep.subr.mxu0 0.0
  %260 = vmatpush2.msra.mxu0 0.0
  %261 = vmatprep.subr.mxu0 0.0
  %262 = vmatpush2.msra.mxu0 0.0
  %263 = vmatprep.mubr.f32.mxu0 0.0
  %264 = vmatmul.mubr.f32.gmra.mxu0 %v188
  %v265 = vpop.f32.mrf.mxu0
  %v266 = vadd.f32 0.0, %v265
  %v267 = vpop.f32.mrf.mxu0
  %268 = vmatprep.mubr.f32.mxu0 0.0
  %269 = vmatmul.mubr.f32.gmra.mxu0 %v191
  %v270 = vpop.f32.mrf.mxu0
  %v271 = vadd.f32 0.0, %v270
  %v272 = vpop.f32.mrf.mxu0
  %273 = vmatprep.mubr.f32.mxu0 0.0
  %274 = vmatmul.mubr.f32.gmra.mxu0 %v194
  %v275 = vpop.f32.mrf.mxu0
  %v276 = vadd.f32 0.0, %v275
  %v277 = vpop.f32.mrf.mxu0
  %278 = vmatprep.mubr.f32.mxu0 0.0
  %279 = vmatmul.mubr.f32.gmra.mxu0 %v197
  %v280 = vpop.f32.mrf.mxu0
  %v281 = vadd.f32 0.0, %v280
  %v282 = vpop.f32.mrf.mxu0
  %283 = vdwg.mxu0
  %v284 = vld [vmem:[%s6] sm:$0xff]
  %v285 = vld [vmem:[%s6 + $0x8] sm:$0xff]
  %v286 = vld [vmem:[%s6 + $0x10] sm:$0xff]
  %v287 = vld [vmem:[%s6 + $0x18] sm:$0xff]
  %v288 = vld [vmem:[%s6 + $0x20] sm:$0xff]
  %v289 = vld [vmem:[%s6 + $0x28] sm:$0xff]
  %v290 = vld [vmem:[%s6 + $0x30] sm:$0xff]
  %v291 = vld [vmem:[%s6 + $0x38] sm:$0xff]
  %v292 = vld [vmem:[%s7] sm:$0x1]
  %v294 = vlaneseq
  %v295 = vshrl.u32 %v294, 7
  %v296 = vsub.s32 0, %v295
  %v297 = vrot.slane %v292, %v296
  %v300 = vsel %vm78, %v178, 0
  %302 = vmatprep.subr.mxu0 0.0
  %303 = vmatpush1.msra.mxu0 0.0
  %304 = vmatprep.subr.mxu0 0.0
  %305 = vmatpush1.msra.mxu0 0.0
  %306 = vmatprep.subr.mxu0 0.0
  %307 = vmatpush1.msra.mxu0 0.0
  %308 = vmatprep.subr.mxu0 0.0
  %309 = vmatpush1.msra.mxu0 0.0
  %310 = vmatprep.subr.mxu0 0.0
  %311 = vmatpush1.msra.mxu0 0.0
  %312 = vmatprep.subr.mxu0 0.0
  %313 = vmatpush1.msra.mxu0 0.0
  %314 = vmatprep.subr.mxu0 0.0
  %315 = vmatpush1.msra.mxu0 0.0
  %316 = vmatprep.subr.mxu0 0.0
  %317 = vmatpush1.msra.mxu0 0.0
  %318 = vmatprep.subr.mxu0 0.0
  %319 = vmatpush1.msra.mxu0 %v291
  %320 = vmatprep.subr.mxu0 0.0
  %321 = vmatpush1.msra.mxu0 %v290
  %322 = vmatprep.subr.mxu0 0.0
  %323 = vmatpush1.msra.mxu0 %v289
  %324 = vmatprep.subr.mxu0 0.0
  %325 = vmatpush1.msra.mxu0 %v288
  %326 = vmatprep.subr.mxu0 0.0
  %327 = vmatpush1.msra.mxu0 %v287
  %328 = vmatprep.subr.mxu0 0.0
  %329 = vmatpush1.msra.mxu0 %v286
  %330 = vmatprep.subr.mxu0 0.0
  %331 = vmatpush1.msra.mxu0 %v285
  %332 = vmatprep.subr.mxu0 0.0
  %333 = vmatpush1.msra.mxu0 %v284
  %334 = vmatprep.subr.mxu0 0.0
  %335 = vmatpush2.msra.mxu0 0.0
  %336 = vmatprep.subr.mxu0 0.0
  %337 = vmatpush2.msra.mxu0 0.0
  %338 = vmatprep.subr.mxu0 0.0
  %339 = vmatpush2.msra.mxu0 0.0
  %340 = vmatprep.subr.mxu0 0.0
  %341 = vmatpush2.msra.mxu0 0.0
  %342 = vmatprep.subr.mxu0 0.0
  %343 = vmatpush2.msra.mxu0 0.0
  %344 = vmatprep.subr.mxu0 0.0
  %345 = vmatpush2.msra.mxu0 0.0
  %346 = vmatprep.subr.mxu0 0.0
  %347 = vmatpush2.msra.mxu0 0.0
  %348 = vmatprep.subr.mxu0 0.0
  %349 = vmatpush2.msra.mxu0 0.0
  %350 = vmatprep.subr.mxu0 0.0
  %351 = vmatpush2.msra.mxu0 0.0
  %352 = vmatprep.subr.mxu0 0.0
  %353 = vmatpush2.msra.mxu0 0.0
  %354 = vmatprep.subr.mxu0 0.0
  %355 = vmatpush2.msra.mxu0 0.0
  %356 = vmatprep.subr.mxu0 0.0
  %357 = vmatpush2.msra.mxu0 0.0
  %358 = vmatprep.subr.mxu0 0.0
  %359 = vmatpush2.msra.mxu0 0.0
  %360 = vmatprep.subr.mxu0 0.0
  %361 = vmatpush2.msra.mxu0 0.0
  %362 = vmatprep.subr.mxu0 0.0
  %363 = vmatpush2.msra.mxu0 0.0
  %364 = vmatprep.subr.mxu0 0.0
  %365 = vmatpush2.msra.mxu0 0.0
  %366 = vmatprep.mubr.f32.mxu0 0.0
  %367 = vmatmul.mubr.f32.gmra.mxu0 %v300
  %v368 = vpop.f32.mrf.mxu0
  %v369 = vadd.f32 %v297, %v368
  %v370 = vpop.f32.mrf.mxu0
  %371 = vdwg.mxu0
  %v374 = vunpack.c.l.s4 1966171168
  %v375 = vunpack.c.0.s8 %v374
  %v376 = vlaneseq
  %v377 = vshrl.u32 %v376, 7
  %v378 = vsub.s32 %v375, %v377
  %v379 = vrot.slane %v369, %v378
  %v380 = vcombine.high %v379, %v379
  %v382 = vunpack.c.l.s4 1966171168
  %v383 = vunpack.c.0.s8 %v382
  %v384 = vlaneseq
  %v385 = vshrl.u32 %v384, 7
  %v386 = vsub.s32 %v383, %v385
  %v387 = vrot.slane %v379, %v386
  %v389 = vunpack.c.l.s4 1966171168
  %v390 = vunpack.c.0.s8 %v389
  %v391 = vlaneseq
  %v392 = vshrl.u32 %v391, 7
  %v393 = vsub.s32 %v390, %v392
  %v394 = vrot.slane %v380, %v393
  %v395 = vlaneseq
  %v396 = vshrl.u32 %v395, 7
  %v397 = vsub.s32 0, %v396
  %v398 = vrot.slane %v387, %v397
  %v399 = vlaneseq
  %v400 = vshrl.u32 %v399, 7
  %v401 = vsub.s32 0, %v400
  %v402 = vrot.slane %v394, %v401
  %v405 = vadd.f32 %v266, %v398
  %v406 = vadd.f32 %v271, %v398
  %v407 = vadd.f32 %v276, %v402
  %v408 = vadd.f32 %v281, %v402
  %v409 = vtanh.pop %v405
  %v410 = vtanh.pop %v406
  %v411 = vtanh.pop %v407
  %v412 = vtanh.pop %v408
  %v413 = vld [vmem:[%s8] sm:$0x1]
  %v415 = vlaneseq
  %v416 = vshrl.u32 %v415, 7
  %v417 = vsub.s32 0, %v416
  %v418 = vrot.slane %v413, %v417
  %v420 = vmul.f32 %v409, %v418
  %v421 = vmul.f32 %v410, %v418
  %v422 = vmul.f32 %v411, %v418
  %v423 = vmul.f32 %v412, %v418
  %v424 = vsel %vm78, %v420, 0.0
  %425 = vadd.xlane.f32.xlu0 %v424
  %v426 = vpop.xlane.xlu0 %425
  %v427 = vsel %vm78, %v421, 0.0
  %428 = vadd.xlane.f32.xlu0 %v427
  %v429 = vpop.xlane.xlu0 %428
  %v430 = vsel %vm78, %v422, 0.0
  %431 = vadd.xlane.f32.xlu0 %v430
  %v432 = vpop.xlane.xlu0 %431
  %v433 = vsel %vm78, %v423, 0.0
  %434 = vadd.xlane.f32.xlu0 %v433
  %v435 = vpop.xlane.xlu0 %434
  %v436 = vld [vmem:[%s9] sm:$0x1]
  %v438 = vlaneseq
  %v439 = vshrl.u32 %v438, 7
  %v440 = vsub.s32 0, %v439
  %v441 = vrot.slane %v436, %v440
  %442 = vset.pattern.permute.xlu0 0
  %443 = vperm.xlu0 %442, %v441
  %v444 = vpop.permute.xlu0 %443
  %v446 = vadd.f32 %v426, %v444
  %v447 = vadd.f32 %v429, %v444
  %v448 = vadd.f32 %v432, %v444
  %v449 = vadd.f32 %v435, %v444
  %v454 = vlaneseq
  %v455 = vand.u32 %v454, 127
  %v456 = vlaneseq
  %v457 = vshrl.u32 %v456, 7
  %v458 = vsub.s32 %v455, %v457
  %v459 = vrot.slane %v446, %v458
  %v460 = vadd.s32 %v455, 4294967288
  %v461 = vlaneseq
  %v462 = vshrl.u32 %v461, 7
  %v463 = vsub.s32 %v460, %v462
  %v464 = vrot.slane %v447, %v463
  %vm465 = vcmask 130112
  %v466 = vsel %vm465, %v464, %v459
  %v467 = vlaneseq
  %v468 = vshrl.u32 %v467, 7
  %v469 = vsub.s32 %v455, %v468
  %v470 = vrot.slane %v448, %v469
  %v471 = vlaneseq
  %v472 = vshrl.u32 %v471, 7
  %v473 = vsub.s32 %v460, %v472
  %v474 = vrot.slane %v449, %v473
  %v475 = vsel %vm465, %v474, %v470
  %vm476 = vcmask 1041409
  %v477 = vsel %vm476, %v475, %v466
  %vm479 = vcmask 123904
  %v480 = vsel %vm479, %v477, -inf
  %481 = vmax.xlane.f32.xlu0 %v480
  %v482 = vpop.xlane.xlu0 %481
  %v484 = vlaneseq
  %v485 = vshrl.u32 %v484, 7
  %v486 = vsub.s32 0, %v485
  %v487 = vrot.slane %v482, %v486
  %v488 = vlaneseq
  %v489 = vshrl.u32 %v488, 7
  %v490 = vsub.s32 1, %v489
  %v491 = vrot.slane %v482, %v490
  %v494 = vsub.f32 %v446, %v487
  %v495 = vsub.f32 %v447, %v487
  %v496 = vsub.f32 %v448, %v491
  %v497 = vsub.f32 %v449, %v491
  %v498 = vmul.f32 %v494, 1.442695
  %v499 = vpow.pop %v498
  %v500 = vmul.f32 %v495, 1.442695
  %v501 = vpow.pop %v500
  %v502 = vmul.f32 %v496, 1.442695
  %v503 = vpow.pop %v502
  %v504 = vmul.f32 %v497, 1.442695
  %v505 = vpow.pop %v504
  %510 = vset.pattern.permute.xlu0 0
  %511 = vperm.xlu0 %510, %v499
  %v512 = vpop.permute.xlu0 %511
  %513 = vset.pattern.permute.xlu0 0
  %514 = vperm.xlu0 %513, %v501
  %v515 = vpop.permute.xlu0 %514
  %516 = vset.pattern.permute.xlu0 0
  %517 = vperm.xlu0 %516, %v503
  %v518 = vpop.permute.xlu0 %517
  %519 = vset.pattern.permute.xlu0 0
  %520 = vperm.xlu0 %519, %v505
  %v521 = vpop.permute.xlu0 %520
  %v522 = vlaneseq
  %v523 = vshrl.u32 %v522, 7
  %v524 = vsub.s32 %v455, %v523
  %v525 = vrot.slane %v512, %v524
  %v526 = vlaneseq
  %v527 = vshrl.u32 %v526, 7
  %v528 = vsub.s32 %v460, %v527
  %v529 = vrot.slane %v515, %v528
  %v530 = vsel %vm465, %v529, %v525
  %v531 = vlaneseq
  %v532 = vshrl.u32 %v531, 7
  %v533 = vsub.s32 %v455, %v532
  %v534 = vrot.slane %v518, %v533
  %v535 = vlaneseq
  %v536 = vshrl.u32 %v535, 7
  %v537 = vsub.s32 %v460, %v536
  %v538 = vrot.slane %v521, %v537
  %v539 = vsel %vm465, %v538, %v534
  %v540 = vsel %vm476, %v539, %v530
  %v542 = vsel %vm479, %v540, 0.0
  %543 = vadd.xlane.f32.xlu0 %v542
  %v544 = vpop.xlane.xlu0 %543
  %v545 = vrcp.pop %v544
  %v547 = vlaneseq
  %v548 = vshrl.u32 %v547, 7
  %v549 = vsub.s32 0, %v548
  %v550 = vrot.slane %v545, %v549
  %v551 = vlaneseq
  %v552 = vshrl.u32 %v551, 7
  %v553 = vsub.s32 1, %v552
  %v554 = vrot.slane %v545, %v553
  %v557 = vmul.f32 %v499, %v550
  %v558 = vmul.f32 %v501, %v550
  %v559 = vmul.f32 %v503, %v554
  %v560 = vmul.f32 %v505, %v554
  %562 = vset.pattern.permute.xlu0 0
  %563 = vperm.xlu0 %562, %v557
  %v564 = vpop.permute.xlu0 %563
  %567 = vset.pattern.permute.xlu0 0
  %568 = vperm.xlu0 %567, %v558
  %v569 = vpop.permute.xlu0 %568
  %572 = vset.pattern.permute.xlu0 0
  %573 = vperm.xlu0 %572, %v559
  %v574 = vpop.permute.xlu0 %573
  %577 = vset.pattern.permute.xlu0 0
  %578 = vperm.xlu0 %577, %v560
  %v579 = vpop.permute.xlu0 %578
  %v581 = vmul.f32 %v564, %v158
  %v582 = vmul.f32 %v569, %v163
  %v583 = vmul.f32 %v574, %v168
  %v584 = vmul.f32 %v579, %v173
  %v585 = vsel %vm78, %v581, 0.0
  %v586 = vsel %vm78, %v582, 0.0
  %v587 = vadd.f32 %v585, %v586
  %v588 = vrot.slane %v587, 4
  %v589 = vadd.f32 %v587, %v588
  %v590 = vrot.slane %v589, 2
  %v591 = vadd.f32 %v589, %v590
  %v592 = vrot.slane %v591, 1
  %v593 = vadd.f32 %v591, %v592
  %v594 = vsel %vm78, %v583, 0.0
  %v595 = vsel %vm78, %v584, 0.0
  %v596 = vadd.f32 %v594, %v595
  %v597 = vrot.slane %v596, 4
  %v598 = vadd.f32 %v596, %v597
  %v599 = vrot.slane %v598, 2
  %v600 = vadd.f32 %v598, %v599
  %v601 = vrot.slane %v600, 1
  %v602 = vadd.f32 %v600, %v601
  %s603 = scalar_lea.vmem %s5, 64
  %v604 = vld [vmem:[%s603] sm:$0xff]
  %v605 = vld [vmem:[%s603 + $0x8] sm:$0xff]
  %v606 = vld [vmem:[%s603 + $0x10] sm:$0xff]
  %v607 = vld [vmem:[%s603 + $0x18] sm:$0xff]
  %v608 = vld [vmem:[%s603 + $0x20] sm:$0xff]
  %v609 = vld [vmem:[%s603 + $0x28] sm:$0xff]
  %v610 = vld [vmem:[%s603 + $0x30] sm:$0xff]
  %v611 = vld [vmem:[%s603 + $0x38] sm:$0xff]
  %v614 = vcombine.low %v176, %v177
  %v615 = vsel %vm78, %v614, 0
  %617 = vmatprep.subr.mxu0 0.0
  %618 = vmatpush1.msra.mxu0 0.0
  %619 = vmatprep.subr.mxu0 0.0
  %620 = vmatpush1.msra.mxu0 0.0
  %621 = vmatprep.subr.mxu0 0.0
  %622 = vmatpush1.msra.mxu0 0.0
  %623 = vmatprep.subr.mxu0 0.0
  %624 = vmatpush1.msra.mxu0 0.0
  %625 = vmatprep.subr.mxu0 0.0
  %626 = vmatpush1.msra.mxu0 0.0
  %627 = vmatprep.subr.mxu0 0.0
  %628 = vmatpush1.msra.mxu0 0.0
  %629 = vmatprep.subr.mxu0 0.0
  %630 = vmatpush1.msra.mxu0 0.0
  %631 = vmatprep.subr.mxu0 0.0
  %632 = vmatpush1.msra.mxu0 0.0
  %633 = vmatprep.subr.mxu0 0.0
  %634 = vmatpush1.msra.mxu0 %v611
  %635 = vmatprep.subr.mxu0 0.0
  %636 = vmatpush1.msra.mxu0 %v610
  %637 = vmatprep.subr.mxu0 0.0
  %638 = vmatpush1.msra.mxu0 %v609
  %639 = vmatprep.subr.mxu0 0.0
  %640 = vmatpush1.msra.mxu0 %v608
  %641 = vmatprep.subr.mxu0 0.0
  %642 = vmatpush1.msra.mxu0 %v607
  %643 = vmatprep.subr.mxu0 0.0
  %644 = vmatpush1.msra.mxu0 %v606
  %645 = vmatprep.subr.mxu0 0.0
  %646 = vmatpush1.msra.mxu0 %v605
  %647 = vmatprep.subr.mxu0 0.0
  %648 = vmatpush1.msra.mxu0 %v604
  %649 = vmatprep.subr.mxu0 0.0
  %650 = vmatpush2.msra.mxu0 0.0
  %651 = vmatprep.subr.mxu0 0.0
  %652 = vmatpush2.msra.mxu0 0.0
  %653 = vmatprep.subr.mxu0 0.0
  %654 = vmatpush2.msra.mxu0 0.0
  %655 = vmatprep.subr.mxu0 0.0
  %656 = vmatpush2.msra.mxu0 0.0
  %657 = vmatprep.subr.mxu0 0.0
  %658 = vmatpush2.msra.mxu0 0.0
  %659 = vmatprep.subr.mxu0 0.0
  %660 = vmatpush2.msra.mxu0 0.0
  %661 = vmatprep.subr.mxu0 0.0
  %662 = vmatpush2.msra.mxu0 0.0
  %663 = vmatprep.subr.mxu0 0.0
  %664 = vmatpush2.msra.mxu0 0.0
  %665 = vmatprep.subr.mxu0 0.0
  %666 = vmatpush2.msra.mxu0 0.0
  %667 = vmatprep.subr.mxu0 0.0
  %668 = vmatpush2.msra.mxu0 0.0
  %669 = vmatprep.subr.mxu0 0.0
  %670 = vmatpush2.msra.mxu0 0.0
  %671 = vmatprep.subr.mxu0 0.0
  %672 = vmatpush2.msra.mxu0 0.0
  %673 = vmatprep.subr.mxu0 0.0
  %674 = vmatpush2.msra.mxu0 0.0
  %675 = vmatprep.subr.mxu0 0.0
  %676 = vmatpush2.msra.mxu0 0.0
  %677 = vmatprep.subr.mxu0 0.0
  %678 = vmatpush2.msra.mxu0 0.0
  %679 = vmatprep.subr.mxu0 0.0
  %680 = vmatpush2.msra.mxu0 0.0
  %681 = vmatprep.mubr.f32.mxu0 0.0
  %682 = vmatmul.mubr.f32.gmra.mxu0 %v615
  %v683 = vpop.f32.mrf.mxu0
  %v684 = vadd.f32 0.0, %v683
  %v685 = vpop.f32.mrf.mxu0
  %686 = vdwg.mxu0
  %v688 = vcombine.high %v684, %v684
  %s690 = scalar_lea.vmem %s6, 64
  %v691 = vld [vmem:[%s690] sm:$0xff]
  %v692 = vld [vmem:[%s690 + $0x8] sm:$0xff]
  %v693 = vld [vmem:[%s690 + $0x10] sm:$0xff]
  %v694 = vld [vmem:[%s690 + $0x18] sm:$0xff]
  %v695 = vld [vmem:[%s690 + $0x20] sm:$0xff]
  %v696 = vld [vmem:[%s690 + $0x28] sm:$0xff]
  %v697 = vld [vmem:[%s690 + $0x30] sm:$0xff]
  %v698 = vld [vmem:[%s690 + $0x38] sm:$0xff]
  %s699 = scalar_lea.vmem %s7, 1
  %v700 = vld [vmem:[%s699] sm:$0x1]
  %v702 = vlaneseq
  %v703 = vshrl.u32 %v702, 7
  %v704 = vsub.s32 0, %v703
  %v705 = vrot.slane %v700, %v704
  %707 = vmatprep.subr.mxu0 0.0
  %708 = vmatpush1.msra.mxu0 0.0
  %709 = vmatprep.subr.mxu0 0.0
  %710 = vmatpush1.msra.mxu0 0.0
  %711 = vmatprep.subr.mxu0 0.0
  %712 = vmatpush1.msra.mxu0 0.0
  %713 = vmatprep.subr.mxu0 0.0
  %714 = vmatpush1.msra.mxu0 0.0
  %715 = vmatprep.subr.mxu0 0.0
  %716 = vmatpush1.msra.mxu0 0.0
  %717 = vmatprep.subr.mxu0 0.0
  %718 = vmatpush1.msra.mxu0 0.0
  %719 = vmatprep.subr.mxu0 0.0
  %720 = vmatpush1.msra.mxu0 0.0
  %721 = vmatprep.subr.mxu0 0.0
  %722 = vmatpush1.msra.mxu0 0.0
  %723 = vmatprep.subr.mxu0 0.0
  %724 = vmatpush1.msra.mxu0 %v698
  %725 = vmatprep.subr.mxu0 0.0
  %726 = vmatpush1.msra.mxu0 %v697
  %727 = vmatprep.subr.mxu0 0.0
  %728 = vmatpush1.msra.mxu0 %v696
  %729 = vmatprep.subr.mxu0 0.0
  %730 = vmatpush1.msra.mxu0 %v695
  %731 = vmatprep.subr.mxu0 0.0
  %732 = vmatpush1.msra.mxu0 %v694
  %733 = vmatprep.subr.mxu0 0.0
  %734 = vmatpush1.msra.mxu0 %v693
  %735 = vmatprep.subr.mxu0 0.0
  %736 = vmatpush1.msra.mxu0 %v692
  %737 = vmatprep.subr.mxu0 0.0
  %738 = vmatpush1.msra.mxu0 %v691
  %739 = vmatprep.subr.mxu0 0.0
  %740 = vmatpush2.msra.mxu0 0.0
  %741 = vmatprep.subr.mxu0 0.0
  %742 = vmatpush2.msra.mxu0 0.0
  %743 = vmatprep.subr.mxu0 0.0
  %744 = vmatpush2.msra.mxu0 0.0
  %745 = vmatprep.subr.mxu0 0.0
  %746 = vmatpush2.msra.mxu0 0.0
  %747 = vmatprep.subr.mxu0 0.0
  %748 = vmatpush2.msra.mxu0 0.0
  %749 = vmatprep.subr.mxu0 0.0
  %750 = vmatpush2.msra.mxu0 0.0
  %751 = vmatprep.subr.mxu0 0.0
  %752 = vmatpush2.msra.mxu0 0.0
  %753 = vmatprep.subr.mxu0 0.0
  %754 = vmatpush2.msra.mxu0 0.0
  %755 = vmatprep.subr.mxu0 0.0
  %756 = vmatpush2.msra.mxu0 0.0
  %757 = vmatprep.subr.mxu0 0.0
  %758 = vmatpush2.msra.mxu0 0.0
  %759 = vmatprep.subr.mxu0 0.0
  %760 = vmatpush2.msra.mxu0 0.0
  %761 = vmatprep.subr.mxu0 0.0
  %762 = vmatpush2.msra.mxu0 0.0
  %763 = vmatprep.subr.mxu0 0.0
  %764 = vmatpush2.msra.mxu0 0.0
  %765 = vmatprep.subr.mxu0 0.0
  %766 = vmatpush2.msra.mxu0 0.0
  %767 = vmatprep.subr.mxu0 0.0
  %768 = vmatpush2.msra.mxu0 0.0
  %769 = vmatprep.subr.mxu0 0.0
  %770 = vmatpush2.msra.mxu0 0.0
  %771 = vmatprep.mubr.f32.mxu0 0.0
  %772 = vmatmul.mubr.f32.gmra.mxu0 %v300
  %v773 = vpop.f32.mrf.mxu0
  %v774 = vadd.f32 %v705, %v773
  %v775 = vpop.f32.mrf.mxu0
  %776 = vdwg.mxu0
  %v779 = vunpack.c.l.s4 1966171168
  %v780 = vunpack.c.0.s8 %v779
  %v781 = vlaneseq
  %v782 = vshrl.u32 %v781, 7
  %v783 = vsub.s32 %v780, %v782
  %v784 = vrot.slane %v774, %v783
  %v785 = vcombine.high %v784, %v784
  %v787 = vunpack.c.l.s4 1966171168
  %v788 = vunpack.c.0.s8 %v787
  %v789 = vlaneseq
  %v790 = vshrl.u32 %v789, 7
  %v791 = vsub.s32 %v788, %v790
  %v792 = vrot.slane %v784, %v791
  %v794 = vunpack.c.l.s4 1966171168
  %v795 = vunpack.c.0.s8 %v794
  %v796 = vlaneseq
  %v797 = vshrl.u32 %v796, 7
  %v798 = vsub.s32 %v795, %v797
  %v799 = vrot.slane %v785, %v798
  %v800 = vlaneseq
  %v801 = vshrl.u32 %v800, 7
  %v802 = vsub.s32 0, %v801
  %v803 = vrot.slane %v792, %v802
  %v804 = vlaneseq
  %v805 = vshrl.u32 %v804, 7
  %v806 = vsub.s32 0, %v805
  %v807 = vrot.slane %v799, %v806
  %v810 = vadd.f32 %v684, %v803
  %v811 = vadd.f32 %v688, %v807
  %v812 = vtanh.pop %v810
  %v813 = vtanh.pop %v811
  %s814 = scalar_lea.vmem %s8, 1
  %v815 = vld [vmem:[%s814] sm:$0x1]
  %v817 = vlaneseq
  %v818 = vshrl.u32 %v817, 7
  %v819 = vsub.s32 0, %v818
  %v820 = vrot.slane %v815, %v819
  %v822 = vmul.f32 %v812, %v820
  %v823 = vmul.f32 %v813, %v820
  %vm824 = vcmask 519168
  %v825 = vsel %vm824, %v822, 0.0
  %826 = vadd.xlane.f32.xlu0 %v825
  %v827 = vpop.xlane.xlu0 %826
  %v828 = vsel %vm824, %v823, 0.0
  %829 = vadd.xlane.f32.xlu0 %v828
  %v830 = vpop.xlane.xlu0 %829
  %s831 = scalar_lea.vmem %s9, 1
  %v832 = vld [vmem:[%s831] sm:$0x1]
  %v834 = vlaneseq
  %v835 = vshrl.u32 %v834, 7
  %v836 = vsub.s32 0, %v835
  %v837 = vrot.slane %v832, %v836
  %838 = vset.pattern.permute.xlu0 0
  %839 = vperm.xlu0 %838, %v837
  %v840 = vpop.permute.xlu0 %839
  %v842 = vadd.f32 %v827, %v840
  %v843 = vadd.f32 %v830, %v840
  %v846 = vlaneseq
  %v847 = vshrl.u32 %v846, 7
  %v848 = vsub.s32 %v455, %v847
  %v849 = vrot.slane %v842, %v848
  %v850 = vlaneseq
  %v851 = vshrl.u32 %v850, 7
  %v852 = vsub.s32 %v455, %v851
  %v853 = vrot.slane %v843, %v852
  %v854 = vsel %vm476, %v853, %v849
  %vm856 = vcmask 25600
  %v857 = vsel %vm856, %v854, -inf
  %858 = vmax.xlane.f32.xlu0 %v857
  %v859 = vpop.xlane.xlu0 %858
  %v861 = vlaneseq
  %v862 = vshrl.u32 %v861, 7
  %v863 = vsub.s32 0, %v862
  %v864 = vrot.slane %v859, %v863
  %v865 = vlaneseq
  %v866 = vshrl.u32 %v865, 7
  %v867 = vsub.s32 1, %v866
  %v868 = vrot.slane %v859, %v867
  %v871 = vsub.f32 %v842, %v864
  %v872 = vsub.f32 %v843, %v868
  %v873 = vmul.f32 %v871, 1.442695
  %v874 = vpow.pop %v873
  %v875 = vmul.f32 %v872, 1.442695
  %v876 = vpow.pop %v875
  %879 = vset.pattern.permute.xlu0 0
  %880 = vperm.xlu0 %879, %v874
  %v881 = vpop.permute.xlu0 %880
  %882 = vset.pattern.permute.xlu0 0
  %883 = vperm.xlu0 %882, %v876
  %v884 = vpop.permute.xlu0 %883
  %v885 = vlaneseq
  %v886 = vshrl.u32 %v885, 7
  %v887 = vsub.s32 %v455, %v886
  %v888 = vrot.slane %v881, %v887
  %v889 = vlaneseq
  %v890 = vshrl.u32 %v889, 7
  %v891 = vsub.s32 %v455, %v890
  %v892 = vrot.slane %v884, %v891
  %v893 = vsel %vm476, %v892, %v888
  %v895 = vsel %vm856, %v893, 0.0
  %896 = vadd.xlane.f32.xlu0 %v895
  %v897 = vpop.xlane.xlu0 %896
  %v898 = vrcp.pop %v897
  %v900 = vlaneseq
  %v901 = vshrl.u32 %v900, 7
  %v902 = vsub.s32 0, %v901
  %v903 = vrot.slane %v898, %v902
  %v904 = vlaneseq
  %v905 = vshrl.u32 %v904, 7
  %v906 = vsub.s32 1, %v905
  %v907 = vrot.slane %v898, %v906
  %v910 = vmul.f32 %v874, %v903
  %v911 = vmul.f32 %v876, %v907
  %913 = vset.pattern.permute.xlu0 0
  %914 = vperm.xlu0 %913, %v910
  %v915 = vpop.permute.xlu0 %914
  %918 = vset.pattern.permute.xlu0 0
  %919 = vperm.xlu0 %918, %v911
  %v920 = vpop.permute.xlu0 %919
  %v922 = vmul.f32 %v915, %v176
  %v923 = vmul.f32 %v920, %v177
  %v924 = vsel %vm824, %v922, 0.0
  %v925 = vrot.slane %v924, 4
  %v926 = vadd.f32 %v924, %v925
  %v927 = vrot.slane %v926, 2
  %v928 = vadd.f32 %v926, %v927
  %v929 = vrot.slane %v928, 1
  %v930 = vadd.f32 %v928, %v929
  %v931 = vsel %vm824, %v923, 0.0
  %v932 = vrot.slane %v931, 4
  %v933 = vadd.f32 %v931, %v932
  %v934 = vrot.slane %v933, 2
  %v935 = vadd.f32 %v933, %v934
  %v936 = vrot.slane %v935, 1
  %v937 = vadd.f32 %v935, %v936
  %s938 = scalar_lea.vmem %s5, 128
  %v939 = vld [vmem:[%s938] sm:$0xff]
  %v940 = vld [vmem:[%s938 + $0x8] sm:$0xff]
  %v941 = vld [vmem:[%s938 + $0x10] sm:$0xff]
  %v942 = vld [vmem:[%s938 + $0x18] sm:$0xff]
  %v943 = vld [vmem:[%s938 + $0x20] sm:$0xff]
  %v944 = vld [vmem:[%s938 + $0x28] sm:$0xff]
  %v945 = vld [vmem:[%s938 + $0x30] sm:$0xff]
  %v946 = vld [vmem:[%s938 + $0x38] sm:$0xff]
  %947 = vmatprep.subr.mxu0 0.0
  %948 = vmatpush1.msra.mxu0 0.0
  %949 = vmatprep.subr.mxu0 0.0
  %950 = vmatpush1.msra.mxu0 0.0
  %951 = vmatprep.subr.mxu0 0.0
  %952 = vmatpush1.msra.mxu0 0.0
  %953 = vmatprep.subr.mxu0 0.0
  %954 = vmatpush1.msra.mxu0 0.0
  %955 = vmatprep.subr.mxu0 0.0
  %956 = vmatpush1.msra.mxu0 0.0
  %957 = vmatprep.subr.mxu0 0.0
  %958 = vmatpush1.msra.mxu0 0.0
  %959 = vmatprep.subr.mxu0 0.0
  %960 = vmatpush1.msra.mxu0 0.0
  %961 = vmatprep.subr.mxu0 0.0
  %962 = vmatpush1.msra.mxu0 0.0
  %963 = vmatprep.subr.mxu0 0.0
  %964 = vmatpush1.msra.mxu0 %v946
  %965 = vmatprep.subr.mxu0 0.0
  %966 = vmatpush1.msra.mxu0 %v945
  %967 = vmatprep.subr.mxu0 0.0
  %968 = vmatpush1.msra.mxu0 %v944
  %969 = vmatprep.subr.mxu0 0.0
  %970 = vmatpush1.msra.mxu0 %v943
  %971 = vmatprep.subr.mxu0 0.0
  %972 = vmatpush1.msra.mxu0 %v942
  %973 = vmatprep.subr.mxu0 0.0
  %974 = vmatpush1.msra.mxu0 %v941
  %975 = vmatprep.subr.mxu0 0.0
  %976 = vmatpush1.msra.mxu0 %v940
  %977 = vmatprep.subr.mxu0 0.0
  %978 = vmatpush1.msra.mxu0 %v939
  %979 = vmatprep.subr.mxu0 0.0
  %980 = vmatpush2.msra.mxu0 0.0
  %981 = vmatprep.subr.mxu0 0.0
  %982 = vmatpush2.msra.mxu0 0.0
  %983 = vmatprep.subr.mxu0 0.0
  %984 = vmatpush2.msra.mxu0 0.0
  %985 = vmatprep.subr.mxu0 0.0
  %986 = vmatpush2.msra.mxu0 0.0
  %987 = vmatprep.subr.mxu0 0.0
  %988 = vmatpush2.msra.mxu0 0.0
  %989 = vmatprep.subr.mxu0 0.0
  %990 = vmatpush2.msra.mxu0 0.0
  %991 = vmatprep.subr.mxu0 0.0
  %992 = vmatpush2.msra.mxu0 0.0
  %993 = vmatprep.subr.mxu0 0.0
  %994 = vmatpush2.msra.mxu0 0.0
  %995 = vmatprep.subr.mxu0 0.0
  %996 = vmatpush2.msra.mxu0 0.0
  %997 = vmatprep.subr.mxu0 0.0
  %998 = vmatpush2.msra.mxu0 0.0
  %999 = vmatprep.subr.mxu0 0.0
  %1000 = vmatpush2.msra.mxu0 0.0
  %1001 = vmatprep.subr.mxu0 0.0
  %1002 = vmatpush2.msra.mxu0 0.0
  %1003 = vmatprep.subr.mxu0 0.0
  %1004 = vmatpush2.msra.mxu0 0.0
  %1005 = vmatprep.subr.mxu0 0.0
  %1006 = vmatpush2.msra.mxu0 0.0
  %1007 = vmatprep.subr.mxu0 0.0
  %1008 = vmatpush2.msra.mxu0 0.0
  %1009 = vmatprep.subr.mxu0 0.0
  %1010 = vmatpush2.msra.mxu0 0.0
  %1011 = vmatprep.mubr.f32.mxu0 0.0
  %1012 = vmatmul.mubr.f32.gmra.mxu0 %v188
  %v1013 = vpop.f32.mrf.mxu0
  %v1014 = vadd.f32 0.0, %v1013
  %v1015 = vpop.f32.mrf.mxu0
  %1016 = vmatprep.mubr.f32.mxu0 0.0
  %1017 = vmatmul.mubr.f32.gmra.mxu0 %v191
  %v1018 = vpop.f32.mrf.mxu0
  %v1019 = vadd.f32 0.0, %v1018
  %v1020 = vpop.f32.mrf.mxu0
  %1021 = vmatprep.mubr.f32.mxu0 0.0
  %1022 = vmatmul.mubr.f32.gmra.mxu0 %v194
  %v1023 = vpop.f32.mrf.mxu0
  %v1024 = vadd.f32 0.0, %v1023
  %v1025 = vpop.f32.mrf.mxu0
  %1026 = vmatprep.mubr.f32.mxu0 0.0
  %1027 = vmatmul.mubr.f32.gmra.mxu0 %v197
  %v1028 = vpop.f32.mrf.mxu0
  %v1029 = vadd.f32 0.0, %v1028
  %v1030 = vpop.f32.mrf.mxu0
  %1031 = vdwg.mxu0
  %s1032 = scalar_lea.vmem %s6, 128
  %v1033 = vld [vmem:[%s1032] sm:$0xff]
  %v1034 = vld [vmem:[%s1032 + $0x8] sm:$0xff]
  %v1035 = vld [vmem:[%s1032 + $0x10] sm:$0xff]
  %v1036 = vld [vmem:[%s1032 + $0x18] sm:$0xff]
  %v1037 = vld [vmem:[%s1032 + $0x20] sm:$0xff]
  %v1038 = vld [vmem:[%s1032 + $0x28] sm:$0xff]
  %v1039 = vld [vmem:[%s1032 + $0x30] sm:$0xff]
  %v1040 = vld [vmem:[%s1032 + $0x38] sm:$0xff]
  %s1041 = scalar_lea.vmem %s7, 2
  %v1042 = vld [vmem:[%s1041] sm:$0x1]
  %v1044 = vlaneseq
  %v1045 = vshrl.u32 %v1044, 7
  %v1046 = vsub.s32 0, %v1045
  %v1047 = vrot.slane %v1042, %v1046
  %v1051 = vsel %vm476, %v937, %v930
  %v1052 = vsel %vm78, %v1051, 0
  %1054 = vmatprep.subr.mxu0 0.0
  %1055 = vmatpush1.msra.mxu0 0.0
  %1056 = vmatprep.subr.mxu0 0.0
  %1057 = vmatpush1.msra.mxu0 0.0
  %1058 = vmatprep.subr.mxu0 0.0
  %1059 = vmatpush1.msra.mxu0 0.0
  %1060 = vmatprep.subr.mxu0 0.0
  %1061 = vmatpush1.msra.mxu0 0.0
  %1062 = vmatprep.subr.mxu0 0.0
  %1063 = vmatpush1.msra.mxu0 0.0
  %1064 = vmatprep.subr.mxu0 0.0
  %1065 = vmatpush1.msra.mxu0 0.0
  %1066 = vmatprep.subr.mxu0 0.0
  %1067 = vmatpush1.msra.mxu0 0.0
  %1068 = vmatprep.subr.mxu0 0.0
  %1069 = vmatpush1.msra.mxu0 0.0
  %1070 = vmatprep.subr.mxu0 0.0
  %1071 = vmatpush1.msra.mxu0 %v1040
  %1072 = vmatprep.subr.mxu0 0.0
  %1073 = vmatpush1.msra.mxu0 %v1039
  %1074 = vmatprep.subr.mxu0 0.0
  %1075 = vmatpush1.msra.mxu0 %v1038
  %1076 = vmatprep.subr.mxu0 0.0
  %1077 = vmatpush1.msra.mxu0 %v1037
  %1078 = vmatprep.subr.mxu0 0.0
  %1079 = vmatpush1.msra.mxu0 %v1036
  %1080 = vmatprep.subr.mxu0 0.0
  %1081 = vmatpush1.msra.mxu0 %v1035
  %1082 = vmatprep.subr.mxu0 0.0
  %1083 = vmatpush1.msra.mxu0 %v1034
  %1084 = vmatprep.subr.mxu0 0.0
  %1085 = vmatpush1.msra.mxu0 %v1033
  %1086 = vmatprep.subr.mxu0 0.0
  %1087 = vmatpush2.msra.mxu0 0.0
  %1088 = vmatprep.subr.mxu0 0.0
  %1089 = vmatpush2.msra.mxu0 0.0
  %1090 = vmatprep.subr.mxu0 0.0
  %1091 = vmatpush2.msra.mxu0 0.0
  %1092 = vmatprep.subr.mxu0 0.0
  %1093 = vmatpush2.msra.mxu0 0.0
  %1094 = vmatprep.subr.mxu0 0.0
  %1095 = vmatpush2.msra.mxu0 0.0
  %1096 = vmatprep.subr.mxu0 0.0
  %1097 = vmatpush2.msra.mxu0 0.0
  %1098 = vmatprep.subr.mxu0 0.0
  %1099 = vmatpush2.msra.mxu0 0.0
  %1100 = vmatprep.subr.mxu0 0.0
  %1101 = vmatpush2.msra.mxu0 0.0
  %1102 = vmatprep.subr.mxu0 0.0
  %1103 = vmatpush2.msra.mxu0 0.0
  %1104 = vmatprep.subr.mxu0 0.0
  %1105 = vmatpush2.msra.mxu0 0.0
  %1106 = vmatprep.subr.mxu0 0.0
  %1107 = vmatpush2.msra.mxu0 0.0
  %1108 = vmatprep.subr.mxu0 0.0
  %1109 = vmatpush2.msra.mxu0 0.0
  %1110 = vmatprep.subr.mxu0 0.0
  %1111 = vmatpush2.msra.mxu0 0.0
  %1112 = vmatprep.subr.mxu0 0.0
  %1113 = vmatpush2.msra.mxu0 0.0
  %1114 = vmatprep.subr.mxu0 0.0
  %1115 = vmatpush2.msra.mxu0 0.0
  %1116 = vmatprep.subr.mxu0 0.0
  %1117 = vmatpush2.msra.mxu0 0.0
  %1118 = vmatprep.mubr.f32.mxu0 0.0
  %1119 = vmatmul.mubr.f32.gmra.mxu0 %v1052
  %v1120 = vpop.f32.mrf.mxu0
  %v1121 = vadd.f32 %v1047, %v1120
  %v1122 = vpop.f32.mrf.mxu0
  %1123 = vdwg.mxu0
  %v1126 = vunpack.c.l.s4 1966171168
  %v1127 = vunpack.c.0.s8 %v1126
  %v1128 = vlaneseq
  %v1129 = vshrl.u32 %v1128, 7
  %v1130 = vsub.s32 %v1127, %v1129
  %v1131 = vrot.slane %v1121, %v1130
  %v1132 = vcombine.high %v1131, %v1131
  %v1134 = vunpack.c.l.s4 1966171168
  %v1135 = vunpack.c.0.s8 %v1134
  %v1136 = vlaneseq
  %v1137 = vshrl.u32 %v1136, 7
  %v1138 = vsub.s32 %v1135, %v1137
  %v1139 = vrot.slane %v1131, %v1138
  %v1141 = vunpack.c.l.s4 1966171168
  %v1142 = vunpack.c.0.s8 %v1141
  %v1143 = vlaneseq
  %v1144 = vshrl.u32 %v1143, 7
  %v1145 = vsub.s32 %v1142, %v1144
  %v1146 = vrot.slane %v1132, %v1145
  %v1147 = vlaneseq
  %v1148 = vshrl.u32 %v1147, 7
  %v1149 = vsub.s32 0, %v1148
  %v1150 = vrot.slane %v1139, %v1149
  %v1151 = vlaneseq
  %v1152 = vshrl.u32 %v1151, 7
  %v1153 = vsub.s32 0, %v1152
  %v1154 = vrot.slane %v1146, %v1153
  %v1157 = vadd.f32 %v1014, %v1150
  %v1158 = vadd.f32 %v1019, %v1150
  %v1159 = vadd.f32 %v1024, %v1154
  %v1160 = vadd.f32 %v1029, %v1154
  %v1161 = vtanh.pop %v1157
  %v1162 = vtanh.pop %v1158
  %v1163 = vtanh.pop %v1159
  %v1164 = vtanh.pop %v1160
  %s1165 = scalar_lea.vmem %s8, 2
  %v1166 = vld [vmem:[%s1165] sm:$0x1]
  %v1168 = vlaneseq
  %v1169 = vshrl.u32 %v1168, 7
  %v1170 = vsub.s32 0, %v1169
  %v1171 = vrot.slane %v1166, %v1170
  %v1173 = vmul.f32 %v1161, %v1171
  %v1174 = vmul.f32 %v1162, %v1171
  %v1175 = vmul.f32 %v1163, %v1171
  %v1176 = vmul.f32 %v1164, %v1171
  %v1177 = vsel %vm78, %v1173, 0.0
  %1178 = vadd.xlane.f32.xlu0 %v1177
  %v1179 = vpop.xlane.xlu0 %1178
  %v1180 = vsel %vm78, %v1174, 0.0
  %1181 = vadd.xlane.f32.xlu0 %v1180
  %v1182 = vpop.xlane.xlu0 %1181
  %v1183 = vsel %vm78, %v1175, 0.0
  %1184 = vadd.xlane.f32.xlu0 %v1183
  %v1185 = vpop.xlane.xlu0 %1184
  %v1186 = vsel %vm78, %v1176, 0.0
  %1187 = vadd.xlane.f32.xlu0 %v1186
  %v1188 = vpop.xlane.xlu0 %1187
  %s1189 = scalar_lea.vmem %s9, 2
  %v1190 = vld [vmem:[%s1189] sm:$0x1]
  %v1192 = vlaneseq
  %v1193 = vshrl.u32 %v1192, 7
  %v1194 = vsub.s32 0, %v1193
  %v1195 = vrot.slane %v1190, %v1194
  %1196 = vset.pattern.permute.xlu0 0
  %1197 = vperm.xlu0 %1196, %v1195
  %v1198 = vpop.permute.xlu0 %1197
  %v1200 = vadd.f32 %v1179, %v1198
  %v1201 = vadd.f32 %v1182, %v1198
  %v1202 = vadd.f32 %v1185, %v1198
  %v1203 = vadd.f32 %v1188, %v1198
  %v1208 = vlaneseq
  %v1209 = vshrl.u32 %v1208, 7
  %v1210 = vsub.s32 %v455, %v1209
  %v1211 = vrot.slane %v1200, %v1210
  %v1212 = vlaneseq
  %v1213 = vshrl.u32 %v1212, 7
  %v1214 = vsub.s32 %v460, %v1213
  %v1215 = vrot.slane %v1201, %v1214
  %v1216 = vsel %vm465, %v1215, %v1211
  %v1217 = vlaneseq
  %v1218 = vshrl.u32 %v1217, 7
  %v1219 = vsub.s32 %v455, %v1218
  %v1220 = vrot.slane %v1202, %v1219
  %v1221 = vlaneseq
  %v1222 = vshrl.u32 %v1221, 7
  %v1223 = vsub.s32 %v460, %v1222
  %v1224 = vrot.slane %v1203, %v1223
  %v1225 = vsel %vm465, %v1224, %v1220
  %v1226 = vsel %vm476, %v1225, %v1216
  %v1228 = vsel %vm479, %v1226, -inf
  %1229 = vmax.xlane.f32.xlu0 %v1228
  %v1230 = vpop.xlane.xlu0 %1229
  %v1232 = vlaneseq
  %v1233 = vshrl.u32 %v1232, 7
  %v1234 = vsub.s32 0, %v1233
  %v1235 = vrot.slane %v1230, %v1234
  %v1236 = vlaneseq
  %v1237 = vshrl.u32 %v1236, 7
  %v1238 = vsub.s32 1, %v1237
  %v1239 = vrot.slane %v1230, %v1238
  %v1242 = vsub.f32 %v1200, %v1235
  %v1243 = vsub.f32 %v1201, %v1235
  %v1244 = vsub.f32 %v1202, %v1239
  %v1245 = vsub.f32 %v1203, %v1239
  %v1246 = vmul.f32 %v1242, 1.442695
  %v1247 = vpow.pop %v1246
  %v1248 = vmul.f32 %v1243, 1.442695
  %v1249 = vpow.pop %v1248
  %v1250 = vmul.f32 %v1244, 1.442695
  %v1251 = vpow.pop %v1250
  %v1252 = vmul.f32 %v1245, 1.442695
  %v1253 = vpow.pop %v1252
  %1258 = vset.pattern.permute.xlu0 0
  %1259 = vperm.xlu0 %1258, %v1247
  %v1260 = vpop.permute.xlu0 %1259
  %1261 = vset.pattern.permute.xlu0 0
  %1262 = vperm.xlu0 %1261, %v1249
  %v1263 = vpop.permute.xlu0 %1262
  %1264 = vset.pattern.permute.xlu0 0
  %1265 = vperm.xlu0 %1264, %v1251
  %v1266 = vpop.permute.xlu0 %1265
  %1267 = vset.pattern.permute.xlu0 0
  %1268 = vperm.xlu0 %1267, %v1253
  %v1269 = vpop.permute.xlu0 %1268
  %v1270 = vlaneseq
  %v1271 = vshrl.u32 %v1270, 7
  %v1272 = vsub.s32 %v455, %v1271
  %v1273 = vrot.slane %v1260, %v1272
  %v1274 = vlaneseq
  %v1275 = vshrl.u32 %v1274, 7
  %v1276 = vsub.s32 %v460, %v1275
  %v1277 = vrot.slane %v1263, %v1276
  %v1278 = vsel %vm465, %v1277, %v1273
  %v1279 = vlaneseq
  %v1280 = vshrl.u32 %v1279, 7
  %v1281 = vsub.s32 %v455, %v1280
  %v1282 = vrot.slane %v1266, %v1281
  %v1283 = vlaneseq
  %v1284 = vshrl.u32 %v1283, 7
  %v1285 = vsub.s32 %v460, %v1284
  %v1286 = vrot.slane %v1269, %v1285
  %v1287 = vsel %vm465, %v1286, %v1282
  %v1288 = vsel %vm476, %v1287, %v1278
  %v1290 = vsel %vm479, %v1288, 0.0
  %1291 = vadd.xlane.f32.xlu0 %v1290
  %v1292 = vpop.xlane.xlu0 %1291
  %v1293 = vrcp.pop %v1292
  %v1295 = vlaneseq
  %v1296 = vshrl.u32 %v1295, 7
  %v1297 = vsub.s32 0, %v1296
  %v1298 = vrot.slane %v1293, %v1297
  %v1299 = vlaneseq
  %v1300 = vshrl.u32 %v1299, 7
  %v1301 = vsub.s32 1, %v1300
  %v1302 = vrot.slane %v1293, %v1301
  %v1305 = vmul.f32 %v1247, %v1298
  %v1306 = vmul.f32 %v1249, %v1298
  %v1307 = vmul.f32 %v1251, %v1302
  %v1308 = vmul.f32 %v1253, %v1302
  %1310 = vset.pattern.permute.xlu0 0
  %1311 = vperm.xlu0 %1310, %v1305
  %v1312 = vpop.permute.xlu0 %1311
  %1315 = vset.pattern.permute.xlu0 0
  %1316 = vperm.xlu0 %1315, %v1306
  %v1317 = vpop.permute.xlu0 %1316
  %1320 = vset.pattern.permute.xlu0 0
  %1321 = vperm.xlu0 %1320, %v1307
  %v1322 = vpop.permute.xlu0 %1321
  %1325 = vset.pattern.permute.xlu0 0
  %1326 = vperm.xlu0 %1325, %v1308
  %v1327 = vpop.permute.xlu0 %1326
  %v1329 = vmul.f32 %v1312, %v158
  %v1330 = vmul.f32 %v1317, %v163
  %v1331 = vmul.f32 %v1322, %v168
  %v1332 = vmul.f32 %v1327, %v173
  %v1333 = vsel %vm78, %v1329, 0.0
  %v1334 = vsel %vm78, %v1330, 0.0
  %v1335 = vadd.f32 %v1333, %v1334
  %v1336 = vrot.slane %v1335, 4
  %v1337 = vadd.f32 %v1335, %v1336
  %v1338 = vrot.slane %v1337, 2
  %v1339 = vadd.f32 %v1337, %v1338
  %v1340 = vrot.slane %v1339, 1
  %v1341 = vadd.f32 %v1339, %v1340
  %v1342 = vsel %vm78, %v1331, 0.0
  %v1343 = vsel %vm78, %v1332, 0.0
  %v1344 = vadd.f32 %v1342, %v1343
  %v1345 = vrot.slane %v1344, 4
  %v1346 = vadd.f32 %v1344, %v1345
  %v1347 = vrot.slane %v1346, 2
  %v1348 = vadd.f32 %v1346, %v1347
  %v1349 = vrot.slane %v1348, 1
  %v1350 = vadd.f32 %v1348, %v1349
  %s1351 = scalar_lea.vmem %s5, 192
  %v1352 = vld [vmem:[%s1351] sm:$0xff]
  %v1353 = vld [vmem:[%s1351 + $0x8] sm:$0xff]
  %v1354 = vld [vmem:[%s1351 + $0x10] sm:$0xff]
  %v1355 = vld [vmem:[%s1351 + $0x18] sm:$0xff]
  %v1356 = vld [vmem:[%s1351 + $0x20] sm:$0xff]
  %v1357 = vld [vmem:[%s1351 + $0x28] sm:$0xff]
  %v1358 = vld [vmem:[%s1351 + $0x30] sm:$0xff]
  %v1359 = vld [vmem:[%s1351 + $0x38] sm:$0xff]
  %1360 = vmatprep.subr.mxu0 0.0
  %1361 = vmatpush1.msra.mxu0 0.0
  %1362 = vmatprep.subr.mxu0 0.0
  %1363 = vmatpush1.msra.mxu0 0.0
  %1364 = vmatprep.subr.mxu0 0.0
  %1365 = vmatpush1.msra.mxu0 0.0
  %1366 = vmatprep.subr.mxu0 0.0
  %1367 = vmatpush1.msra.mxu0 0.0
  %1368 = vmatprep.subr.mxu0 0.0
  %1369 = vmatpush1.msra.mxu0 0.0
  %1370 = vmatprep.subr.mxu0 0.0
  %1371 = vmatpush1.msra.mxu0 0.0
  %1372 = vmatprep.subr.mxu0 0.0
  %1373 = vmatpush1.msra.mxu0 0.0
  %1374 = vmatprep.subr.mxu0 0.0
  %1375 = vmatpush1.msra.mxu0 0.0
  %1376 = vmatprep.subr.mxu0 0.0
  %1377 = vmatpush1.msra.mxu0 %v1359
  %1378 = vmatprep.subr.mxu0 0.0
  %1379 = vmatpush1.msra.mxu0 %v1358
  %1380 = vmatprep.subr.mxu0 0.0
  %1381 = vmatpush1.msra.mxu0 %v1357
  %1382 = vmatprep.subr.mxu0 0.0
  %1383 = vmatpush1.msra.mxu0 %v1356
  %1384 = vmatprep.subr.mxu0 0.0
  %1385 = vmatpush1.msra.mxu0 %v1355
  %1386 = vmatprep.subr.mxu0 0.0
  %1387 = vmatpush1.msra.mxu0 %v1354
  %1388 = vmatprep.subr.mxu0 0.0
  %1389 = vmatpush1.msra.mxu0 %v1353
  %1390 = vmatprep.subr.mxu0 0.0
  %1391 = vmatpush1.msra.mxu0 %v1352
  %1392 = vmatprep.subr.mxu0 0.0
  %1393 = vmatpush2.msra.mxu0 0.0
  %1394 = vmatprep.subr.mxu0 0.0
  %1395 = vmatpush2.msra.mxu0 0.0
  %1396 = vmatprep.subr.mxu0 0.0
  %1397 = vmatpush2.msra.mxu0 0.0
  %1398 = vmatprep.subr.mxu0 0.0
  %1399 = vmatpush2.msra.mxu0 0.0
  %1400 = vmatprep.subr.mxu0 0.0
  %1401 = vmatpush2.msra.mxu0 0.0
  %1402 = vmatprep.subr.mxu0 0.0
  %1403 = vmatpush2.msra.mxu0 0.0
  %1404 = vmatprep.subr.mxu0 0.0
  %1405 = vmatpush2.msra.mxu0 0.0
  %1406 = vmatprep.subr.mxu0 0.0
  %1407 = vmatpush2.msra.mxu0 0.0
  %1408 = vmatprep.subr.mxu0 0.0
  %1409 = vmatpush2.msra.mxu0 0.0
  %1410 = vmatprep.subr.mxu0 0.0
  %1411 = vmatpush2.msra.mxu0 0.0
  %1412 = vmatprep.subr.mxu0 0.0
  %1413 = vmatpush2.msra.mxu0 0.0
  %1414 = vmatprep.subr.mxu0 0.0
  %1415 = vmatpush2.msra.mxu0 0.0
  %1416 = vmatprep.subr.mxu0 0.0
  %1417 = vmatpush2.msra.mxu0 0.0
  %1418 = vmatprep.subr.mxu0 0.0
  %1419 = vmatpush2.msra.mxu0 0.0
  %1420 = vmatprep.subr.mxu0 0.0
  %1421 = vmatpush2.msra.mxu0 0.0
  %1422 = vmatprep.subr.mxu0 0.0
  %1423 = vmatpush2.msra.mxu0 0.0
  %1424 = vmatprep.mubr.f32.mxu0 0.0
  %1425 = vmatmul.mubr.f32.gmra.mxu0 %v615
  %v1426 = vpop.f32.mrf.mxu0
  %v1427 = vadd.f32 0.0, %v1426
  %v1428 = vpop.f32.mrf.mxu0
  %1429 = vdwg.mxu0
  %v1431 = vcombine.high %v1427, %v1427
  %s1433 = scalar_lea.vmem %s6, 192
  %v1434 = vld [vmem:[%s1433] sm:$0xff]
  %v1435 = vld [vmem:[%s1433 + $0x8] sm:$0xff]
  %v1436 = vld [vmem:[%s1433 + $0x10] sm:$0xff]
  %v1437 = vld [vmem:[%s1433 + $0x18] sm:$0xff]
  %v1438 = vld [vmem:[%s1433 + $0x20] sm:$0xff]
  %v1439 = vld [vmem:[%s1433 + $0x28] sm:$0xff]
  %v1440 = vld [vmem:[%s1433 + $0x30] sm:$0xff]
  %v1441 = vld [vmem:[%s1433 + $0x38] sm:$0xff]
  %s1442 = scalar_lea.vmem %s7, 3
  %v1443 = vld [vmem:[%s1442] sm:$0x1]
  %v1445 = vlaneseq
  %v1446 = vshrl.u32 %v1445, 7
  %v1447 = vsub.s32 0, %v1446
  %v1448 = vrot.slane %v1443, %v1447
  %v1452 = vsel %vm476, %v602, %v593
  %v1453 = vsel %vm78, %v1452, 0
  %1455 = vmatprep.subr.mxu0 0.0
  %1456 = vmatpush1.msra.mxu0 0.0
  %1457 = vmatprep.subr.mxu0 0.0
  %1458 = vmatpush1.msra.mxu0 0.0
  %1459 = vmatprep.subr.mxu0 0.0
  %1460 = vmatpush1.msra.mxu0 0.0
  %1461 = vmatprep.subr.mxu0 0.0
  %1462 = vmatpush1.msra.mxu0 0.0
  %1463 = vmatprep.subr.mxu0 0.0
  %1464 = vmatpush1.msra.mxu0 0.0
  %1465 = vmatprep.subr.mxu0 0.0
  %1466 = vmatpush1.msra.mxu0 0.0
  %1467 = vmatprep.subr.mxu0 0.0
  %1468 = vmatpush1.msra.mxu0 0.0
  %1469 = vmatprep.subr.mxu0 0.0
  %1470 = vmatpush1.msra.mxu0 0.0
  %1471 = vmatprep.subr.mxu0 0.0
  %1472 = vmatpush1.msra.mxu0 %v1441
  %1473 = vmatprep.subr.mxu0 0.0
  %1474 = vmatpush1.msra.mxu0 %v1440
  %1475 = vmatprep.subr.mxu0 0.0
  %1476 = vmatpush1.msra.mxu0 %v1439
  %1477 = vmatprep.subr.mxu0 0.0
  %1478 = vmatpush1.msra.mxu0 %v1438
  %1479 = vmatprep.subr.mxu0 0.0
  %1480 = vmatpush1.msra.mxu0 %v1437
  %1481 = vmatprep.subr.mxu0 0.0
  %1482 = vmatpush1.msra.mxu0 %v1436
  %1483 = vmatprep.subr.mxu0 0.0
  %1484 = vmatpush1.msra.mxu0 %v1435
  %1485 = vmatprep.subr.mxu0 0.0
  %1486 = vmatpush1.msra.mxu0 %v1434
  %1487 = vmatprep.subr.mxu0 0.0
  %1488 = vmatpush2.msra.mxu0 0.0
  %1489 = vmatprep.subr.mxu0 0.0
  %1490 = vmatpush2.msra.mxu0 0.0
  %1491 = vmatprep.subr.mxu0 0.0
  %1492 = vmatpush2.msra.mxu0 0.0
  %1493 = vmatprep.subr.mxu0 0.0
  %1494 = vmatpush2.msra.mxu0 0.0
  %1495 = vmatprep.subr.mxu0 0.0
  %1496 = vmatpush2.msra.mxu0 0.0
  %1497 = vmatprep.subr.mxu0 0.0
  %1498 = vmatpush2.msra.mxu0 0.0
  %1499 = vmatprep.subr.mxu0 0.0
  %1500 = vmatpush2.msra.mxu0 0.0
  %1501 = vmatprep.subr.mxu0 0.0
  %1502 = vmatpush2.msra.mxu0 0.0
  %1503 = vmatprep.subr.mxu0 0.0
  %1504 = vmatpush2.msra.mxu0 0.0
  %1505 = vmatprep.subr.mxu0 0.0
  %1506 = vmatpush2.msra.mxu0 0.0
  %1507 = vmatprep.subr.mxu0 0.0
  %1508 = vmatpush2.msra.mxu0 0.0
  %1509 = vmatprep.subr.mxu0 0.0
  %1510 = vmatpush2.msra.mxu0 0.0
  %1511 = vmatprep.subr.mxu0 0.0
  %1512 = vmatpush2.msra.mxu0 0.0
  %1513 = vmatprep.subr.mxu0 0.0
  %1514 = vmatpush2.msra.mxu0 0.0
  %1515 = vmatprep.subr.mxu0 0.0
  %1516 = vmatpush2.msra.mxu0 0.0
  %1517 = vmatprep.subr.mxu0 0.0
  %1518 = vmatpush2.msra.mxu0 0.0
  %1519 = vmatprep.mubr.f32.mxu0 0.0
  %1520 = vmatmul.mubr.f32.gmra.mxu0 %v1453
  %v1521 = vpop.f32.mrf.mxu0
  %v1522 = vadd.f32 %v1448, %v1521
  %v1523 = vpop.f32.mrf.mxu0
  %1524 = vdwg.mxu0
  %v1527 = vunpack.c.l.s4 1966171168
  %v1528 = vunpack.c.0.s8 %v1527
  %v1529 = vlaneseq
  %v1530 = vshrl.u32 %v1529, 7
  %v1531 = vsub.s32 %v1528, %v1530
  %v1532 = vrot.slane %v1522, %v1531
  %v1533 = vcombine.high %v1532, %v1532
  %v1535 = vunpack.c.l.s4 1966171168
  %v1536 = vunpack.c.0.s8 %v1535
  %v1537 = vlaneseq
  %v1538 = vshrl.u32 %v1537, 7
  %v1539 = vsub.s32 %v1536, %v1538
  %v1540 = vrot.slane %v1532, %v1539
  %v1542 = vunpack.c.l.s4 1966171168
  %v1543 = vunpack.c.0.s8 %v1542
  %v1544 = vlaneseq
  %v1545 = vshrl.u32 %v1544, 7
  %v1546 = vsub.s32 %v1543, %v1545
  %v1547 = vrot.slane %v1533, %v1546
  %v1548 = vlaneseq
  %v1549 = vshrl.u32 %v1548, 7
  %v1550 = vsub.s32 0, %v1549
  %v1551 = vrot.slane %v1540, %v1550
  %v1552 = vlaneseq
  %v1553 = vshrl.u32 %v1552, 7
  %v1554 = vsub.s32 0, %v1553
  %v1555 = vrot.slane %v1547, %v1554
  %v1558 = vadd.f32 %v1427, %v1551
  %v1559 = vadd.f32 %v1431, %v1555
  %v1560 = vtanh.pop %v1558
  %v1561 = vtanh.pop %v1559
  %s1562 = scalar_lea.vmem %s8, 3
  %v1563 = vld [vmem:[%s1562] sm:$0x1]
  %v1565 = vlaneseq
  %v1566 = vshrl.u32 %v1565, 7
  %v1567 = vsub.s32 0, %v1566
  %v1568 = vrot.slane %v1563, %v1567
  %v1570 = vmul.f32 %v1560, %v1568
  %v1571 = vmul.f32 %v1561, %v1568
  %v1572 = vsel %vm824, %v1570, 0.0
  %1573 = vadd.xlane.f32.xlu0 %v1572
  %v1574 = vpop.xlane.xlu0 %1573
  %v1575 = vsel %vm824, %v1571, 0.0
  %1576 = vadd.xlane.f32.xlu0 %v1575
  %v1577 = vpop.xlane.xlu0 %1576
  %s1578 = scalar_lea.vmem %s9, 3
  %v1579 = vld [vmem:[%s1578] sm:$0x1]
  %v1581 = vlaneseq
  %v1582 = vshrl.u32 %v1581, 7
  %v1583 = vsub.s32 0, %v1582
  %v1584 = vrot.slane %v1579, %v1583
  %1585 = vset.pattern.permute.xlu0 0
  %1586 = vperm.xlu0 %1585, %v1584
  %v1587 = vpop.permute.xlu0 %1586
  %v1589 = vadd.f32 %v1574, %v1587
  %v1590 = vadd.f32 %v1577, %v1587
  %v1593 = vlaneseq
  %v1594 = vshrl.u32 %v1593, 7
  %v1595 = vsub.s32 %v455, %v1594
  %v1596 = vrot.slane %v1589, %v1595
  %v1597 = vlaneseq
  %v1598 = vshrl.u32 %v1597, 7
  %v1599 = vsub.s32 %v455, %v1598
  %v1600 = vrot.slane %v1590, %v1599
  %v1601 = vsel %vm476, %v1600, %v1596
  %v1603 = vsel %vm856, %v1601, -inf
  %1604 = vmax.xlane.f32.xlu0 %v1603
  %v1605 = vpop.xlane.xlu0 %1604
  %v1607 = vlaneseq
  %v1608 = vshrl.u32 %v1607, 7
  %v1609 = vsub.s32 0, %v1608
  %v1610 = vrot.slane %v1605, %v1609
  %v1611 = vlaneseq
  %v1612 = vshrl.u32 %v1611, 7
  %v1613 = vsub.s32 1, %v1612
  %v1614 = vrot.slane %v1605, %v1613
  %v1617 = vsub.f32 %v1589, %v1610
  %v1618 = vsub.f32 %v1590, %v1614
  %v1619 = vmul.f32 %v1617, 1.442695
  %v1620 = vpow.pop %v1619
  %v1621 = vmul.f32 %v1618, 1.442695
  %v1622 = vpow.pop %v1621
  %1625 = vset.pattern.permute.xlu0 0
  %1626 = vperm.xlu0 %1625, %v1620
  %v1627 = vpop.permute.xlu0 %1626
  %1628 = vset.pattern.permute.xlu0 0
  %1629 = vperm.xlu0 %1628, %v1622
  %v1630 = vpop.permute.xlu0 %1629
  %v1631 = vlaneseq
  %v1632 = vshrl.u32 %v1631, 7
  %v1633 = vsub.s32 %v455, %v1632
  %v1634 = vrot.slane %v1627, %v1633
  %v1635 = vlaneseq
  %v1636 = vshrl.u32 %v1635, 7
  %v1637 = vsub.s32 %v455, %v1636
  %v1638 = vrot.slane %v1630, %v1637
  %v1639 = vsel %vm476, %v1638, %v1634
  %v1641 = vsel %vm856, %v1639, 0.0
  %1642 = vadd.xlane.f32.xlu0 %v1641
  %v1643 = vpop.xlane.xlu0 %1642
  %v1644 = vrcp.pop %v1643
  %v1646 = vlaneseq
  %v1647 = vshrl.u32 %v1646, 7
  %v1648 = vsub.s32 0, %v1647
  %v1649 = vrot.slane %v1644, %v1648
  %v1650 = vlaneseq
  %v1651 = vshrl.u32 %v1650, 7
  %v1652 = vsub.s32 1, %v1651
  %v1653 = vrot.slane %v1644, %v1652
  %v1656 = vmul.f32 %v1620, %v1649
  %v1657 = vmul.f32 %v1622, %v1653
  %1659 = vset.pattern.permute.xlu0 0
  %1660 = vperm.xlu0 %1659, %v1656
  %v1661 = vpop.permute.xlu0 %1660
  %1664 = vset.pattern.permute.xlu0 0
  %1665 = vperm.xlu0 %1664, %v1657
  %v1666 = vpop.permute.xlu0 %1665
  %v1668 = vmul.f32 %v1661, %v176
  %v1669 = vmul.f32 %v1666, %v177
  %v1670 = vsel %vm824, %v1668, 0.0
  %v1671 = vrot.slane %v1670, 4
  %v1672 = vadd.f32 %v1670, %v1671
  %v1673 = vrot.slane %v1672, 2
  %v1674 = vadd.f32 %v1672, %v1673
  %v1675 = vrot.slane %v1674, 1
  %v1676 = vadd.f32 %v1674, %v1675
  %v1677 = vsel %vm824, %v1669, 0.0
  %v1678 = vrot.slane %v1677, 4
  %v1679 = vadd.f32 %v1677, %v1678
  %v1680 = vrot.slane %v1679, 2
  %v1681 = vadd.f32 %v1679, %v1680
  %v1682 = vrot.slane %v1681, 1
  %v1683 = vadd.f32 %v1681, %v1682
  %v1684 = vld [vmem:[%s10] sm:$0xff]
  %v1685 = vld [vmem:[%s10 + $0x8] sm:$0xff]
  %v1686 = vld [vmem:[%s10 + $0x10] sm:$0xff]
  %v1687 = vld [vmem:[%s10 + $0x18] sm:$0xff]
  %v1688 = vld [vmem:[%s10 + $0x20] sm:$0xff]
  %v1689 = vld [vmem:[%s10 + $0x28] sm:$0xff]
  %v1690 = vld [vmem:[%s10 + $0x30] sm:$0xff]
  %v1691 = vld [vmem:[%s10 + $0x38] sm:$0xff]
  %v1692 = vld [vmem:[%s11] sm:$0x1]
  %v1694 = vlaneseq
  %v1695 = vshrl.u32 %v1694, 7
  %v1696 = vsub.s32 0, %v1695
  %v1697 = vrot.slane %v1692, %v1696
  %1699 = vmatprep.subr.mxu0 0.0
  %1700 = vmatpush1.msra.mxu0 0.0
  %1701 = vmatprep.subr.mxu0 0.0
  %1702 = vmatpush1.msra.mxu0 0.0
  %1703 = vmatprep.subr.mxu0 0.0
  %1704 = vmatpush1.msra.mxu0 0.0
  %1705 = vmatprep.subr.mxu0 0.0
  %1706 = vmatpush1.msra.mxu0 0.0
  %1707 = vmatprep.subr.mxu0 0.0
  %1708 = vmatpush1.msra.mxu0 0.0
  %1709 = vmatprep.subr.mxu0 0.0
  %1710 = vmatpush1.msra.mxu0 0.0
  %1711 = vmatprep.subr.mxu0 0.0
  %1712 = vmatpush1.msra.mxu0 0.0
  %1713 = vmatprep.subr.mxu0 0.0
  %1714 = vmatpush1.msra.mxu0 0.0
  %1715 = vmatprep.subr.mxu0 0.0
  %1716 = vmatpush1.msra.mxu0 %v1691
  %1717 = vmatprep.subr.mxu0 0.0
  %1718 = vmatpush1.msra.mxu0 %v1690
  %1719 = vmatprep.subr.mxu0 0.0
  %1720 = vmatpush1.msra.mxu0 %v1689
  %1721 = vmatprep.subr.mxu0 0.0
  %1722 = vmatpush1.msra.mxu0 %v1688
  %1723 = vmatprep.subr.mxu0 0.0
  %1724 = vmatpush1.msra.mxu0 %v1687
  %1725 = vmatprep.subr.mxu0 0.0
  %1726 = vmatpush1.msra.mxu0 %v1686
  %1727 = vmatprep.subr.mxu0 0.0
  %1728 = vmatpush1.msra.mxu0 %v1685
  %1729 = vmatprep.subr.mxu0 0.0
  %1730 = vmatpush1.msra.mxu0 %v1684
  %1731 = vmatprep.subr.mxu0 0.0
  %1732 = vmatpush2.msra.mxu0 0.0
  %1733 = vmatprep.subr.mxu0 0.0
  %1734 = vmatpush2.msra.mxu0 0.0
  %1735 = vmatprep.subr.mxu0 0.0
  %1736 = vmatpush2.msra.mxu0 0.0
  %1737 = vmatprep.subr.mxu0 0.0
  %1738 = vmatpush2.msra.mxu0 0.0
  %1739 = vmatprep.subr.mxu0 0.0
  %1740 = vmatpush2.msra.mxu0 0.0
  %1741 = vmatprep.subr.mxu0 0.0
  %1742 = vmatpush2.msra.mxu0 0.0
  %1743 = vmatprep.subr.mxu0 0.0
  %1744 = vmatpush2.msra.mxu0 0.0
  %1745 = vmatprep.subr.mxu0 0.0
  %1746 = vmatpush2.msra.mxu0 0.0
  %1747 = vmatprep.subr.mxu0 0.0
  %1748 = vmatpush2.msra.mxu0 0.0
  %1749 = vmatprep.subr.mxu0 0.0
  %1750 = vmatpush2.msra.mxu0 0.0
  %1751 = vmatprep.subr.mxu0 0.0
  %1752 = vmatpush2.msra.mxu0 0.0
  %1753 = vmatprep.subr.mxu0 0.0
  %1754 = vmatpush2.msra.mxu0 0.0
  %1755 = vmatprep.subr.mxu0 0.0
  %1756 = vmatpush2.msra.mxu0 0.0
  %1757 = vmatprep.subr.mxu0 0.0
  %1758 = vmatpush2.msra.mxu0 0.0
  %1759 = vmatprep.subr.mxu0 0.0
  %1760 = vmatpush2.msra.mxu0 0.0
  %1761 = vmatprep.subr.mxu0 0.0
  %1762 = vmatpush2.msra.mxu0 0.0
  %1763 = vmatprep.mubr.f32.mxu0 0.0
  %1764 = vmatmul.mubr.f32.gmra.mxu0 %v300
  %v1765 = vpop.f32.mrf.mxu0
  %v1766 = vadd.f32 %v1697, %v1765
  %v1767 = vpop.f32.mrf.mxu0
  %1768 = vdwg.mxu0
  %v1769 = vmax.f32 %v1766, 0.0
  %s1770 = scalar_lea.vmem %s10, 128
  %v1771 = vld [vmem:[%s1770] sm:$0xff]
  %v1772 = vld [vmem:[%s1770 + $0x8] sm:$0xff]
  %v1773 = vld [vmem:[%s1770 + $0x10] sm:$0xff]
  %v1774 = vld [vmem:[%s1770 + $0x18] sm:$0xff]
  %v1775 = vld [vmem:[%s1770 + $0x20] sm:$0xff]
  %v1776 = vld [vmem:[%s1770 + $0x28] sm:$0xff]
  %v1777 = vld [vmem:[%s1770 + $0x30] sm:$0xff]
  %v1778 = vld [vmem:[%s1770 + $0x38] sm:$0xff]
  %s1779 = scalar_lea.vmem %s11, 2
  %v1780 = vld [vmem:[%s1779] sm:$0x1]
  %v1782 = vlaneseq
  %v1783 = vshrl.u32 %v1782, 7
  %v1784 = vsub.s32 0, %v1783
  %v1785 = vrot.slane %v1780, %v1784
  %v1789 = vsel %vm476, %v1683, %v1676
  %v1790 = vsel %vm78, %v1789, 0
  %1792 = vmatprep.subr.mxu0 0.0
  %1793 = vmatpush1.msra.mxu0 0.0
  %1794 = vmatprep.subr.mxu0 0.0
  %1795 = vmatpush1.msra.mxu0 0.0
  %1796 = vmatprep.subr.mxu0 0.0
  %1797 = vmatpush1.msra.mxu0 0.0
  %1798 = vmatprep.subr.mxu0 0.0
  %1799 = vmatpush1.msra.mxu0 0.0
  %1800 = vmatprep.subr.mxu0 0.0
  %1801 = vmatpush1.msra.mxu0 0.0
  %1802 = vmatprep.subr.mxu0 0.0
  %1803 = vmatpush1.msra.mxu0 0.0
  %1804 = vmatprep.subr.mxu0 0.0
  %1805 = vmatpush1.msra.mxu0 0.0
  %1806 = vmatprep.subr.mxu0 0.0
  %1807 = vmatpush1.msra.mxu0 0.0
  %1808 = vmatprep.subr.mxu0 0.0
  %1809 = vmatpush1.msra.mxu0 %v1778
  %1810 = vmatprep.subr.mxu0 0.0
  %1811 = vmatpush1.msra.mxu0 %v1777
  %1812 = vmatprep.subr.mxu0 0.0
  %1813 = vmatpush1.msra.mxu0 %v1776
  %1814 = vmatprep.subr.mxu0 0.0
  %1815 = vmatpush1.msra.mxu0 %v1775
  %1816 = vmatprep.subr.mxu0 0.0
  %1817 = vmatpush1.msra.mxu0 %v1774
  %1818 = vmatprep.subr.mxu0 0.0
  %1819 = vmatpush1.msra.mxu0 %v1773
  %1820 = vmatprep.subr.mxu0 0.0
  %1821 = vmatpush1.msra.mxu0 %v1772
  %1822 = vmatprep.subr.mxu0 0.0
  %1823 = vmatpush1.msra.mxu0 %v1771
  %1824 = vmatprep.subr.mxu0 0.0
  %1825 = vmatpush2.msra.mxu0 0.0
  %1826 = vmatprep.subr.mxu0 0.0
  %1827 = vmatpush2.msra.mxu0 0.0
  %1828 = vmatprep.subr.mxu0 0.0
  %1829 = vmatpush2.msra.mxu0 0.0
  %1830 = vmatprep.subr.mxu0 0.0
  %1831 = vmatpush2.msra.mxu0 0.0
  %1832 = vmatprep.subr.mxu0 0.0
  %1833 = vmatpush2.msra.mxu0 0.0
  %1834 = vmatprep.subr.mxu0 0.0
  %1835 = vmatpush2.msra.mxu0 0.0
  %1836 = vmatprep.subr.mxu0 0.0
  %1837 = vmatpush2.msra.mxu0 0.0
  %1838 = vmatprep.subr.mxu0 0.0
  %1839 = vmatpush2.msra.mxu0 0.0
  %1840 = vmatprep.subr.mxu0 0.0
  %1841 = vmatpush2.msra.mxu0 0.0
  %1842 = vmatprep.subr.mxu0 0.0
  %1843 = vmatpush2.msra.mxu0 0.0
  %1844 = vmatprep.subr.mxu0 0.0
  %1845 = vmatpush2.msra.mxu0 0.0
  %1846 = vmatprep.subr.mxu0 0.0
  %1847 = vmatpush2.msra.mxu0 0.0
  %1848 = vmatprep.subr.mxu0 0.0
  %1849 = vmatpush2.msra.mxu0 0.0
  %1850 = vmatprep.subr.mxu0 0.0
  %1851 = vmatpush2.msra.mxu0 0.0
  %1852 = vmatprep.subr.mxu0 0.0
  %1853 = vmatpush2.msra.mxu0 0.0
  %1854 = vmatprep.subr.mxu0 0.0
  %1855 = vmatpush2.msra.mxu0 0.0
  %1856 = vmatprep.mubr.f32.mxu0 0.0
  %1857 = vmatmul.mubr.f32.gmra.mxu0 %v1790
  %v1858 = vpop.f32.mrf.mxu0
  %v1859 = vadd.f32 %v1785, %v1858
  %v1860 = vpop.f32.mrf.mxu0
  %1861 = vdwg.mxu0
  %v1862 = vmax.f32 %v1859, 0.0
  %v1863 = vmul.f32 %v1769, %v1862
  %s1864 = scalar_lea.vmem %s10, 64
  %v1865 = vld [vmem:[%s1864] sm:$0xff]
  %v1866 = vld [vmem:[%s1864 + $0x8] sm:$0xff]
  %v1867 = vld [vmem:[%s1864 + $0x10] sm:$0xff]
  %v1868 = vld [vmem:[%s1864 + $0x18] sm:$0xff]
  %v1869 = vld [vmem:[%s1864 + $0x20] sm:$0xff]
  %v1870 = vld [vmem:[%s1864 + $0x28] sm:$0xff]
  %v1871 = vld [vmem:[%s1864 + $0x30] sm:$0xff]
  %v1872 = vld [vmem:[%s1864 + $0x38] sm:$0xff]
  %s1873 = scalar_lea.vmem %s11, 1
  %v1874 = vld [vmem:[%s1873] sm:$0x1]
  %v1876 = vlaneseq
  %v1877 = vshrl.u32 %v1876, 7
  %v1878 = vsub.s32 0, %v1877
  %v1879 = vrot.slane %v1874, %v1878
  %v1883 = vsel %vm476, %v1350, %v1341
  %v1884 = vsel %vm78, %v1883, 0
  %1886 = vmatprep.subr.mxu0 0.0
  %1887 = vmatpush1.msra.mxu0 0.0
  %1888 = vmatprep.subr.mxu0 0.0
  %1889 = vmatpush1.msra.mxu0 0.0
  %1890 = vmatprep.subr.mxu0 0.0
  %1891 = vmatpush1.msra.mxu0 0.0
  %1892 = vmatprep.subr.mxu0 0.0
  %1893 = vmatpush1.msra.mxu0 0.0
  %1894 = vmatprep.subr.mxu0 0.0
  %1895 = vmatpush1.msra.mxu0 0.0
  %1896 = vmatprep.subr.mxu0 0.0
  %1897 = vmatpush1.msra.mxu0 0.0
  %1898 = vmatprep.subr.mxu0 0.0
  %1899 = vmatpush1.msra.mxu0 0.0
  %1900 = vmatprep.subr.mxu0 0.0
  %1901 = vmatpush1.msra.mxu0 0.0
  %1902 = vmatprep.subr.mxu0 0.0
  %1903 = vmatpush1.msra.mxu0 %v1872
  %1904 = vmatprep.subr.mxu0 0.0
  %1905 = vmatpush1.msra.mxu0 %v1871
  %1906 = vmatprep.subr.mxu0 0.0
  %1907 = vmatpush1.msra.mxu0 %v1870
  %1908 = vmatprep.subr.mxu0 0.0
  %1909 = vmatpush1.msra.mxu0 %v1869
  %1910 = vmatprep.subr.mxu0 0.0
  %1911 = vmatpush1.msra.mxu0 %v1868
  %1912 = vmatprep.subr.mxu0 0.0
  %1913 = vmatpush1.msra.mxu0 %v1867
  %1914 = vmatprep.subr.mxu0 0.0
  %1915 = vmatpush1.msra.mxu0 %v1866
  %1916 = vmatprep.subr.mxu0 0.0
  %1917 = vmatpush1.msra.mxu0 %v1865
  %1918 = vmatprep.subr.mxu0 0.0
  %1919 = vmatpush2.msra.mxu0 0.0
  %1920 = vmatprep.subr.mxu0 0.0
  %1921 = vmatpush2.msra.mxu0 0.0
  %1922 = vmatprep.subr.mxu0 0.0
  %1923 = vmatpush2.msra.mxu0 0.0
  %1924 = vmatprep.subr.mxu0 0.0
  %1925 = vmatpush2.msra.mxu0 0.0
  %1926 = vmatprep.subr.mxu0 0.0
  %1927 = vmatpush2.msra.mxu0 0.0
  %1928 = vmatprep.subr.mxu0 0.0
  %1929 = vmatpush2.msra.mxu0 0.0
  %1930 = vmatprep.subr.mxu0 0.0
  %1931 = vmatpush2.msra.mxu0 0.0
  %1932 = vmatprep.subr.mxu0 0.0
  %1933 = vmatpush2.msra.mxu0 0.0
  %1934 = vmatprep.subr.mxu0 0.0
  %1935 = vmatpush2.msra.mxu0 0.0
  %1936 = vmatprep.subr.mxu0 0.0
  %1937 = vmatpush2.msra.mxu0 0.0
  %1938 = vmatprep.subr.mxu0 0.0
  %1939 = vmatpush2.msra.mxu0 0.0
  %1940 = vmatprep.subr.mxu0 0.0
  %1941 = vmatpush2.msra.mxu0 0.0
  %1942 = vmatprep.subr.mxu0 0.0
  %1943 = vmatpush2.msra.mxu0 0.0
  %1944 = vmatprep.subr.mxu0 0.0
  %1945 = vmatpush2.msra.mxu0 0.0
  %1946 = vmatprep.subr.mxu0 0.0
  %1947 = vmatpush2.msra.mxu0 0.0
  %1948 = vmatprep.subr.mxu0 0.0
  %1949 = vmatpush2.msra.mxu0 0.0
  %1950 = vmatprep.mubr.f32.mxu0 0.0
  %1951 = vmatmul.mubr.f32.gmra.mxu0 %v1884
  %v1952 = vpop.f32.mrf.mxu0
  %v1953 = vadd.f32 %v1879, %v1952
  %v1954 = vpop.f32.mrf.mxu0
  %1955 = vdwg.mxu0
  %v1956 = vmax.f32 %v1953, 0.0
  %v1957 = vmul.f32 %v1769, %v1956
  %s1958 = scalar_lea.vmem %s5, 256
  %v1959 = vld [vmem:[%s1958] sm:$0xff]
  %v1960 = vld [vmem:[%s1958 + $0x8] sm:$0xff]
  %v1961 = vld [vmem:[%s1958 + $0x10] sm:$0xff]
  %v1962 = vld [vmem:[%s1958 + $0x18] sm:$0xff]
  %v1963 = vld [vmem:[%s1958 + $0x20] sm:$0xff]
  %v1964 = vld [vmem:[%s1958 + $0x28] sm:$0xff]
  %v1965 = vld [vmem:[%s1958 + $0x30] sm:$0xff]
  %v1966 = vld [vmem:[%s1958 + $0x38] sm:$0xff]
  %1967 = vmatprep.subr.mxu0 0.0
  %1968 = vmatpush1.msra.mxu0 0.0
  %1969 = vmatprep.subr.mxu0 0.0
  %1970 = vmatpush1.msra.mxu0 0.0
  %1971 = vmatprep.subr.mxu0 0.0
  %1972 = vmatpush1.msra.mxu0 0.0
  %1973 = vmatprep.subr.mxu0 0.0
  %1974 = vmatpush1.msra.mxu0 0.0
  %1975 = vmatprep.subr.mxu0 0.0
  %1976 = vmatpush1.msra.mxu0 0.0
  %1977 = vmatprep.subr.mxu0 0.0
  %1978 = vmatpush1.msra.mxu0 0.0
  %1979 = vmatprep.subr.mxu0 0.0
  %1980 = vmatpush1.msra.mxu0 0.0
  %1981 = vmatprep.subr.mxu0 0.0
  %1982 = vmatpush1.msra.mxu0 0.0
  %1983 = vmatprep.subr.mxu0 0.0
  %1984 = vmatpush1.msra.mxu0 %v1966
  %1985 = vmatprep.subr.mxu0 0.0
  %1986 = vmatpush1.msra.mxu0 %v1965
  %1987 = vmatprep.subr.mxu0 0.0
  %1988 = vmatpush1.msra.mxu0 %v1964
  %1989 = vmatprep.subr.mxu0 0.0
  %1990 = vmatpush1.msra.mxu0 %v1963
  %1991 = vmatprep.subr.mxu0 0.0
  %1992 = vmatpush1.msra.mxu0 %v1962
  %1993 = vmatprep.subr.mxu0 0.0
  %1994 = vmatpush1.msra.mxu0 %v1961
  %1995 = vmatprep.subr.mxu0 0.0
  %1996 = vmatpush1.msra.mxu0 %v1960
  %1997 = vmatprep.subr.mxu0 0.0
  %1998 = vmatpush1.msra.mxu0 %v1959
  %1999 = vmatprep.subr.mxu0 0.0
  %2000 = vmatpush2.msra.mxu0 0.0
  %2001 = vmatprep.subr.mxu0 0.0
  %2002 = vmatpush2.msra.mxu0 0.0
  %2003 = vmatprep.subr.mxu0 0.0
  %2004 = vmatpush2.msra.mxu0 0.0
  %2005 = vmatprep.subr.mxu0 0.0
  %2006 = vmatpush2.msra.mxu0 0.0
  %2007 = vmatprep.subr.mxu0 0.0
  %2008 = vmatpush2.msra.mxu0 0.0
  %2009 = vmatprep.subr.mxu0 0.0
  %2010 = vmatpush2.msra.mxu0 0.0
  %2011 = vmatprep.subr.mxu0 0.0
  %2012 = vmatpush2.msra.mxu0 0.0
  %2013 = vmatprep.subr.mxu0 0.0
  %2014 = vmatpush2.msra.mxu0 0.0
  %2015 = vmatprep.subr.mxu0 0.0
  %2016 = vmatpush2.msra.mxu0 0.0
  %2017 = vmatprep.subr.mxu0 0.0
  %2018 = vmatpush2.msra.mxu0 0.0
  %2019 = vmatprep.subr.mxu0 0.0
  %2020 = vmatpush2.msra.mxu0 0.0
  %2021 = vmatprep.subr.mxu0 0.0
  %2022 = vmatpush2.msra.mxu0 0.0
  %2023 = vmatprep.subr.mxu0 0.0
  %2024 = vmatpush2.msra.mxu0 0.0
  %2025 = vmatprep.subr.mxu0 0.0
  %2026 = vmatpush2.msra.mxu0 0.0
  %2027 = vmatprep.subr.mxu0 0.0
  %2028 = vmatpush2.msra.mxu0 0.0
  %2029 = vmatprep.subr.mxu0 0.0
  %2030 = vmatpush2.msra.mxu0 0.0
  %2031 = vmatprep.mubr.f32.mxu0 0.0
  %2032 = vmatmul.mubr.f32.gmra.mxu0 %v188
  %v2033 = vpop.f32.mrf.mxu0
  %v2034 = vadd.f32 0.0, %v2033
  %v2035 = vpop.f32.mrf.mxu0
  %2036 = vmatprep.mubr.f32.mxu0 0.0
  %2037 = vmatmul.mubr.f32.gmra.mxu0 %v191
  %v2038 = vpop.f32.mrf.mxu0
  %v2039 = vadd.f32 0.0, %v2038
  %v2040 = vpop.f32.mrf.mxu0
  %2041 = vmatprep.mubr.f32.mxu0 0.0
  %2042 = vmatmul.mubr.f32.gmra.mxu0 %v194
  %v2043 = vpop.f32.mrf.mxu0
  %v2044 = vadd.f32 0.0, %v2043
  %v2045 = vpop.f32.mrf.mxu0
  %2046 = vmatprep.mubr.f32.mxu0 0.0
  %2047 = vmatmul.mubr.f32.gmra.mxu0 %v197
  %v2048 = vpop.f32.mrf.mxu0
  %v2049 = vadd.f32 0.0, %v2048
  %v2050 = vpop.f32.mrf.mxu0
  %2051 = vdwg.mxu0
  %s2052 = scalar_lea.vmem %s6, 256
  %v2053 = vld [vmem:[%s2052] sm:$0xff]
  %v2054 = vld [vmem:[%s2052 + $0x8] sm:$0xff]
  %v2055 = vld [vmem:[%s2052 + $0x10] sm:$0xff]
  %v2056 = vld [vmem:[%s2052 + $0x18] sm:$0xff]
  %v2057 = vld [vmem:[%s2052 + $0x20] sm:$0xff]
  %v2058 = vld [vmem:[%s2052 + $0x28] sm:$0xff]
  %v2059 = vld [vmem:[%s2052 + $0x30] sm:$0xff]
  %v2060 = vld [vmem:[%s2052 + $0x38] sm:$0xff]
  %s2061 = scalar_lea.vmem %s7, 4
  %v2062 = vld [vmem:[%s2061] sm:$0x1]
  %v2064 = vlaneseq
  %v2065 = vshrl.u32 %v2064, 7
  %v2066 = vsub.s32 0, %v2065
  %v2067 = vrot.slane %v2062, %v2066
  %v2070 = vsel %vm78, %v1863, 0
  %2072 = vmatprep.subr.mxu0 0.0
  %2073 = vmatpush1.msra.mxu0 0.0
  %2074 = vmatprep.subr.mxu0 0.0
  %2075 = vmatpush1.msra.mxu0 0.0
  %2076 = vmatprep.subr.mxu0 0.0
  %2077 = vmatpush1.msra.mxu0 0.0
  %2078 = vmatprep.subr.mxu0 0.0
  %2079 = vmatpush1.msra.mxu0 0.0
  %2080 = vmatprep.subr.mxu0 0.0
  %2081 = vmatpush1.msra.mxu0 0.0
  %2082 = vmatprep.subr.mxu0 0.0
  %2083 = vmatpush1.msra.mxu0 0.0
  %2084 = vmatprep.subr.mxu0 0.0
  %2085 = vmatpush1.msra.mxu0 0.0
  %2086 = vmatprep.subr.mxu0 0.0
  %2087 = vmatpush1.msra.mxu0 0.0
  %2088 = vmatprep.subr.mxu0 0.0
  %2089 = vmatpush1.msra.mxu0 %v2060
  %2090 = vmatprep.subr.mxu0 0.0
  %2091 = vmatpush1.msra.mxu0 %v2059
  %2092 = vmatprep.subr.mxu0 0.0
  %2093 = vmatpush1.msra.mxu0 %v2058
  %2094 = vmatprep.subr.mxu0 0.0
  %2095 = vmatpush1.msra.mxu0 %v2057
  %2096 = vmatprep.subr.mxu0 0.0
  %2097 = vmatpush1.msra.mxu0 %v2056
  %2098 = vmatprep.subr.mxu0 0.0
  %2099 = vmatpush1.msra.mxu0 %v2055
  %2100 = vmatprep.subr.mxu0 0.0
  %2101 = vmatpush1.msra.mxu0 %v2054
  %2102 = vmatprep.subr.mxu0 0.0
  %2103 = vmatpush1.msra.mxu0 %v2053
  %2104 = vmatprep.subr.mxu0 0.0
  %2105 = vmatpush2.msra.mxu0 0.0
  %2106 = vmatprep.subr.mxu0 0.0
  %2107 = vmatpush2.msra.mxu0 0.0
  %2108 = vmatprep.subr.mxu0 0.0
  %2109 = vmatpush2.msra.mxu0 0.0
  %2110 = vmatprep.subr.mxu0 0.0
  %2111 = vmatpush2.msra.mxu0 0.0
  %2112 = vmatprep.subr.mxu0 0.0
  %2113 = vmatpush2.msra.mxu0 0.0
  %2114 = vmatprep.subr.mxu0 0.0
  %2115 = vmatpush2.msra.mxu0 0.0
  %2116 = vmatprep.subr.mxu0 0.0
  %2117 = vmatpush2.msra.mxu0 0.0
  %2118 = vmatprep.subr.mxu0 0.0
  %2119 = vmatpush2.msra.mxu0 0.0
  %2120 = vmatprep.subr.mxu0 0.0
  %2121 = vmatpush2.msra.mxu0 0.0
  %2122 = vmatprep.subr.mxu0 0.0
  %2123 = vmatpush2.msra.mxu0 0.0
  %2124 = vmatprep.subr.mxu0 0.0
  %2125 = vmatpush2.msra.mxu0 0.0
  %2126 = vmatprep.subr.mxu0 0.0
  %2127 = vmatpush2.msra.mxu0 0.0
  %2128 = vmatprep.subr.mxu0 0.0
  %2129 = vmatpush2.msra.mxu0 0.0
  %2130 = vmatprep.subr.mxu0 0.0
  %2131 = vmatpush2.msra.mxu0 0.0
  %2132 = vmatprep.subr.mxu0 0.0
  %2133 = vmatpush2.msra.mxu0 0.0
  %2134 = vmatprep.subr.mxu0 0.0
  %2135 = vmatpush2.msra.mxu0 0.0
  %2136 = vmatprep.mubr.f32.mxu0 0.0
  %2137 = vmatmul.mubr.f32.gmra.mxu0 %v2070
  %v2138 = vpop.f32.mrf.mxu0
  %v2139 = vadd.f32 %v2067, %v2138
  %v2140 = vpop.f32.mrf.mxu0
  %2141 = vdwg.mxu0
  %v2144 = vunpack.c.l.s4 1966171168
  %v2145 = vunpack.c.0.s8 %v2144
  %v2146 = vlaneseq
  %v2147 = vshrl.u32 %v2146, 7
  %v2148 = vsub.s32 %v2145, %v2147
  %v2149 = vrot.slane %v2139, %v2148
  %v2150 = vcombine.high %v2149, %v2149
  %v2152 = vunpack.c.l.s4 1966171168
  %v2153 = vunpack.c.0.s8 %v2152
  %v2154 = vlaneseq
  %v2155 = vshrl.u32 %v2154, 7
  %v2156 = vsub.s32 %v2153, %v2155
  %v2157 = vrot.slane %v2149, %v2156
  %v2159 = vunpack.c.l.s4 1966171168
  %v2160 = vunpack.c.0.s8 %v2159
  %v2161 = vlaneseq
  %v2162 = vshrl.u32 %v2161, 7
  %v2163 = vsub.s32 %v2160, %v2162
  %v2164 = vrot.slane %v2150, %v2163
  %v2165 = vlaneseq
  %v2166 = vshrl.u32 %v2165, 7
  %v2167 = vsub.s32 0, %v2166
  %v2168 = vrot.slane %v2157, %v2167
  %v2169 = vlaneseq
  %v2170 = vshrl.u32 %v2169, 7
  %v2171 = vsub.s32 0, %v2170
  %v2172 = vrot.slane %v2164, %v2171
  %v2175 = vadd.f32 %v2034, %v2168
  %v2176 = vadd.f32 %v2039, %v2168
  %v2177 = vadd.f32 %v2044, %v2172
  %v2178 = vadd.f32 %v2049, %v2172
  %v2179 = vtanh.pop %v2175
  %v2180 = vtanh.pop %v2176
  %v2181 = vtanh.pop %v2177
  %v2182 = vtanh.pop %v2178
  %s2183 = scalar_lea.vmem %s8, 4
  %v2184 = vld [vmem:[%s2183] sm:$0x1]
  %v2186 = vlaneseq
  %v2187 = vshrl.u32 %v2186, 7
  %v2188 = vsub.s32 0, %v2187
  %v2189 = vrot.slane %v2184, %v2188
  %v2191 = vmul.f32 %v2179, %v2189
  %v2192 = vmul.f32 %v2180, %v2189
  %v2193 = vmul.f32 %v2181, %v2189
  %v2194 = vmul.f32 %v2182, %v2189
  %v2195 = vsel %vm78, %v2191, 0.0
  %2196 = vadd.xlane.f32.xlu0 %v2195
  %v2197 = vpop.xlane.xlu0 %2196
  %v2198 = vsel %vm78, %v2192, 0.0
  %2199 = vadd.xlane.f32.xlu0 %v2198
  %v2200 = vpop.xlane.xlu0 %2199
  %v2201 = vsel %vm78, %v2193, 0.0
  %2202 = vadd.xlane.f32.xlu0 %v2201
  %v2203 = vpop.xlane.xlu0 %2202
  %v2204 = vsel %vm78, %v2194, 0.0
  %2205 = vadd.xlane.f32.xlu0 %v2204
  %v2206 = vpop.xlane.xlu0 %2205
  %s2207 = scalar_lea.vmem %s9, 4
  %v2208 = vld [vmem:[%s2207] sm:$0x1]
  %v2210 = vlaneseq
  %v2211 = vshrl.u32 %v2210, 7
  %v2212 = vsub.s32 0, %v2211
  %v2213 = vrot.slane %v2208, %v2212
  %2214 = vset.pattern.permute.xlu0 0
  %2215 = vperm.xlu0 %2214, %v2213
  %v2216 = vpop.permute.xlu0 %2215
  %v2218 = vadd.f32 %v2197, %v2216
  %v2219 = vadd.f32 %v2200, %v2216
  %v2220 = vadd.f32 %v2203, %v2216
  %v2221 = vadd.f32 %v2206, %v2216
  %v2226 = vlaneseq
  %v2227 = vshrl.u32 %v2226, 7
  %v2228 = vsub.s32 %v455, %v2227
  %v2229 = vrot.slane %v2218, %v2228
  %v2230 = vlaneseq
  %v2231 = vshrl.u32 %v2230, 7
  %v2232 = vsub.s32 %v460, %v2231
  %v2233 = vrot.slane %v2219, %v2232
  %v2234 = vsel %vm465, %v2233, %v2229
  %v2235 = vlaneseq
  %v2236 = vshrl.u32 %v2235, 7
  %v2237 = vsub.s32 %v455, %v2236
  %v2238 = vrot.slane %v2220, %v2237
  %v2239 = vlaneseq
  %v2240 = vshrl.u32 %v2239, 7
  %v2241 = vsub.s32 %v460, %v2240
  %v2242 = vrot.slane %v2221, %v2241
  %v2243 = vsel %vm465, %v2242, %v2238
  %v2244 = vsel %vm476, %v2243, %v2234
  %v2246 = vsel %vm479, %v2244, -inf
  %2247 = vmax.xlane.f32.xlu0 %v2246
  %v2248 = vpop.xlane.xlu0 %2247
  %v2250 = vlaneseq
  %v2251 = vshrl.u32 %v2250, 7
  %v2252 = vsub.s32 0, %v2251
  %v2253 = vrot.slane %v2248, %v2252
  %v2254 = vlaneseq
  %v2255 = vshrl.u32 %v2254, 7
  %v2256 = vsub.s32 1, %v2255
  %v2257 = vrot.slane %v2248, %v2256
  %v2260 = vsub.f32 %v2218, %v2253
  %v2261 = vsub.f32 %v2219, %v2253
  %v2262 = vsub.f32 %v2220, %v2257
  %v2263 = vsub.f32 %v2221, %v2257
  %v2264 = vmul.f32 %v2260, 1.442695
  %v2265 = vpow.pop %v2264
  %v2266 = vmul.f32 %v2261, 1.442695
  %v2267 = vpow.pop %v2266
  %v2268 = vmul.f32 %v2262, 1.442695
  %v2269 = vpow.pop %v2268
  %v2270 = vmul.f32 %v2263, 1.442695
  %v2271 = vpow.pop %v2270
  %2276 = vset.pattern.permute.xlu0 0
  %2277 = vperm.xlu0 %2276, %v2265
  %v2278 = vpop.permute.xlu0 %2277
  %2279 = vset.pattern.permute.xlu0 0
  %2280 = vperm.xlu0 %2279, %v2267
  %v2281 = vpop.permute.xlu0 %2280
  %2282 = vset.pattern.permute.xlu0 0
  %2283 = vperm.xlu0 %2282, %v2269
  %v2284 = vpop.permute.xlu0 %2283
  %2285 = vset.pattern.permute.xlu0 0
  %2286 = vperm.xlu0 %2285, %v2271
  %v2287 = vpop.permute.xlu0 %2286
  %v2288 = vlaneseq
  %v2289 = vshrl.u32 %v2288, 7
  %v2290 = vsub.s32 %v455, %v2289
  %v2291 = vrot.slane %v2278, %v2290
  %v2292 = vlaneseq
  %v2293 = vshrl.u32 %v2292, 7
  %v2294 = vsub.s32 %v460, %v2293
  %v2295 = vrot.slane %v2281, %v2294
  %v2296 = vsel %vm465, %v2295, %v2291
  %v2297 = vlaneseq
  %v2298 = vshrl.u32 %v2297, 7
  %v2299 = vsub.s32 %v455, %v2298
  %v2300 = vrot.slane %v2284, %v2299
  %v2301 = vlaneseq
  %v2302 = vshrl.u32 %v2301, 7
  %v2303 = vsub.s32 %v460, %v2302
  %v2304 = vrot.slane %v2287, %v2303
  %v2305 = vsel %vm465, %v2304, %v2300
  %v2306 = vsel %vm476, %v2305, %v2296
  %v2308 = vsel %vm479, %v2306, 0.0
  %2309 = vadd.xlane.f32.xlu0 %v2308
  %v2310 = vpop.xlane.xlu0 %2309
  %v2311 = vrcp.pop %v2310
  %v2313 = vlaneseq
  %v2314 = vshrl.u32 %v2313, 7
  %v2315 = vsub.s32 0, %v2314
  %v2316 = vrot.slane %v2311, %v2315
  %v2317 = vlaneseq
  %v2318 = vshrl.u32 %v2317, 7
  %v2319 = vsub.s32 1, %v2318
  %v2320 = vrot.slane %v2311, %v2319
  %v2323 = vmul.f32 %v2265, %v2316
  %v2324 = vmul.f32 %v2267, %v2316
  %v2325 = vmul.f32 %v2269, %v2320
  %v2326 = vmul.f32 %v2271, %v2320
  %2328 = vset.pattern.permute.xlu0 0
  %2329 = vperm.xlu0 %2328, %v2323
  %v2330 = vpop.permute.xlu0 %2329
  %2333 = vset.pattern.permute.xlu0 0
  %2334 = vperm.xlu0 %2333, %v2324
  %v2335 = vpop.permute.xlu0 %2334
  %2338 = vset.pattern.permute.xlu0 0
  %2339 = vperm.xlu0 %2338, %v2325
  %v2340 = vpop.permute.xlu0 %2339
  %2343 = vset.pattern.permute.xlu0 0
  %2344 = vperm.xlu0 %2343, %v2326
  %v2345 = vpop.permute.xlu0 %2344
  %v2347 = vmul.f32 %v2330, %v158
  %v2348 = vmul.f32 %v2335, %v163
  %v2349 = vmul.f32 %v2340, %v168
  %v2350 = vmul.f32 %v2345, %v173
  %v2351 = vsel %vm78, %v2347, 0.0
  %v2352 = vsel %vm78, %v2348, 0.0
  %v2353 = vadd.f32 %v2351, %v2352
  %v2354 = vrot.slane %v2353, 4
  %v2355 = vadd.f32 %v2353, %v2354
  %v2356 = vrot.slane %v2355, 2
  %v2357 = vadd.f32 %v2355, %v2356
  %v2358 = vrot.slane %v2357, 1
  %v2359 = vadd.f32 %v2357, %v2358
  %v2360 = vsel %vm78, %v2349, 0.0
  %v2361 = vsel %vm78, %v2350, 0.0
  %v2362 = vadd.f32 %v2360, %v2361
  %v2363 = vrot.slane %v2362, 4
  %v2364 = vadd.f32 %v2362, %v2363
  %v2365 = vrot.slane %v2364, 2
  %v2366 = vadd.f32 %v2364, %v2365
  %v2367 = vrot.slane %v2366, 1
  %v2368 = vadd.f32 %v2366, %v2367
  %s2369 = scalar_lea.vmem %s5, 320
  %v2370 = vld [vmem:[%s2369] sm:$0xff]
  %v2371 = vld [vmem:[%s2369 + $0x8] sm:$0xff]
  %v2372 = vld [vmem:[%s2369 + $0x10] sm:$0xff]
  %v2373 = vld [vmem:[%s2369 + $0x18] sm:$0xff]
  %v2374 = vld [vmem:[%s2369 + $0x20] sm:$0xff]
  %v2375 = vld [vmem:[%s2369 + $0x28] sm:$0xff]
  %v2376 = vld [vmem:[%s2369 + $0x30] sm:$0xff]
  %v2377 = vld [vmem:[%s2369 + $0x38] sm:$0xff]
  %2378 = vmatprep.subr.mxu0 0.0
  %2379 = vmatpush1.msra.mxu0 0.0
  %2380 = vmatprep.subr.mxu0 0.0
  %2381 = vmatpush1.msra.mxu0 0.0
  %2382 = vmatprep.subr.mxu0 0.0
  %2383 = vmatpush1.msra.mxu0 0.0
  %2384 = vmatprep.subr.mxu0 0.0
  %2385 = vmatpush1.msra.mxu0 0.0
  %2386 = vmatprep.subr.mxu0 0.0
  %2387 = vmatpush1.msra.mxu0 0.0
  %2388 = vmatprep.subr.mxu0 0.0
  %2389 = vmatpush1.msra.mxu0 0.0
  %2390 = vmatprep.subr.mxu0 0.0
  %2391 = vmatpush1.msra.mxu0 0.0
  %2392 = vmatprep.subr.mxu0 0.0
  %2393 = vmatpush1.msra.mxu0 0.0
  %2394 = vmatprep.subr.mxu0 0.0
  %2395 = vmatpush1.msra.mxu0 %v2377
  %2396 = vmatprep.subr.mxu0 0.0
  %2397 = vmatpush1.msra.mxu0 %v2376
  %2398 = vmatprep.subr.mxu0 0.0
  %2399 = vmatpush1.msra.mxu0 %v2375
  %2400 = vmatprep.subr.mxu0 0.0
  %2401 = vmatpush1.msra.mxu0 %v2374
  %2402 = vmatprep.subr.mxu0 0.0
  %2403 = vmatpush1.msra.mxu0 %v2373
  %2404 = vmatprep.subr.mxu0 0.0
  %2405 = vmatpush1.msra.mxu0 %v2372
  %2406 = vmatprep.subr.mxu0 0.0
  %2407 = vmatpush1.msra.mxu0 %v2371
  %2408 = vmatprep.subr.mxu0 0.0
  %2409 = vmatpush1.msra.mxu0 %v2370
  %2410 = vmatprep.subr.mxu0 0.0
  %2411 = vmatpush2.msra.mxu0 0.0
  %2412 = vmatprep.subr.mxu0 0.0
  %2413 = vmatpush2.msra.mxu0 0.0
  %2414 = vmatprep.subr.mxu0 0.0
  %2415 = vmatpush2.msra.mxu0 0.0
  %2416 = vmatprep.subr.mxu0 0.0
  %2417 = vmatpush2.msra.mxu0 0.0
  %2418 = vmatprep.subr.mxu0 0.0
  %2419 = vmatpush2.msra.mxu0 0.0
  %2420 = vmatprep.subr.mxu0 0.0
  %2421 = vmatpush2.msra.mxu0 0.0
  %2422 = vmatprep.subr.mxu0 0.0
  %2423 = vmatpush2.msra.mxu0 0.0
  %2424 = vmatprep.subr.mxu0 0.0
  %2425 = vmatpush2.msra.mxu0 0.0
  %2426 = vmatprep.subr.mxu0 0.0
  %2427 = vmatpush2.msra.mxu0 0.0
  %2428 = vmatprep.subr.mxu0 0.0
  %2429 = vmatpush2.msra.mxu0 0.0
  %2430 = vmatprep.subr.mxu0 0.0
  %2431 = vmatpush2.msra.mxu0 0.0
  %2432 = vmatprep.subr.mxu0 0.0
  %2433 = vmatpush2.msra.mxu0 0.0
  %2434 = vmatprep.subr.mxu0 0.0
  %2435 = vmatpush2.msra.mxu0 0.0
  %2436 = vmatprep.subr.mxu0 0.0
  %2437 = vmatpush2.msra.mxu0 0.0
  %2438 = vmatprep.subr.mxu0 0.0
  %2439 = vmatpush2.msra.mxu0 0.0
  %2440 = vmatprep.subr.mxu0 0.0
  %2441 = vmatpush2.msra.mxu0 0.0
  %2442 = vmatprep.mubr.f32.mxu0 0.0
  %2443 = vmatmul.mubr.f32.gmra.mxu0 %v615
  %v2444 = vpop.f32.mrf.mxu0
  %v2445 = vadd.f32 0.0, %v2444
  %v2446 = vpop.f32.mrf.mxu0
  %2447 = vdwg.mxu0
  %v2449 = vcombine.high %v2445, %v2445
  %s2451 = scalar_lea.vmem %s6, 320
  %v2452 = vld [vmem:[%s2451] sm:$0xff]
  %v2453 = vld [vmem:[%s2451 + $0x8] sm:$0xff]
  %v2454 = vld [vmem:[%s2451 + $0x10] sm:$0xff]
  %v2455 = vld [vmem:[%s2451 + $0x18] sm:$0xff]
  %v2456 = vld [vmem:[%s2451 + $0x20] sm:$0xff]
  %v2457 = vld [vmem:[%s2451 + $0x28] sm:$0xff]
  %v2458 = vld [vmem:[%s2451 + $0x30] sm:$0xff]
  %v2459 = vld [vmem:[%s2451 + $0x38] sm:$0xff]
  %s2460 = scalar_lea.vmem %s7, 5
  %v2461 = vld [vmem:[%s2460] sm:$0x1]
  %v2463 = vlaneseq
  %v2464 = vshrl.u32 %v2463, 7
  %v2465 = vsub.s32 0, %v2464
  %v2466 = vrot.slane %v2461, %v2465
  %v2469 = vsel %vm78, %v1957, 0
  %2471 = vmatprep.subr.mxu0 0.0
  %2472 = vmatpush1.msra.mxu0 0.0
  %2473 = vmatprep.subr.mxu0 0.0
  %2474 = vmatpush1.msra.mxu0 0.0
  %2475 = vmatprep.subr.mxu0 0.0
  %2476 = vmatpush1.msra.mxu0 0.0
  %2477 = vmatprep.subr.mxu0 0.0
  %2478 = vmatpush1.msra.mxu0 0.0
  %2479 = vmatprep.subr.mxu0 0.0
  %2480 = vmatpush1.msra.mxu0 0.0
  %2481 = vmatprep.subr.mxu0 0.0
  %2482 = vmatpush1.msra.mxu0 0.0
  %2483 = vmatprep.subr.mxu0 0.0
  %2484 = vmatpush1.msra.mxu0 0.0
  %2485 = vmatprep.subr.mxu0 0.0
  %2486 = vmatpush1.msra.mxu0 0.0
  %2487 = vmatprep.subr.mxu0 0.0
  %2488 = vmatpush1.msra.mxu0 %v2459
  %2489 = vmatprep.subr.mxu0 0.0
  %2490 = vmatpush1.msra.mxu0 %v2458
  %2491 = vmatprep.subr.mxu0 0.0
  %2492 = vmatpush1.msra.mxu0 %v2457
  %2493 = vmatprep.subr.mxu0 0.0
  %2494 = vmatpush1.msra.mxu0 %v2456
  %2495 = vmatprep.subr.mxu0 0.0
  %2496 = vmatpush1.msra.mxu0 %v2455
  %2497 = vmatprep.subr.mxu0 0.0
  %2498 = vmatpush1.msra.mxu0 %v2454
  %2499 = vmatprep.subr.mxu0 0.0
  %2500 = vmatpush1.msra.mxu0 %v2453
  %2501 = vmatprep.subr.mxu0 0.0
  %2502 = vmatpush1.msra.mxu0 %v2452
  %2503 = vmatprep.subr.mxu0 0.0
  %2504 = vmatpush2.msra.mxu0 0.0
  %2505 = vmatprep.subr.mxu0 0.0
  %2506 = vmatpush2.msra.mxu0 0.0
  %2507 = vmatprep.subr.mxu0 0.0
  %2508 = vmatpush2.msra.mxu0 0.0
  %2509 = vmatprep.subr.mxu0 0.0
  %2510 = vmatpush2.msra.mxu0 0.0
  %2511 = vmatprep.subr.mxu0 0.0
  %2512 = vmatpush2.msra.mxu0 0.0
  %2513 = vmatprep.subr.mxu0 0.0
  %2514 = vmatpush2.msra.mxu0 0.0
  %2515 = vmatprep.subr.mxu0 0.0
  %2516 = vmatpush2.msra.mxu0 0.0
  %2517 = vmatprep.subr.mxu0 0.0
  %2518 = vmatpush2.msra.mxu0 0.0
  %2519 = vmatprep.subr.mxu0 0.0
  %2520 = vmatpush2.msra.mxu0 0.0
  %2521 = vmatprep.subr.mxu0 0.0
  %2522 = vmatpush2.msra.mxu0 0.0
  %2523 = vmatprep.subr.mxu0 0.0
  %2524 = vmatpush2.msra.mxu0 0.0
  %2525 = vmatprep.subr.mxu0 0.0
  %2526 = vmatpush2.msra.mxu0 0.0
  %2527 = vmatprep.subr.mxu0 0.0
  %2528 = vmatpush2.msra.mxu0 0.0
  %2529 = vmatprep.subr.mxu0 0.0
  %2530 = vmatpush2.msra.mxu0 0.0
  %2531 = vmatprep.subr.mxu0 0.0
  %2532 = vmatpush2.msra.mxu0 0.0
  %2533 = vmatprep.subr.mxu0 0.0
  %2534 = vmatpush2.msra.mxu0 0.0
  %2535 = vmatprep.mubr.f32.mxu0 0.0
  %2536 = vmatmul.mubr.f32.gmra.mxu0 %v2469
  %v2537 = vpop.f32.mrf.mxu0
  %v2538 = vadd.f32 %v2466, %v2537
  %v2539 = vpop.f32.mrf.mxu0
  %2540 = vdwg.mxu0
  %v2543 = vunpack.c.l.s4 1966171168
  %v2544 = vunpack.c.0.s8 %v2543
  %v2545 = vlaneseq
  %v2546 = vshrl.u32 %v2545, 7
  %v2547 = vsub.s32 %v2544, %v2546
  %v2548 = vrot.slane %v2538, %v2547
  %v2549 = vcombine.high %v2548, %v2548
  %v2551 = vunpack.c.l.s4 1966171168
  %v2552 = vunpack.c.0.s8 %v2551
  %v2553 = vlaneseq
  %v2554 = vshrl.u32 %v2553, 7
  %v2555 = vsub.s32 %v2552, %v2554
  %v2556 = vrot.slane %v2548, %v2555
  %v2558 = vunpack.c.l.s4 1966171168
  %v2559 = vunpack.c.0.s8 %v2558
  %v2560 = vlaneseq
  %v2561 = vshrl.u32 %v2560, 7
  %v2562 = vsub.s32 %v2559, %v2561
  %v2563 = vrot.slane %v2549, %v2562
  %v2564 = vlaneseq
  %v2565 = vshrl.u32 %v2564, 7
  %v2566 = vsub.s32 0, %v2565
  %v2567 = vrot.slane %v2556, %v2566
  %v2568 = vlaneseq
  %v2569 = vshrl.u32 %v2568, 7
  %v2570 = vsub.s32 0, %v2569
  %v2571 = vrot.slane %v2563, %v2570
  %v2574 = vadd.f32 %v2445, %v2567
  %v2575 = vadd.f32 %v2449, %v2571
  %v2576 = vtanh.pop %v2574
  %v2577 = vtanh.pop %v2575
  %s2578 = scalar_lea.vmem %s8, 5
  %v2579 = vld [vmem:[%s2578] sm:$0x1]
  %v2581 = vlaneseq
  %v2582 = vshrl.u32 %v2581, 7
  %v2583 = vsub.s32 0, %v2582
  %v2584 = vrot.slane %v2579, %v2583
  %v2586 = vmul.f32 %v2576, %v2584
  %v2587 = vmul.f32 %v2577, %v2584
  %v2588 = vsel %vm824, %v2586, 0.0
  %2589 = vadd.xlane.f32.xlu0 %v2588
  %v2590 = vpop.xlane.xlu0 %2589
  %v2591 = vsel %vm824, %v2587, 0.0
  %2592 = vadd.xlane.f32.xlu0 %v2591
  %v2593 = vpop.xlane.xlu0 %2592
  %s2594 = scalar_lea.vmem %s9, 5
  %v2595 = vld [vmem:[%s2594] sm:$0x1]
  %v2597 = vlaneseq
  %v2598 = vshrl.u32 %v2597, 7
  %v2599 = vsub.s32 0, %v2598
  %v2600 = vrot.slane %v2595, %v2599
  %2601 = vset.pattern.permute.xlu0 0
  %2602 = vperm.xlu0 %2601, %v2600
  %v2603 = vpop.permute.xlu0 %2602
  %v2605 = vadd.f32 %v2590, %v2603
  %v2606 = vadd.f32 %v2593, %v2603
  %v2609 = vlaneseq
  %v2610 = vshrl.u32 %v2609, 7
  %v2611 = vsub.s32 %v455, %v2610
  %v2612 = vrot.slane %v2605, %v2611
  %v2613 = vlaneseq
  %v2614 = vshrl.u32 %v2613, 7
  %v2615 = vsub.s32 %v455, %v2614
  %v2616 = vrot.slane %v2606, %v2615
  %v2617 = vsel %vm476, %v2616, %v2612
  %v2619 = vsel %vm856, %v2617, -inf
  %2620 = vmax.xlane.f32.xlu0 %v2619
  %v2621 = vpop.xlane.xlu0 %2620
  %v2623 = vlaneseq
  %v2624 = vshrl.u32 %v2623, 7
  %v2625 = vsub.s32 0, %v2624
  %v2626 = vrot.slane %v2621, %v2625
  %v2627 = vlaneseq
  %v2628 = vshrl.u32 %v2627, 7
  %v2629 = vsub.s32 1, %v2628
  %v2630 = vrot.slane %v2621, %v2629
  %v2633 = vsub.f32 %v2605, %v2626
  %v2634 = vsub.f32 %v2606, %v2630
  %v2635 = vmul.f32 %v2633, 1.442695
  %v2636 = vpow.pop %v2635
  %v2637 = vmul.f32 %v2634, 1.442695
  %v2638 = vpow.pop %v2637
  %2641 = vset.pattern.permute.xlu0 0
  %2642 = vperm.xlu0 %2641, %v2636
  %v2643 = vpop.permute.xlu0 %2642
  %2644 = vset.pattern.permute.xlu0 0
  %2645 = vperm.xlu0 %2644, %v2638
  %v2646 = vpop.permute.xlu0 %2645
  %v2647 = vlaneseq
  %v2648 = vshrl.u32 %v2647, 7
  %v2649 = vsub.s32 %v455, %v2648
  %v2650 = vrot.slane %v2643, %v2649
  %v2651 = vlaneseq
  %v2652 = vshrl.u32 %v2651, 7
  %v2653 = vsub.s32 %v455, %v2652
  %v2654 = vrot.slane %v2646, %v2653
  %v2655 = vsel %vm476, %v2654, %v2650
  %v2657 = vsel %vm856, %v2655, 0.0
  %2658 = vadd.xlane.f32.xlu0 %v2657
  %v2659 = vpop.xlane.xlu0 %2658
  %v2660 = vrcp.pop %v2659
  %v2662 = vlaneseq
  %v2663 = vshrl.u32 %v2662, 7
  %v2664 = vsub.s32 0, %v2663
  %v2665 = vrot.slane %v2660, %v2664
  %v2666 = vlaneseq
  %v2667 = vshrl.u32 %v2666, 7
  %v2668 = vsub.s32 1, %v2667
  %v2669 = vrot.slane %v2660, %v2668
  %v2672 = vmul.f32 %v2636, %v2665
  %v2673 = vmul.f32 %v2638, %v2669
  %2675 = vset.pattern.permute.xlu0 0
  %2676 = vperm.xlu0 %2675, %v2672
  %v2677 = vpop.permute.xlu0 %2676
  %2680 = vset.pattern.permute.xlu0 0
  %2681 = vperm.xlu0 %2680, %v2673
  %v2682 = vpop.permute.xlu0 %2681
  %v2684 = vmul.f32 %v2677, %v176
  %v2685 = vmul.f32 %v2682, %v177
  %v2686 = vsel %vm824, %v2684, 0.0
  %v2687 = vrot.slane %v2686, 4
  %v2688 = vadd.f32 %v2686, %v2687
  %v2689 = vrot.slane %v2688, 2
  %v2690 = vadd.f32 %v2688, %v2689
  %v2691 = vrot.slane %v2690, 1
  %v2692 = vadd.f32 %v2690, %v2691
  %v2693 = vsel %vm824, %v2685, 0.0
  %v2694 = vrot.slane %v2693, 4
  %v2695 = vadd.f32 %v2693, %v2694
  %v2696 = vrot.slane %v2695, 2
  %v2697 = vadd.f32 %v2695, %v2696
  %v2698 = vrot.slane %v2697, 1
  %v2699 = vadd.f32 %v2697, %v2698
  %s2700 = scalar_lea.vmem %s10, 192
  %v2701 = vld [vmem:[%s2700] sm:$0xff]
  %v2702 = vld [vmem:[%s2700 + $0x8] sm:$0xff]
  %v2703 = vld [vmem:[%s2700 + $0x10] sm:$0xff]
  %v2704 = vld [vmem:[%s2700 + $0x18] sm:$0xff]
  %v2705 = vld [vmem:[%s2700 + $0x20] sm:$0xff]
  %v2706 = vld [vmem:[%s2700 + $0x28] sm:$0xff]
  %v2707 = vld [vmem:[%s2700 + $0x30] sm:$0xff]
  %v2708 = vld [vmem:[%s2700 + $0x38] sm:$0xff]
  %s2709 = scalar_lea.vmem %s11, 3
  %v2710 = vld [vmem:[%s2709] sm:$0x1]
  %v2712 = vlaneseq
  %v2713 = vshrl.u32 %v2712, 7
  %v2714 = vsub.s32 0, %v2713
  %v2715 = vrot.slane %v2710, %v2714
  %v2719 = vsel %vm476, %v2368, %v2359
  %v2720 = vsel %vm78, %v2719, 0
  %2722 = vmatprep.subr.mxu0 0.0
  %2723 = vmatpush1.msra.mxu0 0.0
  %2724 = vmatprep.subr.mxu0 0.0
  %2725 = vmatpush1.msra.mxu0 0.0
  %2726 = vmatprep.subr.mxu0 0.0
  %2727 = vmatpush1.msra.mxu0 0.0
  %2728 = vmatprep.subr.mxu0 0.0
  %2729 = vmatpush1.msra.mxu0 0.0
  %2730 = vmatprep.subr.mxu0 0.0
  %2731 = vmatpush1.msra.mxu0 0.0
  %2732 = vmatprep.subr.mxu0 0.0
  %2733 = vmatpush1.msra.mxu0 0.0
  %2734 = vmatprep.subr.mxu0 0.0
  %2735 = vmatpush1.msra.mxu0 0.0
  %2736 = vmatprep.subr.mxu0 0.0
  %2737 = vmatpush1.msra.mxu0 0.0
  %2738 = vmatprep.subr.mxu0 0.0
  %2739 = vmatpush1.msra.mxu0 %v2708
  %2740 = vmatprep.subr.mxu0 0.0
  %2741 = vmatpush1.msra.mxu0 %v2707
  %2742 = vmatprep.subr.mxu0 0.0
  %2743 = vmatpush1.msra.mxu0 %v2706
  %2744 = vmatprep.subr.mxu0 0.0
  %2745 = vmatpush1.msra.mxu0 %v2705
  %2746 = vmatprep.subr.mxu0 0.0
  %2747 = vmatpush1.msra.mxu0 %v2704
  %2748 = vmatprep.subr.mxu0 0.0
  %2749 = vmatpush1.msra.mxu0 %v2703
  %2750 = vmatprep.subr.mxu0 0.0
  %2751 = vmatpush1.msra.mxu0 %v2702
  %2752 = vmatprep.subr.mxu0 0.0
  %2753 = vmatpush1.msra.mxu0 %v2701
  %2754 = vmatprep.subr.mxu0 0.0
  %2755 = vmatpush2.msra.mxu0 0.0
  %2756 = vmatprep.subr.mxu0 0.0
  %2757 = vmatpush2.msra.mxu0 0.0
  %2758 = vmatprep.subr.mxu0 0.0
  %2759 = vmatpush2.msra.mxu0 0.0
  %2760 = vmatprep.subr.mxu0 0.0
  %2761 = vmatpush2.msra.mxu0 0.0
  %2762 = vmatprep.subr.mxu0 0.0
  %2763 = vmatpush2.msra.mxu0 0.0
  %2764 = vmatprep.subr.mxu0 0.0
  %2765 = vmatpush2.msra.mxu0 0.0
  %2766 = vmatprep.subr.mxu0 0.0
  %2767 = vmatpush2.msra.mxu0 0.0
  %2768 = vmatprep.subr.mxu0 0.0
  %2769 = vmatpush2.msra.mxu0 0.0
  %2770 = vmatprep.subr.mxu0 0.0
  %2771 = vmatpush2.msra.mxu0 0.0
  %2772 = vmatprep.subr.mxu0 0.0
  %2773 = vmatpush2.msra.mxu0 0.0
  %2774 = vmatprep.subr.mxu0 0.0
  %2775 = vmatpush2.msra.mxu0 0.0
  %2776 = vmatprep.subr.mxu0 0.0
  %2777 = vmatpush2.msra.mxu0 0.0
  %2778 = vmatprep.subr.mxu0 0.0
  %2779 = vmatpush2.msra.mxu0 0.0
  %2780 = vmatprep.subr.mxu0 0.0
  %2781 = vmatpush2.msra.mxu0 0.0
  %2782 = vmatprep.subr.mxu0 0.0
  %2783 = vmatpush2.msra.mxu0 0.0
  %2784 = vmatprep.subr.mxu0 0.0
  %2785 = vmatpush2.msra.mxu0 0.0
  %2786 = vmatprep.mubr.f32.mxu0 0.0
  %2787 = vmatmul.mubr.f32.gmra.mxu0 %v2720
  %v2788 = vpop.f32.mrf.mxu0
  %v2789 = vadd.f32 %v2715, %v2788
  %v2790 = vpop.f32.mrf.mxu0
  %2791 = vdwg.mxu0
  %v2792 = vmax.f32 %v2789, 0.0
  %s2793 = scalar_lea.vmem %s10, 256
  %v2794 = vld [vmem:[%s2793] sm:$0xff]
  %v2795 = vld [vmem:[%s2793 + $0x8] sm:$0xff]
  %v2796 = vld [vmem:[%s2793 + $0x10] sm:$0xff]
  %v2797 = vld [vmem:[%s2793 + $0x18] sm:$0xff]
  %v2798 = vld [vmem:[%s2793 + $0x20] sm:$0xff]
  %v2799 = vld [vmem:[%s2793 + $0x28] sm:$0xff]
  %v2800 = vld [vmem:[%s2793 + $0x30] sm:$0xff]
  %v2801 = vld [vmem:[%s2793 + $0x38] sm:$0xff]
  %s2802 = scalar_lea.vmem %s11, 4
  %v2803 = vld [vmem:[%s2802] sm:$0x1]
  %v2805 = vlaneseq
  %v2806 = vshrl.u32 %v2805, 7
  %v2807 = vsub.s32 0, %v2806
  %v2808 = vrot.slane %v2803, %v2807
  %v2812 = vsel %vm476, %v2699, %v2692
  %v2813 = vsel %vm78, %v2812, 0
  %2815 = vmatprep.subr.mxu0 0.0
  %2816 = vmatpush1.msra.mxu0 0.0
  %2817 = vmatprep.subr.mxu0 0.0
  %2818 = vmatpush1.msra.mxu0 0.0
  %2819 = vmatprep.subr.mxu0 0.0
  %2820 = vmatpush1.msra.mxu0 0.0
  %2821 = vmatprep.subr.mxu0 0.0
  %2822 = vmatpush1.msra.mxu0 0.0
  %2823 = vmatprep.subr.mxu0 0.0
  %2824 = vmatpush1.msra.mxu0 0.0
  %2825 = vmatprep.subr.mxu0 0.0
  %2826 = vmatpush1.msra.mxu0 0.0
  %2827 = vmatprep.subr.mxu0 0.0
  %2828 = vmatpush1.msra.mxu0 0.0
  %2829 = vmatprep.subr.mxu0 0.0
  %2830 = vmatpush1.msra.mxu0 0.0
  %2831 = vmatprep.subr.mxu0 0.0
  %2832 = vmatpush1.msra.mxu0 %v2801
  %2833 = vmatprep.subr.mxu0 0.0
  %2834 = vmatpush1.msra.mxu0 %v2800
  %2835 = vmatprep.subr.mxu0 0.0
  %2836 = vmatpush1.msra.mxu0 %v2799
  %2837 = vmatprep.subr.mxu0 0.0
  %2838 = vmatpush1.msra.mxu0 %v2798
  %2839 = vmatprep.subr.mxu0 0.0
  %2840 = vmatpush1.msra.mxu0 %v2797
  %2841 = vmatprep.subr.mxu0 0.0
  %2842 = vmatpush1.msra.mxu0 %v2796
  %2843 = vmatprep.subr.mxu0 0.0
  %2844 = vmatpush1.msra.mxu0 %v2795
  %2845 = vmatprep.subr.mxu0 0.0
  %2846 = vmatpush1.msra.mxu0 %v2794
  %2847 = vmatprep.subr.mxu0 0.0
  %2848 = vmatpush2.msra.mxu0 0.0
  %2849 = vmatprep.subr.mxu0 0.0
  %2850 = vmatpush2.msra.mxu0 0.0
  %2851 = vmatprep.subr.mxu0 0.0
  %2852 = vmatpush2.msra.mxu0 0.0
  %2853 = vmatprep.subr.mxu0 0.0
  %2854 = vmatpush2.msra.mxu0 0.0
  %2855 = vmatprep.subr.mxu0 0.0
  %2856 = vmatpush2.msra.mxu0 0.0
  %2857 = vmatprep.subr.mxu0 0.0
  %2858 = vmatpush2.msra.mxu0 0.0
  %2859 = vmatprep.subr.mxu0 0.0
  %2860 = vmatpush2.msra.mxu0 0.0
  %2861 = vmatprep.subr.mxu0 0.0
  %2862 = vmatpush2.msra.mxu0 0.0
  %2863 = vmatprep.subr.mxu0 0.0
  %2864 = vmatpush2.msra.mxu0 0.0
  %2865 = vmatprep.subr.mxu0 0.0
  %2866 = vmatpush2.msra.mxu0 0.0
  %2867 = vmatprep.subr.mxu0 0.0
  %2868 = vmatpush2.msra.mxu0 0.0
  %2869 = vmatprep.subr.mxu0 0.0
  %2870 = vmatpush2.msra.mxu0 0.0
  %2871 = vmatprep.subr.mxu0 0.0
  %2872 = vmatpush2.msra.mxu0 0.0
  %2873 = vmatprep.subr.mxu0 0.0
  %2874 = vmatpush2.msra.mxu0 0.0
  %2875 = vmatprep.subr.mxu0 0.0
  %2876 = vmatpush2.msra.mxu0 0.0
  %2877 = vmatprep.subr.mxu0 0.0
  %2878 = vmatpush2.msra.mxu0 0.0
  %2879 = vmatprep.mubr.f32.mxu0 0.0
  %2880 = vmatmul.mubr.f32.gmra.mxu0 %v2813
  %v2881 = vpop.f32.mrf.mxu0
  %v2882 = vadd.f32 %v2808, %v2881
  %v2883 = vpop.f32.mrf.mxu0
  %2884 = vdwg.mxu0
  %v2885 = vmax.f32 %v2882, 0.0
  %v2886 = vmul.f32 %v1769, %v2792
  %v2887 = vmul.f32 %v1769, %v2885
  %v2888 = vld [vmem:[%s12] sm:$0xff]
  %v2889 = vld [vmem:[%s12 + $0x8] sm:$0xff]
  %v2890 = vld [vmem:[%s12 + $0x10] sm:$0xff]
  %v2891 = vld [vmem:[%s12 + $0x18] sm:$0xff]
  %v2892 = vld [vmem:[%s12 + $0x20] sm:$0xff]
  %v2893 = vld [vmem:[%s12 + $0x28] sm:$0xff]
  %v2894 = vld [vmem:[%s12 + $0x30] sm:$0xff]
  %v2895 = vld [vmem:[%s12 + $0x38] sm:$0xff]
  %v2896 = vld [vmem:[%s13] sm:$0x1]
  %v2898 = vlaneseq
  %v2899 = vshrl.u32 %v2898, 7
  %v2900 = vsub.s32 0, %v2899
  %v2901 = vrot.slane %v2896, %v2900
  %v2904 = vsel %vm78, %v2886, 0
  %2906 = vmatprep.subr.mxu0 0.0
  %2907 = vmatpush1.msra.mxu0 0.0
  %2908 = vmatprep.subr.mxu0 0.0
  %2909 = vmatpush1.msra.mxu0 0.0
  %2910 = vmatprep.subr.mxu0 0.0
  %2911 = vmatpush1.msra.mxu0 0.0
  %2912 = vmatprep.subr.mxu0 0.0
  %2913 = vmatpush1.msra.mxu0 0.0
  %2914 = vmatprep.subr.mxu0 0.0
  %2915 = vmatpush1.msra.mxu0 0.0
  %2916 = vmatprep.subr.mxu0 0.0
  %2917 = vmatpush1.msra.mxu0 0.0
  %2918 = vmatprep.subr.mxu0 0.0
  %2919 = vmatpush1.msra.mxu0 0.0
  %2920 = vmatprep.subr.mxu0 0.0
  %2921 = vmatpush1.msra.mxu0 0.0
  %2922 = vmatprep.subr.mxu0 0.0
  %2923 = vmatpush1.msra.mxu0 %v2895
  %2924 = vmatprep.subr.mxu0 0.0
  %2925 = vmatpush1.msra.mxu0 %v2894
  %2926 = vmatprep.subr.mxu0 0.0
  %2927 = vmatpush1.msra.mxu0 %v2893
  %2928 = vmatprep.subr.mxu0 0.0
  %2929 = vmatpush1.msra.mxu0 %v2892
  %2930 = vmatprep.subr.mxu0 0.0
  %2931 = vmatpush1.msra.mxu0 %v2891
  %2932 = vmatprep.subr.mxu0 0.0
  %2933 = vmatpush1.msra.mxu0 %v2890
  %2934 = vmatprep.subr.mxu0 0.0
  %2935 = vmatpush1.msra.mxu0 %v2889
  %2936 = vmatprep.subr.mxu0 0.0
  %2937 = vmatpush1.msra.mxu0 %v2888
  %2938 = vmatprep.subr.mxu0 0.0
  %2939 = vmatpush2.msra.mxu0 0.0
  %2940 = vmatprep.subr.mxu0 0.0
  %2941 = vmatpush2.msra.mxu0 0.0
  %2942 = vmatprep.subr.mxu0 0.0
  %2943 = vmatpush2.msra.mxu0 0.0
  %2944 = vmatprep.subr.mxu0 0.0
  %2945 = vmatpush2.msra.mxu0 0.0
  %2946 = vmatprep.subr.mxu0 0.0
  %2947 = vmatpush2.msra.mxu0 0.0
  %2948 = vmatprep.subr.mxu0 0.0
  %2949 = vmatpush2.msra.mxu0 0.0
  %2950 = vmatprep.subr.mxu0 0.0
  %2951 = vmatpush2.msra.mxu0 0.0
  %2952 = vmatprep.subr.mxu0 0.0
  %2953 = vmatpush2.msra.mxu0 0.0
  %2954 = vmatprep.subr.mxu0 0.0
  %2955 = vmatpush2.msra.mxu0 0.0
  %2956 = vmatprep.subr.mxu0 0.0
  %2957 = vmatpush2.msra.mxu0 0.0
  %2958 = vmatprep.subr.mxu0 0.0
  %2959 = vmatpush2.msra.mxu0 0.0
  %2960 = vmatprep.subr.mxu0 0.0
  %2961 = vmatpush2.msra.mxu0 0.0
  %2962 = vmatprep.subr.mxu0 0.0
  %2963 = vmatpush2.msra.mxu0 0.0
  %2964 = vmatprep.subr.mxu0 0.0
  %2965 = vmatpush2.msra.mxu0 0.0
  %2966 = vmatprep.subr.mxu0 0.0
  %2967 = vmatpush2.msra.mxu0 0.0
  %2968 = vmatprep.subr.mxu0 0.0
  %2969 = vmatpush2.msra.mxu0 0.0
  %2970 = vmatprep.mubr.f32.mxu0 0.0
  %2971 = vmatmul.mubr.f32.gmra.mxu0 %v2904
  %v2972 = vpop.f32.mrf.mxu0
  %v2973 = vadd.f32 %v2901, %v2972
  %v2974 = vpop.f32.mrf.mxu0
  %2975 = vdwg.mxu0
  %v2976 = vld [vmem:[%s14] sm:$0xff]
  %v2977 = vld [vmem:[%s14 + $0x8] sm:$0xff]
  %v2978 = vld [vmem:[%s14 + $0x10] sm:$0xff]
  %v2979 = vld [vmem:[%s14 + $0x18] sm:$0xff]
  %v2980 = vld [vmem:[%s14 + $0x20] sm:$0xff]
  %v2981 = vld [vmem:[%s14 + $0x28] sm:$0xff]
  %v2982 = vld [vmem:[%s14 + $0x30] sm:$0xff]
  %v2983 = vld [vmem:[%s14 + $0x38] sm:$0xff]
  %v2984 = vld [vmem:[%s15] sm:$0x1]
  %v2986 = vlaneseq
  %v2987 = vshrl.u32 %v2986, 7
  %v2988 = vsub.s32 0, %v2987
  %v2989 = vrot.slane %v2984, %v2988
  %v2992 = vsel %vm78, %v2887, 0
  %2994 = vmatprep.subr.mxu0 0.0
  %2995 = vmatpush1.msra.mxu0 0.0
  %2996 = vmatprep.subr.mxu0 0.0
  %2997 = vmatpush1.msra.mxu0 0.0
  %2998 = vmatprep.subr.mxu0 0.0
  %2999 = vmatpush1.msra.mxu0 0.0
  %3000 = vmatprep.subr.mxu0 0.0
  %3001 = vmatpush1.msra.mxu0 0.0
  %3002 = vmatprep.subr.mxu0 0.0
  %3003 = vmatpush1.msra.mxu0 0.0
  %3004 = vmatprep.subr.mxu0 0.0
  %3005 = vmatpush1.msra.mxu0 0.0
  %3006 = vmatprep.subr.mxu0 0.0
  %3007 = vmatpush1.msra.mxu0 0.0
  %3008 = vmatprep.subr.mxu0 0.0
  %3009 = vmatpush1.msra.mxu0 0.0
  %3010 = vmatprep.subr.mxu0 0.0
  %3011 = vmatpush1.msra.mxu0 %v2983
  %3012 = vmatprep.subr.mxu0 0.0
  %3013 = vmatpush1.msra.mxu0 %v2982
  %3014 = vmatprep.subr.mxu0 0.0
  %3015 = vmatpush1.msra.mxu0 %v2981
  %3016 = vmatprep.subr.mxu0 0.0
  %3017 = vmatpush1.msra.mxu0 %v2980
  %3018 = vmatprep.subr.mxu0 0.0
  %3019 = vmatpush1.msra.mxu0 %v2979
  %3020 = vmatprep.subr.mxu0 0.0
  %3021 = vmatpush1.msra.mxu0 %v2978
  %3022 = vmatprep.subr.mxu0 0.0
  %3023 = vmatpush1.msra.mxu0 %v2977
  %3024 = vmatprep.subr.mxu0 0.0
  %3025 = vmatpush1.msra.mxu0 %v2976
  %3026 = vmatprep.subr.mxu0 0.0
  %3027 = vmatpush2.msra.mxu0 0.0
  %3028 = vmatprep.subr.mxu0 0.0
  %3029 = vmatpush2.msra.mxu0 0.0
  %3030 = vmatprep.subr.mxu0 0.0
  %3031 = vmatpush2.msra.mxu0 0.0
  %3032 = vmatprep.subr.mxu0 0.0
  %3033 = vmatpush2.msra.mxu0 0.0
  %3034 = vmatprep.subr.mxu0 0.0
  %3035 = vmatpush2.msra.mxu0 0.0
  %3036 = vmatprep.subr.mxu0 0.0
  %3037 = vmatpush2.msra.mxu0 0.0
  %3038 = vmatprep.subr.mxu0 0.0
  %3039 = vmatpush2.msra.mxu0 0.0
  %3040 = vmatprep.subr.mxu0 0.0
  %3041 = vmatpush2.msra.mxu0 0.0
  %3042 = vmatprep.subr.mxu0 0.0
  %3043 = vmatpush2.msra.mxu0 0.0
  %3044 = vmatprep.subr.mxu0 0.0
  %3045 = vmatpush2.msra.mxu0 0.0
  %3046 = vmatprep.subr.mxu0 0.0
  %3047 = vmatpush2.msra.mxu0 0.0
  %3048 = vmatprep.subr.mxu0 0.0
  %3049 = vmatpush2.msra.mxu0 0.0
  %3050 = vmatprep.subr.mxu0 0.0
  %3051 = vmatpush2.msra.mxu0 0.0
  %3052 = vmatprep.subr.mxu0 0.0
  %3053 = vmatpush2.msra.mxu0 0.0
  %3054 = vmatprep.subr.mxu0 0.0
  %3055 = vmatpush2.msra.mxu0 0.0
  %3056 = vmatprep.subr.mxu0 0.0
  %3057 = vmatpush2.msra.mxu0 0.0
  %3058 = vmatprep.mubr.f32.mxu0 0.0
  %3059 = vmatmul.mubr.f32.gmra.mxu0 %v2992
  %v3060 = vpop.f32.mrf.mxu0
  %v3061 = vadd.f32 %v2989, %v3060
  %v3062 = vpop.f32.mrf.mxu0
  %3063 = vdwg.mxu0
  %v3064 = vld [vmem:[%s16] sm:$0xff]
  %v3065 = vld [vmem:[%s16 + $0x8] sm:$0xff]
  %v3066 = vld [vmem:[%s16 + $0x10] sm:$0xff]
  %v3067 = vld [vmem:[%s16 + $0x18] sm:$0xff]
  %v3068 = vld [vmem:[%s16 + $0x20] sm:$0xff]
  %v3069 = vld [vmem:[%s16 + $0x28] sm:$0xff]
  %v3070 = vld [vmem:[%s16 + $0x30] sm:$0xff]
  %v3071 = vld [vmem:[%s16 + $0x38] sm:$0xff]
  %v3072 = vld [vmem:[%s16 + $0x40] sm:$0xff]
  %v3073 = vld [vmem:[%s16 + $0x48] sm:$0xff]
  %v3074 = vld [vmem:[%s16 + $0x50] sm:$0xff]
  %v3075 = vld [vmem:[%s16 + $0x58] sm:$0xff]
  %v3076 = vld [vmem:[%s16 + $0x60] sm:$0xff]
  %v3077 = vld [vmem:[%s16 + $0x68] sm:$0xff]
  %v3078 = vld [vmem:[%s16 + $0x70] sm:$0xff]
  %v3079 = vld [vmem:[%s16 + $0x78] sm:$0xff]
  %v3081 = vsel %vm78, %v3061, 0
  %3083 = vmatprep.subr.mxu0 0.0
  %3084 = vmatpush1.msra.mxu0 0.0
  %3085 = vmatprep.subr.mxu0 0.0
  %3086 = vmatpush1.msra.mxu0 0.0
  %3087 = vmatprep.subr.mxu0 0.0
  %3088 = vmatpush1.msra.mxu0 0.0
  %3089 = vmatprep.subr.mxu0 0.0
  %3090 = vmatpush1.msra.mxu0 0.0
  %3091 = vmatprep.subr.mxu0 0.0
  %3092 = vmatpush1.msra.mxu0 0.0
  %3093 = vmatprep.subr.mxu0 0.0
  %3094 = vmatpush1.msra.mxu0 0.0
  %3095 = vmatprep.subr.mxu0 0.0
  %3096 = vmatpush1.msra.mxu0 0.0
  %3097 = vmatprep.subr.mxu0 0.0
  %3098 = vmatpush1.msra.mxu0 0.0
  %3099 = vmatprep.subr.mxu0 0.0
  %3100 = vmatpush1.msra.mxu0 %v3079
  %3101 = vmatprep.subr.mxu0 0.0
  %3102 = vmatpush1.msra.mxu0 %v3078
  %3103 = vmatprep.subr.mxu0 0.0
  %3104 = vmatpush1.msra.mxu0 %v3077
  %3105 = vmatprep.subr.mxu0 0.0
  %3106 = vmatpush1.msra.mxu0 %v3076
  %3107 = vmatprep.subr.mxu0 0.0
  %3108 = vmatpush1.msra.mxu0 %v3075
  %3109 = vmatprep.subr.mxu0 0.0
  %3110 = vmatpush1.msra.mxu0 %v3074
  %3111 = vmatprep.subr.mxu0 0.0
  %3112 = vmatpush1.msra.mxu0 %v3073
  %3113 = vmatprep.subr.mxu0 0.0
  %3114 = vmatpush1.msra.mxu0 %v3072
  %3115 = vmatprep.subr.mxu0 0.0
  %3116 = vmatpush2.msra.mxu0 0.0
  %3117 = vmatprep.subr.mxu0 0.0
  %3118 = vmatpush2.msra.mxu0 0.0
  %3119 = vmatprep.subr.mxu0 0.0
  %3120 = vmatpush2.msra.mxu0 0.0
  %3121 = vmatprep.subr.mxu0 0.0
  %3122 = vmatpush2.msra.mxu0 0.0
  %3123 = vmatprep.subr.mxu0 0.0
  %3124 = vmatpush2.msra.mxu0 0.0
  %3125 = vmatprep.subr.mxu0 0.0
  %3126 = vmatpush2.msra.mxu0 0.0
  %3127 = vmatprep.subr.mxu0 0.0
  %3128 = vmatpush2.msra.mxu0 0.0
  %3129 = vmatprep.subr.mxu0 0.0
  %3130 = vmatpush2.msra.mxu0 0.0
  %3131 = vmatprep.subr.mxu0 0.0
  %3132 = vmatpush2.msra.mxu0 0.0
  %3133 = vmatprep.subr.mxu0 0.0
  %3134 = vmatpush2.msra.mxu0 0.0
  %3135 = vmatprep.subr.mxu0 0.0
  %3136 = vmatpush2.msra.mxu0 0.0
  %3137 = vmatprep.subr.mxu0 0.0
  %3138 = vmatpush2.msra.mxu0 0.0
  %3139 = vmatprep.subr.mxu0 0.0
  %3140 = vmatpush2.msra.mxu0 0.0
  %3141 = vmatprep.subr.mxu0 0.0
  %3142 = vmatpush2.msra.mxu0 0.0
  %3143 = vmatprep.subr.mxu0 0.0
  %3144 = vmatpush2.msra.mxu0 0.0
  %3145 = vmatprep.subr.mxu0 0.0
  %3146 = vmatpush2.msra.mxu0 0.0
  %3147 = vmatprep.mubr.f32.mxu0 0.0
  %3148 = vmatmul.mubr.f32.gmra.mxu0 %v3081
  %v3149 = vpop.f32.mrf.mxu0
  %v3150 = vadd.f32 0.0, %v3149
  %v3151 = vpop.f32.mrf.mxu0
  %3152 = vdwg.mxu0
  %v3154 = vsel %vm78, %v2973, 0
  %3156 = vmatprep.subr.mxu0 0.0
  %3157 = vmatpush1.msra.mxu0 0.0
  %3158 = vmatprep.subr.mxu0 0.0
  %3159 = vmatpush1.msra.mxu0 0.0
  %3160 = vmatprep.subr.mxu0 0.0
  %3161 = vmatpush1.msra.mxu0 0.0
  %3162 = vmatprep.subr.mxu0 0.0
  %3163 = vmatpush1.msra.mxu0 0.0
  %3164 = vmatprep.subr.mxu0 0.0
  %3165 = vmatpush1.msra.mxu0 0.0
  %3166 = vmatprep.subr.mxu0 0.0
  %3167 = vmatpush1.msra.mxu0 0.0
  %3168 = vmatprep.subr.mxu0 0.0
  %3169 = vmatpush1.msra.mxu0 0.0
  %3170 = vmatprep.subr.mxu0 0.0
  %3171 = vmatpush1.msra.mxu0 0.0
  %3172 = vmatprep.subr.mxu0 0.0
  %3173 = vmatpush1.msra.mxu0 %v3071
  %3174 = vmatprep.subr.mxu0 0.0
  %3175 = vmatpush1.msra.mxu0 %v3070
  %3176 = vmatprep.subr.mxu0 0.0
  %3177 = vmatpush1.msra.mxu0 %v3069
  %3178 = vmatprep.subr.mxu0 0.0
  %3179 = vmatpush1.msra.mxu0 %v3068
  %3180 = vmatprep.subr.mxu0 0.0
  %3181 = vmatpush1.msra.mxu0 %v3067
  %3182 = vmatprep.subr.mxu0 0.0
  %3183 = vmatpush1.msra.mxu0 %v3066
  %3184 = vmatprep.subr.mxu0 0.0
  %3185 = vmatpush1.msra.mxu0 %v3065
  %3186 = vmatprep.subr.mxu0 0.0
  %3187 = vmatpush1.msra.mxu0 %v3064
  %3188 = vmatprep.subr.mxu0 0.0
  %3189 = vmatpush2.msra.mxu0 0.0
  %3190 = vmatprep.subr.mxu0 0.0
  %3191 = vmatpush2.msra.mxu0 0.0
  %3192 = vmatprep.subr.mxu0 0.0
  %3193 = vmatpush2.msra.mxu0 0.0
  %3194 = vmatprep.subr.mxu0 0.0
  %3195 = vmatpush2.msra.mxu0 0.0
  %3196 = vmatprep.subr.mxu0 0.0
  %3197 = vmatpush2.msra.mxu0 0.0
  %3198 = vmatprep.subr.mxu0 0.0
  %3199 = vmatpush2.msra.mxu0 0.0
  %3200 = vmatprep.subr.mxu0 0.0
  %3201 = vmatpush2.msra.mxu0 0.0
  %3202 = vmatprep.subr.mxu0 0.0
  %3203 = vmatpush2.msra.mxu0 0.0
  %3204 = vmatprep.subr.mxu0 0.0
  %3205 = vmatpush2.msra.mxu0 0.0
  %3206 = vmatprep.subr.mxu0 0.0
  %3207 = vmatpush2.msra.mxu0 0.0
  %3208 = vmatprep.subr.mxu0 0.0
  %3209 = vmatpush2.msra.mxu0 0.0
  %3210 = vmatprep.subr.mxu0 0.0
  %3211 = vmatpush2.msra.mxu0 0.0
  %3212 = vmatprep.subr.mxu0 0.0
  %3213 = vmatpush2.msra.mxu0 0.0
  %3214 = vmatprep.subr.mxu0 0.0
  %3215 = vmatpush2.msra.mxu0 0.0
  %3216 = vmatprep.subr.mxu0 0.0
  %3217 = vmatpush2.msra.mxu0 0.0
  %3218 = vmatprep.subr.mxu0 0.0
  %3219 = vmatpush2.msra.mxu0 0.0
  %3220 = vmatprep.mubr.f32.mxu0 0.0
  %3221 = vmatmul.mubr.f32.gmra.mxu0 %v3154
  %v3222 = vpop.f32.mrf.mxu0
  %v3223 = vadd.f32 %v3150, %v3222
  %v3224 = vpop.f32.mrf.mxu0
  %3225 = vdwg.mxu0
  %v3226 = vld [vmem:[%s17] sm:$0x1]
  %v3228 = vlaneseq
  %v3229 = vshrl.u32 %v3228, 7
  %v3230 = vsub.s32 0, %v3229
  %v3231 = vrot.slane %v3226, %v3230
  %v3233 = vadd.f32 %v3223, %v3231
  %v3234 = vtanh.pop %v3233
  %vm3235 = vcmask 254976
  %3236 = vst.msk [vmem:[%s18] sm:$0x3] %vm3235, %v3234
  // Predicated region
  $region74: #{forward.6} parent=0 // pred_check
    _
  $region75: #{forward.6} parent=0 // pred_check_branch
    %3238 = sbr.rel (0) target = $region77
  $region76: #{forward.6} parent=0 // pred_region
    _
  $region77: #{forward.6} parent=0 // pred_fallthru
    _
  // Predicated region
  $region78: #{forward.6} parent=0 // pred_check
    _
  $region79: #{forward.6} parent=0 // pred_check_branch
    %3240 = sbr.rel (0) target = $region81
  $region80: #{forward.6} parent=0 // pred_region
    _
  $region81: #{forward.6} parent=0 // pred_fallthru
    _

</llo_original>
